<compile_context>
chip_gen: v7x
topology: tpu7x:2x2x1
jax: 0.10.0
libtpu: 0.0.40
codegen_flags: <defaults>
</compile_context>

<pallas_src>
import jax
import jax.numpy as jnp
from jax import lax
from jax.experimental import pallas as pl
from jax.experimental.pallas import tpu as pltpu

DEQ_EXPAND = 1
NUM_GROUPS = 4
EPS = 1e-5          # PyTorch GroupNorm default eps
LANE = 128          # TPU lane width
ROW_ALIGN = 32      # keep the flattened row count friendly for f32/bf16 tiling


def _round_up(x, m):
    return (x + m - 1) // m * m


# ---------------------------------------------------------------------------
# In-kernel helpers (traced inside the Pallas body).
# ---------------------------------------------------------------------------
def _conv3x3_rows(x2d, w_ref, wp, rows):
    """3x3 / stride-1 / pad-1 conv in the flattened padded-rows layout.

    x2d:   (R, CP) f32, row r = py*wp + px of the zero-padded image.
    w_ref: (9*CP, CP) bf16 VMEM ref, tap-major (ky, kx, cin) x cout.

    Each tap is a circular row shift (pltpu.roll == jnp.roll semantics, so
    shift = -s gives out[i] = x[i + s]); the 9 taps are concatenated along the
    lane axis (128-aligned pieces) and contracted in a single MXU dot.

    CORRECTNESS NOTE: the circular wrap only deposits garbage in border /
    padding rows.  Interior pixel rows read only valid padded-image rows, and
    every downstream consumer masks (GN stats, conv2 input) or slices
    (wrapper) the border rows.  Do not remove those masks.
    """
    taps = []
    for dy in range(3):
        for dx in range(3):
            s = (dy - 1) * wp + (dx - 1)        # neighbour offset in rows
            shift = (-s) % rows
            xt = x2d if shift == 0 else pltpu.roll(x2d, shift=shift, axis=0)
            taps.append(xt.astype(jnp.bfloat16))
        # (cast after the shift is exact / identical to cast-before-shift)
    xcat = jnp.concatenate(taps, axis=1)         # (R, 9*CP) bf16, lane-aligned
    return jnp.dot(xcat, w_ref[...], preferred_element_type=jnp.float32)


def _group_norm(y, sel, gamma, beta, mask, inv_count):
    """Two-pass GroupNorm over the interior rows (mask == 1) of y: (R, CP) f32.
    sel: (G, CP) one-hot channel->group selector (0 for padded channels).
    gamma/beta: (1, CP) affine params (0 for padded channels).
    Group reductions stay on the VPU/XLU (no MXU).  The final normalize reuses
    the masked, mean-subtracted `d` (border rows -> beta; masked/sliced later).
    """
    ym = y * mask
    ch_sum = jnp.sum(ym, axis=0, keepdims=True)                       # (1, CP)
    g_sum = jnp.sum(sel * ch_sum, axis=1, keepdims=True)              # (G, 1)
    mean_c = jnp.sum(sel * g_sum, axis=0, keepdims=True) * inv_count  # (1, CP)
    d = (y - mean_c) * mask                                           # two-pass
    ch_sq = jnp.sum(d * d, axis=0, keepdims=True)                     # (1, CP)
    g_var = jnp.sum(sel * ch_sq, axis=1, keepdims=True) * inv_count   # (G, 1)
    inv_g = lax.rsqrt(g_var + EPS)                                    # (G, 1)
    inv_c = jnp.sum(sel * inv_g, axis=0, keepdims=True)               # (1, CP)
    return d * (inv_c * gamma) + beta


def _make_kernel(wp, rows, inv_count1, inv_count2):
    def kernel(x_ref, inj_ref, w1_ref, w2_ref,
               g1_ref, b1_ref, g2_ref, b2_ref, g3_ref, b3_ref,
               sel1_ref, sel2_ref, mask_ref, out_ref):
        mask = mask_ref[...]                        # (R, 1): 1 at interior rows
        xi_b = x_ref[0] + inj_ref[0]                # bf16: x = x + injection
        xi = xi_b.astype(jnp.float32)               # f32 residual

        # conv1 -> gn1 -> relu (mask REQUIRED: conv2 must see a zero pad ring)
        h = _conv3x3_rows(xi, w1_ref, wp, rows)
        h = _group_norm(h, sel1_ref[...], g1_ref[...], b1_ref[...],
                        mask, inv_count1)
        h = jnp.maximum(h, 0.0) * mask
        # conv2 -> gn2
        h = _conv3x3_rows(h, w2_ref, wp, rows)
        h = _group_norm(h, sel2_ref[...], g2_ref[...], b2_ref[...],
                        mask, inv_count2)
        # += residual, relu3, gn3 (border rows are garbage; wrapper slices them)
        h = jnp.maximum(h + xi, 0.0)
        h = _group_norm(h, sel2_ref[...], g3_ref[...], b3_ref[...],
                        mask, inv_count2)
        out_ref[0] = h.astype(out_ref.dtype)        # lane-dense (R, 128) store
    return kernel


# ---------------------------------------------------------------------------
# Wrapper: layout conversion + pallas_call plumbing.
# ---------------------------------------------------------------------------
def basic_block_forward(x_nchw, inj_nchw, params):
    B, C, H, W = x_nchw.shape
    planes = params['conv2_w'].shape[0]
    c1 = params['conv1_w'].shape[0]                 # DEQ_EXPAND * planes
    assert planes == C and C % NUM_GROUPS == 0 and c1 % NUM_GROUPS == 0

    Hp, Wp = H + 2, W + 2
    CP = _round_up(max(C, c1), LANE)                # lane-dense channel count
    R = _round_up(Hp * Wp, ROW_ALIGN)               # flattened padded rows

    # --- activations: NCHW -> NHWC -> pad halo + channels -> flatten rows ---
    # Shipped as bf16 (halves HBM/VMEM traffic); f32 accumulation in-kernel.
    def to_rows(a_nchw):
        a = jnp.transpose(a_nchw, (0, 2, 3, 1)).astype(jnp.bfloat16)
        a = jnp.pad(a, ((0, 0), (1, 1), (1, 1), (0, CP - C)))
        a = a.reshape(B, Hp * Wp, CP)
        return jnp.pad(a, ((0, 0), (0, R - Hp * Wp), (0, 0)))

    x2d = to_rows(x_nchw)
    inj2d = to_rows(inj_nchw)

    # --- conv weights: OIHW -> HWIO, pad channels, flatten taps into K ---
    def conv_w(w_oihw, cin, cout):
        w = jnp.transpose(w_oihw, (2, 3, 1, 0)).astype(jnp.bfloat16)   # HWIO
        w = jnp.pad(w, ((0, 0), (0, 0), (0, CP - cin), (0, CP - cout)))
        return w.reshape(9 * CP, CP)                # tap-major, K = 9*CP

    w1 = conv_w(params['conv1_w'], C, c1)
    w2 = conv_w(params['conv2_w'], c1, C)

    # --- GN params padded to CP lanes (padding lanes get gamma=beta=0) ---
    def gn_par(name, n):
        g = jnp.pad(params[f'{name}_w'].astype(jnp.float32), (0, CP - n))
        b = jnp.pad(params[f'{name}_b'].astype(jnp.float32), (0, CP - n))
        return g.reshape(1, CP), b.reshape(1, CP)

    g1, b1 = gn_par('gn1', c1)
    g2, b2 = gn_par('gn2', C)
    g3, b3 = gn_par('gn3', C)

    # --- channel -> group selectors (separate for c1 and C channel counts) ---
    def make_sel(n):
        cg = n // NUM_GROUPS
        c = jnp.arange(CP)
        g = jnp.arange(NUM_GROUPS)
        sel = ((c[None, :] // cg) == g[:, None]) & (c[None, :] < n)
        return sel.astype(jnp.float32)              # (G, CP)

    sel1, sel2 = make_sel(c1), make_sel(C)

    # --- interior-row mask (1 where row is a real H x W pixel) ---
    r = jnp.arange(R)
    py, px = r // Wp, r % Wp
    interior = (py >= 1) & (py <= H) & (px >= 1) & (px <= W) & (r < Hp * Wp)
    mask = interior.astype(jnp.float32).reshape(R, 1)

    inv_count1 = 1.0 / float(H * W * (c1 // NUM_GROUPS))
    inv_count2 = 1.0 / float(H * W * (C // NUM_GROUPS))

    kernel = _make_kernel(Wp, R, inv_count1, inv_count2)

    def full(shape):
        nd = len(shape)
        return pl.BlockSpec(shape, lambda n, _nd=nd: (0,) * _nd)

    def act_spec():
        return pl.BlockSpec((1, R, CP), lambda n: (n, 0, 0))

    flops = 2 * (2 * B * R * (9 * CP) * CP)         # two 3x3 convs (padded shapes)
    bytes_accessed = ((x2d.size + inj2d.size) * 2 + B * R * CP * 4
                      + (w1.size + w2.size) * 2
                      + (6 * CP + 2 * NUM_GROUPS * CP + R) * 4)

    out2d = pl.pallas_call(
        kernel,
        out_shape=jax.ShapeDtypeStruct((B, R, CP), jnp.float32),
        grid=(B,),
        in_specs=[act_spec(), act_spec(),
                  full(w1.shape), full(w2.shape),
                  full(g1.shape), full(b1.shape),
                  full(g2.shape), full(b2.shape),
                  full(g3.shape), full(b3.shape),
                  full(sel1.shape), full(sel2.shape), full(mask.shape)],
        out_specs=act_spec(),
        compiler_params=pltpu.CompilerParams(
            dimension_semantics=("parallel",),
            vmem_limit_bytes=32 * 1024 * 1024),
        cost_estimate=pl.CostEstimate(flops=int(flops), transcendentals=0,
                                      bytes_accessed=int(bytes_accessed)),
    )(x2d, inj2d, w1, w2, g1, b1, g2, b2, g3, b3, sel1, sel2, mask)

    # back to NCHW: drop alignment tail, padding ring and padded channels
    out = out2d[:, :Hp * Wp, :].reshape(B, Hp, Wp, CP)[:, 1:H + 1, 1:W + 1, :C]
    return jnp.transpose(out, (0, 3, 1, 2))


# ---------------------------------------------------------------------------
# Pure-JAX reference (sanity check only).
# ---------------------------------------------------------------------------
def _gn_ref(x, w, b):
    B, C, H, W = x.shape
    xg = x.reshape(B, NUM_GROUPS, C // NUM_GROUPS, H, W)
    mean = xg.mean(axis=(2, 3, 4), keepdims=True)
    var = ((xg - mean) ** 2).mean(axis=(2, 3, 4), keepdims=True)
    xn = ((xg - mean) / jnp.sqrt(var + EPS)).reshape(B, C, H, W)
    return xn * w[None, :, None, None] + b[None, :, None, None]


def ref_forward(x, inj, p):
    dn = ('NCHW', 'OIHW', 'NCHW')
    x = x + inj
    residual = x
    out = lax.conv_general_dilated(x, p['conv1_w'], (1, 1), 'SAME',
                                   dimension_numbers=dn,
                                   precision=lax.Precision.HIGHEST)
    out = jnp.maximum(_gn_ref(out, p['gn1_w'], p['gn1_b']), 0.0)
    out = lax.conv_general_dilated(out, p['conv2_w'], (1, 1), 'SAME',
                                   dimension_numbers=dn,
                                   precision=lax.Precision.HIGHEST)
    out = _gn_ref(out, p['gn2_w'], p['gn2_b'])
    out = out + residual
    out = jnp.maximum(out, 0.0)
    return _gn_ref(out, p['gn3_w'], p['gn3_b'])


if __name__ == "__main__":
    key = jax.random.PRNGKey(0)
    B, C, H, W = 2, 4, 16, 16                 # inplanes = planes = 4, stride = 1
    planes = C
    c1 = DEQ_EXPAND * planes
    k = jax.random.split(key, 10)
    x = jax.random.normal(k[0], (B, C, H, W), jnp.float32)
    injection = 0.1 * jax.random.normal(k[1], (B, C, H, W), jnp.float32)
    params = {
        'conv1_w': 0.2 * jax.random.normal(k[2], (c1, C, 3, 3), jnp.float32),
        'conv2_w': 0.2 * jax.random.normal(k[3], (planes, c1, 3, 3), jnp.float32),
        'gn1_w': 1.0 + 0.1 * jax.random.normal(k[4], (c1,), jnp.float32),
        'gn1_b': 0.1 * jax.random.normal(k[5], (c1,), jnp.float32),
        'gn2_w': 1.0 + 0.1 * jax.random.normal(k[6], (planes,), jnp.float32),
        'gn2_b': 0.1 * jax.random.normal(k[7], (planes,), jnp.float32),
        'gn3_w': 1.0 + 0.1 * jax.random.normal(k[8], (planes,), jnp.float32),
        'gn3_b': 0.1 * jax.random.normal(k[9], (planes,), jnp.float32),
    }

    # PyTorch forward takes lists: x=[x0], injection=[inj0]; equivalent call here.
    out = basic_block_forward(x, injection, params)
    out = jax.block_until_ready(out)

    ref = ref_forward(x, injection, params)
    assert out.shape == (B, C, H, W)
    # bf16 activations/weights in the kernel vs f32 HIGHEST reference: ~1e-2 abs error.
    err = float(jnp.max(jnp.abs(out - ref)))
    assert bool(jnp.allclose(out, ref, rtol=5e-2, atol=5e-2)), ("max abs diff:", err)
    print("KERNEL_OK")
</pallas_src>

<mosaic_0001>
module attributes {stable_mosaic.version = 11 : i64} {
  func.func @kernel(%arg0: i32, %arg1: memref<1x352x128xbf16, #tpu.memory_space<vmem>>, %arg2: memref<1x352x128xbf16, #tpu.memory_space<vmem>>, %arg3: memref<1152x128xbf16, #tpu.memory_space<vmem>>, %arg4: memref<1152x128xbf16, #tpu.memory_space<vmem>>, %arg5: memref<1x128xf32, #tpu.memory_space<vmem>>, %arg6: memref<1x128xf32, #tpu.memory_space<vmem>>, %arg7: memref<1x128xf32, #tpu.memory_space<vmem>>, %arg8: memref<1x128xf32, #tpu.memory_space<vmem>>, %arg9: memref<1x128xf32, #tpu.memory_space<vmem>>, %arg10: memref<1x128xf32, #tpu.memory_space<vmem>>, %arg11: memref<4x128xf32, #tpu.memory_space<vmem>>, %arg12: memref<4x128xf32, #tpu.memory_space<vmem>>, %arg13: memref<352x1xf32, #tpu.memory_space<vmem>>, %arg14: memref<1x352x128xf32, #tpu.memory_space<vmem>>) attributes {dimension_semantics = [#tpu.dimension_semantics<parallel>], iteration_bounds = array<i64: 2>, scalar_prefetch = 0 : i64, scratch_operands = 0 : i64, tpu.core_type = #tpu.core_type<tc>, window_params = [{transform_indices = @transform_0, window_bounds = array<i64: 1, 352, 128>}, {transform_indices = @transform_1, window_bounds = array<i64: 1, 352, 128>}, {pipeline_mode = #tpu.pipeline_mode<synchronous>, transform_indices = @transform_2, window_bounds = array<i64: 1152, 128>}, {pipeline_mode = #tpu.pipeline_mode<synchronous>, transform_indices = @transform_3, window_bounds = array<i64: 1152, 128>}, {pipeline_mode = #tpu.pipeline_mode<synchronous>, transform_indices = @transform_4, window_bounds = array<i64: 1, 128>}, {pipeline_mode = #tpu.pipeline_mode<synchronous>, transform_indices = @transform_5, window_bounds = array<i64: 1, 128>}, {pipeline_mode = #tpu.pipeline_mode<synchronous>, transform_indices = @transform_6, window_bounds = array<i64: 1, 128>}, {pipeline_mode = #tpu.pipeline_mode<synchronous>, transform_indices = @transform_7, window_bounds = array<i64: 1, 128>}, {pipeline_mode = #tpu.pipeline_mode<synchronous>, transform_indices = @transform_8, window_bounds = array<i64: 1, 128>}, {pipeline_mode = #tpu.pipeline_mode<synchronous>, transform_indices = @transform_9, window_bounds = array<i64: 1, 128>}, {pipeline_mode = #tpu.pipeline_mode<synchronous>, transform_indices = @transform_10, window_bounds = array<i64: 4, 128>}, {pipeline_mode = #tpu.pipeline_mode<synchronous>, transform_indices = @transform_11, window_bounds = array<i64: 4, 128>}, {pipeline_mode = #tpu.pipeline_mode<synchronous>, transform_indices = @transform_12, window_bounds = array<i64: 352, 1>}, {transform_indices = @transform_13, window_bounds = array<i64: 1, 352, 128>}]} {
    %c0 = arith.constant 0 : index
    %c0_0 = arith.constant 0 : index
    %0 = vector.load %arg13[%c0, %c0_0] : memref<352x1xf32, #tpu.memory_space<vmem>>, vector<352x1xf32>
    %c0_1 = arith.constant 0 : index
    %c0_2 = arith.constant 0 : index
    %c0_3 = arith.constant 0 : index
    %1 = vector.load %arg1[%c0_1, %c0_2, %c0_3] : memref<1x352x128xbf16, #tpu.memory_space<vmem>>, vector<1x352x128xbf16>
    %2 = vector.shape_cast %1 : vector<1x352x128xbf16> to vector<352x128xbf16>
    %c0_4 = arith.constant 0 : index
    %c0_5 = arith.constant 0 : index
    %c0_6 = arith.constant 0 : index
    %3 = vector.load %arg2[%c0_4, %c0_5, %c0_6] : memref<1x352x128xbf16, #tpu.memory_space<vmem>>, vector<1x352x128xbf16>
    %4 = vector.shape_cast %3 : vector<1x352x128xbf16> to vector<352x128xbf16>
    %5 = arith.addf %2, %4 : vector<352x128xbf16>
    %6 = arith.extf %5 : vector<352x128xbf16> to vector<352x128xf32>
    %c19_i32 = arith.constant 19 : i32
    %7 = tpu.dynamic_rotate %6 by %c19_i32 dim 0 : vector<352x128xf32>, i32 -> vector<352x128xf32>
    %8 = arith.truncf %7 : vector<352x128xf32> to vector<352x128xbf16>
    %c18_i32 = arith.constant 18 : i32
    %9 = tpu.dynamic_rotate %6 by %c18_i32 dim 0 : vector<352x128xf32>, i32 -> vector<352x128xf32>
    %10 = arith.truncf %9 : vector<352x128xf32> to vector<352x128xbf16>
    %c17_i32 = arith.constant 17 : i32
    %11 = tpu.dynamic_rotate %6 by %c17_i32 dim 0 : vector<352x128xf32>, i32 -> vector<352x128xf32>
    %12 = arith.truncf %11 : vector<352x128xf32> to vector<352x128xbf16>
    %c1_i32 = arith.constant 1 : i32
    %13 = tpu.dynamic_rotate %6 by %c1_i32 dim 0 : vector<352x128xf32>, i32 -> vector<352x128xf32>
    %14 = arith.truncf %13 : vector<352x128xf32> to vector<352x128xbf16>
    %15 = arith.truncf %6 : vector<352x128xf32> to vector<352x128xbf16>
    %c351_i32 = arith.constant 351 : i32
    %16 = tpu.dynamic_rotate %6 by %c351_i32 dim 0 : vector<352x128xf32>, i32 -> vector<352x128xf32>
    %17 = arith.truncf %16 : vector<352x128xf32> to vector<352x128xbf16>
    %c335_i32 = arith.constant 335 : i32
    %18 = tpu.dynamic_rotate %6 by %c335_i32 dim 0 : vector<352x128xf32>, i32 -> vector<352x128xf32>
    %19 = arith.truncf %18 : vector<352x128xf32> to vector<352x128xbf16>
    %c334_i32 = arith.constant 334 : i32
    %20 = tpu.dynamic_rotate %6 by %c334_i32 dim 0 : vector<352x128xf32>, i32 -> vector<352x128xf32>
    %21 = arith.truncf %20 : vector<352x128xf32> to vector<352x128xbf16>
    %c333_i32 = arith.constant 333 : i32
    %22 = tpu.dynamic_rotate %6 by %c333_i32 dim 0 : vector<352x128xf32>, i32 -> vector<352x128xf32>
    %23 = arith.truncf %22 : vector<352x128xf32> to vector<352x128xbf16>
    %24 = tpu.concatenate %8, %10, %12, %14, %15, %17, %19, %21, %23 in 1 : vector<352x128xbf16>, vector<352x128xbf16>, vector<352x128xbf16>, vector<352x128xbf16>, vector<352x128xbf16>, vector<352x128xbf16>, vector<352x128xbf16>, vector<352x128xbf16>, vector<352x128xbf16> -> vector<352x1152xbf16>
    %c0_7 = arith.constant 0 : index
    %c0_8 = arith.constant 0 : index
    %25 = vector.load %arg3[%c0_7, %c0_8] : memref<1152x128xbf16, #tpu.memory_space<vmem>>, vector<1152x128xbf16>
    %cst = arith.constant dense<0.000000e+00> : vector<352x128xf32>
    %26 = tpu.matmul %24, %25, %cst {dimension_numbers = #tpu.dot_dimension_numbers<[1], [0], [0], [1], [0, 0, 1, 1], [], []>} : vector<352x1152xbf16>, vector<1152x128xbf16>, vector<352x128xf32> -> vector<352x128xf32>
    %c0_9 = arith.constant 0 : index
    %c0_10 = arith.constant 0 : index
    %27 = vector.load %arg11[%c0_9, %c0_10] : memref<4x128xf32, #tpu.memory_space<vmem>>, vector<4x128xf32>
    %c0_11 = arith.constant 0 : index
    %c0_12 = arith.constant 0 : index
    %28 = vector.load %arg5[%c0_11, %c0_12] : memref<1x128xf32, #tpu.memory_space<vmem>>, vector<1x128xf32>
    %c0_13 = arith.constant 0 : index
    %c0_14 = arith.constant 0 : index
    %29 = vector.load %arg6[%c0_13, %c0_14] : memref<1x128xf32, #tpu.memory_space<vmem>>, vector<1x128xf32>
    %30 = vector.broadcast %0 : vector<352x1xf32> to vector<352x128xf32>
    %31 = arith.mulf %26, %30 : vector<352x128xf32>
    %cst_15 = arith.constant dense<0.000000e+00> : vector<128xf32>
    %32 = vector.multi_reduction <add>, %31, %cst_15 [0] : vector<352x128xf32> to vector<128xf32>
    %33 = vector.shape_cast %32 : vector<128xf32> to vector<1x128xf32>
    %34 = vector.broadcast %33 : vector<1x128xf32> to vector<4x128xf32>
    %35 = arith.mulf %27, %34 : vector<4x128xf32>
    %cst_16 = arith.constant dense<0.000000e+00> : vector<4xf32>
    %36 = vector.multi_reduction <add>, %35, %cst_16 [1] : vector<4x128xf32> to vector<4xf32>
    %37 = vector.shape_cast %36 : vector<4xf32> to vector<4x1xf32>
    %38 = vector.broadcast %37 : vector<4x1xf32> to vector<4x128xf32>
    %39 = arith.mulf %27, %38 : vector<4x128xf32>
    %cst_17 = arith.constant dense<0.000000e+00> : vector<128xf32>
    %40 = vector.multi_reduction <add>, %39, %cst_17 [0] : vector<4x128xf32> to vector<128xf32>
    %41 = vector.shape_cast %40 : vector<128xf32> to vector<1x128xf32>
    %cst_18 = arith.constant 3.906250e-03 : f32
    %42 = vector.broadcast %cst_18 : f32 to vector<1x128xf32>
    %43 = arith.mulf %41, %42 : vector<1x128xf32>
    %44 = vector.broadcast %43 : vector<1x128xf32> to vector<352x128xf32>
    %45 = arith.subf %26, %44 : vector<352x128xf32>
    %46 = vector.broadcast %0 : vector<352x1xf32> to vector<352x128xf32>
    %47 = arith.mulf %45, %46 : vector<352x128xf32>
    %48 = arith.mulf %47, %47 : vector<352x128xf32>
    %cst_19 = arith.constant dense<0.000000e+00> : vector<128xf32>
    %49 = vector.multi_reduction <add>, %48, %cst_19 [0] : vector<352x128xf32> to vector<128xf32>
    %50 = vector.shape_cast %49 : vector<128xf32> to vector<1x128xf32>
    %51 = vector.broadcast %50 : vector<1x128xf32> to vector<4x128xf32>
    %52 = arith.mulf %27, %51 : vector<4x128xf32>
    %cst_20 = arith.constant dense<0.000000e+00> : vector<4xf32>
    %53 = vector.multi_reduction <add>, %52, %cst_20 [1] : vector<4x128xf32> to vector<4xf32>
    %54 = vector.shape_cast %53 : vector<4xf32> to vector<4x1xf32>
    %cst_21 = arith.constant 3.906250e-03 : f32
    %55 = vector.broadcast %cst_21 : f32 to vector<4x1xf32>
    %56 = arith.mulf %54, %55 : vector<4x1xf32>
    %cst_22 = arith.constant 9.99999974E-6 : f32
    %57 = vector.broadcast %cst_22 : f32 to vector<4x1xf32>
    %58 = arith.addf %56, %57 : vector<4x1xf32>
    %59 = math.rsqrt %58 : vector<4x1xf32>
    %60 = vector.broadcast %59 : vector<4x1xf32> to vector<4x128xf32>
    %61 = arith.mulf %27, %60 : vector<4x128xf32>
    %cst_23 = arith.constant dense<0.000000e+00> : vector<128xf32>
    %62 = vector.multi_reduction <add>, %61, %cst_23 [0] : vector<4x128xf32> to vector<128xf32>
    %63 = vector.shape_cast %62 : vector<128xf32> to vector<1x128xf32>
    %64 = arith.mulf %63, %28 : vector<1x128xf32>
    %65 = vector.broadcast %64 : vector<1x128xf32> to vector<352x128xf32>
    %66 = arith.mulf %47, %65 : vector<352x128xf32>
    %67 = vector.broadcast %29 : vector<1x128xf32> to vector<352x128xf32>
    %68 = arith.addf %66, %67 : vector<352x128xf32>
    %cst_24 = arith.constant 0.000000e+00 : f32
    %69 = vector.broadcast %cst_24 : f32 to vector<352x128xf32>
    %70 = arith.maximumf %68, %69 : vector<352x128xf32>
    %71 = vector.broadcast %0 : vector<352x1xf32> to vector<352x128xf32>
    %72 = arith.mulf %70, %71 : vector<352x128xf32>
    %c19_i32_25 = arith.constant 19 : i32
    %73 = tpu.dynamic_rotate %72 by %c19_i32_25 dim 0 : vector<352x128xf32>, i32 -> vector<352x128xf32>
    %74 = arith.truncf %73 : vector<352x128xf32> to vector<352x128xbf16>
    %c18_i32_26 = arith.constant 18 : i32
    %75 = tpu.dynamic_rotate %72 by %c18_i32_26 dim 0 : vector<352x128xf32>, i32 -> vector<352x128xf32>
    %76 = arith.truncf %75 : vector<352x128xf32> to vector<352x128xbf16>
    %c17_i32_27 = arith.constant 17 : i32
    %77 = tpu.dynamic_rotate %72 by %c17_i32_27 dim 0 : vector<352x128xf32>, i32 -> vector<352x128xf32>
    %78 = arith.truncf %77 : vector<352x128xf32> to vector<352x128xbf16>
    %c1_i32_28 = arith.constant 1 : i32
    %79 = tpu.dynamic_rotate %72 by %c1_i32_28 dim 0 : vector<352x128xf32>, i32 -> vector<352x128xf32>
    %80 = arith.truncf %79 : vector<352x128xf32> to vector<352x128xbf16>
    %81 = arith.truncf %72 : vector<352x128xf32> to vector<352x128xbf16>
    %c351_i32_29 = arith.constant 351 : i32
    %82 = tpu.dynamic_rotate %72 by %c351_i32_29 dim 0 : vector<352x128xf32>, i32 -> vector<352x128xf32>
    %83 = arith.truncf %82 : vector<352x128xf32> to vector<352x128xbf16>
    %c335_i32_30 = arith.constant 335 : i32
    %84 = tpu.dynamic_rotate %72 by %c335_i32_30 dim 0 : vector<352x128xf32>, i32 -> vector<352x128xf32>
    %85 = arith.truncf %84 : vector<352x128xf32> to vector<352x128xbf16>
    %c334_i32_31 = arith.constant 334 : i32
    %86 = tpu.dynamic_rotate %72 by %c334_i32_31 dim 0 : vector<352x128xf32>, i32 -> vector<352x128xf32>
    %87 = arith.truncf %86 : vector<352x128xf32> to vector<352x128xbf16>
    %c333_i32_32 = arith.constant 333 : i32
    %88 = tpu.dynamic_rotate %72 by %c333_i32_32 dim 0 : vector<352x128xf32>, i32 -> vector<352x128xf32>
    %89 = arith.truncf %88 : vector<352x128xf32> to vector<352x128xbf16>
    %90 = tpu.concatenate %74, %76, %78, %80, %81, %83, %85, %87, %89 in 1 : vector<352x128xbf16>, vector<352x128xbf16>, vector<352x128xbf16>, vector<352x128xbf16>, vector<352x128xbf16>, vector<352x128xbf16>, vector<352x128xbf16>, vector<352x128xbf16>, vector<352x128xbf16> -> vector<352x1152xbf16>
    %c0_33 = arith.constant 0 : index
    %c0_34 = arith.constant 0 : index
    %91 = vector.load %arg4[%c0_33, %c0_34] : memref<1152x128xbf16, #tpu.memory_space<vmem>>, vector<1152x128xbf16>
    %cst_35 = arith.constant dense<0.000000e+00> : vector<352x128xf32>
    %92 = tpu.matmul %90, %91, %cst_35 {dimension_numbers = #tpu.dot_dimension_numbers<[1], [0], [0], [1], [0, 0, 1, 1], [], []>} : vector<352x1152xbf16>, vector<1152x128xbf16>, vector<352x128xf32> -> vector<352x128xf32>
    %c0_36 = arith.constant 0 : index
    %c0_37 = arith.constant 0 : index
    %93 = vector.load %arg12[%c0_36, %c0_37] : memref<4x128xf32, #tpu.memory_space<vmem>>, vector<4x128xf32>
    %c0_38 = arith.constant 0 : index
    %c0_39 = arith.constant 0 : index
    %94 = vector.load %arg7[%c0_38, %c0_39] : memref<1x128xf32, #tpu.memory_space<vmem>>, vector<1x128xf32>
    %c0_40 = arith.constant 0 : index
    %c0_41 = arith.constant 0 : index
    %95 = vector.load %arg8[%c0_40, %c0_41] : memref<1x128xf32, #tpu.memory_space<vmem>>, vector<1x128xf32>
    %96 = vector.broadcast %0 : vector<352x1xf32> to vector<352x128xf32>
    %97 = arith.mulf %92, %96 : vector<352x128xf32>
    %cst_42 = arith.constant dense<0.000000e+00> : vector<128xf32>
    %98 = vector.multi_reduction <add>, %97, %cst_42 [0] : vector<352x128xf32> to vector<128xf32>
    %99 = vector.shape_cast %98 : vector<128xf32> to vector<1x128xf32>
    %100 = vector.broadcast %99 : vector<1x128xf32> to vector<4x128xf32>
    %101 = arith.mulf %93, %100 : vector<4x128xf32>
    %cst_43 = arith.constant dense<0.000000e+00> : vector<4xf32>
    %102 = vector.multi_reduction <add>, %101, %cst_43 [1] : vector<4x128xf32> to vector<4xf32>
    %103 = vector.shape_cast %102 : vector<4xf32> to vector<4x1xf32>
    %104 = vector.broadcast %103 : vector<4x1xf32> to vector<4x128xf32>
    %105 = arith.mulf %93, %104 : vector<4x128xf32>
    %cst_44 = arith.constant dense<0.000000e+00> : vector<128xf32>
    %106 = vector.multi_reduction <add>, %105, %cst_44 [0] : vector<4x128xf32> to vector<128xf32>
    %107 = vector.shape_cast %106 : vector<128xf32> to vector<1x128xf32>
    %cst_45 = arith.constant 3.906250e-03 : f32
    %108 = vector.broadcast %cst_45 : f32 to vector<1x128xf32>
    %109 = arith.mulf %107, %108 : vector<1x128xf32>
    %110 = vector.broadcast %109 : vector<1x128xf32> to vector<352x128xf32>
    %111 = arith.subf %92, %110 : vector<352x128xf32>
    %112 = vector.broadcast %0 : vector<352x1xf32> to vector<352x128xf32>
    %113 = arith.mulf %111, %112 : vector<352x128xf32>
    %114 = arith.mulf %113, %113 : vector<352x128xf32>
    %cst_46 = arith.constant dense<0.000000e+00> : vector<128xf32>
    %115 = vector.multi_reduction <add>, %114, %cst_46 [0] : vector<352x128xf32> to vector<128xf32>
    %116 = vector.shape_cast %115 : vector<128xf32> to vector<1x128xf32>
    %117 = vector.broadcast %116 : vector<1x128xf32> to vector<4x128xf32>
    %118 = arith.mulf %93, %117 : vector<4x128xf32>
    %cst_47 = arith.constant dense<0.000000e+00> : vector<4xf32>
    %119 = vector.multi_reduction <add>, %118, %cst_47 [1] : vector<4x128xf32> to vector<4xf32>
    %120 = vector.shape_cast %119 : vector<4xf32> to vector<4x1xf32>
    %cst_48 = arith.constant 3.906250e-03 : f32
    %121 = vector.broadcast %cst_48 : f32 to vector<4x1xf32>
    %122 = arith.mulf %120, %121 : vector<4x1xf32>
    %cst_49 = arith.constant 9.99999974E-6 : f32
    %123 = vector.broadcast %cst_49 : f32 to vector<4x1xf32>
    %124 = arith.addf %122, %123 : vector<4x1xf32>
    %125 = math.rsqrt %124 : vector<4x1xf32>
    %126 = vector.broadcast %125 : vector<4x1xf32> to vector<4x128xf32>
    %127 = arith.mulf %93, %126 : vector<4x128xf32>
    %cst_50 = arith.constant dense<0.000000e+00> : vector<128xf32>
    %128 = vector.multi_reduction <add>, %127, %cst_50 [0] : vector<4x128xf32> to vector<128xf32>
    %129 = vector.shape_cast %128 : vector<128xf32> to vector<1x128xf32>
    %130 = arith.mulf %129, %94 : vector<1x128xf32>
    %131 = vector.broadcast %130 : vector<1x128xf32> to vector<352x128xf32>
    %132 = arith.mulf %113, %131 : vector<352x128xf32>
    %133 = vector.broadcast %95 : vector<1x128xf32> to vector<352x128xf32>
    %134 = arith.addf %132, %133 : vector<352x128xf32>
    %135 = arith.addf %134, %6 : vector<352x128xf32>
    %cst_51 = arith.constant 0.000000e+00 : f32
    %136 = vector.broadcast %cst_51 : f32 to vector<352x128xf32>
    %137 = arith.maximumf %135, %136 : vector<352x128xf32>
    %c0_52 = arith.constant 0 : index
    %c0_53 = arith.constant 0 : index
    %138 = vector.load %arg12[%c0_52, %c0_53] : memref<4x128xf32, #tpu.memory_space<vmem>>, vector<4x128xf32>
    %c0_54 = arith.constant 0 : index
    %c0_55 = arith.constant 0 : index
    %139 = vector.load %arg9[%c0_54, %c0_55] : memref<1x128xf32, #tpu.memory_space<vmem>>, vector<1x128xf32>
    %c0_56 = arith.constant 0 : index
    %c0_57 = arith.constant 0 : index
    %140 = vector.load %arg10[%c0_56, %c0_57] : memref<1x128xf32, #tpu.memory_space<vmem>>, vector<1x128xf32>
    %141 = vector.broadcast %0 : vector<352x1xf32> to vector<352x128xf32>
    %142 = arith.mulf %137, %141 : vector<352x128xf32>
    %cst_58 = arith.constant dense<0.000000e+00> : vector<128xf32>
    %143 = vector.multi_reduction <add>, %142, %cst_58 [0] : vector<352x128xf32> to vector<128xf32>
    %144 = vector.shape_cast %143 : vector<128xf32> to vector<1x128xf32>
    %145 = vector.broadcast %144 : vector<1x128xf32> to vector<4x128xf32>
    %146 = arith.mulf %138, %145 : vector<4x128xf32>
    %cst_59 = arith.constant dense<0.000000e+00> : vector<4xf32>
    %147 = vector.multi_reduction <add>, %146, %cst_59 [1] : vector<4x128xf32> to vector<4xf32>
    %148 = vector.shape_cast %147 : vector<4xf32> to vector<4x1xf32>
    %149 = vector.broadcast %148 : vector<4x1xf32> to vector<4x128xf32>
    %150 = arith.mulf %138, %149 : vector<4x128xf32>
    %cst_60 = arith.constant dense<0.000000e+00> : vector<128xf32>
    %151 = vector.multi_reduction <add>, %150, %cst_60 [0] : vector<4x128xf32> to vector<128xf32>
    %152 = vector.shape_cast %151 : vector<128xf32> to vector<1x128xf32>
    %cst_61 = arith.constant 3.906250e-03 : f32
    %153 = vector.broadcast %cst_61 : f32 to vector<1x128xf32>
    %154 = arith.mulf %152, %153 : vector<1x128xf32>
    %155 = vector.broadcast %154 : vector<1x128xf32> to vector<352x128xf32>
    %156 = arith.subf %137, %155 : vector<352x128xf32>
    %157 = vector.broadcast %0 : vector<352x1xf32> to vector<352x128xf32>
    %158 = arith.mulf %156, %157 : vector<352x128xf32>
    %159 = arith.mulf %158, %158 : vector<352x128xf32>
    %cst_62 = arith.constant dense<0.000000e+00> : vector<128xf32>
    %160 = vector.multi_reduction <add>, %159, %cst_62 [0] : vector<352x128xf32> to vector<128xf32>
    %161 = vector.shape_cast %160 : vector<128xf32> to vector<1x128xf32>
    %162 = vector.broadcast %161 : vector<1x128xf32> to vector<4x128xf32>
    %163 = arith.mulf %138, %162 : vector<4x128xf32>
    %cst_63 = arith.constant dense<0.000000e+00> : vector<4xf32>
    %164 = vector.multi_reduction <add>, %163, %cst_63 [1] : vector<4x128xf32> to vector<4xf32>
    %165 = vector.shape_cast %164 : vector<4xf32> to vector<4x1xf32>
    %cst_64 = arith.constant 3.906250e-03 : f32
    %166 = vector.broadcast %cst_64 : f32 to vector<4x1xf32>
    %167 = arith.mulf %165, %166 : vector<4x1xf32>
    %cst_65 = arith.constant 9.99999974E-6 : f32
    %168 = vector.broadcast %cst_65 : f32 to vector<4x1xf32>
    %169 = arith.addf %167, %168 : vector<4x1xf32>
    %170 = math.rsqrt %169 : vector<4x1xf32>
    %171 = vector.broadcast %170 : vector<4x1xf32> to vector<4x128xf32>
    %172 = arith.mulf %138, %171 : vector<4x128xf32>
    %cst_66 = arith.constant dense<0.000000e+00> : vector<128xf32>
    %173 = vector.multi_reduction <add>, %172, %cst_66 [0] : vector<4x128xf32> to vector<128xf32>
    %174 = vector.shape_cast %173 : vector<128xf32> to vector<1x128xf32>
    %175 = arith.mulf %174, %139 : vector<1x128xf32>
    %176 = vector.broadcast %175 : vector<1x128xf32> to vector<352x128xf32>
    %177 = arith.mulf %158, %176 : vector<352x128xf32>
    %178 = vector.broadcast %140 : vector<1x128xf32> to vector<352x128xf32>
    %179 = arith.addf %177, %178 : vector<352x128xf32>
    %c0_67 = arith.constant 0 : index
    %c0_68 = arith.constant 0 : index
    %c0_69 = arith.constant 0 : index
    %180 = vector.load %arg14[%c0_67, %c0_68, %c0_69] : memref<1x352x128xf32, #tpu.memory_space<vmem>>, vector<1x352x128xf32>
    %181 = vector.shape_cast %180 : vector<1x352x128xf32> to vector<352x128xf32>
    %182 = vector.shape_cast %179 : vector<352x128xf32> to vector<1x352x128xf32>
    tpu.vector_store %arg14[%c0_67, %c0_68, %c0_69], %182 {strides = array<i32>} : memref<1x352x128xf32, #tpu.memory_space<vmem>>, vector<1x352x128xf32>,
    return
  }
  func.func @transform_0(%arg0: i32) -> (i32, i32, i32) {
    %c0_i32 = arith.constant 0 : i32
    %c0_i32_0 = arith.constant 0 : i32
    %c0_i32_1 = arith.constant 0 : i32
    return %arg0, %c0_i32, %c0_i32_0 : i32, i32, i32
  }
  func.func @transform_1(%arg0: i32) -> (i32, i32, i32) {
    %c0_i32 = arith.constant 0 : i32
    %c0_i32_0 = arith.constant 0 : i32
    %c0_i32_1 = arith.constant 0 : i32
    return %arg0, %c0_i32, %c0_i32_0 : i32, i32, i32
  }
  func.func @transform_2(%arg0: i32) -> (i32, i32) {
    %c0_i32 = arith.constant 0 : i32
    %c0_i32_0 = arith.constant 0 : i32
    %c0_i32_1 = arith.constant 0 : i32
    return %c0_i32, %c0_i32_0 : i32, i32
  }
  func.func @transform_3(%arg0: i32) -> (i32, i32) {
    %c0_i32 = arith.constant 0 : i32
    %c0_i32_0 = arith.constant 0 : i32
    %c0_i32_1 = arith.constant 0 : i32
    return %c0_i32, %c0_i32_0 : i32, i32
  }
  func.func @transform_4(%arg0: i32) -> (i32, i32) {
    %c0_i32 = arith.constant 0 : i32
    %c0_i32_0 = arith.constant 0 : i32
    %c0_i32_1 = arith.constant 0 : i32
    return %c0_i32, %c0_i32_0 : i32, i32
  }
  func.func @transform_5(%arg0: i32) -> (i32, i32) {
    %c0_i32 = arith.constant 0 : i32
    %c0_i32_0 = arith.constant 0 : i32
    %c0_i32_1 = arith.constant 0 : i32
    return %c0_i32, %c0_i32_0 : i32, i32
  }
  func.func @transform_6(%arg0: i32) -> (i32, i32) {
    %c0_i32 = arith.constant 0 : i32
    %c0_i32_0 = arith.constant 0 : i32
    %c0_i32_1 = arith.constant 0 : i32
    return %c0_i32, %c0_i32_0 : i32, i32
  }
  func.func @transform_7(%arg0: i32) -> (i32, i32) {
    %c0_i32 = arith.constant 0 : i32
    %c0_i32_0 = arith.constant 0 : i32
    %c0_i32_1 = arith.constant 0 : i32
    return %c0_i32, %c0_i32_0 : i32, i32
  }
  func.func @transform_8(%arg0: i32) -> (i32, i32) {
    %c0_i32 = arith.constant 0 : i32
    %c0_i32_0 = arith.constant 0 : i32
    %c0_i32_1 = arith.constant 0 : i32
    return %c0_i32, %c0_i32_0 : i32, i32
  }
  func.func @transform_9(%arg0: i32) -> (i32, i32) {
    %c0_i32 = arith.constant 0 : i32
    %c0_i32_0 = arith.constant 0 : i32
    %c0_i32_1 = arith.constant 0 : i32
    return %c0_i32, %c0_i32_0 : i32, i32
  }
  func.func @transform_10(%arg0: i32) -> (i32, i32) {
    %c0_i32 = arith.constant 0 : i32
    %c0_i32_0 = arith.constant 0 : i32
    %c0_i32_1 = arith.constant 0 : i32
    return %c0_i32, %c0_i32_0 : i32, i32
  }
  func.func @transform_11(%arg0: i32) -> (i32, i32) {
    %c0_i32 = arith.constant 0 : i32
    %c0_i32_0 = arith.constant 0 : i32
    %c0_i32_1 = arith.constant 0 : i32
    return %c0_i32, %c0_i32_0 : i32, i32
  }
  func.func @transform_12(%arg0: i32) -> (i32, i32) {
    %c0_i32 = arith.constant 0 : i32
    %c0_i32_0 = arith.constant 0 : i32
    %c0_i32_1 = arith.constant 0 : i32
    return %c0_i32, %c0_i32_0 : i32, i32
  }
  func.func @transform_13(%arg0: i32) -> (i32, i32, i32) {
    %c0_i32 = arith.constant 0 : i32
    %c0_i32_0 = arith.constant 0 : i32
    %c0_i32_1 = arith.constant 0 : i32
    return %arg0, %c0_i32, %c0_i32_0 : i32, i32, i32
  }
}

</mosaic_0001>

<llo_original>
// kernel: tpu_custom_call.1
$region0: #{tpu_custom_call.1}
  #allocation0 [shape = 'u32[]', space=smem, size = 0x4, offset = 0x4, fixed_abs, tag = 'smem constant byte address 0x4 - core index']
  #allocation1 [shape = 'u32[144,128]{1,0:T(1,128)}', space=vmem, size = 0x12000, scoped, tag = 'internal scratch']
  %s0 = inlined_call_operand.vmem [shape: bf16[2,352,128], index: 0, kind: input, shape index: {}]
  %s1 = inlined_call_operand.hbm [shape: bf16[2,352,128], index: 1, kind: input, shape index: {}]
  %s2 = inlined_call_operand.hbm [shape: bf16[1152,128], index: 2, kind: input, shape index: {}]
  %s3 = inlined_call_operand.hbm [shape: bf16[1152,128], index: 3, kind: input, shape index: {}]
  %s4 = inlined_call_operand.vmem [shape: f32[1,128], index: 4, kind: input, shape index: {}]
  %s5 = inlined_call_operand.vmem [shape: f32[1,128], index: 5, kind: input, shape index: {}]
  %s6 = inlined_call_operand.vmem [shape: f32[1,128], index: 6, kind: input, shape index: {}]
  %s7 = inlined_call_operand.vmem [shape: f32[1,128], index: 7, kind: input, shape index: {}]
  %s8 = inlined_call_operand.vmem [shape: f32[1,128], index: 8, kind: input, shape index: {}]
  %s9 = inlined_call_operand.vmem [shape: f32[1,128], index: 9, kind: input, shape index: {}]
  %s10 = inlined_call_operand.vmem [shape: f32[4,128], index: 10, kind: input, shape index: {}]
  %s11 = inlined_call_operand.vmem [shape: f32[4,128], index: 11, kind: input, shape index: {}]
  %s12 = inlined_call_operand.vmem [shape: f32[352,1], index: 12, kind: input, shape index: {}]
  %s13 = inlined_call_operand.hbm [shape: f32[2,352,128], index: 13, kind: output, shape index: {}]
  %s14 = sld [smem:[#allocation0]]
  $region97: #{tpu_custom_call.1} parent=0
    _
  %s16 = ssub.s32 1, %s14
  %s17 = scalar_select 0, %s16, %s14
  $region1: #{tpu_custom_call.1} parent=0
    #allocation2 [shape = 'u8[180224]{0}', space=vmem, size = 0x2c000, scoped, tag = 'input window, operand 1']
    #allocation3 [shape = 's32[2]{0}', space=sflag, size = 0x8, scoped, tag = 'scoped memory for tpu_custom_call.1']
    #allocation4 [shape = 's32[2]{0}', space=sflag, size = 0x8, scoped, tag = 'scoped memory for tpu_custom_call.1']
    #allocation5 [shape = 'u8[294912]{0}', space=vmem, size = 0x48000, scoped, tag = 'input window, operand 2, single buffered']
    #allocation6 [shape = 's32[1]{0}', space=sflag, size = 0x4, scoped, tag = 'scoped memory for tpu_custom_call.1']
    #allocation7 [shape = 'u8[294912]{0}', space=vmem, size = 0x48000, scoped, tag = 'input window, operand 3, single buffered']
    #allocation8 [shape = 'u8[360448]{0}', space=vmem, size = 0x58000, scoped, tag = 'output window, operand 0']
    %18 = vsyncpa [#allocation3], 0
    %s19 = scalar_lea.sflag [#allocation3], 1
    %20 = vsyncpa %s19, 0
    %21 = vsyncpa [#allocation6], 0
    %22 = vsyncpa [#allocation4], 0
    %s23 = scalar_lea.sflag [#allocation4], 1
    %24 = vsyncpa %s23, 0
    loop: start=0, step=1, limit=4
    $region2: #{tpu_custom_call.1} parent=1 // loop_pre_header
      _
    $region3: #{tpu_custom_call.1} parent=1 // loop_header
      %s26 = sphi 0, %s30
      %p27 = scmp.ge.s32.totalorder %s26, 4
      %s36 = sphi 0, %s38
      %s39 = sphi 0, %s36
      %s40 = sphi 0, %s39
      %s56 = sphi 0, %s40
      %s62 = sphi 0, %s64
      %s65 = sphi 0, %s62
      %s66 = sphi 0, %s65
      %s82 = sphi 0, %s66
      %s86 = sphi 0, %s86
      %s88 = sphi 0, %s86
      %s89 = sphi 0, %s88
      %s103 = sphi 0, %s89
      %s107 = sphi 0, %s107
      %s109 = sphi 0, %s107
      %s110 = sphi 0, %s109
      %s124 = sphi 0, %s110
      %s128 = sphi 0, %s128
      %s130 = sphi 0, %s128
      %s131 = sphi 0, %s130
      %s145 = sphi 0, %s131
      %s149 = sphi 0, %s149
      %s151 = sphi 0, %s149
      %s152 = sphi 0, %s151
      %s166 = sphi 0, %s152
      %s170 = sphi 0, %s170
      %s172 = sphi 0, %s170
      %s173 = sphi 0, %s172
      %s187 = sphi 0, %s173
      %s191 = sphi 0, %s191
      %s193 = sphi 0, %s191
      %s194 = sphi 0, %s193
      %s208 = sphi 0, %s194
      %s212 = sphi 0, %s212
      %s214 = sphi 0, %s212
      %s215 = sphi 0, %s214
      %s229 = sphi 0, %s215
      %s233 = sphi 0, %s233
      %s235 = sphi 0, %s233
      %s236 = sphi 0, %s235
      %s250 = sphi 0, %s236
      %s254 = sphi 0, %s254
      %s256 = sphi 0, %s254
      %s257 = sphi 0, %s256
      %s271 = sphi 0, %s257
      %s275 = sphi 0, %s275
      %s277 = sphi 0, %s275
      %s278 = sphi 0, %s277
      %s292 = sphi 0, %s278
      %s296 = sphi 0, %s296
      %s298 = sphi 0, %s296
      %s299 = sphi 0, %s298
      %s313 = sphi 0, %s299
      %s319 = sphi 0, %s321
      %s322 = sphi 0, %s319
      %s323 = sphi 0, %s322
      %s339 = sphi 0, %s323
    $region4: #{tpu_custom_call.1} parent=1 // loop_header_branch
      %29 = sbr.rel (%p27) target = $region8
    $region5: #{tpu_custom_call.1} parent=1 // loop_body
      %s31 = ssub.s32 %s26, 1
      %s32 = ssub.s32 %s26, 2
      %s33 = sadd.s32 %s26, 1
      %s34 = ssub.s32 %s26, %s33
      %p35 = scmp.eq.s32.totalorder %s34, 0
      %s37 = sadd.s32 %s36, 1
      %s38 = scalar_select %p35, %s36, %s37
      %p41 = pneg %p35
      %p42 = scmp.eq.s32.totalorder %s26, 1
      %p43 = por %p41, %p42
      %p44 = scmp.ne.s32.totalorder %s36, %s39
      %p45 = scmp.eq.s32.totalorder %s26, 0
      %p46 = por %p44, %p45
      %p47 = scmp.ne.s32.totalorder %s36, %s39
      %p48 = scmp.eq.s32.totalorder %s31, 1
      %p49 = por %p47, %p48
      %p50 = scmp.ne.s32.totalorder %s39, %s40
      %p51 = scmp.eq.s32.totalorder %s31, 0
      %p52 = por %p50, %p51
      %p53 = scmp.ne.s32.totalorder %s39, %s40
      %p54 = scmp.eq.s32.totalorder %s32, 1
      %p55 = por %p53, %p54
      %p57 = scmp.ne.s32.totalorder %s40, %s56
      %p58 = scmp.eq.s32.totalorder %s32, 0
      %p59 = por %p57, %p58
      %s60 = ssub.s32 %s26, %s33
      %p61 = scmp.eq.s32.totalorder %s60, 0
      %s63 = sadd.s32 %s62, 1
      %s64 = scalar_select %p61, %s62, %s63
      %p67 = pneg %p61
      %p68 = scmp.eq.s32.totalorder %s26, 1
      %p69 = por %p67, %p68
      %p70 = scmp.ne.s32.totalorder %s62, %s65
      %p71 = scmp.eq.s32.totalorder %s26, 0
      %p72 = por %p70, %p71
      %p73 = scmp.ne.s32.totalorder %s62, %s65
      %p74 = scmp.eq.s32.totalorder %s31, 1
      %p75 = por %p73, %p74
      %p76 = scmp.ne.s32.totalorder %s65, %s66
      %p77 = scmp.eq.s32.totalorder %s31, 0
      %p78 = por %p76, %p77
      %p79 = scmp.ne.s32.totalorder %s65, %s66
      %p80 = scmp.eq.s32.totalorder %s32, 1
      %p81 = por %p79, %p80
      %p83 = scmp.ne.s32.totalorder %s66, %s82
      %p84 = scmp.eq.s32.totalorder %s32, 0
      %p85 = por %p83, %p84
      %s87 = sadd.s32 %s86, 1
      %p90 = scmp.eq.s32.totalorder %s26, 1
      %p91 = scmp.ne.s32.totalorder %s86, %s88
      %p92 = scmp.eq.s32.totalorder %s26, 0
      %p93 = por %p91, %p92
      %p94 = scmp.ne.s32.totalorder %s86, %s88
      %p95 = scmp.eq.s32.totalorder %s31, 1
      %p96 = por %p94, %p95
      %p97 = scmp.ne.s32.totalorder %s88, %s89
      %p98 = scmp.eq.s32.totalorder %s31, 0
      %p99 = por %p97, %p98
      %p100 = scmp.ne.s32.totalorder %s88, %s89
      %p101 = scmp.eq.s32.totalorder %s32, 1
      %p102 = por %p100, %p101
      %p104 = scmp.ne.s32.totalorder %s89, %s103
      %p105 = scmp.eq.s32.totalorder %s32, 0
      %p106 = por %p104, %p105
      %s108 = sadd.s32 %s107, 1
      %p111 = scmp.eq.s32.totalorder %s26, 1
      %p112 = scmp.ne.s32.totalorder %s107, %s109
      %p113 = scmp.eq.s32.totalorder %s26, 0
      %p114 = por %p112, %p113
      %p115 = scmp.ne.s32.totalorder %s107, %s109
      %p116 = scmp.eq.s32.totalorder %s31, 1
      %p117 = por %p115, %p116
      %p118 = scmp.ne.s32.totalorder %s109, %s110
      %p119 = scmp.eq.s32.totalorder %s31, 0
      %p120 = por %p118, %p119
      %p121 = scmp.ne.s32.totalorder %s109, %s110
      %p122 = scmp.eq.s32.totalorder %s32, 1
      %p123 = por %p121, %p122
      %p125 = scmp.ne.s32.totalorder %s110, %s124
      %p126 = scmp.eq.s32.totalorder %s32, 0
      %p127 = por %p125, %p126
      %s129 = sadd.s32 %s128, 1
      %p132 = scmp.eq.s32.totalorder %s26, 1
      %p133 = scmp.ne.s32.totalorder %s128, %s130
      %p134 = scmp.eq.s32.totalorder %s26, 0
      %p135 = por %p133, %p134
      %p136 = scmp.ne.s32.totalorder %s128, %s130
      %p137 = scmp.eq.s32.totalorder %s31, 1
      %p138 = por %p136, %p137
      %p139 = scmp.ne.s32.totalorder %s130, %s131
      %p140 = scmp.eq.s32.totalorder %s31, 0
      %p141 = por %p139, %p140
      %p142 = scmp.ne.s32.totalorder %s130, %s131
      %p143 = scmp.eq.s32.totalorder %s32, 1
      %p144 = por %p142, %p143
      %p146 = scmp.ne.s32.totalorder %s131, %s145
      %p147 = scmp.eq.s32.totalorder %s32, 0
      %p148 = por %p146, %p147
      %s150 = sadd.s32 %s149, 1
      %p153 = scmp.eq.s32.totalorder %s26, 1
      %p154 = scmp.ne.s32.totalorder %s149, %s151
      %p155 = scmp.eq.s32.totalorder %s26, 0
      %p156 = por %p154, %p155
      %p157 = scmp.ne.s32.totalorder %s149, %s151
      %p158 = scmp.eq.s32.totalorder %s31, 1
      %p159 = por %p157, %p158
      %p160 = scmp.ne.s32.totalorder %s151, %s152
      %p161 = scmp.eq.s32.totalorder %s31, 0
      %p162 = por %p160, %p161
      %p163 = scmp.ne.s32.totalorder %s151, %s152
      %p164 = scmp.eq.s32.totalorder %s32, 1
      %p165 = por %p163, %p164
      %p167 = scmp.ne.s32.totalorder %s152, %s166
      %p168 = scmp.eq.s32.totalorder %s32, 0
      %p169 = por %p167, %p168
      %s171 = sadd.s32 %s170, 1
      %p174 = scmp.eq.s32.totalorder %s26, 1
      %p175 = scmp.ne.s32.totalorder %s170, %s172
      %p176 = scmp.eq.s32.totalorder %s26, 0
      %p177 = por %p175, %p176
      %p178 = scmp.ne.s32.totalorder %s170, %s172
      %p179 = scmp.eq.s32.totalorder %s31, 1
      %p180 = por %p178, %p179
      %p181 = scmp.ne.s32.totalorder %s172, %s173
      %p182 = scmp.eq.s32.totalorder %s31, 0
      %p183 = por %p181, %p182
      %p184 = scmp.ne.s32.totalorder %s172, %s173
      %p185 = scmp.eq.s32.totalorder %s32, 1
      %p186 = por %p184, %p185
      %p188 = scmp.ne.s32.totalorder %s173, %s187
      %p189 = scmp.eq.s32.totalorder %s32, 0
      %p190 = por %p188, %p189
      %s192 = sadd.s32 %s191, 1
      %p195 = scmp.eq.s32.totalorder %s26, 1
      %p196 = scmp.ne.s32.totalorder %s191, %s193
      %p197 = scmp.eq.s32.totalorder %s26, 0
      %p198 = por %p196, %p197
      %p199 = scmp.ne.s32.totalorder %s191, %s193
      %p200 = scmp.eq.s32.totalorder %s31, 1
      %p201 = por %p199, %p200
      %p202 = scmp.ne.s32.totalorder %s193, %s194
      %p203 = scmp.eq.s32.totalorder %s31, 0
      %p204 = por %p202, %p203
      %p205 = scmp.ne.s32.totalorder %s193, %s194
      %p206 = scmp.eq.s32.totalorder %s32, 1
      %p207 = por %p205, %p206
      %p209 = scmp.ne.s32.totalorder %s194, %s208
      %p210 = scmp.eq.s32.totalorder %s32, 0
      %p211 = por %p209, %p210
      %s213 = sadd.s32 %s212, 1
      %p216 = scmp.eq.s32.totalorder %s26, 1
      %p217 = scmp.ne.s32.totalorder %s212, %s214
      %p218 = scmp.eq.s32.totalorder %s26, 0
      %p219 = por %p217, %p218
      %p220 = scmp.ne.s32.totalorder %s212, %s214
      %p221 = scmp.eq.s32.totalorder %s31, 1
      %p222 = por %p220, %p221
      %p223 = scmp.ne.s32.totalorder %s214, %s215
      %p224 = scmp.eq.s32.totalorder %s31, 0
      %p225 = por %p223, %p224
      %p226 = scmp.ne.s32.totalorder %s214, %s215
      %p227 = scmp.eq.s32.totalorder %s32, 1
      %p228 = por %p226, %p227
      %p230 = scmp.ne.s32.totalorder %s215, %s229
      %p231 = scmp.eq.s32.totalorder %s32, 0
      %p232 = por %p230, %p231
      %s234 = sadd.s32 %s233, 1
      %p237 = scmp.eq.s32.totalorder %s26, 1
      %p238 = scmp.ne.s32.totalorder %s233, %s235
      %p239 = scmp.eq.s32.totalorder %s26, 0
      %p240 = por %p238, %p239
      %p241 = scmp.ne.s32.totalorder %s233, %s235
      %p242 = scmp.eq.s32.totalorder %s31, 1
      %p243 = por %p241, %p242
      %p244 = scmp.ne.s32.totalorder %s235, %s236
      %p245 = scmp.eq.s32.totalorder %s31, 0
      %p246 = por %p244, %p245
      %p247 = scmp.ne.s32.totalorder %s235, %s236
      %p248 = scmp.eq.s32.totalorder %s32, 1
      %p249 = por %p247, %p248
      %p251 = scmp.ne.s32.totalorder %s236, %s250
      %p252 = scmp.eq.s32.totalorder %s32, 0
      %p253 = por %p251, %p252
      %s255 = sadd.s32 %s254, 1
      %p258 = scmp.eq.s32.totalorder %s26, 1
      %p259 = scmp.ne.s32.totalorder %s254, %s256
      %p260 = scmp.eq.s32.totalorder %s26, 0
      %p261 = por %p259, %p260
      %p262 = scmp.ne.s32.totalorder %s254, %s256
      %p263 = scmp.eq.s32.totalorder %s31, 1
      %p264 = por %p262, %p263
      %p265 = scmp.ne.s32.totalorder %s256, %s257
      %p266 = scmp.eq.s32.totalorder %s31, 0
      %p267 = por %p265, %p266
      %p268 = scmp.ne.s32.totalorder %s256, %s257
      %p269 = scmp.eq.s32.totalorder %s32, 1
      %p270 = por %p268, %p269
      %p272 = scmp.ne.s32.totalorder %s257, %s271
      %p273 = scmp.eq.s32.totalorder %s32, 0
      %p274 = por %p272, %p273
      %s276 = sadd.s32 %s275, 1
      %p279 = scmp.eq.s32.totalorder %s26, 1
      %p280 = scmp.ne.s32.totalorder %s275, %s277
      %p281 = scmp.eq.s32.totalorder %s26, 0
      %p282 = por %p280, %p281
      %p283 = scmp.ne.s32.totalorder %s275, %s277
      %p284 = scmp.eq.s32.totalorder %s31, 1
      %p285 = por %p283, %p284
      %p286 = scmp.ne.s32.totalorder %s277, %s278
      %p287 = scmp.eq.s32.totalorder %s31, 0
      %p288 = por %p286, %p287
      %p289 = scmp.ne.s32.totalorder %s277, %s278
      %p290 = scmp.eq.s32.totalorder %s32, 1
      %p291 = por %p289, %p290
      %p293 = scmp.ne.s32.totalorder %s278, %s292
      %p294 = scmp.eq.s32.totalorder %s32, 0
      %p295 = por %p293, %p294
      %s297 = sadd.s32 %s296, 1
      %p300 = scmp.eq.s32.totalorder %s26, 1
      %p301 = scmp.ne.s32.totalorder %s296, %s298
      %p302 = scmp.eq.s32.totalorder %s26, 0
      %p303 = por %p301, %p302
      %p304 = scmp.ne.s32.totalorder %s296, %s298
      %p305 = scmp.eq.s32.totalorder %s31, 1
      %p306 = por %p304, %p305
      %p307 = scmp.ne.s32.totalorder %s298, %s299
      %p308 = scmp.eq.s32.totalorder %s31, 0
      %p309 = por %p307, %p308
      %p310 = scmp.ne.s32.totalorder %s298, %s299
      %p311 = scmp.eq.s32.totalorder %s32, 1
      %p312 = por %p310, %p311
      %p314 = scmp.ne.s32.totalorder %s299, %s313
      %p315 = scmp.eq.s32.totalorder %s32, 0
      %p316 = por %p314, %p315
      %s317 = ssub.s32 %s26, %s33
      %p318 = scmp.eq.s32.totalorder %s317, 0
      %s320 = sadd.s32 %s319, 1
      %s321 = scalar_select %p318, %s319, %s320
      %p324 = pneg %p318
      %p325 = scmp.eq.s32.totalorder %s26, 1
      %p326 = por %p324, %p325
      %p327 = scmp.ne.s32.totalorder %s319, %s322
      %p328 = scmp.eq.s32.totalorder %s26, 0
      %p329 = por %p327, %p328
      %p330 = scmp.ne.s32.totalorder %s319, %s322
      %p331 = scmp.eq.s32.totalorder %s31, 1
      %p332 = por %p330, %p331
      %p333 = scmp.ne.s32.totalorder %s322, %s323
      %p334 = scmp.eq.s32.totalorder %s31, 0
      %p335 = por %p333, %p334
      %p336 = scmp.ne.s32.totalorder %s322, %s323
      %p337 = scmp.eq.s32.totalorder %s32, 1
      %p338 = por %p336, %p337
      %p340 = scmp.ne.s32.totalorder %s323, %s339
      %p341 = scmp.eq.s32.totalorder %s32, 0
      %p342 = por %p340, %p341
      %p343 = scmp.le.s32.totalorder 1, %s26
      %p344 = scmp.lt.s32.totalorder %s26, 3
      %p345 = pnand %p343, %p344
      %p346 = pneg %p345
      // Predicated region
      $region9: #{tpu_custom_call.1} parent=5 // pred_check
        _
      $region10: #{tpu_custom_call.1} parent=5 // pred_check_branch
        %348 = sbr.rel (%p345) target = $region12
      $region11: #{tpu_custom_call.1} parent=5 // pred_region
        %s349 = ssub.s32 %s26, 1
        // Predicated region
        $region13: #{tpu_custom_call.1} parent=11 // pred_check
          %p350 = pneg %p99
        $region14: #{tpu_custom_call.1} parent=11 // pred_check_branch
          %352 = sbr.rel (%p350) target = $region16
        $region15: #{tpu_custom_call.1} parent=11 // pred_region
          %s354 = ssub.s32 9216, 9216
          %355 = vsyncadd [#allocation6], %s354
          %s356 = sshll.u32 [#allocation5], 4
          %s357 = int_to_ptr.vmem [resolvable:$true] %s356
          %362 = dma.hbm_to_vmem [thread:$0]  %s2, 9216, %s357, [#allocation6], 64, 64, 4
        $region16: #{tpu_custom_call.1} parent=11 // pred_fallthru
          _
        // Predicated region
        $region17: #{tpu_custom_call.1} parent=11 // pred_check
          %p363 = pneg %p120
        $region18: #{tpu_custom_call.1} parent=11 // pred_check_branch
          %365 = sbr.rel (%p363) target = $region20
        $region19: #{tpu_custom_call.1} parent=11 // pred_region
          %s367 = ssub.s32 9216, 9216
          %368 = vsyncadd [#allocation6], %s367
          %s369 = sshll.u32 [#allocation7], 4
          %s370 = int_to_ptr.vmem [resolvable:$true] %s369
          %375 = dma.hbm_to_vmem [thread:$0]  %s3, 9216, %s370, [#allocation6], 64, 64, 4
        $region20: #{tpu_custom_call.1} parent=11 // pred_fallthru
          _
        // Predicated region
        $region21: #{tpu_custom_call.1} parent=11 // pred_check
          %p376 = pneg %p141
        $region22: #{tpu_custom_call.1} parent=11 // pred_check_branch
          %378 = sbr.rel (%p376) target = $region24
        $region23: #{tpu_custom_call.1} parent=11 // pred_region
          _
        $region24: #{tpu_custom_call.1} parent=11 // pred_fallthru
          _
        // Predicated region
        $region25: #{tpu_custom_call.1} parent=11 // pred_check
          %p379 = pneg %p162
        $region26: #{tpu_custom_call.1} parent=11 // pred_check_branch
          %381 = sbr.rel (%p379) target = $region28
        $region27: #{tpu_custom_call.1} parent=11 // pred_region
          _
        $region28: #{tpu_custom_call.1} parent=11 // pred_fallthru
          _
        // Predicated region
        $region29: #{tpu_custom_call.1} parent=11 // pred_check
          %p382 = pneg %p183
        $region30: #{tpu_custom_call.1} parent=11 // pred_check_branch
          %384 = sbr.rel (%p382) target = $region32
        $region31: #{tpu_custom_call.1} parent=11 // pred_region
          _
        $region32: #{tpu_custom_call.1} parent=11 // pred_fallthru
          _
        // Predicated region
        $region33: #{tpu_custom_call.1} parent=11 // pred_check
          %p385 = pneg %p204
        $region34: #{tpu_custom_call.1} parent=11 // pred_check_branch
          %387 = sbr.rel (%p385) target = $region36
        $region35: #{tpu_custom_call.1} parent=11 // pred_region
          _
        $region36: #{tpu_custom_call.1} parent=11 // pred_fallthru
          _
        // Predicated region
        $region37: #{tpu_custom_call.1} parent=11 // pred_check
          %p388 = pneg %p225
        $region38: #{tpu_custom_call.1} parent=11 // pred_check_branch
          %390 = sbr.rel (%p388) target = $region40
        $region39: #{tpu_custom_call.1} parent=11 // pred_region
          _
        $region40: #{tpu_custom_call.1} parent=11 // pred_fallthru
          _
        // Predicated region
        $region41: #{tpu_custom_call.1} parent=11 // pred_check
          %p391 = pneg %p246
        $region42: #{tpu_custom_call.1} parent=11 // pred_check_branch
          %393 = sbr.rel (%p391) target = $region44
        $region43: #{tpu_custom_call.1} parent=11 // pred_region
          _
        $region44: #{tpu_custom_call.1} parent=11 // pred_fallthru
          _
        // Predicated region
        $region45: #{tpu_custom_call.1} parent=11 // pred_check
          %p394 = pneg %p267
        $region46: #{tpu_custom_call.1} parent=11 // pred_check_branch
          %396 = sbr.rel (%p394) target = $region48
        $region47: #{tpu_custom_call.1} parent=11 // pred_region
          _
        $region48: #{tpu_custom_call.1} parent=11 // pred_fallthru
          _
        // Predicated region
        $region49: #{tpu_custom_call.1} parent=11 // pred_check
          %p397 = pneg %p288
        $region50: #{tpu_custom_call.1} parent=11 // pred_check_branch
          %399 = sbr.rel (%p397) target = $region52
        $region51: #{tpu_custom_call.1} parent=11 // pred_region
          _
        $region52: #{tpu_custom_call.1} parent=11 // pred_fallthru
          _
        // Predicated region
        $region53: #{tpu_custom_call.1} parent=11 // pred_check
          %p400 = pneg %p309
        $region54: #{tpu_custom_call.1} parent=11 // pred_check_branch
          %402 = sbr.rel (%p400) target = $region56
        $region55: #{tpu_custom_call.1} parent=11 // pred_region
          _
        $region56: #{tpu_custom_call.1} parent=11 // pred_fallthru
          _
      $region12: #{tpu_custom_call.1} parent=5 // pred_fallthru
        _
      %p403 = scmp.lt.s32.totalorder %s26, 2
      // Predicated region
      $region57: #{tpu_custom_call.1} parent=5 // pred_check
        %p404 = pneg %p403
      $region58: #{tpu_custom_call.1} parent=5 // pred_check_branch
        %406 = sbr.rel (%p404) target = $region60
      $region59: #{tpu_custom_call.1} parent=5 // pred_region
        // Predicated region
        $region61: #{tpu_custom_call.1} parent=59 // pred_check
          %p407 = pneg %p46
        $region62: #{tpu_custom_call.1} parent=59 // pred_check_branch
          %409 = sbr.rel (%p407) target = $region64
        $region63: #{tpu_custom_call.1} parent=59 // pred_region
          %p410 = scmp.lt.s32.totalorder %s26, 1
          %s411 = scalar_select %p410, %s26, 1
          %s412 = smul.addr %s411, 44
          %s413 = smul.addr %s412, 4
          %s414 = scalar_lea.vmem %s0, %s413
        $region64: #{tpu_custom_call.1} parent=59 // pred_fallthru
          _
        // Predicated region
        $region65: #{tpu_custom_call.1} parent=59 // pred_check
          %p415 = pneg %p72
        $region66: #{tpu_custom_call.1} parent=59 // pred_check_branch
          %417 = sbr.rel (%p415) target = $region68
        $region67: #{tpu_custom_call.1} parent=59 // pred_region
          %s418 = sand.u32 %s62, 1
          %s419 = scalar_lea.sflag [#allocation3], %s418
          %s420 = sand.u32 %s62, 1
          %s421 = smul.addr %s420, 176
          %s422 = scalar_lea.vmem [#allocation2], %s421
          %s424 = ssub.s32 2816, 2816
          %425 = vsyncadd %s419, %s424
          %s426 = smul.addr %s26, 44
          %s427 = smul.addr %s426, 64
          %s428 = scalar_lea.hbm %s1, %s427
          %s429 = sshll.u32 %s422, 4
          %s430 = int_to_ptr.vmem [resolvable:$true] %s429
          %435 = dma.hbm_to_vmem [thread:$0]  %s428, 2816, %s430, %s419, 64, 64, 4
        $region68: #{tpu_custom_call.1} parent=59 // pred_fallthru
          _
      $region60: #{tpu_custom_call.1} parent=5 // pred_fallthru
        _
      %p436 = scmp.le.s32.totalorder 1, %s26
      %p437 = scmp.lt.s32.totalorder %s26, 3
      %p438 = pnand %p436, %p437
      %p439 = pneg %p438
      // Predicated region
      $region69: #{tpu_custom_call.1} parent=5 // pred_check
        _
      $region70: #{tpu_custom_call.1} parent=5 // pred_check_branch
        %441 = sbr.rel (%p438) target = $region72
      $region71: #{tpu_custom_call.1} parent=5 // pred_region
        %s442 = ssub.s32 %s26, 1
        %s443 = sand.u32 %s65, 1
        %s444 = scalar_lea.sflag [#allocation3], %s443
        %s445 = sand.u32 %s65, 1
        %s446 = smul.addr %s445, 176
        %s447 = scalar_lea.vmem [#allocation2], %s446
        // Predicated region
        $region73: #{tpu_custom_call.1} parent=71 // pred_check
          %p448 = pneg %p78
        $region74: #{tpu_custom_call.1} parent=71 // pred_check_branch
          %450 = sbr.rel (%p448) target = $region76
        $region75: #{tpu_custom_call.1} parent=71 // pred_region
          %451 = dma.done %s444, 2816
        $region76: #{tpu_custom_call.1} parent=71 // pred_fallthru
          _
        // Predicated region
        $region77: #{tpu_custom_call.1} parent=71 // pred_check
          %p452 = pneg %p99
        $region78: #{tpu_custom_call.1} parent=71 // pred_check_branch
          %454 = sbr.rel (%p452) target = $region80
        $region79: #{tpu_custom_call.1} parent=71 // pred_region
          %455 = dma.done [#allocation6], 9216
        $region80: #{tpu_custom_call.1} parent=71 // pred_fallthru
          _
        // Predicated region
        $region81: #{tpu_custom_call.1} parent=71 // pred_check
          %p456 = pneg %p120
        $region82: #{tpu_custom_call.1} parent=71 // pred_check_branch
          %458 = sbr.rel (%p456) target = $region84
        $region83: #{tpu_custom_call.1} parent=71 // pred_region
          %459 = dma.done [#allocation6], 9216
        $region84: #{tpu_custom_call.1} parent=71 // pred_fallthru
          _
        %p460 = scmp.lt.s32.totalorder %s31, 1
        %s461 = scalar_select %p460, %s31, 1
        %s462 = smul.addr %s461, 44
        %s463 = smul.addr %s462, 4
        %s464 = scalar_lea.vmem %s0, %s463
        %p465 = pneg %p52
        %p466 = pneg %p49
        %s467 = sand.u32 %s65, 1
        %s468 = scalar_lea.sflag [#allocation3], %s467
        %s469 = sand.u32 %s65, 1
        %s470 = smul.addr %s469, 176
        %s471 = scalar_lea.vmem [#allocation2], %s470
        %p472 = pneg %p78
        %p473 = pneg %p75
        %p474 = pneg %p99
        %p475 = pneg %p96
        %p476 = pneg %p120
        %p477 = pneg %p117
        %p478 = pneg %p141
        %p479 = pneg %p138
        %p480 = pneg %p162
        %p481 = pneg %p159
        %p482 = pneg %p183
        %p483 = pneg %p180
        %p484 = pneg %p204
        %p485 = pneg %p201
        %p486 = pneg %p225
        %p487 = pneg %p222
        %p488 = pneg %p246
        %p489 = pneg %p243
        %p490 = pneg %p267
        %p491 = pneg %p264
        %p492 = pneg %p288
        %p493 = pneg %p285
        %p494 = pneg %p309
        %p495 = pneg %p306
        %p496 = pneg %p335
        %p497 = pneg %p332
        %s498 = sand.u32 %s322, 1
        %s499 = scalar_lea.sflag [#allocation4], %s498
        %s500 = sand.u32 %s322, 1
        %s501 = smul.addr %s500, 352
        %s502 = scalar_lea.vmem [#allocation8], %s501
        %p503 = scmp.lt.s32.totalorder %s31, 1
        %s504 = scalar_select %p503, %s31, 1
        %s505 = smul.addr %s504, 44
        %s506 = smul.addr %s505, 4
        %s507 = scalar_lea.vmem %s0, %s506
        %v509 = vld [vmem:[%s12] sm:$0xff]
        %v510 = vld [vmem:[%s12 + $0x8] sm:$0xff]
        %v511 = vld [vmem:[%s12 + $0x10] sm:$0xff]
        %v512 = vld [vmem:[%s12 + $0x18] sm:$0xff]
        %v513 = vld [vmem:[%s12 + $0x20] sm:$0xff]
        %v514 = vld [vmem:[%s12 + $0x28] sm:$0xff]
        %v515 = vld [vmem:[%s12 + $0x30] sm:$0xff]
        %v516 = vld [vmem:[%s12 + $0x38] sm:$0xff]
        %v517 = vld [vmem:[%s12 + $0x40] sm:$0xff]
        %v518 = vld [vmem:[%s12 + $0x48] sm:$0xff]
        %v519 = vld [vmem:[%s12 + $0x50] sm:$0xff]
        %v520 = vld [vmem:[%s12 + $0x58] sm:$0xff]
        %v521 = vld [vmem:[%s12 + $0x60] sm:$0xff]
        %v522 = vld [vmem:[%s12 + $0x68] sm:$0xff]
        %v523 = vld [vmem:[%s12 + $0x70] sm:$0xff]
        %v524 = vld [vmem:[%s12 + $0x78] sm:$0xff]
        %v525 = vld [vmem:[%s12 + $0x80] sm:$0xff]
        %v526 = vld [vmem:[%s12 + $0x88] sm:$0xff]
        %v527 = vld [vmem:[%s12 + $0x90] sm:$0xff]
        %v528 = vld [vmem:[%s12 + $0x98] sm:$0xff]
        %v529 = vld [vmem:[%s12 + $0xa0] sm:$0xff]
        %v530 = vld [vmem:[%s12 + $0xa8] sm:$0xff]
        %v531 = vld [vmem:[%s12 + $0xb0] sm:$0xff]
        %v532 = vld [vmem:[%s12 + $0xb8] sm:$0xff]
        %v533 = vld [vmem:[%s12 + $0xc0] sm:$0xff]
        %v534 = vld [vmem:[%s12 + $0xc8] sm:$0xff]
        %v535 = vld [vmem:[%s12 + $0xd0] sm:$0xff]
        %v536 = vld [vmem:[%s12 + $0xd8] sm:$0xff]
        %v537 = vld [vmem:[%s12 + $0xe0] sm:$0xff]
        %v538 = vld [vmem:[%s12 + $0xe8] sm:$0xff]
        %v539 = vld [vmem:[%s12 + $0xf0] sm:$0xff]
        %v540 = vld [vmem:[%s12 + $0xf8] sm:$0xff]
        %v541 = vld [vmem:[%s12 + $0x100] sm:$0xff]
        %v542 = vld [vmem:[%s12 + $0x108] sm:$0xff]
        %v543 = vld [vmem:[%s12 + $0x110] sm:$0xff]
        %v544 = vld [vmem:[%s12 + $0x118] sm:$0xff]
        %v545 = vld [vmem:[%s12 + $0x120] sm:$0xff]
        %v546 = vld [vmem:[%s12 + $0x128] sm:$0xff]
        %v547 = vld [vmem:[%s12 + $0x130] sm:$0xff]
        %v548 = vld [vmem:[%s12 + $0x138] sm:$0xff]
        %v549 = vld [vmem:[%s12 + $0x140] sm:$0xff]
        %v550 = vld [vmem:[%s12 + $0x148] sm:$0xff]
        %v551 = vld [vmem:[%s12 + $0x150] sm:$0xff]
        %v552 = vld [vmem:[%s12 + $0x158] sm:$0xff]
        %v553 = vld [vmem:[%s507] sm:$0xf]
        %v554 = vld [vmem:[%s507 + $0x4] sm:$0xf]
        %v555 = vld [vmem:[%s507 + $0x8] sm:$0xf]
        %v556 = vld [vmem:[%s507 + $0xc] sm:$0xf]
        %v557 = vld [vmem:[%s507 + $0x10] sm:$0xf]
        %v558 = vld [vmem:[%s507 + $0x14] sm:$0xf]
        %v559 = vld [vmem:[%s507 + $0x18] sm:$0xf]
        %v560 = vld [vmem:[%s507 + $0x1c] sm:$0xf]
        %v561 = vld [vmem:[%s507 + $0x20] sm:$0xf]
        %v562 = vld [vmem:[%s507 + $0x24] sm:$0xf]
        %v563 = vld [vmem:[%s507 + $0x28] sm:$0xf]
        %v564 = vld [vmem:[%s507 + $0x2c] sm:$0xf]
        %v565 = vld [vmem:[%s507 + $0x30] sm:$0xf]
        %v566 = vld [vmem:[%s507 + $0x34] sm:$0xf]
        %v567 = vld [vmem:[%s507 + $0x38] sm:$0xf]
        %v568 = vld [vmem:[%s507 + $0x3c] sm:$0xf]
        %v569 = vld [vmem:[%s507 + $0x40] sm:$0xf]
        %v570 = vld [vmem:[%s507 + $0x44] sm:$0xf]
        %v571 = vld [vmem:[%s507 + $0x48] sm:$0xf]
        %v572 = vld [vmem:[%s507 + $0x4c] sm:$0xf]
        %v573 = vld [vmem:[%s507 + $0x50] sm:$0xf]
        %v574 = vld [vmem:[%s507 + $0x54] sm:$0xf]
        %v575 = vld [vmem:[%s507 + $0x58] sm:$0xf]
        %v576 = vld [vmem:[%s507 + $0x5c] sm:$0xf]
        %v577 = vld [vmem:[%s507 + $0x60] sm:$0xf]
        %v578 = vld [vmem:[%s507 + $0x64] sm:$0xf]
        %v579 = vld [vmem:[%s507 + $0x68] sm:$0xf]
        %v580 = vld [vmem:[%s507 + $0x6c] sm:$0xf]
        %v581 = vld [vmem:[%s507 + $0x70] sm:$0xf]
        %v582 = vld [vmem:[%s507 + $0x74] sm:$0xf]
        %v583 = vld [vmem:[%s507 + $0x78] sm:$0xf]
        %v584 = vld [vmem:[%s507 + $0x7c] sm:$0xf]
        %v585 = vld [vmem:[%s507 + $0x80] sm:$0xf]
        %v586 = vld [vmem:[%s507 + $0x84] sm:$0xf]
        %v587 = vld [vmem:[%s507 + $0x88] sm:$0xf]
        %v588 = vld [vmem:[%s507 + $0x8c] sm:$0xf]
        %v589 = vld [vmem:[%s507 + $0x90] sm:$0xf]
        %v590 = vld [vmem:[%s507 + $0x94] sm:$0xf]
        %v591 = vld [vmem:[%s507 + $0x98] sm:$0xf]
        %v592 = vld [vmem:[%s507 + $0x9c] sm:$0xf]
        %v593 = vld [vmem:[%s507 + $0xa0] sm:$0xf]
        %v594 = vld [vmem:[%s507 + $0xa4] sm:$0xf]
        %v595 = vld [vmem:[%s507 + $0xa8] sm:$0xf]
        %v596 = vld [vmem:[%s507 + $0xac] sm:$0xf]
        %v597 = vld [vmem:[%s447] sm:$0xf]
        %v598 = vld [vmem:[%s447 + $0x4] sm:$0xf]
        %v599 = vld [vmem:[%s447 + $0x8] sm:$0xf]
        %v600 = vld [vmem:[%s447 + $0xc] sm:$0xf]
        %v601 = vld [vmem:[%s447 + $0x10] sm:$0xf]
        %v602 = vld [vmem:[%s447 + $0x14] sm:$0xf]
        %v603 = vld [vmem:[%s447 + $0x18] sm:$0xf]
        %v604 = vld [vmem:[%s447 + $0x1c] sm:$0xf]
        %v605 = vld [vmem:[%s447 + $0x20] sm:$0xf]
        %v606 = vld [vmem:[%s447 + $0x24] sm:$0xf]
        %v607 = vld [vmem:[%s447 + $0x28] sm:$0xf]
        %v608 = vld [vmem:[%s447 + $0x2c] sm:$0xf]
        %v609 = vld [vmem:[%s447 + $0x30] sm:$0xf]
        %v610 = vld [vmem:[%s447 + $0x34] sm:$0xf]
        %v611 = vld [vmem:[%s447 + $0x38] sm:$0xf]
        %v612 = vld [vmem:[%s447 + $0x3c] sm:$0xf]
        %v613 = vld [vmem:[%s447 + $0x40] sm:$0xf]
        %v614 = vld [vmem:[%s447 + $0x44] sm:$0xf]
        %v615 = vld [vmem:[%s447 + $0x48] sm:$0xf]
        %v616 = vld [vmem:[%s447 + $0x4c] sm:$0xf]
        %v617 = vld [vmem:[%s447 + $0x50] sm:$0xf]
        %v618 = vld [vmem:[%s447 + $0x54] sm:$0xf]
        %v619 = vld [vmem:[%s447 + $0x58] sm:$0xf]
        %v620 = vld [vmem:[%s447 + $0x5c] sm:$0xf]
        %v621 = vld [vmem:[%s447 + $0x60] sm:$0xf]
        %v622 = vld [vmem:[%s447 + $0x64] sm:$0xf]
        %v623 = vld [vmem:[%s447 + $0x68] sm:$0xf]
        %v624 = vld [vmem:[%s447 + $0x6c] sm:$0xf]
        %v625 = vld [vmem:[%s447 + $0x70] sm:$0xf]
        %v626 = vld [vmem:[%s447 + $0x74] sm:$0xf]
        %v627 = vld [vmem:[%s447 + $0x78] sm:$0xf]
        %v628 = vld [vmem:[%s447 + $0x7c] sm:$0xf]
        %v629 = vld [vmem:[%s447 + $0x80] sm:$0xf]
        %v630 = vld [vmem:[%s447 + $0x84] sm:$0xf]
        %v631 = vld [vmem:[%s447 + $0x88] sm:$0xf]
        %v632 = vld [vmem:[%s447 + $0x8c] sm:$0xf]
        %v633 = vld [vmem:[%s447 + $0x90] sm:$0xf]
        %v634 = vld [vmem:[%s447 + $0x94] sm:$0xf]
        %v635 = vld [vmem:[%s447 + $0x98] sm:$0xf]
        %v636 = vld [vmem:[%s447 + $0x9c] sm:$0xf]
        %v637 = vld [vmem:[%s447 + $0xa0] sm:$0xf]
        %v638 = vld [vmem:[%s447 + $0xa4] sm:$0xf]
        %v639 = vld [vmem:[%s447 + $0xa8] sm:$0xf]
        %v640 = vld [vmem:[%s447 + $0xac] sm:$0xf]
        %v641 = vadd.bf16 %v553, %v597
        %v642 = vadd.bf16 %v554, %v598
        %v643 = vadd.bf16 %v555, %v599
        %v644 = vadd.bf16 %v556, %v600
        %v645 = vadd.bf16 %v557, %v601
        %v646 = vadd.bf16 %v558, %v602
        %v647 = vadd.bf16 %v559, %v603
        %v648 = vadd.bf16 %v560, %v604
        %v649 = vadd.bf16 %v561, %v605
        %v650 = vadd.bf16 %v562, %v606
        %v651 = vadd.bf16 %v563, %v607
        %v652 = vadd.bf16 %v564, %v608
        %v653 = vadd.bf16 %v565, %v609
        %v654 = vadd.bf16 %v566, %v610
        %v655 = vadd.bf16 %v567, %v611
        %v656 = vadd.bf16 %v568, %v612
        %v657 = vadd.bf16 %v569, %v613
        %v658 = vadd.bf16 %v570, %v614
        %v659 = vadd.bf16 %v571, %v615
        %v660 = vadd.bf16 %v572, %v616
        %v661 = vadd.bf16 %v573, %v617
        %v662 = vadd.bf16 %v574, %v618
        %v663 = vadd.bf16 %v575, %v619
        %v664 = vadd.bf16 %v576, %v620
        %v665 = vadd.bf16 %v577, %v621
        %v666 = vadd.bf16 %v578, %v622
        %v667 = vadd.bf16 %v579, %v623
        %v668 = vadd.bf16 %v580, %v624
        %v669 = vadd.bf16 %v581, %v625
        %v670 = vadd.bf16 %v582, %v626
        %v671 = vadd.bf16 %v583, %v627
        %v672 = vadd.bf16 %v584, %v628
        %v673 = vadd.bf16 %v585, %v629
        %v674 = vadd.bf16 %v586, %v630
        %v675 = vadd.bf16 %v587, %v631
        %v676 = vadd.bf16 %v588, %v632
        %v677 = vadd.bf16 %v589, %v633
        %v678 = vadd.bf16 %v590, %v634
        %v679 = vadd.bf16 %v591, %v635
        %v680 = vadd.bf16 %v592, %v636
        %v681 = vadd.bf16 %v593, %v637
        %v682 = vadd.bf16 %v594, %v638
        %v683 = vadd.bf16 %v595, %v639
        %v684 = vadd.bf16 %v596, %v640
        %v685 = vunpack.c.l.bf16 %v641
        %v686 = vunpack.c.l.bf16 %v642
        %v687 = vunpack.c.l.bf16 %v643
        %v688 = vunpack.c.l.bf16 %v644
        %v689 = vunpack.c.l.bf16 %v645
        %v690 = vunpack.c.l.bf16 %v646
        %v691 = vunpack.c.l.bf16 %v647
        %v692 = vunpack.c.l.bf16 %v648
        %v693 = vunpack.c.l.bf16 %v649
        %v694 = vunpack.c.l.bf16 %v650
        %v695 = vunpack.c.l.bf16 %v651
        %v696 = vunpack.c.l.bf16 %v652
        %v697 = vunpack.c.l.bf16 %v653
        %v698 = vunpack.c.l.bf16 %v654
        %v699 = vunpack.c.l.bf16 %v655
        %v700 = vunpack.c.l.bf16 %v656
        %v701 = vunpack.c.l.bf16 %v657
        %v702 = vunpack.c.l.bf16 %v658
        %v703 = vunpack.c.l.bf16 %v659
        %v704 = vunpack.c.l.bf16 %v660
        %v705 = vunpack.c.l.bf16 %v661
        %v706 = vunpack.c.l.bf16 %v662
        %v707 = vunpack.c.l.bf16 %v663
        %v708 = vunpack.c.l.bf16 %v664
        %v709 = vunpack.c.l.bf16 %v665
        %v710 = vunpack.c.l.bf16 %v666
        %v711 = vunpack.c.l.bf16 %v667
        %v712 = vunpack.c.l.bf16 %v668
        %v713 = vunpack.c.l.bf16 %v669
        %v714 = vunpack.c.l.bf16 %v670
        %v715 = vunpack.c.l.bf16 %v671
        %v716 = vunpack.c.l.bf16 %v672
        %v717 = vunpack.c.l.bf16 %v673
        %v718 = vunpack.c.l.bf16 %v674
        %v719 = vunpack.c.l.bf16 %v675
        %v720 = vunpack.c.l.bf16 %v676
        %v721 = vunpack.c.l.bf16 %v677
        %v722 = vunpack.c.l.bf16 %v678
        %v723 = vunpack.c.l.bf16 %v679
        %v724 = vunpack.c.l.bf16 %v680
        %v725 = vunpack.c.l.bf16 %v681
        %v726 = vunpack.c.l.bf16 %v682
        %v727 = vunpack.c.l.bf16 %v683
        %v728 = vunpack.c.l.bf16 %v684
        %v729 = vrot.slane %v685, 5
        %v730 = vrot.slane %v686, 5
        %v731 = vrot.slane %v687, 5
        %v732 = vrot.slane %v688, 5
        %v733 = vrot.slane %v689, 5
        %v734 = vrot.slane %v690, 5
        %v735 = vrot.slane %v691, 5
        %v736 = vrot.slane %v692, 5
        %v737 = vrot.slane %v693, 5
        %v738 = vrot.slane %v694, 5
        %v739 = vrot.slane %v695, 5
        %v740 = vrot.slane %v696, 5
        %v741 = vrot.slane %v697, 5
        %v742 = vrot.slane %v698, 5
        %v743 = vrot.slane %v699, 5
        %v744 = vrot.slane %v700, 5
        %v745 = vrot.slane %v701, 5
        %v746 = vrot.slane %v702, 5
        %v747 = vrot.slane %v703, 5
        %v748 = vrot.slane %v704, 5
        %v749 = vrot.slane %v705, 5
        %v750 = vrot.slane %v706, 5
        %v751 = vrot.slane %v707, 5
        %v752 = vrot.slane %v708, 5
        %v753 = vrot.slane %v709, 5
        %v754 = vrot.slane %v710, 5
        %v755 = vrot.slane %v711, 5
        %v756 = vrot.slane %v712, 5
        %v757 = vrot.slane %v713, 5
        %v758 = vrot.slane %v714, 5
        %v759 = vrot.slane %v715, 5
        %v760 = vrot.slane %v716, 5
        %v761 = vrot.slane %v717, 5
        %v762 = vrot.slane %v718, 5
        %v763 = vrot.slane %v719, 5
        %v764 = vrot.slane %v720, 5
        %v765 = vrot.slane %v721, 5
        %v766 = vrot.slane %v722, 5
        %v767 = vrot.slane %v723, 5
        %v768 = vrot.slane %v724, 5
        %v769 = vrot.slane %v725, 5
        %v770 = vrot.slane %v726, 5
        %v771 = vrot.slane %v727, 5
        %v772 = vrot.slane %v728, 5
        %v773 = vlaneseq
        %v774 = vshrl.u32 %v773, 7
        %vm775 = vcmp.lt.s32.totalorder %v774, 3
        %v776 = vsel %vm775, %v771, %v772
        %v777 = vsel %vm775, %v770, %v771
        %v778 = vsel %vm775, %v769, %v770
        %v779 = vsel %vm775, %v768, %v769
        %v780 = vsel %vm775, %v767, %v768
        %v781 = vsel %vm775, %v766, %v767
        %v782 = vsel %vm775, %v765, %v766
        %v783 = vsel %vm775, %v764, %v765
        %v784 = vsel %vm775, %v763, %v764
        %v785 = vsel %vm775, %v762, %v763
        %v786 = vsel %vm775, %v761, %v762
        %v787 = vsel %vm775, %v760, %v761
        %v788 = vsel %vm775, %v759, %v760
        %v789 = vsel %vm775, %v758, %v759
        %v790 = vsel %vm775, %v757, %v758
        %v791 = vsel %vm775, %v756, %v757
        %v792 = vsel %vm775, %v755, %v756
        %v793 = vsel %vm775, %v754, %v755
        %v794 = vsel %vm775, %v753, %v754
        %v795 = vsel %vm775, %v752, %v753
        %v796 = vsel %vm775, %v751, %v752
        %v797 = vsel %vm775, %v750, %v751
        %v798 = vsel %vm775, %v749, %v750
        %v799 = vsel %vm775, %v748, %v749
        %v800 = vsel %vm775, %v747, %v748
        %v801 = vsel %vm775, %v746, %v747
        %v802 = vsel %vm775, %v745, %v746
        %v803 = vsel %vm775, %v744, %v745
        %v804 = vsel %vm775, %v743, %v744
        %v805 = vsel %vm775, %v742, %v743
        %v806 = vsel %vm775, %v741, %v742
        %v807 = vsel %vm775, %v740, %v741
        %v808 = vsel %vm775, %v739, %v740
        %v809 = vsel %vm775, %v738, %v739
        %v810 = vsel %vm775, %v737, %v738
        %v811 = vsel %vm775, %v736, %v737
        %v812 = vsel %vm775, %v735, %v736
        %v813 = vsel %vm775, %v734, %v735
        %v814 = vsel %vm775, %v733, %v734
        %v815 = vsel %vm775, %v732, %v733
        %v816 = vsel %vm775, %v731, %v732
        %v817 = vsel %vm775, %v730, %v731
        %v818 = vsel %vm775, %v729, %v730
        %v819 = vsel %vm775, %v772, %v729
        %v820 = vpack.c.bf16 %v776, %v777
        %v821 = vpack.c.bf16 %v818, %v819
        %v822 = vpack.c.bf16 %v816, %v817
        %v823 = vpack.c.bf16 %v814, %v815
        %v824 = vpack.c.bf16 %v812, %v813
        %v825 = vpack.c.bf16 %v810, %v811
        %v826 = vpack.c.bf16 %v808, %v809
        %v827 = vpack.c.bf16 %v806, %v807
        %v828 = vpack.c.bf16 %v804, %v805
        %v829 = vpack.c.bf16 %v802, %v803
        %v830 = vpack.c.bf16 %v800, %v801
        %v831 = vpack.c.bf16 %v798, %v799
        %v832 = vpack.c.bf16 %v796, %v797
        %v833 = vpack.c.bf16 %v794, %v795
        %v834 = vpack.c.bf16 %v792, %v793
        %v835 = vpack.c.bf16 %v790, %v791
        %v836 = vpack.c.bf16 %v788, %v789
        %v837 = vpack.c.bf16 %v786, %v787
        %v838 = vpack.c.bf16 %v784, %v785
        %v839 = vpack.c.bf16 %v782, %v783
        %v840 = vpack.c.bf16 %v780, %v781
        %v841 = vpack.c.bf16 %v778, %v779
        %v842 = vrot.slane %v685, 6
        %v843 = vrot.slane %v686, 6
        %v844 = vrot.slane %v687, 6
        %v845 = vrot.slane %v688, 6
        %v846 = vrot.slane %v689, 6
        %v847 = vrot.slane %v690, 6
        %v848 = vrot.slane %v691, 6
        %v849 = vrot.slane %v692, 6
        %v850 = vrot.slane %v693, 6
        %v851 = vrot.slane %v694, 6
        %v852 = vrot.slane %v695, 6
        %v853 = vrot.slane %v696, 6
        %v854 = vrot.slane %v697, 6
        %v855 = vrot.slane %v698, 6
        %v856 = vrot.slane %v699, 6
        %v857 = vrot.slane %v700, 6
        %v858 = vrot.slane %v701, 6
        %v859 = vrot.slane %v702, 6
        %v860 = vrot.slane %v703, 6
        %v861 = vrot.slane %v704, 6
        %v862 = vrot.slane %v705, 6
        %v863 = vrot.slane %v706, 6
        %v864 = vrot.slane %v707, 6
        %v865 = vrot.slane %v708, 6
        %v866 = vrot.slane %v709, 6
        %v867 = vrot.slane %v710, 6
        %v868 = vrot.slane %v711, 6
        %v869 = vrot.slane %v712, 6
        %v870 = vrot.slane %v713, 6
        %v871 = vrot.slane %v714, 6
        %v872 = vrot.slane %v715, 6
        %v873 = vrot.slane %v716, 6
        %v874 = vrot.slane %v717, 6
        %v875 = vrot.slane %v718, 6
        %v876 = vrot.slane %v719, 6
        %v877 = vrot.slane %v720, 6
        %v878 = vrot.slane %v721, 6
        %v879 = vrot.slane %v722, 6
        %v880 = vrot.slane %v723, 6
        %v881 = vrot.slane %v724, 6
        %v882 = vrot.slane %v725, 6
        %v883 = vrot.slane %v726, 6
        %v884 = vrot.slane %v727, 6
        %v885 = vrot.slane %v728, 6
        %vm886 = vcmp.lt.s32.totalorder %v774, 2
        %v887 = vsel %vm886, %v884, %v885
        %v888 = vsel %vm886, %v883, %v884
        %v889 = vsel %vm886, %v882, %v883
        %v890 = vsel %vm886, %v881, %v882
        %v891 = vsel %vm886, %v880, %v881
        %v892 = vsel %vm886, %v879, %v880
        %v893 = vsel %vm886, %v878, %v879
        %v894 = vsel %vm886, %v877, %v878
        %v895 = vsel %vm886, %v876, %v877
        %v896 = vsel %vm886, %v875, %v876
        %v897 = vsel %vm886, %v874, %v875
        %v898 = vsel %vm886, %v873, %v874
        %v899 = vsel %vm886, %v872, %v873
        %v900 = vsel %vm886, %v871, %v872
        %v901 = vsel %vm886, %v870, %v871
        %v902 = vsel %vm886, %v869, %v870
        %v903 = vsel %vm886, %v868, %v869
        %v904 = vsel %vm886, %v867, %v868
        %v905 = vsel %vm886, %v866, %v867
        %v906 = vsel %vm886, %v865, %v866
        %v907 = vsel %vm886, %v864, %v865
        %v908 = vsel %vm886, %v863, %v864
        %v909 = vsel %vm886, %v862, %v863
        %v910 = vsel %vm886, %v861, %v862
        %v911 = vsel %vm886, %v860, %v861
        %v912 = vsel %vm886, %v859, %v860
        %v913 = vsel %vm886, %v858, %v859
        %v914 = vsel %vm886, %v857, %v858
        %v915 = vsel %vm886, %v856, %v857
        %v916 = vsel %vm886, %v855, %v856
        %v917 = vsel %vm886, %v854, %v855
        %v918 = vsel %vm886, %v853, %v854
        %v919 = vsel %vm886, %v852, %v853
        %v920 = vsel %vm886, %v851, %v852
        %v921 = vsel %vm886, %v850, %v851
        %v922 = vsel %vm886, %v849, %v850
        %v923 = vsel %vm886, %v848, %v849
        %v924 = vsel %vm886, %v847, %v848
        %v925 = vsel %vm886, %v846, %v847
        %v926 = vsel %vm886, %v845, %v846
        %v927 = vsel %vm886, %v844, %v845
        %v928 = vsel %vm886, %v843, %v844
        %v929 = vsel %vm886, %v842, %v843
        %v930 = vsel %vm886, %v885, %v842
        %v931 = vpack.c.bf16 %v887, %v888
        %v932 = vpack.c.bf16 %v929, %v930
        %v933 = vpack.c.bf16 %v927, %v928
        %v934 = vpack.c.bf16 %v925, %v926
        %v935 = vpack.c.bf16 %v923, %v924
        %v936 = vpack.c.bf16 %v921, %v922
        %v937 = vpack.c.bf16 %v919, %v920
        %v938 = vpack.c.bf16 %v917, %v918
        %v939 = vpack.c.bf16 %v915, %v916
        %v940 = vpack.c.bf16 %v913, %v914
        %v941 = vpack.c.bf16 %v911, %v912
        %v942 = vpack.c.bf16 %v909, %v910
        %v943 = vpack.c.bf16 %v907, %v908
        %v944 = vpack.c.bf16 %v905, %v906
        %v945 = vpack.c.bf16 %v903, %v904
        %v946 = vpack.c.bf16 %v901, %v902
        %v947 = vpack.c.bf16 %v899, %v900
        %v948 = vpack.c.bf16 %v897, %v898
        %v949 = vpack.c.bf16 %v895, %v896
        %v950 = vpack.c.bf16 %v893, %v894
        %v951 = vpack.c.bf16 %v891, %v892
        %v952 = vpack.c.bf16 %v889, %v890
        %v953 = vrot.slane %v685, 7
        %v954 = vrot.slane %v686, 7
        %v955 = vrot.slane %v687, 7
        %v956 = vrot.slane %v688, 7
        %v957 = vrot.slane %v689, 7
        %v958 = vrot.slane %v690, 7
        %v959 = vrot.slane %v691, 7
        %v960 = vrot.slane %v692, 7
        %v961 = vrot.slane %v693, 7
        %v962 = vrot.slane %v694, 7
        %v963 = vrot.slane %v695, 7
        %v964 = vrot.slane %v696, 7
        %v965 = vrot.slane %v697, 7
        %v966 = vrot.slane %v698, 7
        %v967 = vrot.slane %v699, 7
        %v968 = vrot.slane %v700, 7
        %v969 = vrot.slane %v701, 7
        %v970 = vrot.slane %v702, 7
        %v971 = vrot.slane %v703, 7
        %v972 = vrot.slane %v704, 7
        %v973 = vrot.slane %v705, 7
        %v974 = vrot.slane %v706, 7
        %v975 = vrot.slane %v707, 7
        %v976 = vrot.slane %v708, 7
        %v977 = vrot.slane %v709, 7
        %v978 = vrot.slane %v710, 7
        %v979 = vrot.slane %v711, 7
        %v980 = vrot.slane %v712, 7
        %v981 = vrot.slane %v713, 7
        %v982 = vrot.slane %v714, 7
        %v983 = vrot.slane %v715, 7
        %v984 = vrot.slane %v716, 7
        %v985 = vrot.slane %v717, 7
        %v986 = vrot.slane %v718, 7
        %v987 = vrot.slane %v719, 7
        %v988 = vrot.slane %v720, 7
        %v989 = vrot.slane %v721, 7
        %v990 = vrot.slane %v722, 7
        %v991 = vrot.slane %v723, 7
        %v992 = vrot.slane %v724, 7
        %v993 = vrot.slane %v725, 7
        %v994 = vrot.slane %v726, 7
        %v995 = vrot.slane %v727, 7
        %v996 = vrot.slane %v728, 7
        %vm997 = vcmp.lt.s32.totalorder %v774, 1
        %v998 = vsel %vm997, %v995, %v996
        %v999 = vsel %vm997, %v994, %v995
        %v1000 = vsel %vm997, %v993, %v994
        %v1001 = vsel %vm997, %v992, %v993
        %v1002 = vsel %vm997, %v991, %v992
        %v1003 = vsel %vm997, %v990, %v991
        %v1004 = vsel %vm997, %v989, %v990
        %v1005 = vsel %vm997, %v988, %v989
        %v1006 = vsel %vm997, %v987, %v988
        %v1007 = vsel %vm997, %v986, %v987
        %v1008 = vsel %vm997, %v985, %v986
        %v1009 = vsel %vm997, %v984, %v985
        %v1010 = vsel %vm997, %v983, %v984
        %v1011 = vsel %vm997, %v982, %v983
        %v1012 = vsel %vm997, %v981, %v982
        %v1013 = vsel %vm997, %v980, %v981
        %v1014 = vsel %vm997, %v979, %v980
        %v1015 = vsel %vm997, %v978, %v979
        %v1016 = vsel %vm997, %v977, %v978
        %v1017 = vsel %vm997, %v976, %v977
        %v1018 = vsel %vm997, %v975, %v976
        %v1019 = vsel %vm997, %v974, %v975
        %v1020 = vsel %vm997, %v973, %v974
        %v1021 = vsel %vm997, %v972, %v973
        %v1022 = vsel %vm997, %v971, %v972
        %v1023 = vsel %vm997, %v970, %v971
        %v1024 = vsel %vm997, %v969, %v970
        %v1025 = vsel %vm997, %v968, %v969
        %v1026 = vsel %vm997, %v967, %v968
        %v1027 = vsel %vm997, %v966, %v967
        %v1028 = vsel %vm997, %v965, %v966
        %v1029 = vsel %vm997, %v964, %v965
        %v1030 = vsel %vm997, %v963, %v964
        %v1031 = vsel %vm997, %v962, %v963
        %v1032 = vsel %vm997, %v961, %v962
        %v1033 = vsel %vm997, %v960, %v961
        %v1034 = vsel %vm997, %v959, %v960
        %v1035 = vsel %vm997, %v958, %v959
        %v1036 = vsel %vm997, %v957, %v958
        %v1037 = vsel %vm997, %v956, %v957
        %v1038 = vsel %vm997, %v955, %v956
        %v1039 = vsel %vm997, %v954, %v955
        %v1040 = vsel %vm997, %v953, %v954
        %v1041 = vsel %vm997, %v996, %v953
        %v1042 = vpack.c.bf16 %v998, %v999
        %v1043 = vpack.c.bf16 %v1040, %v1041
        %v1044 = vpack.c.bf16 %v1038, %v1039
        %v1045 = vpack.c.bf16 %v1036, %v1037
        %v1046 = vpack.c.bf16 %v1034, %v1035
        %v1047 = vpack.c.bf16 %v1032, %v1033
        %v1048 = vpack.c.bf16 %v1030, %v1031
        %v1049 = vpack.c.bf16 %v1028, %v1029
        %v1050 = vpack.c.bf16 %v1026, %v1027
        %v1051 = vpack.c.bf16 %v1024, %v1025
        %v1052 = vpack.c.bf16 %v1022, %v1023
        %v1053 = vpack.c.bf16 %v1020, %v1021
        %v1054 = vpack.c.bf16 %v1018, %v1019
        %v1055 = vpack.c.bf16 %v1016, %v1017
        %v1056 = vpack.c.bf16 %v1014, %v1015
        %v1057 = vpack.c.bf16 %v1012, %v1013
        %v1058 = vpack.c.bf16 %v1010, %v1011
        %v1059 = vpack.c.bf16 %v1008, %v1009
        %v1060 = vpack.c.bf16 %v1006, %v1007
        %v1061 = vpack.c.bf16 %v1004, %v1005
        %v1062 = vpack.c.bf16 %v1002, %v1003
        %v1063 = vpack.c.bf16 %v1000, %v1001
        %v1064 = vrot.slane %v685, 1
        %v1065 = vrot.slane %v686, 1
        %v1066 = vrot.slane %v687, 1
        %v1067 = vrot.slane %v688, 1
        %v1068 = vrot.slane %v689, 1
        %v1069 = vrot.slane %v690, 1
        %v1070 = vrot.slane %v691, 1
        %v1071 = vrot.slane %v692, 1
        %v1072 = vrot.slane %v693, 1
        %v1073 = vrot.slane %v694, 1
        %v1074 = vrot.slane %v695, 1
        %v1075 = vrot.slane %v696, 1
        %v1076 = vrot.slane %v697, 1
        %v1077 = vrot.slane %v698, 1
        %v1078 = vrot.slane %v699, 1
        %v1079 = vrot.slane %v700, 1
        %v1080 = vrot.slane %v701, 1
        %v1081 = vrot.slane %v702, 1
        %v1082 = vrot.slane %v703, 1
        %v1083 = vrot.slane %v704, 1
        %v1084 = vrot.slane %v705, 1
        %v1085 = vrot.slane %v706, 1
        %v1086 = vrot.slane %v707, 1
        %v1087 = vrot.slane %v708, 1
        %v1088 = vrot.slane %v709, 1
        %v1089 = vrot.slane %v710, 1
        %v1090 = vrot.slane %v711, 1
        %v1091 = vrot.slane %v712, 1
        %v1092 = vrot.slane %v713, 1
        %v1093 = vrot.slane %v714, 1
        %v1094 = vrot.slane %v715, 1
        %v1095 = vrot.slane %v716, 1
        %v1096 = vrot.slane %v717, 1
        %v1097 = vrot.slane %v718, 1
        %v1098 = vrot.slane %v719, 1
        %v1099 = vrot.slane %v720, 1
        %v1100 = vrot.slane %v721, 1
        %v1101 = vrot.slane %v722, 1
        %v1102 = vrot.slane %v723, 1
        %v1103 = vrot.slane %v724, 1
        %v1104 = vrot.slane %v725, 1
        %v1105 = vrot.slane %v726, 1
        %v1106 = vrot.slane %v727, 1
        %v1107 = vrot.slane %v728, 1
        %vm1108 = vcmp.lt.s32.totalorder %v774, 7
        %v1109 = vsel %vm1108, %v1106, %v1107
        %v1110 = vsel %vm1108, %v1105, %v1106
        %v1111 = vsel %vm1108, %v1104, %v1105
        %v1112 = vsel %vm1108, %v1103, %v1104
        %v1113 = vsel %vm1108, %v1102, %v1103
        %v1114 = vsel %vm1108, %v1101, %v1102
        %v1115 = vsel %vm1108, %v1100, %v1101
        %v1116 = vsel %vm1108, %v1099, %v1100
        %v1117 = vsel %vm1108, %v1098, %v1099
        %v1118 = vsel %vm1108, %v1097, %v1098
        %v1119 = vsel %vm1108, %v1096, %v1097
        %v1120 = vsel %vm1108, %v1095, %v1096
        %v1121 = vsel %vm1108, %v1094, %v1095
        %v1122 = vsel %vm1108, %v1093, %v1094
        %v1123 = vsel %vm1108, %v1092, %v1093
        %v1124 = vsel %vm1108, %v1091, %v1092
        %v1125 = vsel %vm1108, %v1090, %v1091
        %v1126 = vsel %vm1108, %v1089, %v1090
        %v1127 = vsel %vm1108, %v1088, %v1089
        %v1128 = vsel %vm1108, %v1087, %v1088
        %v1129 = vsel %vm1108, %v1086, %v1087
        %v1130 = vsel %vm1108, %v1085, %v1086
        %v1131 = vsel %vm1108, %v1084, %v1085
        %v1132 = vsel %vm1108, %v1083, %v1084
        %v1133 = vsel %vm1108, %v1082, %v1083
        %v1134 = vsel %vm1108, %v1081, %v1082
        %v1135 = vsel %vm1108, %v1080, %v1081
        %v1136 = vsel %vm1108, %v1079, %v1080
        %v1137 = vsel %vm1108, %v1078, %v1079
        %v1138 = vsel %vm1108, %v1077, %v1078
        %v1139 = vsel %vm1108, %v1076, %v1077
        %v1140 = vsel %vm1108, %v1075, %v1076
        %v1141 = vsel %vm1108, %v1074, %v1075
        %v1142 = vsel %vm1108, %v1073, %v1074
        %v1143 = vsel %vm1108, %v1072, %v1073
        %v1144 = vsel %vm1108, %v1071, %v1072
        %v1145 = vsel %vm1108, %v1070, %v1071
        %v1146 = vsel %vm1108, %v1069, %v1070
        %v1147 = vsel %vm1108, %v1068, %v1069
        %v1148 = vsel %vm1108, %v1067, %v1068
        %v1149 = vsel %vm1108, %v1066, %v1067
        %v1150 = vsel %vm1108, %v1065, %v1066
        %v1151 = vsel %vm1108, %v1064, %v1065
        %v1152 = vsel %vm1108, %v1107, %v1064
        %v1153 = vpack.c.bf16 %v1150, %v1151
        %v1154 = vpack.c.bf16 %v1148, %v1149
        %v1155 = vpack.c.bf16 %v1146, %v1147
        %v1156 = vpack.c.bf16 %v1144, %v1145
        %v1157 = vpack.c.bf16 %v1142, %v1143
        %v1158 = vpack.c.bf16 %v1140, %v1141
        %v1159 = vpack.c.bf16 %v1138, %v1139
        %v1160 = vpack.c.bf16 %v1136, %v1137
        %v1161 = vpack.c.bf16 %v1134, %v1135
        %v1162 = vpack.c.bf16 %v1132, %v1133
        %v1163 = vpack.c.bf16 %v1130, %v1131
        %v1164 = vpack.c.bf16 %v1128, %v1129
        %v1165 = vpack.c.bf16 %v1126, %v1127
        %v1166 = vpack.c.bf16 %v1124, %v1125
        %v1167 = vpack.c.bf16 %v1122, %v1123
        %v1168 = vpack.c.bf16 %v1120, %v1121
        %v1169 = vpack.c.bf16 %v1118, %v1119
        %v1170 = vpack.c.bf16 %v1116, %v1117
        %v1171 = vpack.c.bf16 %v1114, %v1115
        %v1172 = vpack.c.bf16 %v1112, %v1113
        %v1173 = vpack.c.bf16 %v1110, %v1111
        %v1174 = vpack.c.bf16 %v1152, %v1109
        %v1175 = vrot.slane %v685, 2
        %v1176 = vrot.slane %v686, 2
        %v1177 = vrot.slane %v687, 2
        %v1178 = vrot.slane %v688, 2
        %v1179 = vrot.slane %v689, 2
        %v1180 = vrot.slane %v690, 2
        %v1181 = vrot.slane %v691, 2
        %v1182 = vrot.slane %v692, 2
        %v1183 = vrot.slane %v693, 2
        %v1184 = vrot.slane %v694, 2
        %v1185 = vrot.slane %v695, 2
        %v1186 = vrot.slane %v696, 2
        %v1187 = vrot.slane %v697, 2
        %v1188 = vrot.slane %v698, 2
        %v1189 = vrot.slane %v699, 2
        %v1190 = vrot.slane %v700, 2
        %v1191 = vrot.slane %v701, 2
        %v1192 = vrot.slane %v702, 2
        %v1193 = vrot.slane %v703, 2
        %v1194 = vrot.slane %v704, 2
        %v1195 = vrot.slane %v705, 2
        %v1196 = vrot.slane %v706, 2
        %v1197 = vrot.slane %v707, 2
        %v1198 = vrot.slane %v708, 2
        %v1199 = vrot.slane %v709, 2
        %v1200 = vrot.slane %v710, 2
        %v1201 = vrot.slane %v711, 2
        %v1202 = vrot.slane %v712, 2
        %v1203 = vrot.slane %v713, 2
        %v1204 = vrot.slane %v714, 2
        %v1205 = vrot.slane %v715, 2
        %v1206 = vrot.slane %v716, 2
        %v1207 = vrot.slane %v717, 2
        %v1208 = vrot.slane %v718, 2
        %v1209 = vrot.slane %v719, 2
        %v1210 = vrot.slane %v720, 2
        %v1211 = vrot.slane %v721, 2
        %v1212 = vrot.slane %v722, 2
        %v1213 = vrot.slane %v723, 2
        %v1214 = vrot.slane %v724, 2
        %v1215 = vrot.slane %v725, 2
        %v1216 = vrot.slane %v726, 2
        %v1217 = vrot.slane %v727, 2
        %v1218 = vrot.slane %v728, 2
        %vm1219 = vcmp.lt.s32.totalorder %v774, 6
        %v1220 = vsel %vm1219, %v1217, %v1218
        %v1221 = vsel %vm1219, %v1216, %v1217
        %v1222 = vsel %vm1219, %v1215, %v1216
        %v1223 = vsel %vm1219, %v1214, %v1215
        %v1224 = vsel %vm1219, %v1213, %v1214
        %v1225 = vsel %vm1219, %v1212, %v1213
        %v1226 = vsel %vm1219, %v1211, %v1212
        %v1227 = vsel %vm1219, %v1210, %v1211
        %v1228 = vsel %vm1219, %v1209, %v1210
        %v1229 = vsel %vm1219, %v1208, %v1209
        %v1230 = vsel %vm1219, %v1207, %v1208
        %v1231 = vsel %vm1219, %v1206, %v1207
        %v1232 = vsel %vm1219, %v1205, %v1206
        %v1233 = vsel %vm1219, %v1204, %v1205
        %v1234 = vsel %vm1219, %v1203, %v1204
        %v1235 = vsel %vm1219, %v1202, %v1203
        %v1236 = vsel %vm1219, %v1201, %v1202
        %v1237 = vsel %vm1219, %v1200, %v1201
        %v1238 = vsel %vm1219, %v1199, %v1200
        %v1239 = vsel %vm1219, %v1198, %v1199
        %v1240 = vsel %vm1219, %v1197, %v1198
        %v1241 = vsel %vm1219, %v1196, %v1197
        %v1242 = vsel %vm1219, %v1195, %v1196
        %v1243 = vsel %vm1219, %v1194, %v1195
        %v1244 = vsel %vm1219, %v1193, %v1194
        %v1245 = vsel %vm1219, %v1192, %v1193
        %v1246 = vsel %vm1219, %v1191, %v1192
        %v1247 = vsel %vm1219, %v1190, %v1191
        %v1248 = vsel %vm1219, %v1189, %v1190
        %v1249 = vsel %vm1219, %v1188, %v1189
        %v1250 = vsel %vm1219, %v1187, %v1188
        %v1251 = vsel %vm1219, %v1186, %v1187
        %v1252 = vsel %vm1219, %v1185, %v1186
        %v1253 = vsel %vm1219, %v1184, %v1185
        %v1254 = vsel %vm1219, %v1183, %v1184
        %v1255 = vsel %vm1219, %v1182, %v1183
        %v1256 = vsel %vm1219, %v1181, %v1182
        %v1257 = vsel %vm1219, %v1180, %v1181
        %v1258 = vsel %vm1219, %v1179, %v1180
        %v1259 = vsel %vm1219, %v1178, %v1179
        %v1260 = vsel %vm1219, %v1177, %v1178
        %v1261 = vsel %vm1219, %v1176, %v1177
        %v1262 = vsel %vm1219, %v1175, %v1176
        %v1263 = vsel %vm1219, %v1218, %v1175
        %v1264 = vpack.c.bf16 %v1259, %v1260
        %v1265 = vpack.c.bf16 %v1257, %v1258
        %v1266 = vpack.c.bf16 %v1255, %v1256
        %v1267 = vpack.c.bf16 %v1253, %v1254
        %v1268 = vpack.c.bf16 %v1251, %v1252
        %v1269 = vpack.c.bf16 %v1249, %v1250
        %v1270 = vpack.c.bf16 %v1247, %v1248
        %v1271 = vpack.c.bf16 %v1245, %v1246
        %v1272 = vpack.c.bf16 %v1243, %v1244
        %v1273 = vpack.c.bf16 %v1241, %v1242
        %v1274 = vpack.c.bf16 %v1239, %v1240
        %v1275 = vpack.c.bf16 %v1237, %v1238
        %v1276 = vpack.c.bf16 %v1235, %v1236
        %v1277 = vpack.c.bf16 %v1233, %v1234
        %v1278 = vpack.c.bf16 %v1231, %v1232
        %v1279 = vpack.c.bf16 %v1229, %v1230
        %v1280 = vpack.c.bf16 %v1227, %v1228
        %v1281 = vpack.c.bf16 %v1225, %v1226
        %v1282 = vpack.c.bf16 %v1223, %v1224
        %v1283 = vpack.c.bf16 %v1221, %v1222
        %v1284 = vpack.c.bf16 %v1263, %v1220
        %v1285 = vpack.c.bf16 %v1261, %v1262
        %v1286 = vrot.slane %v685, 3
        %v1287 = vrot.slane %v686, 3
        %v1288 = vrot.slane %v687, 3
        %v1289 = vrot.slane %v688, 3
        %v1290 = vrot.slane %v689, 3
        %v1291 = vrot.slane %v690, 3
        %v1292 = vrot.slane %v691, 3
        %v1293 = vrot.slane %v692, 3
        %v1294 = vrot.slane %v693, 3
        %v1295 = vrot.slane %v694, 3
        %v1296 = vrot.slane %v695, 3
        %v1297 = vrot.slane %v696, 3
        %v1298 = vrot.slane %v697, 3
        %v1299 = vrot.slane %v698, 3
        %v1300 = vrot.slane %v699, 3
        %v1301 = vrot.slane %v700, 3
        %v1302 = vrot.slane %v701, 3
        %v1303 = vrot.slane %v702, 3
        %v1304 = vrot.slane %v703, 3
        %v1305 = vrot.slane %v704, 3
        %v1306 = vrot.slane %v705, 3
        %v1307 = vrot.slane %v706, 3
        %v1308 = vrot.slane %v707, 3
        %v1309 = vrot.slane %v708, 3
        %v1310 = vrot.slane %v709, 3
        %v1311 = vrot.slane %v710, 3
        %v1312 = vrot.slane %v711, 3
        %v1313 = vrot.slane %v712, 3
        %v1314 = vrot.slane %v713, 3
        %v1315 = vrot.slane %v714, 3
        %v1316 = vrot.slane %v715, 3
        %v1317 = vrot.slane %v716, 3
        %v1318 = vrot.slane %v717, 3
        %v1319 = vrot.slane %v718, 3
        %v1320 = vrot.slane %v719, 3
        %v1321 = vrot.slane %v720, 3
        %v1322 = vrot.slane %v721, 3
        %v1323 = vrot.slane %v722, 3
        %v1324 = vrot.slane %v723, 3
        %v1325 = vrot.slane %v724, 3
        %v1326 = vrot.slane %v725, 3
        %v1327 = vrot.slane %v726, 3
        %v1328 = vrot.slane %v727, 3
        %v1329 = vrot.slane %v728, 3
        %vm1330 = vcmp.lt.s32.totalorder %v774, 5
        %v1331 = vsel %vm1330, %v1328, %v1329
        %v1332 = vsel %vm1330, %v1327, %v1328
        %v1333 = vsel %vm1330, %v1326, %v1327
        %v1334 = vsel %vm1330, %v1325, %v1326
        %v1335 = vsel %vm1330, %v1324, %v1325
        %v1336 = vsel %vm1330, %v1323, %v1324
        %v1337 = vsel %vm1330, %v1322, %v1323
        %v1338 = vsel %vm1330, %v1321, %v1322
        %v1339 = vsel %vm1330, %v1320, %v1321
        %v1340 = vsel %vm1330, %v1319, %v1320
        %v1341 = vsel %vm1330, %v1318, %v1319
        %v1342 = vsel %vm1330, %v1317, %v1318
        %v1343 = vsel %vm1330, %v1316, %v1317
        %v1344 = vsel %vm1330, %v1315, %v1316
        %v1345 = vsel %vm1330, %v1314, %v1315
        %v1346 = vsel %vm1330, %v1313, %v1314
        %v1347 = vsel %vm1330, %v1312, %v1313
        %v1348 = vsel %vm1330, %v1311, %v1312
        %v1349 = vsel %vm1330, %v1310, %v1311
        %v1350 = vsel %vm1330, %v1309, %v1310
        %v1351 = vsel %vm1330, %v1308, %v1309
        %v1352 = vsel %vm1330, %v1307, %v1308
        %v1353 = vsel %vm1330, %v1306, %v1307
        %v1354 = vsel %vm1330, %v1305, %v1306
        %v1355 = vsel %vm1330, %v1304, %v1305
        %v1356 = vsel %vm1330, %v1303, %v1304
        %v1357 = vsel %vm1330, %v1302, %v1303
        %v1358 = vsel %vm1330, %v1301, %v1302
        %v1359 = vsel %vm1330, %v1300, %v1301
        %v1360 = vsel %vm1330, %v1299, %v1300
        %v1361 = vsel %vm1330, %v1298, %v1299
        %v1362 = vsel %vm1330, %v1297, %v1298
        %v1363 = vsel %vm1330, %v1296, %v1297
        %v1364 = vsel %vm1330, %v1295, %v1296
        %v1365 = vsel %vm1330, %v1294, %v1295
        %v1366 = vsel %vm1330, %v1293, %v1294
        %v1367 = vsel %vm1330, %v1292, %v1293
        %v1368 = vsel %vm1330, %v1291, %v1292
        %v1369 = vsel %vm1330, %v1290, %v1291
        %v1370 = vsel %vm1330, %v1289, %v1290
        %v1371 = vsel %vm1330, %v1288, %v1289
        %v1372 = vsel %vm1330, %v1287, %v1288
        %v1373 = vsel %vm1330, %v1286, %v1287
        %v1374 = vsel %vm1330, %v1329, %v1286
        %v1375 = vpack.c.bf16 %v1370, %v1371
        %v1376 = vpack.c.bf16 %v1368, %v1369
        %v1377 = vpack.c.bf16 %v1366, %v1367
        %v1378 = vpack.c.bf16 %v1364, %v1365
        %v1379 = vpack.c.bf16 %v1362, %v1363
        %v1380 = vpack.c.bf16 %v1360, %v1361
        %v1381 = vpack.c.bf16 %v1358, %v1359
        %v1382 = vpack.c.bf16 %v1356, %v1357
        %v1383 = vpack.c.bf16 %v1354, %v1355
        %v1384 = vpack.c.bf16 %v1352, %v1353
        %v1385 = vpack.c.bf16 %v1350, %v1351
        %v1386 = vpack.c.bf16 %v1348, %v1349
        %v1387 = vpack.c.bf16 %v1346, %v1347
        %v1388 = vpack.c.bf16 %v1344, %v1345
        %v1389 = vpack.c.bf16 %v1342, %v1343
        %v1390 = vpack.c.bf16 %v1340, %v1341
        %v1391 = vpack.c.bf16 %v1338, %v1339
        %v1392 = vpack.c.bf16 %v1336, %v1337
        %v1393 = vpack.c.bf16 %v1334, %v1335
        %v1394 = vpack.c.bf16 %v1332, %v1333
        %v1395 = vpack.c.bf16 %v1374, %v1331
        %v1396 = vpack.c.bf16 %v1372, %v1373
        %v1441 = vunpack.c.l.b16 %v641
        %v1442 = vunpack.c.l.b16 %v642
        %v1443 = vunpack.c.l.b16 %v643
        %v1444 = vunpack.c.l.b16 %v644
        %v1445 = vunpack.c.l.b16 %v645
        %v1446 = vunpack.c.l.b16 %v646
        %v1447 = vunpack.c.l.b16 %v647
        %v1448 = vunpack.c.l.b16 %v648
        %v1449 = vunpack.c.l.b16 %v649
        %v1450 = vunpack.c.l.b16 %v650
        %v1451 = vunpack.c.l.b16 %v651
        %v1452 = vunpack.c.l.b16 %v652
        %v1453 = vunpack.c.l.b16 %v653
        %v1454 = vunpack.c.l.b16 %v654
        %v1455 = vunpack.c.l.b16 %v655
        %v1456 = vunpack.c.l.b16 %v656
        %v1457 = vunpack.c.l.b16 %v657
        %v1458 = vunpack.c.l.b16 %v658
        %v1459 = vunpack.c.l.b16 %v659
        %v1460 = vunpack.c.l.b16 %v660
        %v1461 = vunpack.c.l.b16 %v661
        %v1462 = vunpack.c.l.b16 %v662
        %v1463 = vunpack.c.l.b16 %v663
        %v1464 = vunpack.c.l.b16 %v664
        %v1465 = vunpack.c.l.b16 %v665
        %v1466 = vunpack.c.l.b16 %v666
        %v1467 = vunpack.c.l.b16 %v667
        %v1468 = vunpack.c.l.b16 %v668
        %v1469 = vunpack.c.l.b16 %v669
        %v1470 = vunpack.c.l.b16 %v670
        %v1471 = vunpack.c.l.b16 %v671
        %v1472 = vunpack.c.l.b16 %v672
        %v1473 = vunpack.c.l.b16 %v673
        %v1474 = vunpack.c.l.b16 %v674
        %v1475 = vunpack.c.l.b16 %v675
        %v1476 = vunpack.c.l.b16 %v676
        %v1477 = vunpack.c.l.b16 %v677
        %v1478 = vunpack.c.l.b16 %v678
        %v1479 = vunpack.c.l.b16 %v679
        %v1480 = vunpack.c.l.b16 %v680
        %v1481 = vunpack.c.l.b16 %v681
        %v1482 = vunpack.c.l.b16 %v682
        %v1483 = vunpack.c.l.b16 %v683
        %v1484 = vunpack.c.l.b16 %v684
        %v1485 = vpack.c.b16 %v1442, %v1441
        %v1486 = vpack.c.b16 %v1444, %v1443
        %v1487 = vpack.c.b16 %v1446, %v1445
        %v1488 = vpack.c.b16 %v1448, %v1447
        %v1489 = vpack.c.b16 %v1450, %v1449
        %v1490 = vpack.c.b16 %v1452, %v1451
        %v1491 = vpack.c.b16 %v1454, %v1453
        %v1492 = vpack.c.b16 %v1456, %v1455
        %v1493 = vpack.c.b16 %v1458, %v1457
        %v1494 = vpack.c.b16 %v1460, %v1459
        %v1495 = vpack.c.b16 %v1462, %v1461
        %v1496 = vpack.c.b16 %v1464, %v1463
        %v1497 = vpack.c.b16 %v1466, %v1465
        %v1498 = vpack.c.b16 %v1468, %v1467
        %v1499 = vpack.c.b16 %v1470, %v1469
        %v1500 = vpack.c.b16 %v1472, %v1471
        %v1501 = vpack.c.b16 %v1474, %v1473
        %v1502 = vpack.c.b16 %v1476, %v1475
        %v1503 = vpack.c.b16 %v1478, %v1477
        %v1504 = vpack.c.b16 %v1480, %v1479
        %v1505 = vpack.c.b16 %v1482, %v1481
        %v1506 = vpack.c.b16 %v1484, %v1483
        %v1529 = vld [vmem:[#allocation5] sm:$0xf]
        %v1530 = vld [vmem:[#allocation5 + $0x4] sm:$0xf]
        %v1531 = vld [vmem:[#allocation5 + $0x8] sm:$0xf]
        %v1532 = vld [vmem:[#allocation5 + $0xc] sm:$0xf]
        %v1533 = vld [vmem:[#allocation5 + $0x10] sm:$0xf]
        %v1534 = vld [vmem:[#allocation5 + $0x14] sm:$0xf]
        %v1535 = vld [vmem:[#allocation5 + $0x18] sm:$0xf]
        %v1536 = vld [vmem:[#allocation5 + $0x1c] sm:$0xf]
        %v1537 = vld [vmem:[#allocation5 + $0x20] sm:$0xf]
        %v1538 = vld [vmem:[#allocation5 + $0x24] sm:$0xf]
        %v1539 = vld [vmem:[#allocation5 + $0x28] sm:$0xf]
        %v1540 = vld [vmem:[#allocation5 + $0x2c] sm:$0xf]
        %v1541 = vld [vmem:[#allocation5 + $0x30] sm:$0xf]
        %v1542 = vld [vmem:[#allocation5 + $0x34] sm:$0xf]
        %v1543 = vld [vmem:[#allocation5 + $0x38] sm:$0xf]
        %v1544 = vld [vmem:[#allocation5 + $0x3c] sm:$0xf]
        %v1545 = vld [vmem:[#allocation5 + $0x40] sm:$0xf]
        %v1546 = vld [vmem:[#allocation5 + $0x44] sm:$0xf]
        %v1547 = vld [vmem:[#allocation5 + $0x48] sm:$0xf]
        %v1548 = vld [vmem:[#allocation5 + $0x4c] sm:$0xf]
        %v1549 = vld [vmem:[#allocation5 + $0x50] sm:$0xf]
        %v1550 = vld [vmem:[#allocation5 + $0x54] sm:$0xf]
        %v1551 = vld [vmem:[#allocation5 + $0x58] sm:$0xf]
        %v1552 = vld [vmem:[#allocation5 + $0x5c] sm:$0xf]
        %v1553 = vld [vmem:[#allocation5 + $0x60] sm:$0xf]
        %v1554 = vld [vmem:[#allocation5 + $0x64] sm:$0xf]
        %v1555 = vld [vmem:[#allocation5 + $0x68] sm:$0xf]
        %v1556 = vld [vmem:[#allocation5 + $0x6c] sm:$0xf]
        %v1557 = vld [vmem:[#allocation5 + $0x70] sm:$0xf]
        %v1558 = vld [vmem:[#allocation5 + $0x74] sm:$0xf]
        %v1559 = vld [vmem:[#allocation5 + $0x78] sm:$0xf]
        %v1560 = vld [vmem:[#allocation5 + $0x7c] sm:$0xf]
        %v1561 = vld [vmem:[#allocation5 + $0x80] sm:$0xf]
        %v1562 = vld [vmem:[#allocation5 + $0x84] sm:$0xf]
        %v1563 = vld [vmem:[#allocation5 + $0x88] sm:$0xf]
        %v1564 = vld [vmem:[#allocation5 + $0x8c] sm:$0xf]
        %v1565 = vld [vmem:[#allocation5 + $0x90] sm:$0xf]
        %v1566 = vld [vmem:[#allocation5 + $0x94] sm:$0xf]
        %v1567 = vld [vmem:[#allocation5 + $0x98] sm:$0xf]
        %v1568 = vld [vmem:[#allocation5 + $0x9c] sm:$0xf]
        %v1569 = vld [vmem:[#allocation5 + $0xa0] sm:$0xf]
        %v1570 = vld [vmem:[#allocation5 + $0xa4] sm:$0xf]
        %v1571 = vld [vmem:[#allocation5 + $0xa8] sm:$0xf]
        %v1572 = vld [vmem:[#allocation5 + $0xac] sm:$0xf]
        %v1573 = vld [vmem:[#allocation5 + $0xb0] sm:$0xf]
        %v1574 = vld [vmem:[#allocation5 + $0xb4] sm:$0xf]
        %v1575 = vld [vmem:[#allocation5 + $0xb8] sm:$0xf]
        %v1576 = vld [vmem:[#allocation5 + $0xbc] sm:$0xf]
        %v1577 = vld [vmem:[#allocation5 + $0xc0] sm:$0xf]
        %v1578 = vld [vmem:[#allocation5 + $0xc4] sm:$0xf]
        %v1579 = vld [vmem:[#allocation5 + $0xc8] sm:$0xf]
        %v1580 = vld [vmem:[#allocation5 + $0xcc] sm:$0xf]
        %v1581 = vld [vmem:[#allocation5 + $0xd0] sm:$0xf]
        %v1582 = vld [vmem:[#allocation5 + $0xd4] sm:$0xf]
        %v1583 = vld [vmem:[#allocation5 + $0xd8] sm:$0xf]
        %v1584 = vld [vmem:[#allocation5 + $0xdc] sm:$0xf]
        %v1585 = vld [vmem:[#allocation5 + $0xe0] sm:$0xf]
        %v1586 = vld [vmem:[#allocation5 + $0xe4] sm:$0xf]
        %v1587 = vld [vmem:[#allocation5 + $0xe8] sm:$0xf]
        %v1588 = vld [vmem:[#allocation5 + $0xec] sm:$0xf]
        %v1589 = vld [vmem:[#allocation5 + $0xf0] sm:$0xf]
        %v1590 = vld [vmem:[#allocation5 + $0xf4] sm:$0xf]
        %v1591 = vld [vmem:[#allocation5 + $0xf8] sm:$0xf]
        %v1592 = vld [vmem:[#allocation5 + $0xfc] sm:$0xf]
        %v1593 = vld [vmem:[#allocation5 + $0x100] sm:$0xf]
        %v1594 = vld [vmem:[#allocation5 + $0x104] sm:$0xf]
        %v1595 = vld [vmem:[#allocation5 + $0x108] sm:$0xf]
        %v1596 = vld [vmem:[#allocation5 + $0x10c] sm:$0xf]
        %v1597 = vld [vmem:[#allocation5 + $0x110] sm:$0xf]
        %v1598 = vld [vmem:[#allocation5 + $0x114] sm:$0xf]
        %v1599 = vld [vmem:[#allocation5 + $0x118] sm:$0xf]
        %v1600 = vld [vmem:[#allocation5 + $0x11c] sm:$0xf]
        %v1601 = vld [vmem:[#allocation5 + $0x120] sm:$0xf]
        %v1602 = vld [vmem:[#allocation5 + $0x124] sm:$0xf]
        %v1603 = vld [vmem:[#allocation5 + $0x128] sm:$0xf]
        %v1604 = vld [vmem:[#allocation5 + $0x12c] sm:$0xf]
        %v1605 = vld [vmem:[#allocation5 + $0x130] sm:$0xf]
        %v1606 = vld [vmem:[#allocation5 + $0x134] sm:$0xf]
        %v1607 = vld [vmem:[#allocation5 + $0x138] sm:$0xf]
        %v1608 = vld [vmem:[#allocation5 + $0x13c] sm:$0xf]
        %v1609 = vld [vmem:[#allocation5 + $0x140] sm:$0xf]
        %v1610 = vld [vmem:[#allocation5 + $0x144] sm:$0xf]
        %v1611 = vld [vmem:[#allocation5 + $0x148] sm:$0xf]
        %v1612 = vld [vmem:[#allocation5 + $0x14c] sm:$0xf]
        %v1613 = vld [vmem:[#allocation5 + $0x150] sm:$0xf]
        %v1614 = vld [vmem:[#allocation5 + $0x154] sm:$0xf]
        %v1615 = vld [vmem:[#allocation5 + $0x158] sm:$0xf]
        %v1616 = vld [vmem:[#allocation5 + $0x15c] sm:$0xf]
        %v1617 = vld [vmem:[#allocation5 + $0x160] sm:$0xf]
        %v1618 = vld [vmem:[#allocation5 + $0x164] sm:$0xf]
        %v1619 = vld [vmem:[#allocation5 + $0x168] sm:$0xf]
        %v1620 = vld [vmem:[#allocation5 + $0x16c] sm:$0xf]
        %v1621 = vld [vmem:[#allocation5 + $0x170] sm:$0xf]
        %v1622 = vld [vmem:[#allocation5 + $0x174] sm:$0xf]
        %v1623 = vld [vmem:[#allocation5 + $0x178] sm:$0xf]
        %v1624 = vld [vmem:[#allocation5 + $0x17c] sm:$0xf]
        %v1625 = vld [vmem:[#allocation5 + $0x180] sm:$0xf]
        %v1626 = vld [vmem:[#allocation5 + $0x184] sm:$0xf]
        %v1627 = vld [vmem:[#allocation5 + $0x188] sm:$0xf]
        %v1628 = vld [vmem:[#allocation5 + $0x18c] sm:$0xf]
        %v1629 = vld [vmem:[#allocation5 + $0x190] sm:$0xf]
        %v1630 = vld [vmem:[#allocation5 + $0x194] sm:$0xf]
        %v1631 = vld [vmem:[#allocation5 + $0x198] sm:$0xf]
        %v1632 = vld [vmem:[#allocation5 + $0x19c] sm:$0xf]
        %v1633 = vld [vmem:[#allocation5 + $0x1a0] sm:$0xf]
        %v1634 = vld [vmem:[#allocation5 + $0x1a4] sm:$0xf]
        %v1635 = vld [vmem:[#allocation5 + $0x1a8] sm:$0xf]
        %v1636 = vld [vmem:[#allocation5 + $0x1ac] sm:$0xf]
        %v1637 = vld [vmem:[#allocation5 + $0x1b0] sm:$0xf]
        %v1638 = vld [vmem:[#allocation5 + $0x1b4] sm:$0xf]
        %v1639 = vld [vmem:[#allocation5 + $0x1b8] sm:$0xf]
        %v1640 = vld [vmem:[#allocation5 + $0x1bc] sm:$0xf]
        %v1641 = vld [vmem:[#allocation5 + $0x1c0] sm:$0xf]
        %v1642 = vld [vmem:[#allocation5 + $0x1c4] sm:$0xf]
        %v1643 = vld [vmem:[#allocation5 + $0x1c8] sm:$0xf]
        %v1644 = vld [vmem:[#allocation5 + $0x1cc] sm:$0xf]
        %v1645 = vld [vmem:[#allocation5 + $0x1d0] sm:$0xf]
        %v1646 = vld [vmem:[#allocation5 + $0x1d4] sm:$0xf]
        %v1647 = vld [vmem:[#allocation5 + $0x1d8] sm:$0xf]
        %v1648 = vld [vmem:[#allocation5 + $0x1dc] sm:$0xf]
        %v1649 = vld [vmem:[#allocation5 + $0x1e0] sm:$0xf]
        %v1650 = vld [vmem:[#allocation5 + $0x1e4] sm:$0xf]
        %v1651 = vld [vmem:[#allocation5 + $0x1e8] sm:$0xf]
        %v1652 = vld [vmem:[#allocation5 + $0x1ec] sm:$0xf]
        %v1653 = vld [vmem:[#allocation5 + $0x1f0] sm:$0xf]
        %v1654 = vld [vmem:[#allocation5 + $0x1f4] sm:$0xf]
        %v1655 = vld [vmem:[#allocation5 + $0x1f8] sm:$0xf]
        %v1656 = vld [vmem:[#allocation5 + $0x1fc] sm:$0xf]
        %v1657 = vld [vmem:[#allocation5 + $0x200] sm:$0xf]
        %v1658 = vld [vmem:[#allocation5 + $0x204] sm:$0xf]
        %v1659 = vld [vmem:[#allocation5 + $0x208] sm:$0xf]
        %v1660 = vld [vmem:[#allocation5 + $0x20c] sm:$0xf]
        %v1661 = vld [vmem:[#allocation5 + $0x210] sm:$0xf]
        %v1662 = vld [vmem:[#allocation5 + $0x214] sm:$0xf]
        %v1663 = vld [vmem:[#allocation5 + $0x218] sm:$0xf]
        %v1664 = vld [vmem:[#allocation5 + $0x21c] sm:$0xf]
        %v1665 = vld [vmem:[#allocation5 + $0x220] sm:$0xf]
        %v1666 = vld [vmem:[#allocation5 + $0x224] sm:$0xf]
        %v1667 = vld [vmem:[#allocation5 + $0x228] sm:$0xf]
        %v1668 = vld [vmem:[#allocation5 + $0x22c] sm:$0xf]
        %v1669 = vld [vmem:[#allocation5 + $0x230] sm:$0xf]
        %v1670 = vld [vmem:[#allocation5 + $0x234] sm:$0xf]
        %v1671 = vld [vmem:[#allocation5 + $0x238] sm:$0xf]
        %v1672 = vld [vmem:[#allocation5 + $0x23c] sm:$0xf]
        %v1817 = vunpack.c.l.b16 %v1529
        %v1818 = vunpack.c.l.b16 %v1530
        %v1819 = vunpack.c.l.b16 %v1531
        %v1820 = vunpack.c.l.b16 %v1532
        %v1821 = vunpack.c.l.b16 %v1533
        %v1822 = vunpack.c.l.b16 %v1534
        %v1823 = vunpack.c.l.b16 %v1535
        %v1824 = vunpack.c.l.b16 %v1536
        %v1825 = vunpack.c.l.b16 %v1537
        %v1826 = vunpack.c.l.b16 %v1538
        %v1827 = vunpack.c.l.b16 %v1539
        %v1828 = vunpack.c.l.b16 %v1540
        %v1829 = vunpack.c.l.b16 %v1541
        %v1830 = vunpack.c.l.b16 %v1542
        %v1831 = vunpack.c.l.b16 %v1543
        %v1832 = vunpack.c.l.b16 %v1544
        %v1833 = vunpack.c.l.b16 %v1545
        %v1834 = vunpack.c.l.b16 %v1546
        %v1835 = vunpack.c.l.b16 %v1547
        %v1836 = vunpack.c.l.b16 %v1548
        %v1837 = vunpack.c.l.b16 %v1549
        %v1838 = vunpack.c.l.b16 %v1550
        %v1839 = vunpack.c.l.b16 %v1551
        %v1840 = vunpack.c.l.b16 %v1552
        %v1841 = vunpack.c.l.b16 %v1553
        %v1842 = vunpack.c.l.b16 %v1554
        %v1843 = vunpack.c.l.b16 %v1555
        %v1844 = vunpack.c.l.b16 %v1556
        %v1845 = vunpack.c.l.b16 %v1557
        %v1846 = vunpack.c.l.b16 %v1558
        %v1847 = vunpack.c.l.b16 %v1559
        %v1848 = vunpack.c.l.b16 %v1560
        %v1849 = vunpack.c.l.b16 %v1561
        %v1850 = vunpack.c.l.b16 %v1562
        %v1851 = vunpack.c.l.b16 %v1563
        %v1852 = vunpack.c.l.b16 %v1564
        %v1853 = vunpack.c.l.b16 %v1565
        %v1854 = vunpack.c.l.b16 %v1566
        %v1855 = vunpack.c.l.b16 %v1567
        %v1856 = vunpack.c.l.b16 %v1568
        %v1857 = vunpack.c.l.b16 %v1569
        %v1858 = vunpack.c.l.b16 %v1570
        %v1859 = vunpack.c.l.b16 %v1571
        %v1860 = vunpack.c.l.b16 %v1572
        %v1861 = vunpack.c.l.b16 %v1573
        %v1862 = vunpack.c.l.b16 %v1574
        %v1863 = vunpack.c.l.b16 %v1575
        %v1864 = vunpack.c.l.b16 %v1576
        %v1865 = vunpack.c.l.b16 %v1577
        %v1866 = vunpack.c.l.b16 %v1578
        %v1867 = vunpack.c.l.b16 %v1579
        %v1868 = vunpack.c.l.b16 %v1580
        %v1869 = vunpack.c.l.b16 %v1581
        %v1870 = vunpack.c.l.b16 %v1582
        %v1871 = vunpack.c.l.b16 %v1583
        %v1872 = vunpack.c.l.b16 %v1584
        %v1873 = vunpack.c.l.b16 %v1585
        %v1874 = vunpack.c.l.b16 %v1586
        %v1875 = vunpack.c.l.b16 %v1587
        %v1876 = vunpack.c.l.b16 %v1588
        %v1877 = vunpack.c.l.b16 %v1589
        %v1878 = vunpack.c.l.b16 %v1590
        %v1879 = vunpack.c.l.b16 %v1591
        %v1880 = vunpack.c.l.b16 %v1592
        %v1881 = vunpack.c.l.b16 %v1593
        %v1882 = vunpack.c.l.b16 %v1594
        %v1883 = vunpack.c.l.b16 %v1595
        %v1884 = vunpack.c.l.b16 %v1596
        %v1885 = vunpack.c.l.b16 %v1597
        %v1886 = vunpack.c.l.b16 %v1598
        %v1887 = vunpack.c.l.b16 %v1599
        %v1888 = vunpack.c.l.b16 %v1600
        %v1889 = vunpack.c.l.b16 %v1601
        %v1890 = vunpack.c.l.b16 %v1602
        %v1891 = vunpack.c.l.b16 %v1603
        %v1892 = vunpack.c.l.b16 %v1604
        %v1893 = vunpack.c.l.b16 %v1605
        %v1894 = vunpack.c.l.b16 %v1606
        %v1895 = vunpack.c.l.b16 %v1607
        %v1896 = vunpack.c.l.b16 %v1608
        %v1897 = vunpack.c.l.b16 %v1609
        %v1898 = vunpack.c.l.b16 %v1610
        %v1899 = vunpack.c.l.b16 %v1611
        %v1900 = vunpack.c.l.b16 %v1612
        %v1901 = vunpack.c.l.b16 %v1613
        %v1902 = vunpack.c.l.b16 %v1614
        %v1903 = vunpack.c.l.b16 %v1615
        %v1904 = vunpack.c.l.b16 %v1616
        %v1905 = vunpack.c.l.b16 %v1617
        %v1906 = vunpack.c.l.b16 %v1618
        %v1907 = vunpack.c.l.b16 %v1619
        %v1908 = vunpack.c.l.b16 %v1620
        %v1909 = vunpack.c.l.b16 %v1621
        %v1910 = vunpack.c.l.b16 %v1622
        %v1911 = vunpack.c.l.b16 %v1623
        %v1912 = vunpack.c.l.b16 %v1624
        %v1913 = vunpack.c.l.b16 %v1625
        %v1914 = vunpack.c.l.b16 %v1626
        %v1915 = vunpack.c.l.b16 %v1627
        %v1916 = vunpack.c.l.b16 %v1628
        %v1917 = vunpack.c.l.b16 %v1629
        %v1918 = vunpack.c.l.b16 %v1630
        %v1919 = vunpack.c.l.b16 %v1631
        %v1920 = vunpack.c.l.b16 %v1632
        %v1921 = vunpack.c.l.b16 %v1633
        %v1922 = vunpack.c.l.b16 %v1634
        %v1923 = vunpack.c.l.b16 %v1635
        %v1924 = vunpack.c.l.b16 %v1636
        %v1925 = vunpack.c.l.b16 %v1637
        %v1926 = vunpack.c.l.b16 %v1638
        %v1927 = vunpack.c.l.b16 %v1639
        %v1928 = vunpack.c.l.b16 %v1640
        %v1929 = vunpack.c.l.b16 %v1641
        %v1930 = vunpack.c.l.b16 %v1642
        %v1931 = vunpack.c.l.b16 %v1643
        %v1932 = vunpack.c.l.b16 %v1644
        %v1933 = vunpack.c.l.b16 %v1645
        %v1934 = vunpack.c.l.b16 %v1646
        %v1935 = vunpack.c.l.b16 %v1647
        %v1936 = vunpack.c.l.b16 %v1648
        %v1937 = vunpack.c.l.b16 %v1649
        %v1938 = vunpack.c.l.b16 %v1650
        %v1939 = vunpack.c.l.b16 %v1651
        %v1940 = vunpack.c.l.b16 %v1652
        %v1941 = vunpack.c.l.b16 %v1653
        %v1942 = vunpack.c.l.b16 %v1654
        %v1943 = vunpack.c.l.b16 %v1655
        %v1944 = vunpack.c.l.b16 %v1656
        %v1945 = vunpack.c.l.b16 %v1657
        %v1946 = vunpack.c.l.b16 %v1658
        %v1947 = vunpack.c.l.b16 %v1659
        %v1948 = vunpack.c.l.b16 %v1660
        %v1949 = vunpack.c.l.b16 %v1661
        %v1950 = vunpack.c.l.b16 %v1662
        %v1951 = vunpack.c.l.b16 %v1663
        %v1952 = vunpack.c.l.b16 %v1664
        %v1953 = vunpack.c.l.b16 %v1665
        %v1954 = vunpack.c.l.b16 %v1666
        %v1955 = vunpack.c.l.b16 %v1667
        %v1956 = vunpack.c.l.b16 %v1668
        %v1957 = vunpack.c.l.b16 %v1669
        %v1958 = vunpack.c.l.b16 %v1670
        %v1959 = vunpack.c.l.b16 %v1671
        %v1960 = vunpack.c.l.b16 %v1672
        %v1961 = vpack.c.b16 %v1818, %v1817
        %v1962 = vpack.c.b16 %v1820, %v1819
        %v1963 = vpack.c.b16 %v1822, %v1821
        %v1964 = vpack.c.b16 %v1824, %v1823
        %v1965 = vpack.c.b16 %v1826, %v1825
        %v1966 = vpack.c.b16 %v1828, %v1827
        %v1967 = vpack.c.b16 %v1830, %v1829
        %v1968 = vpack.c.b16 %v1832, %v1831
        %v1969 = vpack.c.b16 %v1834, %v1833
        %v1970 = vpack.c.b16 %v1836, %v1835
        %v1971 = vpack.c.b16 %v1838, %v1837
        %v1972 = vpack.c.b16 %v1840, %v1839
        %v1973 = vpack.c.b16 %v1842, %v1841
        %v1974 = vpack.c.b16 %v1844, %v1843
        %v1975 = vpack.c.b16 %v1846, %v1845
        %v1976 = vpack.c.b16 %v1848, %v1847
        %v1977 = vpack.c.b16 %v1850, %v1849
        %v1978 = vpack.c.b16 %v1852, %v1851
        %v1979 = vpack.c.b16 %v1854, %v1853
        %v1980 = vpack.c.b16 %v1856, %v1855
        %v1981 = vpack.c.b16 %v1858, %v1857
        %v1982 = vpack.c.b16 %v1860, %v1859
        %v1983 = vpack.c.b16 %v1862, %v1861
        %v1984 = vpack.c.b16 %v1864, %v1863
        %v1985 = vpack.c.b16 %v1866, %v1865
        %v1986 = vpack.c.b16 %v1868, %v1867
        %v1987 = vpack.c.b16 %v1870, %v1869
        %v1988 = vpack.c.b16 %v1872, %v1871
        %v1989 = vpack.c.b16 %v1874, %v1873
        %v1990 = vpack.c.b16 %v1876, %v1875
        %v1991 = vpack.c.b16 %v1878, %v1877
        %v1992 = vpack.c.b16 %v1880, %v1879
        %v1993 = vpack.c.b16 %v1882, %v1881
        %v1994 = vpack.c.b16 %v1884, %v1883
        %v1995 = vpack.c.b16 %v1886, %v1885
        %v1996 = vpack.c.b16 %v1888, %v1887
        %v1997 = vpack.c.b16 %v1890, %v1889
        %v1998 = vpack.c.b16 %v1892, %v1891
        %v1999 = vpack.c.b16 %v1894, %v1893
        %v2000 = vpack.c.b16 %v1896, %v1895
        %v2001 = vpack.c.b16 %v1898, %v1897
        %v2002 = vpack.c.b16 %v1900, %v1899
        %v2003 = vpack.c.b16 %v1902, %v1901
        %v2004 = vpack.c.b16 %v1904, %v1903
        %v2005 = vpack.c.b16 %v1906, %v1905
        %v2006 = vpack.c.b16 %v1908, %v1907
        %v2007 = vpack.c.b16 %v1910, %v1909
        %v2008 = vpack.c.b16 %v1912, %v1911
        %v2009 = vpack.c.b16 %v1914, %v1913
        %v2010 = vpack.c.b16 %v1916, %v1915
        %v2011 = vpack.c.b16 %v1918, %v1917
        %v2012 = vpack.c.b16 %v1920, %v1919
        %v2013 = vpack.c.b16 %v1922, %v1921
        %v2014 = vpack.c.b16 %v1924, %v1923
        %v2015 = vpack.c.b16 %v1926, %v1925
        %v2016 = vpack.c.b16 %v1928, %v1927
        %v2017 = vpack.c.b16 %v1930, %v1929
        %v2018 = vpack.c.b16 %v1932, %v1931
        %v2019 = vpack.c.b16 %v1934, %v1933
        %v2020 = vpack.c.b16 %v1936, %v1935
        %v2021 = vpack.c.b16 %v1938, %v1937
        %v2022 = vpack.c.b16 %v1940, %v1939
        %v2023 = vpack.c.b16 %v1942, %v1941
        %v2024 = vpack.c.b16 %v1944, %v1943
        %v2025 = vpack.c.b16 %v1946, %v1945
        %v2026 = vpack.c.b16 %v1948, %v1947
        %v2027 = vpack.c.b16 %v1950, %v1949
        %v2028 = vpack.c.b16 %v1952, %v1951
        %v2029 = vpack.c.b16 %v1954, %v1953
        %v2030 = vpack.c.b16 %v1956, %v1955
        %v2031 = vpack.c.b16 %v1958, %v1957
        %v2032 = vpack.c.b16 %v1960, %v1959
        %2105 = vmatprep.subr.bf16.mxu0 0
        %2106 = vmatpush1.bf16.msra.mxu0 %v1961
        %2107 = vmatprep.subr.bf16.mxu0 0
        %2108 = vmatpush1.bf16.msra.mxu0 %v1962
        %2109 = vmatprep.subr.bf16.mxu0 0
        %2110 = vmatpush1.bf16.msra.mxu0 %v1963
        %2111 = vmatprep.subr.bf16.mxu0 0
        %2112 = vmatpush1.bf16.msra.mxu0 %v1964
        %2113 = vmatprep.subr.bf16.mxu0 0
        %2114 = vmatpush1.bf16.msra.mxu0 %v1965
        %2115 = vmatprep.subr.bf16.mxu0 0
        %2116 = vmatpush1.bf16.msra.mxu0 %v1966
        %2117 = vmatprep.subr.bf16.mxu0 0
        %2118 = vmatpush1.bf16.msra.mxu0 %v1967
        %2119 = vmatprep.subr.bf16.mxu0 0
        %2120 = vmatpush1.bf16.msra.mxu0 %v1968
        %2121 = vmatprep.subr.bf16.mxu0 0
        %2122 = vmatpush1.bf16.msra.mxu0 %v1969
        %2123 = vmatprep.subr.bf16.mxu0 0
        %2124 = vmatpush1.bf16.msra.mxu0 %v1970
        %2125 = vmatprep.subr.bf16.mxu0 0
        %2126 = vmatpush1.bf16.msra.mxu0 %v1971
        %2127 = vmatprep.subr.bf16.mxu0 0
        %2128 = vmatpush1.bf16.msra.mxu0 %v1972
        %2129 = vmatprep.subr.bf16.mxu0 0
        %2130 = vmatpush1.bf16.msra.mxu0 %v1973
        %2131 = vmatprep.subr.bf16.mxu0 0
        %2132 = vmatpush1.bf16.msra.mxu0 %v1974
        %2133 = vmatprep.subr.bf16.mxu0 0
        %2134 = vmatpush1.bf16.msra.mxu0 %v1975
        %2135 = vmatprep.subr.bf16.mxu0 0
        %2136 = vmatpush1.bf16.msra.mxu0 %v1976
        %2137 = vmatprep.mubr.bf16.mxu0 %v931
        %2138 = vmatmul.mubr.bf16.gmra.mrb[0].mxu0 %v820
        %v2139 = vpop.f32.mrb[0].mxu0
        %v2140 = vadd.f32 0.0, %v2139
        %v2141 = vpop.f32.mrb[0].mxu0
        %v2142 = vpop.f32.mrb[0].mxu0
        %v2143 = vadd.f32 0.0, %v2142
        %v2144 = vpop.f32.mrb[0].mxu0
        %2145 = vmatprep.mubr.bf16.mxu0 %v932
        %2146 = vmatmul.mubr.bf16.gmra.mrb[0].mxu0 %v821
        %v2147 = vpop.f32.mrb[0].mxu0
        %v2148 = vadd.f32 0.0, %v2147
        %v2149 = vpop.f32.mrb[0].mxu0
        %v2150 = vpop.f32.mrb[0].mxu0
        %v2151 = vadd.f32 0.0, %v2150
        %v2152 = vpop.f32.mrb[0].mxu0
        %2153 = vmatprep.mubr.bf16.mxu0 %v933
        %2154 = vmatmul.mubr.bf16.gmra.mrb[0].mxu0 %v822
        %v2155 = vpop.f32.mrb[0].mxu0
        %v2156 = vadd.f32 0.0, %v2155
        %v2157 = vpop.f32.mrb[0].mxu0
        %v2158 = vpop.f32.mrb[0].mxu0
        %v2159 = vadd.f32 0.0, %v2158
        %v2160 = vpop.f32.mrb[0].mxu0
        %2161 = vmatprep.mubr.bf16.mxu0 %v934
        %2162 = vmatmul.mubr.bf16.gmra.mrb[0].mxu0 %v823
        %v2163 = vpop.f32.mrb[0].mxu0
        %v2164 = vadd.f32 0.0, %v2163
        %v2165 = vpop.f32.mrb[0].mxu0
        %v2166 = vpop.f32.mrb[0].mxu0
        %v2167 = vadd.f32 0.0, %v2166
        %v2168 = vpop.f32.mrb[0].mxu0
        %2169 = vmatprep.mubr.bf16.mxu0 %v935
        %2170 = vmatmul.mubr.bf16.gmra.mrb[0].mxu0 %v824
        %v2171 = vpop.f32.mrb[0].mxu0
        %v2172 = vadd.f32 0.0, %v2171
        %v2173 = vpop.f32.mrb[0].mxu0
        %v2174 = vpop.f32.mrb[0].mxu0
        %v2175 = vadd.f32 0.0, %v2174
        %v2176 = vpop.f32.mrb[0].mxu0
        %2177 = vmatprep.mubr.bf16.mxu0 %v936
        %2178 = vmatmul.mubr.bf16.gmra.mrb[0].mxu0 %v825
        %v2179 = vpop.f32.mrb[0].mxu0
        %v2180 = vadd.f32 0.0, %v2179
        %v2181 = vpop.f32.mrb[0].mxu0
        %v2182 = vpop.f32.mrb[0].mxu0
        %v2183 = vadd.f32 0.0, %v2182
        %v2184 = vpop.f32.mrb[0].mxu0
        %2185 = vmatprep.mubr.bf16.mxu0 %v937
        %2186 = vmatmul.mubr.bf16.gmra.mrb[0].mxu0 %v826
        %v2187 = vpop.f32.mrb[0].mxu0
        %v2188 = vadd.f32 0.0, %v2187
        %v2189 = vpop.f32.mrb[0].mxu0
        %v2190 = vpop.f32.mrb[0].mxu0
        %v2191 = vadd.f32 0.0, %v2190
        %v2192 = vpop.f32.mrb[0].mxu0
        %2193 = vmatprep.mubr.bf16.mxu0 %v938
        %2194 = vmatmul.mubr.bf16.gmra.mrb[0].mxu0 %v827
        %v2195 = vpop.f32.mrb[0].mxu0
        %v2196 = vadd.f32 0.0, %v2195
        %v2197 = vpop.f32.mrb[0].mxu0
        %v2198 = vpop.f32.mrb[0].mxu0
        %v2199 = vadd.f32 0.0, %v2198
        %v2200 = vpop.f32.mrb[0].mxu0
        %2201 = vmatprep.mubr.bf16.mxu0 %v939
        %2202 = vmatmul.mubr.bf16.gmra.mrb[0].mxu0 %v828
        %v2203 = vpop.f32.mrb[0].mxu0
        %v2204 = vadd.f32 0.0, %v2203
        %v2205 = vpop.f32.mrb[0].mxu0
        %v2206 = vpop.f32.mrb[0].mxu0
        %v2207 = vadd.f32 0.0, %v2206
        %v2208 = vpop.f32.mrb[0].mxu0
        %2209 = vmatprep.mubr.bf16.mxu0 %v940
        %2210 = vmatmul.mubr.bf16.gmra.mrb[0].mxu0 %v829
        %v2211 = vpop.f32.mrb[0].mxu0
        %v2212 = vadd.f32 0.0, %v2211
        %v2213 = vpop.f32.mrb[0].mxu0
        %v2214 = vpop.f32.mrb[0].mxu0
        %v2215 = vadd.f32 0.0, %v2214
        %v2216 = vpop.f32.mrb[0].mxu0
        %2217 = vmatprep.mubr.bf16.mxu0 %v941
        %2218 = vmatmul.mubr.bf16.gmra.mrb[0].mxu0 %v830
        %v2219 = vpop.f32.mrb[0].mxu0
        %v2220 = vadd.f32 0.0, %v2219
        %v2221 = vpop.f32.mrb[0].mxu0
        %v2222 = vpop.f32.mrb[0].mxu0
        %v2223 = vadd.f32 0.0, %v2222
        %v2224 = vpop.f32.mrb[0].mxu0
        %2225 = vmatprep.mubr.bf16.mxu0 %v942
        %2226 = vmatmul.mubr.bf16.gmra.mrb[0].mxu0 %v831
        %v2227 = vpop.f32.mrb[0].mxu0
        %v2228 = vadd.f32 0.0, %v2227
        %v2229 = vpop.f32.mrb[0].mxu0
        %v2230 = vpop.f32.mrb[0].mxu0
        %v2231 = vadd.f32 0.0, %v2230
        %v2232 = vpop.f32.mrb[0].mxu0
        %2233 = vmatprep.mubr.bf16.mxu0 %v943
        %2234 = vmatmul.mubr.bf16.gmra.mrb[0].mxu0 %v832
        %v2235 = vpop.f32.mrb[0].mxu0
        %v2236 = vadd.f32 0.0, %v2235
        %v2237 = vpop.f32.mrb[0].mxu0
        %v2238 = vpop.f32.mrb[0].mxu0
        %v2239 = vadd.f32 0.0, %v2238
        %v2240 = vpop.f32.mrb[0].mxu0
        %2241 = vmatprep.mubr.bf16.mxu0 %v944
        %2242 = vmatmul.mubr.bf16.gmra.mrb[0].mxu0 %v833
        %v2243 = vpop.f32.mrb[0].mxu0
        %v2244 = vadd.f32 0.0, %v2243
        %v2245 = vpop.f32.mrb[0].mxu0
        %v2246 = vpop.f32.mrb[0].mxu0
        %v2247 = vadd.f32 0.0, %v2246
        %v2248 = vpop.f32.mrb[0].mxu0
        %2249 = vmatprep.mubr.bf16.mxu0 %v945
        %2250 = vmatmul.mubr.bf16.gmra.mrb[0].mxu0 %v834
        %v2251 = vpop.f32.mrb[0].mxu0
        %v2252 = vadd.f32 0.0, %v2251
        %v2253 = vpop.f32.mrb[0].mxu0
        %v2254 = vpop.f32.mrb[0].mxu0
        %v2255 = vadd.f32 0.0, %v2254
        %v2256 = vpop.f32.mrb[0].mxu0
        %2257 = vmatprep.mubr.bf16.mxu0 %v946
        %2258 = vmatmul.mubr.bf16.gmra.mrb[0].mxu0 %v835
        %v2259 = vpop.f32.mrb[0].mxu0
        %v2260 = vadd.f32 0.0, %v2259
        %v2261 = vpop.f32.mrb[0].mxu0
        %v2262 = vpop.f32.mrb[0].mxu0
        %v2263 = vadd.f32 0.0, %v2262
        %v2264 = vpop.f32.mrb[0].mxu0
        %2265 = vmatprep.mubr.bf16.mxu0 %v947
        %2266 = vmatmul.mubr.bf16.gmra.mrb[0].mxu0 %v836
        %v2267 = vpop.f32.mrb[0].mxu0
        %v2268 = vadd.f32 0.0, %v2267
        %v2269 = vpop.f32.mrb[0].mxu0
        %v2270 = vpop.f32.mrb[0].mxu0
        %v2271 = vadd.f32 0.0, %v2270
        %v2272 = vpop.f32.mrb[0].mxu0
        %2273 = vmatprep.mubr.bf16.mxu0 %v948
        %2274 = vmatmul.mubr.bf16.gmra.mrb[0].mxu0 %v837
        %v2275 = vpop.f32.mrb[0].mxu0
        %v2276 = vadd.f32 0.0, %v2275
        %v2277 = vpop.f32.mrb[0].mxu0
        %v2278 = vpop.f32.mrb[0].mxu0
        %v2279 = vadd.f32 0.0, %v2278
        %v2280 = vpop.f32.mrb[0].mxu0
        %2281 = vmatprep.mubr.bf16.mxu0 %v949
        %2282 = vmatmul.mubr.bf16.gmra.mrb[0].mxu0 %v838
        %v2283 = vpop.f32.mrb[0].mxu0
        %v2284 = vadd.f32 0.0, %v2283
        %v2285 = vpop.f32.mrb[0].mxu0
        %v2286 = vpop.f32.mrb[0].mxu0
        %v2287 = vadd.f32 0.0, %v2286
        %v2288 = vpop.f32.mrb[0].mxu0
        %2289 = vmatprep.mubr.bf16.mxu0 %v950
        %2290 = vmatmul.mubr.bf16.gmra.mrb[0].mxu0 %v839
        %v2291 = vpop.f32.mrb[0].mxu0
        %v2292 = vadd.f32 0.0, %v2291
        %v2293 = vpop.f32.mrb[0].mxu0
        %v2294 = vpop.f32.mrb[0].mxu0
        %v2295 = vadd.f32 0.0, %v2294
        %v2296 = vpop.f32.mrb[0].mxu0
        %2297 = vmatprep.mubr.bf16.mxu0 %v951
        %2298 = vmatmul.mubr.bf16.gmra.mrb[0].mxu0 %v840
        %v2299 = vpop.f32.mrb[0].mxu0
        %v2300 = vadd.f32 0.0, %v2299
        %v2301 = vpop.f32.mrb[0].mxu0
        %v2302 = vpop.f32.mrb[0].mxu0
        %v2303 = vadd.f32 0.0, %v2302
        %v2304 = vpop.f32.mrb[0].mxu0
        %2305 = vmatprep.mubr.bf16.mxu0 %v952
        %2306 = vmatmul.mubr.bf16.gmra.mrb[0].mxu0 %v841
        %v2307 = vpop.f32.mrb[0].mxu0
        %v2308 = vadd.f32 0.0, %v2307
        %v2309 = vpop.f32.mrb[0].mxu0
        %v2310 = vpop.f32.mrb[0].mxu0
        %v2311 = vadd.f32 0.0, %v2310
        %v2312 = vpop.f32.mrb[0].mxu0
        %2313 = vdwg.mxu0
        %2314 = vmatprep.subr.bf16.mxu0 0
        %2315 = vmatpush1.bf16.msra.mxu0 %v1977
        %2316 = vmatprep.subr.bf16.mxu0 0
        %2317 = vmatpush1.bf16.msra.mxu0 %v1978
        %2318 = vmatprep.subr.bf16.mxu0 0
        %2319 = vmatpush1.bf16.msra.mxu0 %v1979
        %2320 = vmatprep.subr.bf16.mxu0 0
        %2321 = vmatpush1.bf16.msra.mxu0 %v1980
        %2322 = vmatprep.subr.bf16.mxu0 0
        %2323 = vmatpush1.bf16.msra.mxu0 %v1981
        %2324 = vmatprep.subr.bf16.mxu0 0
        %2325 = vmatpush1.bf16.msra.mxu0 %v1982
        %2326 = vmatprep.subr.bf16.mxu0 0
        %2327 = vmatpush1.bf16.msra.mxu0 %v1983
        %2328 = vmatprep.subr.bf16.mxu0 0
        %2329 = vmatpush1.bf16.msra.mxu0 %v1984
        %2330 = vmatprep.subr.bf16.mxu0 0
        %2331 = vmatpush1.bf16.msra.mxu0 %v1985
        %2332 = vmatprep.subr.bf16.mxu0 0
        %2333 = vmatpush1.bf16.msra.mxu0 %v1986
        %2334 = vmatprep.subr.bf16.mxu0 0
        %2335 = vmatpush1.bf16.msra.mxu0 %v1987
        %2336 = vmatprep.subr.bf16.mxu0 0
        %2337 = vmatpush1.bf16.msra.mxu0 %v1988
        %2338 = vmatprep.subr.bf16.mxu0 0
        %2339 = vmatpush1.bf16.msra.mxu0 %v1989
        %2340 = vmatprep.subr.bf16.mxu0 0
        %2341 = vmatpush1.bf16.msra.mxu0 %v1990
        %2342 = vmatprep.subr.bf16.mxu0 0
        %2343 = vmatpush1.bf16.msra.mxu0 %v1991
        %2344 = vmatprep.subr.bf16.mxu0 0
        %2345 = vmatpush1.bf16.msra.mxu0 %v1992
        %2346 = vmatprep.mubr.bf16.mxu0 %v1043
        %2347 = vmatmul.mubr.bf16.gmra.mrb[0].mxu0 %v1042
        %v2348 = vpop.f32.mrb[0].mxu0
        %v2349 = vadd.f32 %v2140, %v2348
        %v2350 = vpop.f32.mrb[0].mxu0
        %v2351 = vpop.f32.mrb[0].mxu0
        %v2352 = vadd.f32 %v2143, %v2351
        %v2353 = vpop.f32.mrb[0].mxu0
        %2354 = vmatprep.mubr.bf16.mxu0 %v1044
        %2355 = vmatmul.mubr.bf16.gmra.mrb[0].mxu0 %v1043
        %v2356 = vpop.f32.mrb[0].mxu0
        %v2357 = vadd.f32 %v2148, %v2356
        %v2358 = vpop.f32.mrb[0].mxu0
        %v2359 = vpop.f32.mrb[0].mxu0
        %v2360 = vadd.f32 %v2151, %v2359
        %v2361 = vpop.f32.mrb[0].mxu0
        %2362 = vmatprep.mubr.bf16.mxu0 %v1045
        %2363 = vmatmul.mubr.bf16.gmra.mrb[0].mxu0 %v1044
        %v2364 = vpop.f32.mrb[0].mxu0
        %v2365 = vadd.f32 %v2156, %v2364
        %v2366 = vpop.f32.mrb[0].mxu0
        %v2367 = vpop.f32.mrb[0].mxu0
        %v2368 = vadd.f32 %v2159, %v2367
        %v2369 = vpop.f32.mrb[0].mxu0
        %2370 = vmatprep.mubr.bf16.mxu0 %v1046
        %2371 = vmatmul.mubr.bf16.gmra.mrb[0].mxu0 %v1045
        %v2372 = vpop.f32.mrb[0].mxu0
        %v2373 = vadd.f32 %v2164, %v2372
        %v2374 = vpop.f32.mrb[0].mxu0
        %v2375 = vpop.f32.mrb[0].mxu0
        %v2376 = vadd.f32 %v2167, %v2375
        %v2377 = vpop.f32.mrb[0].mxu0
        %2378 = vmatprep.mubr.bf16.mxu0 %v1047
        %2379 = vmatmul.mubr.bf16.gmra.mrb[0].mxu0 %v1046
        %v2380 = vpop.f32.mrb[0].mxu0
        %v2381 = vadd.f32 %v2172, %v2380
        %v2382 = vpop.f32.mrb[0].mxu0
        %v2383 = vpop.f32.mrb[0].mxu0
        %v2384 = vadd.f32 %v2175, %v2383
        %v2385 = vpop.f32.mrb[0].mxu0
        %2386 = vmatprep.mubr.bf16.mxu0 %v1048
        %2387 = vmatmul.mubr.bf16.gmra.mrb[0].mxu0 %v1047
        %v2388 = vpop.f32.mrb[0].mxu0
        %v2389 = vadd.f32 %v2180, %v2388
        %v2390 = vpop.f32.mrb[0].mxu0
        %v2391 = vpop.f32.mrb[0].mxu0
        %v2392 = vadd.f32 %v2183, %v2391
        %v2393 = vpop.f32.mrb[0].mxu0
        %2394 = vmatprep.mubr.bf16.mxu0 %v1049
        %2395 = vmatmul.mubr.bf16.gmra.mrb[0].mxu0 %v1048
        %v2396 = vpop.f32.mrb[0].mxu0
        %v2397 = vadd.f32 %v2188, %v2396
        %v2398 = vpop.f32.mrb[0].mxu0
        %v2399 = vpop.f32.mrb[0].mxu0
        %v2400 = vadd.f32 %v2191, %v2399
        %v2401 = vpop.f32.mrb[0].mxu0
        %2402 = vmatprep.mubr.bf16.mxu0 %v1050
        %2403 = vmatmul.mubr.bf16.gmra.mrb[0].mxu0 %v1049
        %v2404 = vpop.f32.mrb[0].mxu0
        %v2405 = vadd.f32 %v2196, %v2404
        %v2406 = vpop.f32.mrb[0].mxu0
        %v2407 = vpop.f32.mrb[0].mxu0
        %v2408 = vadd.f32 %v2199, %v2407
        %v2409 = vpop.f32.mrb[0].mxu0
        %2410 = vmatprep.mubr.bf16.mxu0 %v1051
        %2411 = vmatmul.mubr.bf16.gmra.mrb[0].mxu0 %v1050
        %v2412 = vpop.f32.mrb[0].mxu0
        %v2413 = vadd.f32 %v2204, %v2412
        %v2414 = vpop.f32.mrb[0].mxu0
        %v2415 = vpop.f32.mrb[0].mxu0
        %v2416 = vadd.f32 %v2207, %v2415
        %v2417 = vpop.f32.mrb[0].mxu0
        %2418 = vmatprep.mubr.bf16.mxu0 %v1052
        %2419 = vmatmul.mubr.bf16.gmra.mrb[0].mxu0 %v1051
        %v2420 = vpop.f32.mrb[0].mxu0
        %v2421 = vadd.f32 %v2212, %v2420
        %v2422 = vpop.f32.mrb[0].mxu0
        %v2423 = vpop.f32.mrb[0].mxu0
        %v2424 = vadd.f32 %v2215, %v2423
        %v2425 = vpop.f32.mrb[0].mxu0
        %2426 = vmatprep.mubr.bf16.mxu0 %v1053
        %2427 = vmatmul.mubr.bf16.gmra.mrb[0].mxu0 %v1052
        %v2428 = vpop.f32.mrb[0].mxu0
        %v2429 = vadd.f32 %v2220, %v2428
        %v2430 = vpop.f32.mrb[0].mxu0
        %v2431 = vpop.f32.mrb[0].mxu0
        %v2432 = vadd.f32 %v2223, %v2431
        %v2433 = vpop.f32.mrb[0].mxu0
        %2434 = vmatprep.mubr.bf16.mxu0 %v1054
        %2435 = vmatmul.mubr.bf16.gmra.mrb[0].mxu0 %v1053
        %v2436 = vpop.f32.mrb[0].mxu0
        %v2437 = vadd.f32 %v2228, %v2436
        %v2438 = vpop.f32.mrb[0].mxu0
        %v2439 = vpop.f32.mrb[0].mxu0
        %v2440 = vadd.f32 %v2231, %v2439
        %v2441 = vpop.f32.mrb[0].mxu0
        %2442 = vmatprep.mubr.bf16.mxu0 %v1055
        %2443 = vmatmul.mubr.bf16.gmra.mrb[0].mxu0 %v1054
        %v2444 = vpop.f32.mrb[0].mxu0
        %v2445 = vadd.f32 %v2236, %v2444
        %v2446 = vpop.f32.mrb[0].mxu0
        %v2447 = vpop.f32.mrb[0].mxu0
        %v2448 = vadd.f32 %v2239, %v2447
        %v2449 = vpop.f32.mrb[0].mxu0
        %2450 = vmatprep.mubr.bf16.mxu0 %v1056
        %2451 = vmatmul.mubr.bf16.gmra.mrb[0].mxu0 %v1055
        %v2452 = vpop.f32.mrb[0].mxu0
        %v2453 = vadd.f32 %v2244, %v2452
        %v2454 = vpop.f32.mrb[0].mxu0
        %v2455 = vpop.f32.mrb[0].mxu0
        %v2456 = vadd.f32 %v2247, %v2455
        %v2457 = vpop.f32.mrb[0].mxu0
        %2458 = vmatprep.mubr.bf16.mxu0 %v1057
        %2459 = vmatmul.mubr.bf16.gmra.mrb[0].mxu0 %v1056
        %v2460 = vpop.f32.mrb[0].mxu0
        %v2461 = vadd.f32 %v2252, %v2460
        %v2462 = vpop.f32.mrb[0].mxu0
        %v2463 = vpop.f32.mrb[0].mxu0
        %v2464 = vadd.f32 %v2255, %v2463
        %v2465 = vpop.f32.mrb[0].mxu0
        %2466 = vmatprep.mubr.bf16.mxu0 %v1058
        %2467 = vmatmul.mubr.bf16.gmra.mrb[0].mxu0 %v1057
        %v2468 = vpop.f32.mrb[0].mxu0
        %v2469 = vadd.f32 %v2260, %v2468
        %v2470 = vpop.f32.mrb[0].mxu0
        %v2471 = vpop.f32.mrb[0].mxu0
        %v2472 = vadd.f32 %v2263, %v2471
        %v2473 = vpop.f32.mrb[0].mxu0
        %2474 = vmatprep.mubr.bf16.mxu0 %v1059
        %2475 = vmatmul.mubr.bf16.gmra.mrb[0].mxu0 %v1058
        %v2476 = vpop.f32.mrb[0].mxu0
        %v2477 = vadd.f32 %v2268, %v2476
        %v2478 = vpop.f32.mrb[0].mxu0
        %v2479 = vpop.f32.mrb[0].mxu0
        %v2480 = vadd.f32 %v2271, %v2479
        %v2481 = vpop.f32.mrb[0].mxu0
        %2482 = vmatprep.mubr.bf16.mxu0 %v1060
        %2483 = vmatmul.mubr.bf16.gmra.mrb[0].mxu0 %v1059
        %v2484 = vpop.f32.mrb[0].mxu0
        %v2485 = vadd.f32 %v2276, %v2484
        %v2486 = vpop.f32.mrb[0].mxu0
        %v2487 = vpop.f32.mrb[0].mxu0
        %v2488 = vadd.f32 %v2279, %v2487
        %v2489 = vpop.f32.mrb[0].mxu0
        %2490 = vmatprep.mubr.bf16.mxu0 %v1061
        %2491 = vmatmul.mubr.bf16.gmra.mrb[0].mxu0 %v1060
        %v2492 = vpop.f32.mrb[0].mxu0
        %v2493 = vadd.f32 %v2284, %v2492
        %v2494 = vpop.f32.mrb[0].mxu0
        %v2495 = vpop.f32.mrb[0].mxu0
        %v2496 = vadd.f32 %v2287, %v2495
        %v2497 = vpop.f32.mrb[0].mxu0
        %2498 = vmatprep.mubr.bf16.mxu0 %v1062
        %2499 = vmatmul.mubr.bf16.gmra.mrb[0].mxu0 %v1061
        %v2500 = vpop.f32.mrb[0].mxu0
        %v2501 = vadd.f32 %v2292, %v2500
        %v2502 = vpop.f32.mrb[0].mxu0
        %v2503 = vpop.f32.mrb[0].mxu0
        %v2504 = vadd.f32 %v2295, %v2503
        %v2505 = vpop.f32.mrb[0].mxu0
        %2506 = vmatprep.mubr.bf16.mxu0 %v1063
        %2507 = vmatmul.mubr.bf16.gmra.mrb[0].mxu0 %v1062
        %v2508 = vpop.f32.mrb[0].mxu0
        %v2509 = vadd.f32 %v2300, %v2508
        %v2510 = vpop.f32.mrb[0].mxu0
        %v2511 = vpop.f32.mrb[0].mxu0
        %v2512 = vadd.f32 %v2303, %v2511
        %v2513 = vpop.f32.mrb[0].mxu0
        %2514 = vmatprep.mubr.bf16.mxu0 %v1042
        %2515 = vmatmul.mubr.bf16.gmra.mrb[0].mxu0 %v1063
        %v2516 = vpop.f32.mrb[0].mxu0
        %v2517 = vadd.f32 %v2308, %v2516
        %v2518 = vpop.f32.mrb[0].mxu0
        %v2519 = vpop.f32.mrb[0].mxu0
        %v2520 = vadd.f32 %v2311, %v2519
        %v2521 = vpop.f32.mrb[0].mxu0
        %2522 = vdwg.mxu0
        %2523 = vmatprep.subr.bf16.mxu0 0
        %2524 = vmatpush1.bf16.msra.mxu0 %v1993
        %2525 = vmatprep.subr.bf16.mxu0 0
        %2526 = vmatpush1.bf16.msra.mxu0 %v1994
        %2527 = vmatprep.subr.bf16.mxu0 0
        %2528 = vmatpush1.bf16.msra.mxu0 %v1995
        %2529 = vmatprep.subr.bf16.mxu0 0
        %2530 = vmatpush1.bf16.msra.mxu0 %v1996
        %2531 = vmatprep.subr.bf16.mxu0 0
        %2532 = vmatpush1.bf16.msra.mxu0 %v1997
        %2533 = vmatprep.subr.bf16.mxu0 0
        %2534 = vmatpush1.bf16.msra.mxu0 %v1998
        %2535 = vmatprep.subr.bf16.mxu0 0
        %2536 = vmatpush1.bf16.msra.mxu0 %v1999
        %2537 = vmatprep.subr.bf16.mxu0 0
        %2538 = vmatpush1.bf16.msra.mxu0 %v2000
        %2539 = vmatprep.subr.bf16.mxu0 0
        %2540 = vmatpush1.bf16.msra.mxu0 %v2001
        %2541 = vmatprep.subr.bf16.mxu0 0
        %2542 = vmatpush1.bf16.msra.mxu0 %v2002
        %2543 = vmatprep.subr.bf16.mxu0 0
        %2544 = vmatpush1.bf16.msra.mxu0 %v2003
        %2545 = vmatprep.subr.bf16.mxu0 0
        %2546 = vmatpush1.bf16.msra.mxu0 %v2004
        %2547 = vmatprep.subr.bf16.mxu0 0
        %2548 = vmatpush1.bf16.msra.mxu0 %v2005
        %2549 = vmatprep.subr.bf16.mxu0 0
        %2550 = vmatpush1.bf16.msra.mxu0 %v2006
        %2551 = vmatprep.subr.bf16.mxu0 0
        %2552 = vmatpush1.bf16.msra.mxu0 %v2007
        %2553 = vmatprep.subr.bf16.mxu0 0
        %2554 = vmatpush1.bf16.msra.mxu0 %v2008
        %2555 = vmatprep.mubr.bf16.mxu0 %v1153
        %2556 = vmatmul.mubr.bf16.gmra.mrb[0].mxu0 %v1485
        %v2557 = vpop.f32.mrb[0].mxu0
        %v2558 = vadd.f32 %v2349, %v2557
        %v2559 = vpop.f32.mrb[0].mxu0
        %v2560 = vpop.f32.mrb[0].mxu0
        %v2561 = vadd.f32 %v2352, %v2560
        %v2562 = vpop.f32.mrb[0].mxu0
        %2563 = vmatprep.mubr.bf16.mxu0 %v1154
        %2564 = vmatmul.mubr.bf16.gmra.mrb[0].mxu0 %v1486
        %v2565 = vpop.f32.mrb[0].mxu0
        %v2566 = vadd.f32 %v2357, %v2565
        %v2567 = vpop.f32.mrb[0].mxu0
        %v2568 = vpop.f32.mrb[0].mxu0
        %v2569 = vadd.f32 %v2360, %v2568
        %v2570 = vpop.f32.mrb[0].mxu0
        %2571 = vmatprep.mubr.bf16.mxu0 %v1155
        %2572 = vmatmul.mubr.bf16.gmra.mrb[0].mxu0 %v1487
        %v2573 = vpop.f32.mrb[0].mxu0
        %v2574 = vadd.f32 %v2365, %v2573
        %v2575 = vpop.f32.mrb[0].mxu0
        %v2576 = vpop.f32.mrb[0].mxu0
        %v2577 = vadd.f32 %v2368, %v2576
        %v2578 = vpop.f32.mrb[0].mxu0
        %2579 = vmatprep.mubr.bf16.mxu0 %v1156
        %2580 = vmatmul.mubr.bf16.gmra.mrb[0].mxu0 %v1488
        %v2581 = vpop.f32.mrb[0].mxu0
        %v2582 = vadd.f32 %v2373, %v2581
        %v2583 = vpop.f32.mrb[0].mxu0
        %v2584 = vpop.f32.mrb[0].mxu0
        %v2585 = vadd.f32 %v2376, %v2584
        %v2586 = vpop.f32.mrb[0].mxu0
        %2587 = vmatprep.mubr.bf16.mxu0 %v1157
        %2588 = vmatmul.mubr.bf16.gmra.mrb[0].mxu0 %v1489
        %v2589 = vpop.f32.mrb[0].mxu0
        %v2590 = vadd.f32 %v2381, %v2589
        %v2591 = vpop.f32.mrb[0].mxu0
        %v2592 = vpop.f32.mrb[0].mxu0
        %v2593 = vadd.f32 %v2384, %v2592
        %v2594 = vpop.f32.mrb[0].mxu0
        %2595 = vmatprep.mubr.bf16.mxu0 %v1158
        %2596 = vmatmul.mubr.bf16.gmra.mrb[0].mxu0 %v1490
        %v2597 = vpop.f32.mrb[0].mxu0
        %v2598 = vadd.f32 %v2389, %v2597
        %v2599 = vpop.f32.mrb[0].mxu0
        %v2600 = vpop.f32.mrb[0].mxu0
        %v2601 = vadd.f32 %v2392, %v2600
        %v2602 = vpop.f32.mrb[0].mxu0
        %2603 = vmatprep.mubr.bf16.mxu0 %v1159
        %2604 = vmatmul.mubr.bf16.gmra.mrb[0].mxu0 %v1491
        %v2605 = vpop.f32.mrb[0].mxu0
        %v2606 = vadd.f32 %v2397, %v2605
        %v2607 = vpop.f32.mrb[0].mxu0
        %v2608 = vpop.f32.mrb[0].mxu0
        %v2609 = vadd.f32 %v2400, %v2608
        %v2610 = vpop.f32.mrb[0].mxu0
        %2611 = vmatprep.mubr.bf16.mxu0 %v1160
        %2612 = vmatmul.mubr.bf16.gmra.mrb[0].mxu0 %v1492
        %v2613 = vpop.f32.mrb[0].mxu0
        %v2614 = vadd.f32 %v2405, %v2613
        %v2615 = vpop.f32.mrb[0].mxu0
        %v2616 = vpop.f32.mrb[0].mxu0
        %v2617 = vadd.f32 %v2408, %v2616
        %v2618 = vpop.f32.mrb[0].mxu0
        %2619 = vmatprep.mubr.bf16.mxu0 %v1161
        %2620 = vmatmul.mubr.bf16.gmra.mrb[0].mxu0 %v1493
        %v2621 = vpop.f32.mrb[0].mxu0
        %v2622 = vadd.f32 %v2413, %v2621
        %v2623 = vpop.f32.mrb[0].mxu0
        %v2624 = vpop.f32.mrb[0].mxu0
        %v2625 = vadd.f32 %v2416, %v2624
        %v2626 = vpop.f32.mrb[0].mxu0
        %2627 = vmatprep.mubr.bf16.mxu0 %v1162
        %2628 = vmatmul.mubr.bf16.gmra.mrb[0].mxu0 %v1494
        %v2629 = vpop.f32.mrb[0].mxu0
        %v2630 = vadd.f32 %v2421, %v2629
        %v2631 = vpop.f32.mrb[0].mxu0
        %v2632 = vpop.f32.mrb[0].mxu0
        %v2633 = vadd.f32 %v2424, %v2632
        %v2634 = vpop.f32.mrb[0].mxu0
        %2635 = vmatprep.mubr.bf16.mxu0 %v1163
        %2636 = vmatmul.mubr.bf16.gmra.mrb[0].mxu0 %v1495
        %v2637 = vpop.f32.mrb[0].mxu0
        %v2638 = vadd.f32 %v2429, %v2637
        %v2639 = vpop.f32.mrb[0].mxu0
        %v2640 = vpop.f32.mrb[0].mxu0
        %v2641 = vadd.f32 %v2432, %v2640
        %v2642 = vpop.f32.mrb[0].mxu0
        %2643 = vmatprep.mubr.bf16.mxu0 %v1164
        %2644 = vmatmul.mubr.bf16.gmra.mrb[0].mxu0 %v1496
        %v2645 = vpop.f32.mrb[0].mxu0
        %v2646 = vadd.f32 %v2437, %v2645
        %v2647 = vpop.f32.mrb[0].mxu0
        %v2648 = vpop.f32.mrb[0].mxu0
        %v2649 = vadd.f32 %v2440, %v2648
        %v2650 = vpop.f32.mrb[0].mxu0
        %2651 = vmatprep.mubr.bf16.mxu0 %v1165
        %2652 = vmatmul.mubr.bf16.gmra.mrb[0].mxu0 %v1497
        %v2653 = vpop.f32.mrb[0].mxu0
        %v2654 = vadd.f32 %v2445, %v2653
        %v2655 = vpop.f32.mrb[0].mxu0
        %v2656 = vpop.f32.mrb[0].mxu0
        %v2657 = vadd.f32 %v2448, %v2656
        %v2658 = vpop.f32.mrb[0].mxu0
        %2659 = vmatprep.mubr.bf16.mxu0 %v1166
        %2660 = vmatmul.mubr.bf16.gmra.mrb[0].mxu0 %v1498
        %v2661 = vpop.f32.mrb[0].mxu0
        %v2662 = vadd.f32 %v2453, %v2661
        %v2663 = vpop.f32.mrb[0].mxu0
        %v2664 = vpop.f32.mrb[0].mxu0
        %v2665 = vadd.f32 %v2456, %v2664
        %v2666 = vpop.f32.mrb[0].mxu0
        %2667 = vmatprep.mubr.bf16.mxu0 %v1167
        %2668 = vmatmul.mubr.bf16.gmra.mrb[0].mxu0 %v1499
        %v2669 = vpop.f32.mrb[0].mxu0
        %v2670 = vadd.f32 %v2461, %v2669
        %v2671 = vpop.f32.mrb[0].mxu0
        %v2672 = vpop.f32.mrb[0].mxu0
        %v2673 = vadd.f32 %v2464, %v2672
        %v2674 = vpop.f32.mrb[0].mxu0
        %2675 = vmatprep.mubr.bf16.mxu0 %v1168
        %2676 = vmatmul.mubr.bf16.gmra.mrb[0].mxu0 %v1500
        %v2677 = vpop.f32.mrb[0].mxu0
        %v2678 = vadd.f32 %v2469, %v2677
        %v2679 = vpop.f32.mrb[0].mxu0
        %v2680 = vpop.f32.mrb[0].mxu0
        %v2681 = vadd.f32 %v2472, %v2680
        %v2682 = vpop.f32.mrb[0].mxu0
        %2683 = vmatprep.mubr.bf16.mxu0 %v1169
        %2684 = vmatmul.mubr.bf16.gmra.mrb[0].mxu0 %v1501
        %v2685 = vpop.f32.mrb[0].mxu0
        %v2686 = vadd.f32 %v2477, %v2685
        %v2687 = vpop.f32.mrb[0].mxu0
        %v2688 = vpop.f32.mrb[0].mxu0
        %v2689 = vadd.f32 %v2480, %v2688
        %v2690 = vpop.f32.mrb[0].mxu0
        %2691 = vmatprep.mubr.bf16.mxu0 %v1170
        %2692 = vmatmul.mubr.bf16.gmra.mrb[0].mxu0 %v1502
        %v2693 = vpop.f32.mrb[0].mxu0
        %v2694 = vadd.f32 %v2485, %v2693
        %v2695 = vpop.f32.mrb[0].mxu0
        %v2696 = vpop.f32.mrb[0].mxu0
        %v2697 = vadd.f32 %v2488, %v2696
        %v2698 = vpop.f32.mrb[0].mxu0
        %2699 = vmatprep.mubr.bf16.mxu0 %v1171
        %2700 = vmatmul.mubr.bf16.gmra.mrb[0].mxu0 %v1503
        %v2701 = vpop.f32.mrb[0].mxu0
        %v2702 = vadd.f32 %v2493, %v2701
        %v2703 = vpop.f32.mrb[0].mxu0
        %v2704 = vpop.f32.mrb[0].mxu0
        %v2705 = vadd.f32 %v2496, %v2704
        %v2706 = vpop.f32.mrb[0].mxu0
        %2707 = vmatprep.mubr.bf16.mxu0 %v1172
        %2708 = vmatmul.mubr.bf16.gmra.mrb[0].mxu0 %v1504
        %v2709 = vpop.f32.mrb[0].mxu0
        %v2710 = vadd.f32 %v2501, %v2709
        %v2711 = vpop.f32.mrb[0].mxu0
        %v2712 = vpop.f32.mrb[0].mxu0
        %v2713 = vadd.f32 %v2504, %v2712
        %v2714 = vpop.f32.mrb[0].mxu0
        %2715 = vmatprep.mubr.bf16.mxu0 %v1173
        %2716 = vmatmul.mubr.bf16.gmra.mrb[0].mxu0 %v1505
        %v2717 = vpop.f32.mrb[0].mxu0
        %v2718 = vadd.f32 %v2509, %v2717
        %v2719 = vpop.f32.mrb[0].mxu0
        %v2720 = vpop.f32.mrb[0].mxu0
        %v2721 = vadd.f32 %v2512, %v2720
        %v2722 = vpop.f32.mrb[0].mxu0
        %2723 = vmatprep.mubr.bf16.mxu0 %v1174
        %2724 = vmatmul.mubr.bf16.gmra.mrb[0].mxu0 %v1506
        %v2725 = vpop.f32.mrb[0].mxu0
        %v2726 = vadd.f32 %v2517, %v2725
        %v2727 = vpop.f32.mrb[0].mxu0
        %v2728 = vpop.f32.mrb[0].mxu0
        %v2729 = vadd.f32 %v2520, %v2728
        %v2730 = vpop.f32.mrb[0].mxu0
        %2731 = vdwg.mxu0
        %2732 = vmatprep.subr.bf16.mxu0 0
        %2733 = vmatpush1.bf16.msra.mxu0 %v2009
        %2734 = vmatprep.subr.bf16.mxu0 0
        %2735 = vmatpush1.bf16.msra.mxu0 %v2010
        %2736 = vmatprep.subr.bf16.mxu0 0
        %2737 = vmatpush1.bf16.msra.mxu0 %v2011
        %2738 = vmatprep.subr.bf16.mxu0 0
        %2739 = vmatpush1.bf16.msra.mxu0 %v2012
        %2740 = vmatprep.subr.bf16.mxu0 0
        %2741 = vmatpush1.bf16.msra.mxu0 %v2013
        %2742 = vmatprep.subr.bf16.mxu0 0
        %2743 = vmatpush1.bf16.msra.mxu0 %v2014
        %2744 = vmatprep.subr.bf16.mxu0 0
        %2745 = vmatpush1.bf16.msra.mxu0 %v2015
        %2746 = vmatprep.subr.bf16.mxu0 0
        %2747 = vmatpush1.bf16.msra.mxu0 %v2016
        %2748 = vmatprep.subr.bf16.mxu0 0
        %2749 = vmatpush1.bf16.msra.mxu0 %v2017
        %2750 = vmatprep.subr.bf16.mxu0 0
        %2751 = vmatpush1.bf16.msra.mxu0 %v2018
        %2752 = vmatprep.subr.bf16.mxu0 0
        %2753 = vmatpush1.bf16.msra.mxu0 %v2019
        %2754 = vmatprep.subr.bf16.mxu0 0
        %2755 = vmatpush1.bf16.msra.mxu0 %v2020
        %2756 = vmatprep.subr.bf16.mxu0 0
        %2757 = vmatpush1.bf16.msra.mxu0 %v2021
        %2758 = vmatprep.subr.bf16.mxu0 0
        %2759 = vmatpush1.bf16.msra.mxu0 %v2022
        %2760 = vmatprep.subr.bf16.mxu0 0
        %2761 = vmatpush1.bf16.msra.mxu0 %v2023
        %2762 = vmatprep.subr.bf16.mxu0 0
        %2763 = vmatpush1.bf16.msra.mxu0 %v2024
        %2764 = vmatprep.mubr.bf16.mxu0 %v1264
        %2765 = vmatmul.mubr.bf16.gmra.mrb[0].mxu0 %v1154
        %v2766 = vpop.f32.mrb[0].mxu0
        %v2767 = vadd.f32 %v2558, %v2766
        %v2768 = vpop.f32.mrb[0].mxu0
        %v2769 = vpop.f32.mrb[0].mxu0
        %v2770 = vadd.f32 %v2561, %v2769
        %v2771 = vpop.f32.mrb[0].mxu0
        %2772 = vmatprep.mubr.bf16.mxu0 %v1265
        %2773 = vmatmul.mubr.bf16.gmra.mrb[0].mxu0 %v1155
        %v2774 = vpop.f32.mrb[0].mxu0
        %v2775 = vadd.f32 %v2566, %v2774
        %v2776 = vpop.f32.mrb[0].mxu0
        %v2777 = vpop.f32.mrb[0].mxu0
        %v2778 = vadd.f32 %v2569, %v2777
        %v2779 = vpop.f32.mrb[0].mxu0
        %2780 = vmatprep.mubr.bf16.mxu0 %v1266
        %2781 = vmatmul.mubr.bf16.gmra.mrb[0].mxu0 %v1156
        %v2782 = vpop.f32.mrb[0].mxu0
        %v2783 = vadd.f32 %v2574, %v2782
        %v2784 = vpop.f32.mrb[0].mxu0
        %v2785 = vpop.f32.mrb[0].mxu0
        %v2786 = vadd.f32 %v2577, %v2785
        %v2787 = vpop.f32.mrb[0].mxu0
        %2788 = vmatprep.mubr.bf16.mxu0 %v1267
        %2789 = vmatmul.mubr.bf16.gmra.mrb[0].mxu0 %v1157
        %v2790 = vpop.f32.mrb[0].mxu0
        %v2791 = vadd.f32 %v2582, %v2790
        %v2792 = vpop.f32.mrb[0].mxu0
        %v2793 = vpop.f32.mrb[0].mxu0
        %v2794 = vadd.f32 %v2585, %v2793
        %v2795 = vpop.f32.mrb[0].mxu0
        %2796 = vmatprep.mubr.bf16.mxu0 %v1268
        %2797 = vmatmul.mubr.bf16.gmra.mrb[0].mxu0 %v1158
        %v2798 = vpop.f32.mrb[0].mxu0
        %v2799 = vadd.f32 %v2590, %v2798
        %v2800 = vpop.f32.mrb[0].mxu0
        %v2801 = vpop.f32.mrb[0].mxu0
        %v2802 = vadd.f32 %v2593, %v2801
        %v2803 = vpop.f32.mrb[0].mxu0
        %2804 = vmatprep.mubr.bf16.mxu0 %v1269
        %2805 = vmatmul.mubr.bf16.gmra.mrb[0].mxu0 %v1159
        %v2806 = vpop.f32.mrb[0].mxu0
        %v2807 = vadd.f32 %v2598, %v2806
        %v2808 = vpop.f32.mrb[0].mxu0
        %v2809 = vpop.f32.mrb[0].mxu0
        %v2810 = vadd.f32 %v2601, %v2809
        %v2811 = vpop.f32.mrb[0].mxu0
        %2812 = vmatprep.mubr.bf16.mxu0 %v1270
        %2813 = vmatmul.mubr.bf16.gmra.mrb[0].mxu0 %v1160
        %v2814 = vpop.f32.mrb[0].mxu0
        %v2815 = vadd.f32 %v2606, %v2814
        %v2816 = vpop.f32.mrb[0].mxu0
        %v2817 = vpop.f32.mrb[0].mxu0
        %v2818 = vadd.f32 %v2609, %v2817
        %v2819 = vpop.f32.mrb[0].mxu0
        %2820 = vmatprep.mubr.bf16.mxu0 %v1271
        %2821 = vmatmul.mubr.bf16.gmra.mrb[0].mxu0 %v1161
        %v2822 = vpop.f32.mrb[0].mxu0
        %v2823 = vadd.f32 %v2614, %v2822
        %v2824 = vpop.f32.mrb[0].mxu0
        %v2825 = vpop.f32.mrb[0].mxu0
        %v2826 = vadd.f32 %v2617, %v2825
        %v2827 = vpop.f32.mrb[0].mxu0
        %2828 = vmatprep.mubr.bf16.mxu0 %v1272
        %2829 = vmatmul.mubr.bf16.gmra.mrb[0].mxu0 %v1162
        %v2830 = vpop.f32.mrb[0].mxu0
        %v2831 = vadd.f32 %v2622, %v2830
        %v2832 = vpop.f32.mrb[0].mxu0
        %v2833 = vpop.f32.mrb[0].mxu0
        %v2834 = vadd.f32 %v2625, %v2833
        %v2835 = vpop.f32.mrb[0].mxu0
        %2836 = vmatprep.mubr.bf16.mxu0 %v1273
        %2837 = vmatmul.mubr.bf16.gmra.mrb[0].mxu0 %v1163
        %v2838 = vpop.f32.mrb[0].mxu0
        %v2839 = vadd.f32 %v2630, %v2838
        %v2840 = vpop.f32.mrb[0].mxu0
        %v2841 = vpop.f32.mrb[0].mxu0
        %v2842 = vadd.f32 %v2633, %v2841
        %v2843 = vpop.f32.mrb[0].mxu0
        %2844 = vmatprep.mubr.bf16.mxu0 %v1274
        %2845 = vmatmul.mubr.bf16.gmra.mrb[0].mxu0 %v1164
        %v2846 = vpop.f32.mrb[0].mxu0
        %v2847 = vadd.f32 %v2638, %v2846
        %v2848 = vpop.f32.mrb[0].mxu0
        %v2849 = vpop.f32.mrb[0].mxu0
        %v2850 = vadd.f32 %v2641, %v2849
        %v2851 = vpop.f32.mrb[0].mxu0
        %2852 = vmatprep.mubr.bf16.mxu0 %v1275
        %2853 = vmatmul.mubr.bf16.gmra.mrb[0].mxu0 %v1165
        %v2854 = vpop.f32.mrb[0].mxu0
        %v2855 = vadd.f32 %v2646, %v2854
        %v2856 = vpop.f32.mrb[0].mxu0
        %v2857 = vpop.f32.mrb[0].mxu0
        %v2858 = vadd.f32 %v2649, %v2857
        %v2859 = vpop.f32.mrb[0].mxu0
        %2860 = vmatprep.mubr.bf16.mxu0 %v1276
        %2861 = vmatmul.mubr.bf16.gmra.mrb[0].mxu0 %v1166
        %v2862 = vpop.f32.mrb[0].mxu0
        %v2863 = vadd.f32 %v2654, %v2862
        %v2864 = vpop.f32.mrb[0].mxu0
        %v2865 = vpop.f32.mrb[0].mxu0
        %v2866 = vadd.f32 %v2657, %v2865
        %v2867 = vpop.f32.mrb[0].mxu0
        %2868 = vmatprep.mubr.bf16.mxu0 %v1277
        %2869 = vmatmul.mubr.bf16.gmra.mrb[0].mxu0 %v1167
        %v2870 = vpop.f32.mrb[0].mxu0
        %v2871 = vadd.f32 %v2662, %v2870
        %v2872 = vpop.f32.mrb[0].mxu0
        %v2873 = vpop.f32.mrb[0].mxu0
        %v2874 = vadd.f32 %v2665, %v2873
        %v2875 = vpop.f32.mrb[0].mxu0
        %2876 = vmatprep.mubr.bf16.mxu0 %v1278
        %2877 = vmatmul.mubr.bf16.gmra.mrb[0].mxu0 %v1168
        %v2878 = vpop.f32.mrb[0].mxu0
        %v2879 = vadd.f32 %v2670, %v2878
        %v2880 = vpop.f32.mrb[0].mxu0
        %v2881 = vpop.f32.mrb[0].mxu0
        %v2882 = vadd.f32 %v2673, %v2881
        %v2883 = vpop.f32.mrb[0].mxu0
        %2884 = vmatprep.mubr.bf16.mxu0 %v1279
        %2885 = vmatmul.mubr.bf16.gmra.mrb[0].mxu0 %v1169
        %v2886 = vpop.f32.mrb[0].mxu0
        %v2887 = vadd.f32 %v2678, %v2886
        %v2888 = vpop.f32.mrb[0].mxu0
        %v2889 = vpop.f32.mrb[0].mxu0
        %v2890 = vadd.f32 %v2681, %v2889
        %v2891 = vpop.f32.mrb[0].mxu0
        %2892 = vmatprep.mubr.bf16.mxu0 %v1280
        %2893 = vmatmul.mubr.bf16.gmra.mrb[0].mxu0 %v1170
        %v2894 = vpop.f32.mrb[0].mxu0
        %v2895 = vadd.f32 %v2686, %v2894
        %v2896 = vpop.f32.mrb[0].mxu0
        %v2897 = vpop.f32.mrb[0].mxu0
        %v2898 = vadd.f32 %v2689, %v2897
        %v2899 = vpop.f32.mrb[0].mxu0
        %2900 = vmatprep.mubr.bf16.mxu0 %v1281
        %2901 = vmatmul.mubr.bf16.gmra.mrb[0].mxu0 %v1171
        %v2902 = vpop.f32.mrb[0].mxu0
        %v2903 = vadd.f32 %v2694, %v2902
        %v2904 = vpop.f32.mrb[0].mxu0
        %v2905 = vpop.f32.mrb[0].mxu0
        %v2906 = vadd.f32 %v2697, %v2905
        %v2907 = vpop.f32.mrb[0].mxu0
        %2908 = vmatprep.mubr.bf16.mxu0 %v1282
        %2909 = vmatmul.mubr.bf16.gmra.mrb[0].mxu0 %v1172
        %v2910 = vpop.f32.mrb[0].mxu0
        %v2911 = vadd.f32 %v2702, %v2910
        %v2912 = vpop.f32.mrb[0].mxu0
        %v2913 = vpop.f32.mrb[0].mxu0
        %v2914 = vadd.f32 %v2705, %v2913
        %v2915 = vpop.f32.mrb[0].mxu0
        %2916 = vmatprep.mubr.bf16.mxu0 %v1283
        %2917 = vmatmul.mubr.bf16.gmra.mrb[0].mxu0 %v1173
        %v2918 = vpop.f32.mrb[0].mxu0
        %v2919 = vadd.f32 %v2710, %v2918
        %v2920 = vpop.f32.mrb[0].mxu0
        %v2921 = vpop.f32.mrb[0].mxu0
        %v2922 = vadd.f32 %v2713, %v2921
        %v2923 = vpop.f32.mrb[0].mxu0
        %2924 = vmatprep.mubr.bf16.mxu0 %v1284
        %2925 = vmatmul.mubr.bf16.gmra.mrb[0].mxu0 %v1174
        %v2926 = vpop.f32.mrb[0].mxu0
        %v2927 = vadd.f32 %v2718, %v2926
        %v2928 = vpop.f32.mrb[0].mxu0
        %v2929 = vpop.f32.mrb[0].mxu0
        %v2930 = vadd.f32 %v2721, %v2929
        %v2931 = vpop.f32.mrb[0].mxu0
        %2932 = vmatprep.mubr.bf16.mxu0 %v1285
        %2933 = vmatmul.mubr.bf16.gmra.mrb[0].mxu0 %v1153
        %v2934 = vpop.f32.mrb[0].mxu0
        %v2935 = vadd.f32 %v2726, %v2934
        %v2936 = vpop.f32.mrb[0].mxu0
        %v2937 = vpop.f32.mrb[0].mxu0
        %v2938 = vadd.f32 %v2729, %v2937
        %v2939 = vpop.f32.mrb[0].mxu0
        %2940 = vdwg.mxu0
        %2941 = vmatprep.subr.bf16.mxu0 0
        %2942 = vmatpush1.bf16.msra.mxu0 %v2025
        %2943 = vmatprep.subr.bf16.mxu0 0
        %2944 = vmatpush1.bf16.msra.mxu0 %v2026
        %2945 = vmatprep.subr.bf16.mxu0 0
        %2946 = vmatpush1.bf16.msra.mxu0 %v2027
        %2947 = vmatprep.subr.bf16.mxu0 0
        %2948 = vmatpush1.bf16.msra.mxu0 %v2028
        %2949 = vmatprep.subr.bf16.mxu0 0
        %2950 = vmatpush1.bf16.msra.mxu0 %v2029
        %2951 = vmatprep.subr.bf16.mxu0 0
        %2952 = vmatpush1.bf16.msra.mxu0 %v2030
        %2953 = vmatprep.subr.bf16.mxu0 0
        %2954 = vmatpush1.bf16.msra.mxu0 %v2031
        %2955 = vmatprep.subr.bf16.mxu0 0
        %2956 = vmatpush1.bf16.msra.mxu0 %v2032
        %2957 = vmatprep.subr.bf16.mxu0 0
        %2958 = vmatpush1.bf16.msra.mxu0 0
        %2959 = vmatprep.subr.bf16.mxu0 0
        %2960 = vmatpush1.bf16.msra.mxu0 0
        %2961 = vmatprep.subr.bf16.mxu0 0
        %2962 = vmatpush1.bf16.msra.mxu0 0
        %2963 = vmatprep.subr.bf16.mxu0 0
        %2964 = vmatpush1.bf16.msra.mxu0 0
        %2965 = vmatprep.subr.bf16.mxu0 0
        %2966 = vmatpush1.bf16.msra.mxu0 0
        %2967 = vmatprep.subr.bf16.mxu0 0
        %2968 = vmatpush1.bf16.msra.mxu0 0
        %2969 = vmatprep.subr.bf16.mxu0 0
        %2970 = vmatpush1.bf16.msra.mxu0 0
        %2971 = vmatprep.subr.bf16.mxu0 0
        %2972 = vmatpush1.bf16.msra.mxu0 0
        %2973 = vmatprep.mubr.bf16.mxu0 0
        %2974 = vmatmul.mubr.bf16.gmra.mrb[0].mxu0 %v1375
        %v2975 = vpop.f32.mrb[0].mxu0
        %v2976 = vadd.f32 %v2767, %v2975
        %v2977 = vpop.f32.mrb[0].mxu0
        %v2978 = vpop.f32.mrb[0].mxu0
        %v2979 = vadd.f32 %v2770, %v2978
        %v2980 = vpop.f32.mrb[0].mxu0
        %2981 = vmatprep.mubr.bf16.mxu0 0
        %2982 = vmatmul.mubr.bf16.gmra.mrb[0].mxu0 %v1376
        %v2983 = vpop.f32.mrb[0].mxu0
        %v2984 = vadd.f32 %v2775, %v2983
        %v2985 = vpop.f32.mrb[0].mxu0
        %v2986 = vpop.f32.mrb[0].mxu0
        %v2987 = vadd.f32 %v2778, %v2986
        %v2988 = vpop.f32.mrb[0].mxu0
        %2989 = vmatprep.mubr.bf16.mxu0 0
        %2990 = vmatmul.mubr.bf16.gmra.mrb[0].mxu0 %v1377
        %v2991 = vpop.f32.mrb[0].mxu0
        %v2992 = vadd.f32 %v2783, %v2991
        %v2993 = vpop.f32.mrb[0].mxu0
        %v2994 = vpop.f32.mrb[0].mxu0
        %v2995 = vadd.f32 %v2786, %v2994
        %v2996 = vpop.f32.mrb[0].mxu0
        %2997 = vmatprep.mubr.bf16.mxu0 0
        %2998 = vmatmul.mubr.bf16.gmra.mrb[0].mxu0 %v1378
        %v2999 = vpop.f32.mrb[0].mxu0
        %v3000 = vadd.f32 %v2791, %v2999
        %v3001 = vpop.f32.mrb[0].mxu0
        %v3002 = vpop.f32.mrb[0].mxu0
        %v3003 = vadd.f32 %v2794, %v3002
        %v3004 = vpop.f32.mrb[0].mxu0
        %3005 = vmatprep.mubr.bf16.mxu0 0
        %3006 = vmatmul.mubr.bf16.gmra.mrb[0].mxu0 %v1379
        %v3007 = vpop.f32.mrb[0].mxu0
        %v3008 = vadd.f32 %v2799, %v3007
        %v3009 = vpop.f32.mrb[0].mxu0
        %v3010 = vpop.f32.mrb[0].mxu0
        %v3011 = vadd.f32 %v2802, %v3010
        %v3012 = vpop.f32.mrb[0].mxu0
        %3013 = vmatprep.mubr.bf16.mxu0 0
        %3014 = vmatmul.mubr.bf16.gmra.mrb[0].mxu0 %v1380
        %v3015 = vpop.f32.mrb[0].mxu0
        %v3016 = vadd.f32 %v2807, %v3015
        %v3017 = vpop.f32.mrb[0].mxu0
        %v3018 = vpop.f32.mrb[0].mxu0
        %v3019 = vadd.f32 %v2810, %v3018
        %v3020 = vpop.f32.mrb[0].mxu0
        %3021 = vmatprep.mubr.bf16.mxu0 0
        %3022 = vmatmul.mubr.bf16.gmra.mrb[0].mxu0 %v1381
        %v3023 = vpop.f32.mrb[0].mxu0
        %v3024 = vadd.f32 %v2815, %v3023
        %v3025 = vpop.f32.mrb[0].mxu0
        %v3026 = vpop.f32.mrb[0].mxu0
        %v3027 = vadd.f32 %v2818, %v3026
        %v3028 = vpop.f32.mrb[0].mxu0
        %3029 = vmatprep.mubr.bf16.mxu0 0
        %3030 = vmatmul.mubr.bf16.gmra.mrb[0].mxu0 %v1382
        %v3031 = vpop.f32.mrb[0].mxu0
        %v3032 = vadd.f32 %v2823, %v3031
        %v3033 = vpop.f32.mrb[0].mxu0
        %v3034 = vpop.f32.mrb[0].mxu0
        %v3035 = vadd.f32 %v2826, %v3034
        %v3036 = vpop.f32.mrb[0].mxu0
        %3037 = vmatprep.mubr.bf16.mxu0 0
        %3038 = vmatmul.mubr.bf16.gmra.mrb[0].mxu0 %v1383
        %v3039 = vpop.f32.mrb[0].mxu0
        %v3040 = vadd.f32 %v2831, %v3039
        %v3041 = vpop.f32.mrb[0].mxu0
        %v3042 = vpop.f32.mrb[0].mxu0
        %v3043 = vadd.f32 %v2834, %v3042
        %v3044 = vpop.f32.mrb[0].mxu0
        %3045 = vmatprep.mubr.bf16.mxu0 0
        %3046 = vmatmul.mubr.bf16.gmra.mrb[0].mxu0 %v1384
        %v3047 = vpop.f32.mrb[0].mxu0
        %v3048 = vadd.f32 %v2839, %v3047
        %v3049 = vpop.f32.mrb[0].mxu0
        %v3050 = vpop.f32.mrb[0].mxu0
        %v3051 = vadd.f32 %v2842, %v3050
        %v3052 = vpop.f32.mrb[0].mxu0
        %3053 = vmatprep.mubr.bf16.mxu0 0
        %3054 = vmatmul.mubr.bf16.gmra.mrb[0].mxu0 %v1385
        %v3055 = vpop.f32.mrb[0].mxu0
        %v3056 = vadd.f32 %v2847, %v3055
        %v3057 = vpop.f32.mrb[0].mxu0
        %v3058 = vpop.f32.mrb[0].mxu0
        %v3059 = vadd.f32 %v2850, %v3058
        %v3060 = vpop.f32.mrb[0].mxu0
        %3061 = vmatprep.mubr.bf16.mxu0 0
        %3062 = vmatmul.mubr.bf16.gmra.mrb[0].mxu0 %v1386
        %v3063 = vpop.f32.mrb[0].mxu0
        %v3064 = vadd.f32 %v2855, %v3063
        %v3065 = vpop.f32.mrb[0].mxu0
        %v3066 = vpop.f32.mrb[0].mxu0
        %v3067 = vadd.f32 %v2858, %v3066
        %v3068 = vpop.f32.mrb[0].mxu0
        %3069 = vmatprep.mubr.bf16.mxu0 0
        %3070 = vmatmul.mubr.bf16.gmra.mrb[0].mxu0 %v1387
        %v3071 = vpop.f32.mrb[0].mxu0
        %v3072 = vadd.f32 %v2863, %v3071
        %v3073 = vpop.f32.mrb[0].mxu0
        %v3074 = vpop.f32.mrb[0].mxu0
        %v3075 = vadd.f32 %v2866, %v3074
        %v3076 = vpop.f32.mrb[0].mxu0
        %3077 = vmatprep.mubr.bf16.mxu0 0
        %3078 = vmatmul.mubr.bf16.gmra.mrb[0].mxu0 %v1388
        %v3079 = vpop.f32.mrb[0].mxu0
        %v3080 = vadd.f32 %v2871, %v3079
        %v3081 = vpop.f32.mrb[0].mxu0
        %v3082 = vpop.f32.mrb[0].mxu0
        %v3083 = vadd.f32 %v2874, %v3082
        %v3084 = vpop.f32.mrb[0].mxu0
        %3085 = vmatprep.mubr.bf16.mxu0 0
        %3086 = vmatmul.mubr.bf16.gmra.mrb[0].mxu0 %v1389
        %v3087 = vpop.f32.mrb[0].mxu0
        %v3088 = vadd.f32 %v2879, %v3087
        %v3089 = vpop.f32.mrb[0].mxu0
        %v3090 = vpop.f32.mrb[0].mxu0
        %v3091 = vadd.f32 %v2882, %v3090
        %v3092 = vpop.f32.mrb[0].mxu0
        %3093 = vmatprep.mubr.bf16.mxu0 0
        %3094 = vmatmul.mubr.bf16.gmra.mrb[0].mxu0 %v1390
        %v3095 = vpop.f32.mrb[0].mxu0
        %v3096 = vadd.f32 %v2887, %v3095
        %v3097 = vpop.f32.mrb[0].mxu0
        %v3098 = vpop.f32.mrb[0].mxu0
        %v3099 = vadd.f32 %v2890, %v3098
        %v3100 = vpop.f32.mrb[0].mxu0
        %3101 = vmatprep.mubr.bf16.mxu0 0
        %3102 = vmatmul.mubr.bf16.gmra.mrb[0].mxu0 %v1391
        %v3103 = vpop.f32.mrb[0].mxu0
        %v3104 = vadd.f32 %v2895, %v3103
        %v3105 = vpop.f32.mrb[0].mxu0
        %v3106 = vpop.f32.mrb[0].mxu0
        %v3107 = vadd.f32 %v2898, %v3106
        %v3108 = vpop.f32.mrb[0].mxu0
        %3109 = vmatprep.mubr.bf16.mxu0 0
        %3110 = vmatmul.mubr.bf16.gmra.mrb[0].mxu0 %v1392
        %v3111 = vpop.f32.mrb[0].mxu0
        %v3112 = vadd.f32 %v2903, %v3111
        %v3113 = vpop.f32.mrb[0].mxu0
        %v3114 = vpop.f32.mrb[0].mxu0
        %v3115 = vadd.f32 %v2906, %v3114
        %v3116 = vpop.f32.mrb[0].mxu0
        %3117 = vmatprep.mubr.bf16.mxu0 0
        %3118 = vmatmul.mubr.bf16.gmra.mrb[0].mxu0 %v1393
        %v3119 = vpop.f32.mrb[0].mxu0
        %v3120 = vadd.f32 %v2911, %v3119
        %v3121 = vpop.f32.mrb[0].mxu0
        %v3122 = vpop.f32.mrb[0].mxu0
        %v3123 = vadd.f32 %v2914, %v3122
        %v3124 = vpop.f32.mrb[0].mxu0
        %3125 = vmatprep.mubr.bf16.mxu0 0
        %3126 = vmatmul.mubr.bf16.gmra.mrb[0].mxu0 %v1394
        %v3127 = vpop.f32.mrb[0].mxu0
        %v3128 = vadd.f32 %v2919, %v3127
        %v3129 = vpop.f32.mrb[0].mxu0
        %v3130 = vpop.f32.mrb[0].mxu0
        %v3131 = vadd.f32 %v2922, %v3130
        %v3132 = vpop.f32.mrb[0].mxu0
        %3133 = vmatprep.mubr.bf16.mxu0 0
        %3134 = vmatmul.mubr.bf16.gmra.mrb[0].mxu0 %v1395
        %v3135 = vpop.f32.mrb[0].mxu0
        %v3136 = vadd.f32 %v2927, %v3135
        %v3137 = vpop.f32.mrb[0].mxu0
        %v3138 = vpop.f32.mrb[0].mxu0
        %v3139 = vadd.f32 %v2930, %v3138
        %v3140 = vpop.f32.mrb[0].mxu0
        %3141 = vmatprep.mubr.bf16.mxu0 0
        %3142 = vmatmul.mubr.bf16.gmra.mrb[0].mxu0 %v1396
        %v3143 = vpop.f32.mrb[0].mxu0
        %v3144 = vadd.f32 %v2935, %v3143
        %v3145 = vpop.f32.mrb[0].mxu0
        %v3146 = vpop.f32.mrb[0].mxu0
        %v3147 = vadd.f32 %v2938, %v3146
        %v3148 = vpop.f32.mrb[0].mxu0
        %3149 = vdwg.mxu0
        %v3150 = vld [vmem:[%s10] sm:$0xf]
        %v3151 = vld [vmem:[%s4] sm:$0x1]
        %v3152 = vld [vmem:[%s5] sm:$0x1]
        %3154 = vset.pattern.permute.xlu0 0
        %3155 = vperm.xlu0 %3154, %v509
        %v3156 = vpop.permute.xlu0 %3155
        %3159 = vset.pattern.permute.xlu0 0
        %3160 = vperm.xlu0 %3159, %v510
        %v3161 = vpop.permute.xlu0 %3160
        %3164 = vset.pattern.permute.xlu0 0
        %3165 = vperm.xlu0 %3164, %v511
        %v3166 = vpop.permute.xlu0 %3165
        %3169 = vset.pattern.permute.xlu0 0
        %3170 = vperm.xlu0 %3169, %v512
        %v3171 = vpop.permute.xlu0 %3170
        %3174 = vset.pattern.permute.xlu0 0
        %3175 = vperm.xlu0 %3174, %v513
        %v3176 = vpop.permute.xlu0 %3175
        %3179 = vset.pattern.permute.xlu0 0
        %3180 = vperm.xlu0 %3179, %v514
        %v3181 = vpop.permute.xlu0 %3180
        %3184 = vset.pattern.permute.xlu0 0
        %3185 = vperm.xlu0 %3184, %v515
        %v3186 = vpop.permute.xlu0 %3185
        %3189 = vset.pattern.permute.xlu0 0
        %3190 = vperm.xlu0 %3189, %v516
        %v3191 = vpop.permute.xlu0 %3190
        %3194 = vset.pattern.permute.xlu0 0
        %3195 = vperm.xlu0 %3194, %v517
        %v3196 = vpop.permute.xlu0 %3195
        %3199 = vset.pattern.permute.xlu0 0
        %3200 = vperm.xlu0 %3199, %v518
        %v3201 = vpop.permute.xlu0 %3200
        %3204 = vset.pattern.permute.xlu0 0
        %3205 = vperm.xlu0 %3204, %v519
        %v3206 = vpop.permute.xlu0 %3205
        %3209 = vset.pattern.permute.xlu0 0
        %3210 = vperm.xlu0 %3209, %v520
        %v3211 = vpop.permute.xlu0 %3210
        %3214 = vset.pattern.permute.xlu0 0
        %3215 = vperm.xlu0 %3214, %v521
        %v3216 = vpop.permute.xlu0 %3215
        %3219 = vset.pattern.permute.xlu0 0
        %3220 = vperm.xlu0 %3219, %v522
        %v3221 = vpop.permute.xlu0 %3220
        %3224 = vset.pattern.permute.xlu0 0
        %3225 = vperm.xlu0 %3224, %v523
        %v3226 = vpop.permute.xlu0 %3225
        %3229 = vset.pattern.permute.xlu0 0
        %3230 = vperm.xlu0 %3229, %v524
        %v3231 = vpop.permute.xlu0 %3230
        %3234 = vset.pattern.permute.xlu0 0
        %3235 = vperm.xlu0 %3234, %v525
        %v3236 = vpop.permute.xlu0 %3235
        %3239 = vset.pattern.permute.xlu0 0
        %3240 = vperm.xlu0 %3239, %v526
        %v3241 = vpop.permute.xlu0 %3240
        %3244 = vset.pattern.permute.xlu0 0
        %3245 = vperm.xlu0 %3244, %v527
        %v3246 = vpop.permute.xlu0 %3245
        %3249 = vset.pattern.permute.xlu0 0
        %3250 = vperm.xlu0 %3249, %v528
        %v3251 = vpop.permute.xlu0 %3250
        %3254 = vset.pattern.permute.xlu0 0
        %3255 = vperm.xlu0 %3254, %v529
        %v3256 = vpop.permute.xlu0 %3255
        %3259 = vset.pattern.permute.xlu0 0
        %3260 = vperm.xlu0 %3259, %v530
        %v3261 = vpop.permute.xlu0 %3260
        %3264 = vset.pattern.permute.xlu0 0
        %3265 = vperm.xlu0 %3264, %v531
        %v3266 = vpop.permute.xlu0 %3265
        %3269 = vset.pattern.permute.xlu0 0
        %3270 = vperm.xlu0 %3269, %v532
        %v3271 = vpop.permute.xlu0 %3270
        %3274 = vset.pattern.permute.xlu0 0
        %3275 = vperm.xlu0 %3274, %v533
        %v3276 = vpop.permute.xlu0 %3275
        %3279 = vset.pattern.permute.xlu0 0
        %3280 = vperm.xlu0 %3279, %v534
        %v3281 = vpop.permute.xlu0 %3280
        %3284 = vset.pattern.permute.xlu0 0
        %3285 = vperm.xlu0 %3284, %v535
        %v3286 = vpop.permute.xlu0 %3285
        %3289 = vset.pattern.permute.xlu0 0
        %3290 = vperm.xlu0 %3289, %v536
        %v3291 = vpop.permute.xlu0 %3290
        %3294 = vset.pattern.permute.xlu0 0
        %3295 = vperm.xlu0 %3294, %v537
        %v3296 = vpop.permute.xlu0 %3295
        %3299 = vset.pattern.permute.xlu0 0
        %3300 = vperm.xlu0 %3299, %v538
        %v3301 = vpop.permute.xlu0 %3300
        %3304 = vset.pattern.permute.xlu0 0
        %3305 = vperm.xlu0 %3304, %v539
        %v3306 = vpop.permute.xlu0 %3305
        %3309 = vset.pattern.permute.xlu0 0
        %3310 = vperm.xlu0 %3309, %v540
        %v3311 = vpop.permute.xlu0 %3310
        %3314 = vset.pattern.permute.xlu0 0
        %3315 = vperm.xlu0 %3314, %v541
        %v3316 = vpop.permute.xlu0 %3315
        %3319 = vset.pattern.permute.xlu0 0
        %3320 = vperm.xlu0 %3319, %v542
        %v3321 = vpop.permute.xlu0 %3320
        %3324 = vset.pattern.permute.xlu0 0
        %3325 = vperm.xlu0 %3324, %v543
        %v3326 = vpop.permute.xlu0 %3325
        %3329 = vset.pattern.permute.xlu0 0
        %3330 = vperm.xlu0 %3329, %v544
        %v3331 = vpop.permute.xlu0 %3330
        %3334 = vset.pattern.permute.xlu0 0
        %3335 = vperm.xlu0 %3334, %v545
        %v3336 = vpop.permute.xlu0 %3335
        %3339 = vset.pattern.permute.xlu0 0
        %3340 = vperm.xlu0 %3339, %v546
        %v3341 = vpop.permute.xlu0 %3340
        %3344 = vset.pattern.permute.xlu0 0
        %3345 = vperm.xlu0 %3344, %v547
        %v3346 = vpop.permute.xlu0 %3345
        %3349 = vset.pattern.permute.xlu0 0
        %3350 = vperm.xlu0 %3349, %v548
        %v3351 = vpop.permute.xlu0 %3350
        %3354 = vset.pattern.permute.xlu0 0
        %3355 = vperm.xlu0 %3354, %v549
        %v3356 = vpop.permute.xlu0 %3355
        %3359 = vset.pattern.permute.xlu0 0
        %3360 = vperm.xlu0 %3359, %v550
        %v3361 = vpop.permute.xlu0 %3360
        %3364 = vset.pattern.permute.xlu0 0
        %3365 = vperm.xlu0 %3364, %v551
        %v3366 = vpop.permute.xlu0 %3365
        %3369 = vset.pattern.permute.xlu0 0
        %3370 = vperm.xlu0 %3369, %v552
        %v3371 = vpop.permute.xlu0 %3370
        %v3373 = vmul.f32 %v2976, %v3156
        %v3374 = vmul.f32 %v2979, %v3161
        %v3375 = vmul.f32 %v2984, %v3166
        %v3376 = vmul.f32 %v2987, %v3171
        %v3377 = vmul.f32 %v2992, %v3176
        %v3378 = vmul.f32 %v2995, %v3181
        %v3379 = vmul.f32 %v3000, %v3186
        %v3380 = vmul.f32 %v3003, %v3191
        %v3381 = vmul.f32 %v3008, %v3196
        %v3382 = vmul.f32 %v3011, %v3201
        %v3383 = vmul.f32 %v3016, %v3206
        %v3384 = vmul.f32 %v3019, %v3211
        %v3385 = vmul.f32 %v3024, %v3216
        %v3386 = vmul.f32 %v3027, %v3221
        %v3387 = vmul.f32 %v3032, %v3226
        %v3388 = vmul.f32 %v3035, %v3231
        %v3389 = vmul.f32 %v3040, %v3236
        %v3390 = vmul.f32 %v3043, %v3241
        %v3391 = vmul.f32 %v3048, %v3246
        %v3392 = vmul.f32 %v3051, %v3251
        %v3393 = vmul.f32 %v3056, %v3256
        %v3394 = vmul.f32 %v3059, %v3261
        %v3395 = vmul.f32 %v3064, %v3266
        %v3396 = vmul.f32 %v3067, %v3271
        %v3397 = vmul.f32 %v3072, %v3276
        %v3398 = vmul.f32 %v3075, %v3281
        %v3399 = vmul.f32 %v3080, %v3286
        %v3400 = vmul.f32 %v3083, %v3291
        %v3401 = vmul.f32 %v3088, %v3296
        %v3402 = vmul.f32 %v3091, %v3301
        %v3403 = vmul.f32 %v3096, %v3306
        %v3404 = vmul.f32 %v3099, %v3311
        %v3405 = vmul.f32 %v3104, %v3316
        %v3406 = vmul.f32 %v3107, %v3321
        %v3407 = vmul.f32 %v3112, %v3326
        %v3408 = vmul.f32 %v3115, %v3331
        %v3409 = vmul.f32 %v3120, %v3336
        %v3410 = vmul.f32 %v3123, %v3341
        %v3411 = vmul.f32 %v3128, %v3346
        %v3412 = vmul.f32 %v3131, %v3351
        %v3413 = vmul.f32 %v3136, %v3356
        %v3414 = vmul.f32 %v3139, %v3361
        %v3415 = vmul.f32 %v3144, %v3366
        %v3416 = vmul.f32 %v3147, %v3371
        %v3417 = vadd.f32 %v3373, %v3374
        %v3418 = vadd.f32 %v3417, %v3375
        %v3419 = vadd.f32 %v3418, %v3376
        %v3420 = vadd.f32 %v3419, %v3377
        %v3421 = vadd.f32 %v3420, %v3378
        %v3422 = vadd.f32 %v3421, %v3379
        %v3423 = vadd.f32 %v3422, %v3380
        %v3424 = vadd.f32 %v3423, %v3381
        %v3425 = vadd.f32 %v3424, %v3382
        %v3426 = vadd.f32 %v3425, %v3383
        %v3427 = vadd.f32 %v3426, %v3384
        %v3428 = vadd.f32 %v3427, %v3385
        %v3429 = vadd.f32 %v3428, %v3386
        %v3430 = vadd.f32 %v3429, %v3387
        %v3431 = vadd.f32 %v3430, %v3388
        %v3432 = vadd.f32 %v3431, %v3389
        %v3433 = vadd.f32 %v3432, %v3390
        %v3434 = vadd.f32 %v3433, %v3391
        %v3435 = vadd.f32 %v3434, %v3392
        %v3436 = vadd.f32 %v3435, %v3393
        %v3437 = vadd.f32 %v3436, %v3394
        %v3438 = vadd.f32 %v3437, %v3395
        %v3439 = vadd.f32 %v3438, %v3396
        %v3440 = vadd.f32 %v3439, %v3397
        %v3441 = vadd.f32 %v3440, %v3398
        %v3442 = vadd.f32 %v3441, %v3399
        %v3443 = vadd.f32 %v3442, %v3400
        %v3444 = vadd.f32 %v3443, %v3401
        %v3445 = vadd.f32 %v3444, %v3402
        %v3446 = vadd.f32 %v3445, %v3403
        %v3447 = vadd.f32 %v3446, %v3404
        %v3448 = vadd.f32 %v3447, %v3405
        %v3449 = vadd.f32 %v3448, %v3406
        %v3450 = vadd.f32 %v3449, %v3407
        %v3451 = vadd.f32 %v3450, %v3408
        %v3452 = vadd.f32 %v3451, %v3409
        %v3453 = vadd.f32 %v3452, %v3410
        %v3454 = vadd.f32 %v3453, %v3411
        %v3455 = vadd.f32 %v3454, %v3412
        %v3456 = vadd.f32 %v3455, %v3413
        %v3457 = vadd.f32 %v3456, %v3414
        %v3458 = vadd.f32 %v3457, %v3415
        %v3459 = vadd.f32 %v3458, %v3416
        %v3460 = vrot.slane %v3459, 4
        %v3461 = vadd.f32 %v3459, %v3460
        %v3462 = vrot.slane %v3461, 2
        %v3463 = vadd.f32 %v3461, %v3462
        %v3464 = vrot.slane %v3463, 1
        %v3465 = vadd.f32 %v3463, %v3464
        %v3466 = vmul.f32 %v3150, %v3465
        %vm3467 = vcmask 1043456
        %v3468 = vsel %vm3467, %v3466, 0.0
        %3469 = vadd.xlane.f32.xlu0 %v3468
        %v3470 = vpop.xlane.xlu0 %3469
        %v3471 = vmul.f32 %v3150, %v3470
        %v3472 = vsel %vm3467, %v3471, 0.0
        %v3473 = vrot.slane %v3472, 4
        %v3474 = vadd.f32 %v3472, %v3473
        %v3475 = vrot.slane %v3474, 2
        %v3476 = vadd.f32 %v3474, %v3475
        %v3477 = vrot.slane %v3476, 1
        %v3478 = vadd.f32 %v3476, %v3477
        %v3479 = vmul.f32 %v3478, 0.00390625
        %v3480 = vsub.f32 %v2976, %v3479
        %v3481 = vsub.f32 %v2979, %v3479
        %v3482 = vsub.f32 %v2984, %v3479
        %v3483 = vsub.f32 %v2987, %v3479
        %v3484 = vsub.f32 %v2992, %v3479
        %v3485 = vsub.f32 %v2995, %v3479
        %v3486 = vsub.f32 %v3000, %v3479
        %v3487 = vsub.f32 %v3003, %v3479
        %v3488 = vsub.f32 %v3008, %v3479
        %v3489 = vsub.f32 %v3011, %v3479
        %v3490 = vsub.f32 %v3016, %v3479
        %v3491 = vsub.f32 %v3019, %v3479
        %v3492 = vsub.f32 %v3024, %v3479
        %v3493 = vsub.f32 %v3027, %v3479
        %v3494 = vsub.f32 %v3032, %v3479
        %v3495 = vsub.f32 %v3035, %v3479
        %v3496 = vsub.f32 %v3040, %v3479
        %v3497 = vsub.f32 %v3043, %v3479
        %v3498 = vsub.f32 %v3048, %v3479
        %v3499 = vsub.f32 %v3051, %v3479
        %v3500 = vsub.f32 %v3056, %v3479
        %v3501 = vsub.f32 %v3059, %v3479
        %v3502 = vsub.f32 %v3064, %v3479
        %v3503 = vsub.f32 %v3067, %v3479
        %v3504 = vsub.f32 %v3072, %v3479
        %v3505 = vsub.f32 %v3075, %v3479
        %v3506 = vsub.f32 %v3080, %v3479
        %v3507 = vsub.f32 %v3083, %v3479
        %v3508 = vsub.f32 %v3088, %v3479
        %v3509 = vsub.f32 %v3091, %v3479
        %v3510 = vsub.f32 %v3096, %v3479
        %v3511 = vsub.f32 %v3099, %v3479
        %v3512 = vsub.f32 %v3104, %v3479
        %v3513 = vsub.f32 %v3107, %v3479
        %v3514 = vsub.f32 %v3112, %v3479
        %v3515 = vsub.f32 %v3115, %v3479
        %v3516 = vsub.f32 %v3120, %v3479
        %v3517 = vsub.f32 %v3123, %v3479
        %v3518 = vsub.f32 %v3128, %v3479
        %v3519 = vsub.f32 %v3131, %v3479
        %v3520 = vsub.f32 %v3136, %v3479
        %v3521 = vsub.f32 %v3139, %v3479
        %v3522 = vsub.f32 %v3144, %v3479
        %v3523 = vsub.f32 %v3147, %v3479
        %v3524 = vmul.f32 %v3480, %v3156
        %v3525 = vmul.f32 %v3481, %v3161
        %v3526 = vmul.f32 %v3482, %v3166
        %v3527 = vmul.f32 %v3483, %v3171
        %v3528 = vmul.f32 %v3484, %v3176
        %v3529 = vmul.f32 %v3485, %v3181
        %v3530 = vmul.f32 %v3486, %v3186
        %v3531 = vmul.f32 %v3487, %v3191
        %v3532 = vmul.f32 %v3488, %v3196
        %v3533 = vmul.f32 %v3489, %v3201
        %v3534 = vmul.f32 %v3490, %v3206
        %v3535 = vmul.f32 %v3491, %v3211
        %v3536 = vmul.f32 %v3492, %v3216
        %v3537 = vmul.f32 %v3493, %v3221
        %v3538 = vmul.f32 %v3494, %v3226
        %v3539 = vmul.f32 %v3495, %v3231
        %v3540 = vmul.f32 %v3496, %v3236
        %v3541 = vmul.f32 %v3497, %v3241
        %v3542 = vmul.f32 %v3498, %v3246
        %v3543 = vmul.f32 %v3499, %v3251
        %v3544 = vmul.f32 %v3500, %v3256
        %v3545 = vmul.f32 %v3501, %v3261
        %v3546 = vmul.f32 %v3502, %v3266
        %v3547 = vmul.f32 %v3503, %v3271
        %v3548 = vmul.f32 %v3504, %v3276
        %v3549 = vmul.f32 %v3505, %v3281
        %v3550 = vmul.f32 %v3506, %v3286
        %v3551 = vmul.f32 %v3507, %v3291
        %v3552 = vmul.f32 %v3508, %v3296
        %v3553 = vmul.f32 %v3509, %v3301
        %v3554 = vmul.f32 %v3510, %v3306
        %v3555 = vmul.f32 %v3511, %v3311
        %v3556 = vmul.f32 %v3512, %v3316
        %v3557 = vmul.f32 %v3513, %v3321
        %v3558 = vmul.f32 %v3514, %v3326
        %v3559 = vmul.f32 %v3515, %v3331
        %v3560 = vmul.f32 %v3516, %v3336
        %v3561 = vmul.f32 %v3517, %v3341
        %v3562 = vmul.f32 %v3518, %v3346
        %v3563 = vmul.f32 %v3519, %v3351
        %v3564 = vmul.f32 %v3520, %v3356
        %v3565 = vmul.f32 %v3521, %v3361
        %v3566 = vmul.f32 %v3522, %v3366
        %v3567 = vmul.f32 %v3523, %v3371
        %v3568 = vmul.f32 %v3524, %v3524
        %v3569 = vmul.f32 %v3525, %v3525
        %v3570 = vmul.f32 %v3526, %v3526
        %v3571 = vmul.f32 %v3527, %v3527
        %v3572 = vmul.f32 %v3528, %v3528
        %v3573 = vmul.f32 %v3529, %v3529
        %v3574 = vmul.f32 %v3530, %v3530
        %v3575 = vmul.f32 %v3531, %v3531
        %v3576 = vmul.f32 %v3532, %v3532
        %v3577 = vmul.f32 %v3533, %v3533
        %v3578 = vmul.f32 %v3534, %v3534
        %v3579 = vmul.f32 %v3535, %v3535
        %v3580 = vmul.f32 %v3536, %v3536
        %v3581 = vmul.f32 %v3537, %v3537
        %v3582 = vmul.f32 %v3538, %v3538
        %v3583 = vmul.f32 %v3539, %v3539
        %v3584 = vmul.f32 %v3540, %v3540
        %v3585 = vmul.f32 %v3541, %v3541
        %v3586 = vmul.f32 %v3542, %v3542
        %v3587 = vmul.f32 %v3543, %v3543
        %v3588 = vmul.f32 %v3544, %v3544
        %v3589 = vmul.f32 %v3545, %v3545
        %v3590 = vmul.f32 %v3546, %v3546
        %v3591 = vmul.f32 %v3547, %v3547
        %v3592 = vmul.f32 %v3548, %v3548
        %v3593 = vmul.f32 %v3549, %v3549
        %v3594 = vmul.f32 %v3550, %v3550
        %v3595 = vmul.f32 %v3551, %v3551
        %v3596 = vmul.f32 %v3552, %v3552
        %v3597 = vmul.f32 %v3553, %v3553
        %v3598 = vmul.f32 %v3554, %v3554
        %v3599 = vmul.f32 %v3555, %v3555
        %v3600 = vmul.f32 %v3556, %v3556
        %v3601 = vmul.f32 %v3557, %v3557
        %v3602 = vmul.f32 %v3558, %v3558
        %v3603 = vmul.f32 %v3559, %v3559
        %v3604 = vmul.f32 %v3560, %v3560
        %v3605 = vmul.f32 %v3561, %v3561
        %v3606 = vmul.f32 %v3562, %v3562
        %v3607 = vmul.f32 %v3563, %v3563
        %v3608 = vmul.f32 %v3564, %v3564
        %v3609 = vmul.f32 %v3565, %v3565
        %v3610 = vmul.f32 %v3566, %v3566
        %v3611 = vmul.f32 %v3567, %v3567
        %v3612 = vadd.f32 %v3568, %v3569
        %v3613 = vadd.f32 %v3612, %v3570
        %v3614 = vadd.f32 %v3613, %v3571
        %v3615 = vadd.f32 %v3614, %v3572
        %v3616 = vadd.f32 %v3615, %v3573
        %v3617 = vadd.f32 %v3616, %v3574
        %v3618 = vadd.f32 %v3617, %v3575
        %v3619 = vadd.f32 %v3618, %v3576
        %v3620 = vadd.f32 %v3619, %v3577
        %v3621 = vadd.f32 %v3620, %v3578
        %v3622 = vadd.f32 %v3621, %v3579
        %v3623 = vadd.f32 %v3622, %v3580
        %v3624 = vadd.f32 %v3623, %v3581
        %v3625 = vadd.f32 %v3624, %v3582
        %v3626 = vadd.f32 %v3625, %v3583
        %v3627 = vadd.f32 %v3626, %v3584
        %v3628 = vadd.f32 %v3627, %v3585
        %v3629 = vadd.f32 %v3628, %v3586
        %v3630 = vadd.f32 %v3629, %v3587
        %v3631 = vadd.f32 %v3630, %v3588
        %v3632 = vadd.f32 %v3631, %v3589
        %v3633 = vadd.f32 %v3632, %v3590
        %v3634 = vadd.f32 %v3633, %v3591
        %v3635 = vadd.f32 %v3634, %v3592
        %v3636 = vadd.f32 %v3635, %v3593
        %v3637 = vadd.f32 %v3636, %v3594
        %v3638 = vadd.f32 %v3637, %v3595
        %v3639 = vadd.f32 %v3638, %v3596
        %v3640 = vadd.f32 %v3639, %v3597
        %v3641 = vadd.f32 %v3640, %v3598
        %v3642 = vadd.f32 %v3641, %v3599
        %v3643 = vadd.f32 %v3642, %v3600
        %v3644 = vadd.f32 %v3643, %v3601
        %v3645 = vadd.f32 %v3644, %v3602
        %v3646 = vadd.f32 %v3645, %v3603
        %v3647 = vadd.f32 %v3646, %v3604
        %v3648 = vadd.f32 %v3647, %v3605
        %v3649 = vadd.f32 %v3648, %v3606
        %v3650 = vadd.f32 %v3649, %v3607
        %v3651 = vadd.f32 %v3650, %v3608
        %v3652 = vadd.f32 %v3651, %v3609
        %v3653 = vadd.f32 %v3652, %v3610
        %v3654 = vadd.f32 %v3653, %v3611
        %v3655 = vrot.slane %v3654, 4
        %v3656 = vadd.f32 %v3654, %v3655
        %v3657 = vrot.slane %v3656, 2
        %v3658 = vadd.f32 %v3656, %v3657
        %v3659 = vrot.slane %v3658, 1
        %v3660 = vadd.f32 %v3658, %v3659
        %v3661 = vmul.f32 %v3150, %v3660
        %v3662 = vsel %vm3467, %v3661, 0.0
        %3663 = vadd.xlane.f32.xlu0 %v3662
        %v3664 = vpop.xlane.xlu0 %3663
        %v3665 = vmul.f32 %v3664, 0.00390625
        %v3666 = vadd.f32 %v3665, 1e-05
        %v3667 = vrsqrt.pop %v3666
        %v3668 = vmul.f32 %v3150, %v3667
        %v3669 = vsel %vm3467, %v3668, 0.0
        %v3670 = vrot.slane %v3669, 4
        %v3671 = vadd.f32 %v3669, %v3670
        %v3672 = vrot.slane %v3671, 2
        %v3673 = vadd.f32 %v3671, %v3672
        %v3674 = vrot.slane %v3673, 1
        %v3675 = vadd.f32 %v3673, %v3674
        %v3676 = vmul.f32 %v3675, %v3151
        %v3677 = vlaneseq
        %v3678 = vshrl.u32 %v3677, 7
        %v3679 = vsub.s32 0, %v3678
        %v3680 = vrot.slane %v3676, %v3679
        %v3681 = vmul.f32 %v3524, %v3680
        %v3682 = vmul.f32 %v3525, %v3680
        %v3683 = vmul.f32 %v3526, %v3680
        %v3684 = vmul.f32 %v3527, %v3680
        %v3685 = vmul.f32 %v3528, %v3680
        %v3686 = vmul.f32 %v3529, %v3680
        %v3687 = vmul.f32 %v3530, %v3680
        %v3688 = vmul.f32 %v3531, %v3680
        %v3689 = vmul.f32 %v3532, %v3680
        %v3690 = vmul.f32 %v3533, %v3680
        %v3691 = vmul.f32 %v3534, %v3680
        %v3692 = vmul.f32 %v3535, %v3680
        %v3693 = vmul.f32 %v3536, %v3680
        %v3694 = vmul.f32 %v3537, %v3680
        %v3695 = vmul.f32 %v3538, %v3680
        %v3696 = vmul.f32 %v3539, %v3680
        %v3697 = vmul.f32 %v3540, %v3680
        %v3698 = vmul.f32 %v3541, %v3680
        %v3699 = vmul.f32 %v3542, %v3680
        %v3700 = vmul.f32 %v3543, %v3680
        %v3701 = vmul.f32 %v3544, %v3680
        %v3702 = vmul.f32 %v3545, %v3680
        %v3703 = vmul.f32 %v3546, %v3680
        %v3704 = vmul.f32 %v3547, %v3680
        %v3705 = vmul.f32 %v3548, %v3680
        %v3706 = vmul.f32 %v3549, %v3680
        %v3707 = vmul.f32 %v3550, %v3680
        %v3708 = vmul.f32 %v3551, %v3680
        %v3709 = vmul.f32 %v3552, %v3680
        %v3710 = vmul.f32 %v3553, %v3680
        %v3711 = vmul.f32 %v3554, %v3680
        %v3712 = vmul.f32 %v3555, %v3680
        %v3713 = vmul.f32 %v3556, %v3680
        %v3714 = vmul.f32 %v3557, %v3680
        %v3715 = vmul.f32 %v3558, %v3680
        %v3716 = vmul.f32 %v3559, %v3680
        %v3717 = vmul.f32 %v3560, %v3680
        %v3718 = vmul.f32 %v3561, %v3680
        %v3719 = vmul.f32 %v3562, %v3680
        %v3720 = vmul.f32 %v3563, %v3680
        %v3721 = vmul.f32 %v3564, %v3680
        %v3722 = vmul.f32 %v3565, %v3680
        %v3723 = vmul.f32 %v3566, %v3680
        %v3724 = vmul.f32 %v3567, %v3680
        %v3726 = vlaneseq
        %v3727 = vshrl.u32 %v3726, 7
        %v3728 = vsub.s32 0, %v3727
        %v3729 = vrot.slane %v3152, %v3728
        %v3731 = vadd.f32 %v3681, %v3729
        %v3732 = vadd.f32 %v3682, %v3729
        %v3733 = vadd.f32 %v3683, %v3729
        %v3734 = vadd.f32 %v3684, %v3729
        %v3735 = vadd.f32 %v3685, %v3729
        %v3736 = vadd.f32 %v3686, %v3729
        %v3737 = vadd.f32 %v3687, %v3729
        %v3738 = vadd.f32 %v3688, %v3729
        %v3739 = vadd.f32 %v3689, %v3729
        %v3740 = vadd.f32 %v3690, %v3729
        %v3741 = vadd.f32 %v3691, %v3729
        %v3742 = vadd.f32 %v3692, %v3729
        %v3743 = vadd.f32 %v3693, %v3729
        %v3744 = vadd.f32 %v3694, %v3729
        %v3745 = vadd.f32 %v3695, %v3729
        %v3746 = vadd.f32 %v3696, %v3729
        %v3747 = vadd.f32 %v3697, %v3729
        %v3748 = vadd.f32 %v3698, %v3729
        %v3749 = vadd.f32 %v3699, %v3729
        %v3750 = vadd.f32 %v3700, %v3729
        %v3751 = vadd.f32 %v3701, %v3729
        %v3752 = vadd.f32 %v3702, %v3729
        %v3753 = vadd.f32 %v3703, %v3729
        %v3754 = vadd.f32 %v3704, %v3729
        %v3755 = vadd.f32 %v3705, %v3729
        %v3756 = vadd.f32 %v3706, %v3729
        %v3757 = vadd.f32 %v3707, %v3729
        %v3758 = vadd.f32 %v3708, %v3729
        %v3759 = vadd.f32 %v3709, %v3729
        %v3760 = vadd.f32 %v3710, %v3729
        %v3761 = vadd.f32 %v3711, %v3729
        %v3762 = vadd.f32 %v3712, %v3729
        %v3763 = vadd.f32 %v3713, %v3729
        %v3764 = vadd.f32 %v3714, %v3729
        %v3765 = vadd.f32 %v3715, %v3729
        %v3766 = vadd.f32 %v3716, %v3729
        %v3767 = vadd.f32 %v3717, %v3729
        %v3768 = vadd.f32 %v3718, %v3729
        %v3769 = vadd.f32 %v3719, %v3729
        %v3770 = vadd.f32 %v3720, %v3729
        %v3771 = vadd.f32 %v3721, %v3729
        %v3772 = vadd.f32 %v3722, %v3729
        %v3773 = vadd.f32 %v3723, %v3729
        %v3774 = vadd.f32 %v3724, %v3729
        %v3775 = vmax.f32 %v3731, 0.0
        %v3776 = vmax.f32 %v3732, 0.0
        %v3777 = vmax.f32 %v3733, 0.0
        %v3778 = vmax.f32 %v3734, 0.0
        %v3779 = vmax.f32 %v3735, 0.0
        %v3780 = vmax.f32 %v3736, 0.0
        %v3781 = vmax.f32 %v3737, 0.0
        %v3782 = vmax.f32 %v3738, 0.0
        %v3783 = vmax.f32 %v3739, 0.0
        %v3784 = vmax.f32 %v3740, 0.0
        %v3785 = vmax.f32 %v3741, 0.0
        %v3786 = vmax.f32 %v3742, 0.0
        %v3787 = vmax.f32 %v3743, 0.0
        %v3788 = vmax.f32 %v3744, 0.0
        %v3789 = vmax.f32 %v3745, 0.0
        %v3790 = vmax.f32 %v3746, 0.0
        %v3791 = vmax.f32 %v3747, 0.0
        %v3792 = vmax.f32 %v3748, 0.0
        %v3793 = vmax.f32 %v3749, 0.0
        %v3794 = vmax.f32 %v3750, 0.0
        %v3795 = vmax.f32 %v3751, 0.0
        %v3796 = vmax.f32 %v3752, 0.0
        %v3797 = vmax.f32 %v3753, 0.0
        %v3798 = vmax.f32 %v3754, 0.0
        %v3799 = vmax.f32 %v3755, 0.0
        %v3800 = vmax.f32 %v3756, 0.0
        %v3801 = vmax.f32 %v3757, 0.0
        %v3802 = vmax.f32 %v3758, 0.0
        %v3803 = vmax.f32 %v3759, 0.0
        %v3804 = vmax.f32 %v3760, 0.0
        %v3805 = vmax.f32 %v3761, 0.0
        %v3806 = vmax.f32 %v3762, 0.0
        %v3807 = vmax.f32 %v3763, 0.0
        %v3808 = vmax.f32 %v3764, 0.0
        %v3809 = vmax.f32 %v3765, 0.0
        %v3810 = vmax.f32 %v3766, 0.0
        %v3811 = vmax.f32 %v3767, 0.0
        %v3812 = vmax.f32 %v3768, 0.0
        %v3813 = vmax.f32 %v3769, 0.0
        %v3814 = vmax.f32 %v3770, 0.0
        %v3815 = vmax.f32 %v3771, 0.0
        %v3816 = vmax.f32 %v3772, 0.0
        %v3817 = vmax.f32 %v3773, 0.0
        %v3818 = vmax.f32 %v3774, 0.0
        %v3819 = vmul.f32 %v3775, %v3156
        %v3820 = vmul.f32 %v3776, %v3161
        %v3821 = vmul.f32 %v3777, %v3166
        %v3822 = vmul.f32 %v3778, %v3171
        %v3823 = vmul.f32 %v3779, %v3176
        %v3824 = vmul.f32 %v3780, %v3181
        %v3825 = vmul.f32 %v3781, %v3186
        %v3826 = vmul.f32 %v3782, %v3191
        %v3827 = vmul.f32 %v3783, %v3196
        %v3828 = vmul.f32 %v3784, %v3201
        %v3829 = vmul.f32 %v3785, %v3206
        %v3830 = vmul.f32 %v3786, %v3211
        %v3831 = vmul.f32 %v3787, %v3216
        %v3832 = vmul.f32 %v3788, %v3221
        %v3833 = vmul.f32 %v3789, %v3226
        %v3834 = vmul.f32 %v3790, %v3231
        %v3835 = vmul.f32 %v3791, %v3236
        %v3836 = vmul.f32 %v3792, %v3241
        %v3837 = vmul.f32 %v3793, %v3246
        %v3838 = vmul.f32 %v3794, %v3251
        %v3839 = vmul.f32 %v3795, %v3256
        %v3840 = vmul.f32 %v3796, %v3261
        %v3841 = vmul.f32 %v3797, %v3266
        %v3842 = vmul.f32 %v3798, %v3271
        %v3843 = vmul.f32 %v3799, %v3276
        %v3844 = vmul.f32 %v3800, %v3281
        %v3845 = vmul.f32 %v3801, %v3286
        %v3846 = vmul.f32 %v3802, %v3291
        %v3847 = vmul.f32 %v3803, %v3296
        %v3848 = vmul.f32 %v3804, %v3301
        %v3849 = vmul.f32 %v3805, %v3306
        %v3850 = vmul.f32 %v3806, %v3311
        %v3851 = vmul.f32 %v3807, %v3316
        %v3852 = vmul.f32 %v3808, %v3321
        %v3853 = vmul.f32 %v3809, %v3326
        %v3854 = vmul.f32 %v3810, %v3331
        %v3855 = vmul.f32 %v3811, %v3336
        %v3856 = vmul.f32 %v3812, %v3341
        %v3857 = vmul.f32 %v3813, %v3346
        %v3858 = vmul.f32 %v3814, %v3351
        %v3859 = vmul.f32 %v3815, %v3356
        %v3860 = vmul.f32 %v3816, %v3361
        %v3861 = vmul.f32 %v3817, %v3366
        %v3862 = vmul.f32 %v3818, %v3371
        %v3863 = vrot.slane %v3819, 5
        %v3864 = vrot.slane %v3820, 5
        %v3865 = vrot.slane %v3821, 5
        %v3866 = vrot.slane %v3822, 5
        %v3867 = vrot.slane %v3823, 5
        %v3868 = vrot.slane %v3824, 5
        %v3869 = vrot.slane %v3825, 5
        %v3870 = vrot.slane %v3826, 5
        %v3871 = vrot.slane %v3827, 5
        %v3872 = vrot.slane %v3828, 5
        %v3873 = vrot.slane %v3829, 5
        %v3874 = vrot.slane %v3830, 5
        %v3875 = vrot.slane %v3831, 5
        %v3876 = vrot.slane %v3832, 5
        %v3877 = vrot.slane %v3833, 5
        %v3878 = vrot.slane %v3834, 5
        %v3879 = vrot.slane %v3835, 5
        %v3880 = vrot.slane %v3836, 5
        %v3881 = vrot.slane %v3837, 5
        %v3882 = vrot.slane %v3838, 5
        %v3883 = vrot.slane %v3839, 5
        %v3884 = vrot.slane %v3840, 5
        %v3885 = vrot.slane %v3841, 5
        %v3886 = vrot.slane %v3842, 5
        %v3887 = vrot.slane %v3843, 5
        %v3888 = vrot.slane %v3844, 5
        %v3889 = vrot.slane %v3845, 5
        %v3890 = vrot.slane %v3846, 5
        %v3891 = vrot.slane %v3847, 5
        %v3892 = vrot.slane %v3848, 5
        %v3893 = vrot.slane %v3849, 5
        %v3894 = vrot.slane %v3850, 5
        %v3895 = vrot.slane %v3851, 5
        %v3896 = vrot.slane %v3852, 5
        %v3897 = vrot.slane %v3853, 5
        %v3898 = vrot.slane %v3854, 5
        %v3899 = vrot.slane %v3855, 5
        %v3900 = vrot.slane %v3856, 5
        %v3901 = vrot.slane %v3857, 5
        %v3902 = vrot.slane %v3858, 5
        %v3903 = vrot.slane %v3859, 5
        %v3904 = vrot.slane %v3860, 5
        %v3905 = vrot.slane %v3861, 5
        %v3906 = vrot.slane %v3862, 5
        %v3907 = vsel %vm775, %v3905, %v3906
        %v3908 = vsel %vm775, %v3904, %v3905
        %v3909 = vsel %vm775, %v3903, %v3904
        %v3910 = vsel %vm775, %v3902, %v3903
        %v3911 = vsel %vm775, %v3901, %v3902
        %v3912 = vsel %vm775, %v3900, %v3901
        %v3913 = vsel %vm775, %v3899, %v3900
        %v3914 = vsel %vm775, %v3898, %v3899
        %v3915 = vsel %vm775, %v3897, %v3898
        %v3916 = vsel %vm775, %v3896, %v3897
        %v3917 = vsel %vm775, %v3895, %v3896
        %v3918 = vsel %vm775, %v3894, %v3895
        %v3919 = vsel %vm775, %v3893, %v3894
        %v3920 = vsel %vm775, %v3892, %v3893
        %v3921 = vsel %vm775, %v3891, %v3892
        %v3922 = vsel %vm775, %v3890, %v3891
        %v3923 = vsel %vm775, %v3889, %v3890
        %v3924 = vsel %vm775, %v3888, %v3889
        %v3925 = vsel %vm775, %v3887, %v3888
        %v3926 = vsel %vm775, %v3886, %v3887
        %v3927 = vsel %vm775, %v3885, %v3886
        %v3928 = vsel %vm775, %v3884, %v3885
        %v3929 = vsel %vm775, %v3883, %v3884
        %v3930 = vsel %vm775, %v3882, %v3883
        %v3931 = vsel %vm775, %v3881, %v3882
        %v3932 = vsel %vm775, %v3880, %v3881
        %v3933 = vsel %vm775, %v3879, %v3880
        %v3934 = vsel %vm775, %v3878, %v3879
        %v3935 = vsel %vm775, %v3877, %v3878
        %v3936 = vsel %vm775, %v3876, %v3877
        %v3937 = vsel %vm775, %v3875, %v3876
        %v3938 = vsel %vm775, %v3874, %v3875
        %v3939 = vsel %vm775, %v3873, %v3874
        %v3940 = vsel %vm775, %v3872, %v3873
        %v3941 = vsel %vm775, %v3871, %v3872
        %v3942 = vsel %vm775, %v3870, %v3871
        %v3943 = vsel %vm775, %v3869, %v3870
        %v3944 = vsel %vm775, %v3868, %v3869
        %v3945 = vsel %vm775, %v3867, %v3868
        %v3946 = vsel %vm775, %v3866, %v3867
        %v3947 = vsel %vm775, %v3865, %v3866
        %v3948 = vsel %vm775, %v3864, %v3865
        %v3949 = vsel %vm775, %v3863, %v3864
        %v3950 = vsel %vm775, %v3906, %v3863
        %v3951 = vpack.c.bf16 %v3907, %v3908
        %v3952 = vpack.c.bf16 %v3949, %v3950
        %v3953 = vpack.c.bf16 %v3947, %v3948
        %v3954 = vpack.c.bf16 %v3945, %v3946
        %v3955 = vpack.c.bf16 %v3943, %v3944
        %v3956 = vpack.c.bf16 %v3941, %v3942
        %v3957 = vpack.c.bf16 %v3939, %v3940
        %v3958 = vpack.c.bf16 %v3937, %v3938
        %v3959 = vpack.c.bf16 %v3935, %v3936
        %v3960 = vpack.c.bf16 %v3933, %v3934
        %v3961 = vpack.c.bf16 %v3931, %v3932
        %v3962 = vpack.c.bf16 %v3929, %v3930
        %v3963 = vpack.c.bf16 %v3927, %v3928
        %v3964 = vpack.c.bf16 %v3925, %v3926
        %v3965 = vpack.c.bf16 %v3923, %v3924
        %v3966 = vpack.c.bf16 %v3921, %v3922
        %v3967 = vpack.c.bf16 %v3919, %v3920
        %v3968 = vpack.c.bf16 %v3917, %v3918
        %v3969 = vpack.c.bf16 %v3915, %v3916
        %v3970 = vpack.c.bf16 %v3913, %v3914
        %v3971 = vpack.c.bf16 %v3911, %v3912
        %v3972 = vpack.c.bf16 %v3909, %v3910
        %v3973 = vrot.slane %v3819, 6
        %v3974 = vrot.slane %v3820, 6
        %v3975 = vrot.slane %v3821, 6
        %v3976 = vrot.slane %v3822, 6
        %v3977 = vrot.slane %v3823, 6
        %v3978 = vrot.slane %v3824, 6
        %v3979 = vrot.slane %v3825, 6
        %v3980 = vrot.slane %v3826, 6
        %v3981 = vrot.slane %v3827, 6
        %v3982 = vrot.slane %v3828, 6
        %v3983 = vrot.slane %v3829, 6
        %v3984 = vrot.slane %v3830, 6
        %v3985 = vrot.slane %v3831, 6
        %v3986 = vrot.slane %v3832, 6
        %v3987 = vrot.slane %v3833, 6
        %v3988 = vrot.slane %v3834, 6
        %v3989 = vrot.slane %v3835, 6
        %v3990 = vrot.slane %v3836, 6
        %v3991 = vrot.slane %v3837, 6
        %v3992 = vrot.slane %v3838, 6
        %v3993 = vrot.slane %v3839, 6
        %v3994 = vrot.slane %v3840, 6
        %v3995 = vrot.slane %v3841, 6
        %v3996 = vrot.slane %v3842, 6
        %v3997 = vrot.slane %v3843, 6
        %v3998 = vrot.slane %v3844, 6
        %v3999 = vrot.slane %v3845, 6
        %v4000 = vrot.slane %v3846, 6
        %v4001 = vrot.slane %v3847, 6
        %v4002 = vrot.slane %v3848, 6
        %v4003 = vrot.slane %v3849, 6
        %v4004 = vrot.slane %v3850, 6
        %v4005 = vrot.slane %v3851, 6
        %v4006 = vrot.slane %v3852, 6
        %v4007 = vrot.slane %v3853, 6
        %v4008 = vrot.slane %v3854, 6
        %v4009 = vrot.slane %v3855, 6
        %v4010 = vrot.slane %v3856, 6
        %v4011 = vrot.slane %v3857, 6
        %v4012 = vrot.slane %v3858, 6
        %v4013 = vrot.slane %v3859, 6
        %v4014 = vrot.slane %v3860, 6
        %v4015 = vrot.slane %v3861, 6
        %v4016 = vrot.slane %v3862, 6
        %v4017 = vsel %vm886, %v4015, %v4016
        %v4018 = vsel %vm886, %v4014, %v4015
        %v4019 = vsel %vm886, %v4013, %v4014
        %v4020 = vsel %vm886, %v4012, %v4013
        %v4021 = vsel %vm886, %v4011, %v4012
        %v4022 = vsel %vm886, %v4010, %v4011
        %v4023 = vsel %vm886, %v4009, %v4010
        %v4024 = vsel %vm886, %v4008, %v4009
        %v4025 = vsel %vm886, %v4007, %v4008
        %v4026 = vsel %vm886, %v4006, %v4007
        %v4027 = vsel %vm886, %v4005, %v4006
        %v4028 = vsel %vm886, %v4004, %v4005
        %v4029 = vsel %vm886, %v4003, %v4004
        %v4030 = vsel %vm886, %v4002, %v4003
        %v4031 = vsel %vm886, %v4001, %v4002
        %v4032 = vsel %vm886, %v4000, %v4001
        %v4033 = vsel %vm886, %v3999, %v4000
        %v4034 = vsel %vm886, %v3998, %v3999
        %v4035 = vsel %vm886, %v3997, %v3998
        %v4036 = vsel %vm886, %v3996, %v3997
        %v4037 = vsel %vm886, %v3995, %v3996
        %v4038 = vsel %vm886, %v3994, %v3995
        %v4039 = vsel %vm886, %v3993, %v3994
        %v4040 = vsel %vm886, %v3992, %v3993
        %v4041 = vsel %vm886, %v3991, %v3992
        %v4042 = vsel %vm886, %v3990, %v3991
        %v4043 = vsel %vm886, %v3989, %v3990
        %v4044 = vsel %vm886, %v3988, %v3989
        %v4045 = vsel %vm886, %v3987, %v3988
        %v4046 = vsel %vm886, %v3986, %v3987
        %v4047 = vsel %vm886, %v3985, %v3986
        %v4048 = vsel %vm886, %v3984, %v3985
        %v4049 = vsel %vm886, %v3983, %v3984
        %v4050 = vsel %vm886, %v3982, %v3983
        %v4051 = vsel %vm886, %v3981, %v3982
        %v4052 = vsel %vm886, %v3980, %v3981
        %v4053 = vsel %vm886, %v3979, %v3980
        %v4054 = vsel %vm886, %v3978, %v3979
        %v4055 = vsel %vm886, %v3977, %v3978
        %v4056 = vsel %vm886, %v3976, %v3977
        %v4057 = vsel %vm886, %v3975, %v3976
        %v4058 = vsel %vm886, %v3974, %v3975
        %v4059 = vsel %vm886, %v3973, %v3974
        %v4060 = vsel %vm886, %v4016, %v3973
        %v4061 = vpack.c.bf16 %v4017, %v4018
        %v4062 = vpack.c.bf16 %v4059, %v4060
        %v4063 = vpack.c.bf16 %v4057, %v4058
        %v4064 = vpack.c.bf16 %v4055, %v4056
        %v4065 = vpack.c.bf16 %v4053, %v4054
        %v4066 = vpack.c.bf16 %v4051, %v4052
        %v4067 = vpack.c.bf16 %v4049, %v4050
        %v4068 = vpack.c.bf16 %v4047, %v4048
        %v4069 = vpack.c.bf16 %v4045, %v4046
        %v4070 = vpack.c.bf16 %v4043, %v4044
        %v4071 = vpack.c.bf16 %v4041, %v4042
        %v4072 = vpack.c.bf16 %v4039, %v4040
        %v4073 = vpack.c.bf16 %v4037, %v4038
        %v4074 = vpack.c.bf16 %v4035, %v4036
        %v4075 = vpack.c.bf16 %v4033, %v4034
        %v4076 = vpack.c.bf16 %v4031, %v4032
        %v4077 = vpack.c.bf16 %v4029, %v4030
        %v4078 = vpack.c.bf16 %v4027, %v4028
        %v4079 = vpack.c.bf16 %v4025, %v4026
        %v4080 = vpack.c.bf16 %v4023, %v4024
        %v4081 = vpack.c.bf16 %v4021, %v4022
        %v4082 = vpack.c.bf16 %v4019, %v4020
        %v4083 = vrot.slane %v3819, 7
        %v4084 = vrot.slane %v3820, 7
        %v4085 = vrot.slane %v3821, 7
        %v4086 = vrot.slane %v3822, 7
        %v4087 = vrot.slane %v3823, 7
        %v4088 = vrot.slane %v3824, 7
        %v4089 = vrot.slane %v3825, 7
        %v4090 = vrot.slane %v3826, 7
        %v4091 = vrot.slane %v3827, 7
        %v4092 = vrot.slane %v3828, 7
        %v4093 = vrot.slane %v3829, 7
        %v4094 = vrot.slane %v3830, 7
        %v4095 = vrot.slane %v3831, 7
        %v4096 = vrot.slane %v3832, 7
        %v4097 = vrot.slane %v3833, 7
        %v4098 = vrot.slane %v3834, 7
        %v4099 = vrot.slane %v3835, 7
        %v4100 = vrot.slane %v3836, 7
        %v4101 = vrot.slane %v3837, 7
        %v4102 = vrot.slane %v3838, 7
        %v4103 = vrot.slane %v3839, 7
        %v4104 = vrot.slane %v3840, 7
        %v4105 = vrot.slane %v3841, 7
        %v4106 = vrot.slane %v3842, 7
        %v4107 = vrot.slane %v3843, 7
        %v4108 = vrot.slane %v3844, 7
        %v4109 = vrot.slane %v3845, 7
        %v4110 = vrot.slane %v3846, 7
        %v4111 = vrot.slane %v3847, 7
        %v4112 = vrot.slane %v3848, 7
        %v4113 = vrot.slane %v3849, 7
        %v4114 = vrot.slane %v3850, 7
        %v4115 = vrot.slane %v3851, 7
        %v4116 = vrot.slane %v3852, 7
        %v4117 = vrot.slane %v3853, 7
        %v4118 = vrot.slane %v3854, 7
        %v4119 = vrot.slane %v3855, 7
        %v4120 = vrot.slane %v3856, 7
        %v4121 = vrot.slane %v3857, 7
        %v4122 = vrot.slane %v3858, 7
        %v4123 = vrot.slane %v3859, 7
        %v4124 = vrot.slane %v3860, 7
        %v4125 = vrot.slane %v3861, 7
        %v4126 = vrot.slane %v3862, 7
        %v4127 = vsel %vm997, %v4125, %v4126
        %v4128 = vsel %vm997, %v4124, %v4125
        %v4129 = vsel %vm997, %v4123, %v4124
        %v4130 = vsel %vm997, %v4122, %v4123
        %v4131 = vsel %vm997, %v4121, %v4122
        %v4132 = vsel %vm997, %v4120, %v4121
        %v4133 = vsel %vm997, %v4119, %v4120
        %v4134 = vsel %vm997, %v4118, %v4119
        %v4135 = vsel %vm997, %v4117, %v4118
        %v4136 = vsel %vm997, %v4116, %v4117
        %v4137 = vsel %vm997, %v4115, %v4116
        %v4138 = vsel %vm997, %v4114, %v4115
        %v4139 = vsel %vm997, %v4113, %v4114
        %v4140 = vsel %vm997, %v4112, %v4113
        %v4141 = vsel %vm997, %v4111, %v4112
        %v4142 = vsel %vm997, %v4110, %v4111
        %v4143 = vsel %vm997, %v4109, %v4110
        %v4144 = vsel %vm997, %v4108, %v4109
        %v4145 = vsel %vm997, %v4107, %v4108
        %v4146 = vsel %vm997, %v4106, %v4107
        %v4147 = vsel %vm997, %v4105, %v4106
        %v4148 = vsel %vm997, %v4104, %v4105
        %v4149 = vsel %vm997, %v4103, %v4104
        %v4150 = vsel %vm997, %v4102, %v4103
        %v4151 = vsel %vm997, %v4101, %v4102
        %v4152 = vsel %vm997, %v4100, %v4101
        %v4153 = vsel %vm997, %v4099, %v4100
        %v4154 = vsel %vm997, %v4098, %v4099
        %v4155 = vsel %vm997, %v4097, %v4098
        %v4156 = vsel %vm997, %v4096, %v4097
        %v4157 = vsel %vm997, %v4095, %v4096
        %v4158 = vsel %vm997, %v4094, %v4095
        %v4159 = vsel %vm997, %v4093, %v4094
        %v4160 = vsel %vm997, %v4092, %v4093
        %v4161 = vsel %vm997, %v4091, %v4092
        %v4162 = vsel %vm997, %v4090, %v4091
        %v4163 = vsel %vm997, %v4089, %v4090
        %v4164 = vsel %vm997, %v4088, %v4089
        %v4165 = vsel %vm997, %v4087, %v4088
        %v4166 = vsel %vm997, %v4086, %v4087
        %v4167 = vsel %vm997, %v4085, %v4086
        %v4168 = vsel %vm997, %v4084, %v4085
        %v4169 = vsel %vm997, %v4083, %v4084
        %v4170 = vsel %vm997, %v4126, %v4083
        %v4171 = vpack.c.bf16 %v4127, %v4128
        %v4172 = vpack.c.bf16 %v4169, %v4170
        %v4173 = vpack.c.bf16 %v4167, %v4168
        %v4174 = vpack.c.bf16 %v4165, %v4166
        %v4175 = vpack.c.bf16 %v4163, %v4164
        %v4176 = vpack.c.bf16 %v4161, %v4162
        %v4177 = vpack.c.bf16 %v4159, %v4160
        %v4178 = vpack.c.bf16 %v4157, %v4158
        %v4179 = vpack.c.bf16 %v4155, %v4156
        %v4180 = vpack.c.bf16 %v4153, %v4154
        %v4181 = vpack.c.bf16 %v4151, %v4152
        %v4182 = vpack.c.bf16 %v4149, %v4150
        %v4183 = vpack.c.bf16 %v4147, %v4148
        %v4184 = vpack.c.bf16 %v4145, %v4146
        %v4185 = vpack.c.bf16 %v4143, %v4144
        %v4186 = vpack.c.bf16 %v4141, %v4142
        %v4187 = vpack.c.bf16 %v4139, %v4140
        %v4188 = vpack.c.bf16 %v4137, %v4138
        %v4189 = vpack.c.bf16 %v4135, %v4136
        %v4190 = vpack.c.bf16 %v4133, %v4134
        %v4191 = vpack.c.bf16 %v4131, %v4132
        %v4192 = vpack.c.bf16 %v4129, %v4130
        %v4193 = vpack.c.bf16 %v3820, %v3819
        %v4194 = vpack.c.bf16 %v3822, %v3821
        %v4195 = vpack.c.bf16 %v3824, %v3823
        %v4196 = vpack.c.bf16 %v3826, %v3825
        %v4197 = vpack.c.bf16 %v3828, %v3827
        %v4198 = vpack.c.bf16 %v3830, %v3829
        %v4199 = vpack.c.bf16 %v3832, %v3831
        %v4200 = vpack.c.bf16 %v3834, %v3833
        %v4201 = vpack.c.bf16 %v3836, %v3835
        %v4202 = vpack.c.bf16 %v3838, %v3837
        %v4203 = vpack.c.bf16 %v3840, %v3839
        %v4204 = vpack.c.bf16 %v3842, %v3841
        %v4205 = vpack.c.bf16 %v3844, %v3843
        %v4206 = vpack.c.bf16 %v3846, %v3845
        %v4207 = vpack.c.bf16 %v3848, %v3847
        %v4208 = vpack.c.bf16 %v3850, %v3849
        %v4209 = vpack.c.bf16 %v3852, %v3851
        %v4210 = vpack.c.bf16 %v3854, %v3853
        %v4211 = vpack.c.bf16 %v3856, %v3855
        %v4212 = vpack.c.bf16 %v3858, %v3857
        %v4213 = vpack.c.bf16 %v3860, %v3859
        %v4214 = vpack.c.bf16 %v3862, %v3861
        %v4215 = vrot.slane %v3819, 1
        %v4216 = vrot.slane %v3820, 1
        %v4217 = vrot.slane %v3821, 1
        %v4218 = vrot.slane %v3822, 1
        %v4219 = vrot.slane %v3823, 1
        %v4220 = vrot.slane %v3824, 1
        %v4221 = vrot.slane %v3825, 1
        %v4222 = vrot.slane %v3826, 1
        %v4223 = vrot.slane %v3827, 1
        %v4224 = vrot.slane %v3828, 1
        %v4225 = vrot.slane %v3829, 1
        %v4226 = vrot.slane %v3830, 1
        %v4227 = vrot.slane %v3831, 1
        %v4228 = vrot.slane %v3832, 1
        %v4229 = vrot.slane %v3833, 1
        %v4230 = vrot.slane %v3834, 1
        %v4231 = vrot.slane %v3835, 1
        %v4232 = vrot.slane %v3836, 1
        %v4233 = vrot.slane %v3837, 1
        %v4234 = vrot.slane %v3838, 1
        %v4235 = vrot.slane %v3839, 1
        %v4236 = vrot.slane %v3840, 1
        %v4237 = vrot.slane %v3841, 1
        %v4238 = vrot.slane %v3842, 1
        %v4239 = vrot.slane %v3843, 1
        %v4240 = vrot.slane %v3844, 1
        %v4241 = vrot.slane %v3845, 1
        %v4242 = vrot.slane %v3846, 1
        %v4243 = vrot.slane %v3847, 1
        %v4244 = vrot.slane %v3848, 1
        %v4245 = vrot.slane %v3849, 1
        %v4246 = vrot.slane %v3850, 1
        %v4247 = vrot.slane %v3851, 1
        %v4248 = vrot.slane %v3852, 1
        %v4249 = vrot.slane %v3853, 1
        %v4250 = vrot.slane %v3854, 1
        %v4251 = vrot.slane %v3855, 1
        %v4252 = vrot.slane %v3856, 1
        %v4253 = vrot.slane %v3857, 1
        %v4254 = vrot.slane %v3858, 1
        %v4255 = vrot.slane %v3859, 1
        %v4256 = vrot.slane %v3860, 1
        %v4257 = vrot.slane %v3861, 1
        %v4258 = vrot.slane %v3862, 1
        %v4259 = vsel %vm1108, %v4257, %v4258
        %v4260 = vsel %vm1108, %v4256, %v4257
        %v4261 = vsel %vm1108, %v4255, %v4256
        %v4262 = vsel %vm1108, %v4254, %v4255
        %v4263 = vsel %vm1108, %v4253, %v4254
        %v4264 = vsel %vm1108, %v4252, %v4253
        %v4265 = vsel %vm1108, %v4251, %v4252
        %v4266 = vsel %vm1108, %v4250, %v4251
        %v4267 = vsel %vm1108, %v4249, %v4250
        %v4268 = vsel %vm1108, %v4248, %v4249
        %v4269 = vsel %vm1108, %v4247, %v4248
        %v4270 = vsel %vm1108, %v4246, %v4247
        %v4271 = vsel %vm1108, %v4245, %v4246
        %v4272 = vsel %vm1108, %v4244, %v4245
        %v4273 = vsel %vm1108, %v4243, %v4244
        %v4274 = vsel %vm1108, %v4242, %v4243
        %v4275 = vsel %vm1108, %v4241, %v4242
        %v4276 = vsel %vm1108, %v4240, %v4241
        %v4277 = vsel %vm1108, %v4239, %v4240
        %v4278 = vsel %vm1108, %v4238, %v4239
        %v4279 = vsel %vm1108, %v4237, %v4238
        %v4280 = vsel %vm1108, %v4236, %v4237
        %v4281 = vsel %vm1108, %v4235, %v4236
        %v4282 = vsel %vm1108, %v4234, %v4235
        %v4283 = vsel %vm1108, %v4233, %v4234
        %v4284 = vsel %vm1108, %v4232, %v4233
        %v4285 = vsel %vm1108, %v4231, %v4232
        %v4286 = vsel %vm1108, %v4230, %v4231
        %v4287 = vsel %vm1108, %v4229, %v4230
        %v4288 = vsel %vm1108, %v4228, %v4229
        %v4289 = vsel %vm1108, %v4227, %v4228
        %v4290 = vsel %vm1108, %v4226, %v4227
        %v4291 = vsel %vm1108, %v4225, %v4226
        %v4292 = vsel %vm1108, %v4224, %v4225
        %v4293 = vsel %vm1108, %v4223, %v4224
        %v4294 = vsel %vm1108, %v4222, %v4223
        %v4295 = vsel %vm1108, %v4221, %v4222
        %v4296 = vsel %vm1108, %v4220, %v4221
        %v4297 = vsel %vm1108, %v4219, %v4220
        %v4298 = vsel %vm1108, %v4218, %v4219
        %v4299 = vsel %vm1108, %v4217, %v4218
        %v4300 = vsel %vm1108, %v4216, %v4217
        %v4301 = vsel %vm1108, %v4215, %v4216
        %v4302 = vsel %vm1108, %v4258, %v4215
        %v4303 = vpack.c.bf16 %v4300, %v4301
        %v4304 = vpack.c.bf16 %v4298, %v4299
        %v4305 = vpack.c.bf16 %v4296, %v4297
        %v4306 = vpack.c.bf16 %v4294, %v4295
        %v4307 = vpack.c.bf16 %v4292, %v4293
        %v4308 = vpack.c.bf16 %v4290, %v4291
        %v4309 = vpack.c.bf16 %v4288, %v4289
        %v4310 = vpack.c.bf16 %v4286, %v4287
        %v4311 = vpack.c.bf16 %v4284, %v4285
        %v4312 = vpack.c.bf16 %v4282, %v4283
        %v4313 = vpack.c.bf16 %v4280, %v4281
        %v4314 = vpack.c.bf16 %v4278, %v4279
        %v4315 = vpack.c.bf16 %v4276, %v4277
        %v4316 = vpack.c.bf16 %v4274, %v4275
        %v4317 = vpack.c.bf16 %v4272, %v4273
        %v4318 = vpack.c.bf16 %v4270, %v4271
        %v4319 = vpack.c.bf16 %v4268, %v4269
        %v4320 = vpack.c.bf16 %v4266, %v4267
        %v4321 = vpack.c.bf16 %v4264, %v4265
        %v4322 = vpack.c.bf16 %v4262, %v4263
        %v4323 = vpack.c.bf16 %v4260, %v4261
        %v4324 = vpack.c.bf16 %v4302, %v4259
        %v4325 = vrot.slane %v3819, 2
        %v4326 = vrot.slane %v3820, 2
        %v4327 = vrot.slane %v3821, 2
        %v4328 = vrot.slane %v3822, 2
        %v4329 = vrot.slane %v3823, 2
        %v4330 = vrot.slane %v3824, 2
        %v4331 = vrot.slane %v3825, 2
        %v4332 = vrot.slane %v3826, 2
        %v4333 = vrot.slane %v3827, 2
        %v4334 = vrot.slane %v3828, 2
        %v4335 = vrot.slane %v3829, 2
        %v4336 = vrot.slane %v3830, 2
        %v4337 = vrot.slane %v3831, 2
        %v4338 = vrot.slane %v3832, 2
        %v4339 = vrot.slane %v3833, 2
        %v4340 = vrot.slane %v3834, 2
        %v4341 = vrot.slane %v3835, 2
        %v4342 = vrot.slane %v3836, 2
        %v4343 = vrot.slane %v3837, 2
        %v4344 = vrot.slane %v3838, 2
        %v4345 = vrot.slane %v3839, 2
        %v4346 = vrot.slane %v3840, 2
        %v4347 = vrot.slane %v3841, 2
        %v4348 = vrot.slane %v3842, 2
        %v4349 = vrot.slane %v3843, 2
        %v4350 = vrot.slane %v3844, 2
        %v4351 = vrot.slane %v3845, 2
        %v4352 = vrot.slane %v3846, 2
        %v4353 = vrot.slane %v3847, 2
        %v4354 = vrot.slane %v3848, 2
        %v4355 = vrot.slane %v3849, 2
        %v4356 = vrot.slane %v3850, 2
        %v4357 = vrot.slane %v3851, 2
        %v4358 = vrot.slane %v3852, 2
        %v4359 = vrot.slane %v3853, 2
        %v4360 = vrot.slane %v3854, 2
        %v4361 = vrot.slane %v3855, 2
        %v4362 = vrot.slane %v3856, 2
        %v4363 = vrot.slane %v3857, 2
        %v4364 = vrot.slane %v3858, 2
        %v4365 = vrot.slane %v3859, 2
        %v4366 = vrot.slane %v3860, 2
        %v4367 = vrot.slane %v3861, 2
        %v4368 = vrot.slane %v3862, 2
        %v4369 = vsel %vm1219, %v4367, %v4368
        %v4370 = vsel %vm1219, %v4366, %v4367
        %v4371 = vsel %vm1219, %v4365, %v4366
        %v4372 = vsel %vm1219, %v4364, %v4365
        %v4373 = vsel %vm1219, %v4363, %v4364
        %v4374 = vsel %vm1219, %v4362, %v4363
        %v4375 = vsel %vm1219, %v4361, %v4362
        %v4376 = vsel %vm1219, %v4360, %v4361
        %v4377 = vsel %vm1219, %v4359, %v4360
        %v4378 = vsel %vm1219, %v4358, %v4359
        %v4379 = vsel %vm1219, %v4357, %v4358
        %v4380 = vsel %vm1219, %v4356, %v4357
        %v4381 = vsel %vm1219, %v4355, %v4356
        %v4382 = vsel %vm1219, %v4354, %v4355
        %v4383 = vsel %vm1219, %v4353, %v4354
        %v4384 = vsel %vm1219, %v4352, %v4353
        %v4385 = vsel %vm1219, %v4351, %v4352
        %v4386 = vsel %vm1219, %v4350, %v4351
        %v4387 = vsel %vm1219, %v4349, %v4350
        %v4388 = vsel %vm1219, %v4348, %v4349
        %v4389 = vsel %vm1219, %v4347, %v4348
        %v4390 = vsel %vm1219, %v4346, %v4347
        %v4391 = vsel %vm1219, %v4345, %v4346
        %v4392 = vsel %vm1219, %v4344, %v4345
        %v4393 = vsel %vm1219, %v4343, %v4344
        %v4394 = vsel %vm1219, %v4342, %v4343
        %v4395 = vsel %vm1219, %v4341, %v4342
        %v4396 = vsel %vm1219, %v4340, %v4341
        %v4397 = vsel %vm1219, %v4339, %v4340
        %v4398 = vsel %vm1219, %v4338, %v4339
        %v4399 = vsel %vm1219, %v4337, %v4338
        %v4400 = vsel %vm1219, %v4336, %v4337
        %v4401 = vsel %vm1219, %v4335, %v4336
        %v4402 = vsel %vm1219, %v4334, %v4335
        %v4403 = vsel %vm1219, %v4333, %v4334
        %v4404 = vsel %vm1219, %v4332, %v4333
        %v4405 = vsel %vm1219, %v4331, %v4332
        %v4406 = vsel %vm1219, %v4330, %v4331
        %v4407 = vsel %vm1219, %v4329, %v4330
        %v4408 = vsel %vm1219, %v4328, %v4329
        %v4409 = vsel %vm1219, %v4327, %v4328
        %v4410 = vsel %vm1219, %v4326, %v4327
        %v4411 = vsel %vm1219, %v4325, %v4326
        %v4412 = vsel %vm1219, %v4368, %v4325
        %v4413 = vpack.c.bf16 %v4408, %v4409
        %v4414 = vpack.c.bf16 %v4406, %v4407
        %v4415 = vpack.c.bf16 %v4404, %v4405
        %v4416 = vpack.c.bf16 %v4402, %v4403
        %v4417 = vpack.c.bf16 %v4400, %v4401
        %v4418 = vpack.c.bf16 %v4398, %v4399
        %v4419 = vpack.c.bf16 %v4396, %v4397
        %v4420 = vpack.c.bf16 %v4394, %v4395
        %v4421 = vpack.c.bf16 %v4392, %v4393
        %v4422 = vpack.c.bf16 %v4390, %v4391
        %v4423 = vpack.c.bf16 %v4388, %v4389
        %v4424 = vpack.c.bf16 %v4386, %v4387
        %v4425 = vpack.c.bf16 %v4384, %v4385
        %v4426 = vpack.c.bf16 %v4382, %v4383
        %v4427 = vpack.c.bf16 %v4380, %v4381
        %v4428 = vpack.c.bf16 %v4378, %v4379
        %v4429 = vpack.c.bf16 %v4376, %v4377
        %v4430 = vpack.c.bf16 %v4374, %v4375
        %v4431 = vpack.c.bf16 %v4372, %v4373
        %v4432 = vpack.c.bf16 %v4370, %v4371
        %v4433 = vpack.c.bf16 %v4412, %v4369
        %v4434 = vpack.c.bf16 %v4410, %v4411
        %v4435 = vrot.slane %v3819, 3
        %v4436 = vrot.slane %v3820, 3
        %v4437 = vrot.slane %v3821, 3
        %v4438 = vrot.slane %v3822, 3
        %v4439 = vrot.slane %v3823, 3
        %v4440 = vrot.slane %v3824, 3
        %v4441 = vrot.slane %v3825, 3
        %v4442 = vrot.slane %v3826, 3
        %v4443 = vrot.slane %v3827, 3
        %v4444 = vrot.slane %v3828, 3
        %v4445 = vrot.slane %v3829, 3
        %v4446 = vrot.slane %v3830, 3
        %v4447 = vrot.slane %v3831, 3
        %v4448 = vrot.slane %v3832, 3
        %v4449 = vrot.slane %v3833, 3
        %v4450 = vrot.slane %v3834, 3
        %v4451 = vrot.slane %v3835, 3
        %v4452 = vrot.slane %v3836, 3
        %v4453 = vrot.slane %v3837, 3
        %v4454 = vrot.slane %v3838, 3
        %v4455 = vrot.slane %v3839, 3
        %v4456 = vrot.slane %v3840, 3
        %v4457 = vrot.slane %v3841, 3
        %v4458 = vrot.slane %v3842, 3
        %v4459 = vrot.slane %v3843, 3
        %v4460 = vrot.slane %v3844, 3
        %v4461 = vrot.slane %v3845, 3
        %v4462 = vrot.slane %v3846, 3
        %v4463 = vrot.slane %v3847, 3
        %v4464 = vrot.slane %v3848, 3
        %v4465 = vrot.slane %v3849, 3
        %v4466 = vrot.slane %v3850, 3
        %v4467 = vrot.slane %v3851, 3
        %v4468 = vrot.slane %v3852, 3
        %v4469 = vrot.slane %v3853, 3
        %v4470 = vrot.slane %v3854, 3
        %v4471 = vrot.slane %v3855, 3
        %v4472 = vrot.slane %v3856, 3
        %v4473 = vrot.slane %v3857, 3
        %v4474 = vrot.slane %v3858, 3
        %v4475 = vrot.slane %v3859, 3
        %v4476 = vrot.slane %v3860, 3
        %v4477 = vrot.slane %v3861, 3
        %v4478 = vrot.slane %v3862, 3
        %v4479 = vsel %vm1330, %v4477, %v4478
        %v4480 = vsel %vm1330, %v4476, %v4477
        %v4481 = vsel %vm1330, %v4475, %v4476
        %v4482 = vsel %vm1330, %v4474, %v4475
        %v4483 = vsel %vm1330, %v4473, %v4474
        %v4484 = vsel %vm1330, %v4472, %v4473
        %v4485 = vsel %vm1330, %v4471, %v4472
        %v4486 = vsel %vm1330, %v4470, %v4471
        %v4487 = vsel %vm1330, %v4469, %v4470
        %v4488 = vsel %vm1330, %v4468, %v4469
        %v4489 = vsel %vm1330, %v4467, %v4468
        %v4490 = vsel %vm1330, %v4466, %v4467
        %v4491 = vsel %vm1330, %v4465, %v4466
        %v4492 = vsel %vm1330, %v4464, %v4465
        %v4493 = vsel %vm1330, %v4463, %v4464
        %v4494 = vsel %vm1330, %v4462, %v4463
        %v4495 = vsel %vm1330, %v4461, %v4462
        %v4496 = vsel %vm1330, %v4460, %v4461
        %v4497 = vsel %vm1330, %v4459, %v4460
        %v4498 = vsel %vm1330, %v4458, %v4459
        %v4499 = vsel %vm1330, %v4457, %v4458
        %v4500 = vsel %vm1330, %v4456, %v4457
        %v4501 = vsel %vm1330, %v4455, %v4456
        %v4502 = vsel %vm1330, %v4454, %v4455
        %v4503 = vsel %vm1330, %v4453, %v4454
        %v4504 = vsel %vm1330, %v4452, %v4453
        %v4505 = vsel %vm1330, %v4451, %v4452
        %v4506 = vsel %vm1330, %v4450, %v4451
        %v4507 = vsel %vm1330, %v4449, %v4450
        %v4508 = vsel %vm1330, %v4448, %v4449
        %v4509 = vsel %vm1330, %v4447, %v4448
        %v4510 = vsel %vm1330, %v4446, %v4447
        %v4511 = vsel %vm1330, %v4445, %v4446
        %v4512 = vsel %vm1330, %v4444, %v4445
        %v4513 = vsel %vm1330, %v4443, %v4444
        %v4514 = vsel %vm1330, %v4442, %v4443
        %v4515 = vsel %vm1330, %v4441, %v4442
        %v4516 = vsel %vm1330, %v4440, %v4441
        %v4517 = vsel %vm1330, %v4439, %v4440
        %v4518 = vsel %vm1330, %v4438, %v4439
        %v4519 = vsel %vm1330, %v4437, %v4438
        %v4520 = vsel %vm1330, %v4436, %v4437
        %v4521 = vsel %vm1330, %v4435, %v4436
        %v4522 = vsel %vm1330, %v4478, %v4435
        %v4523 = vpack.c.bf16 %v4518, %v4519
        %v4524 = vpack.c.bf16 %v4516, %v4517
        %v4525 = vpack.c.bf16 %v4514, %v4515
        %v4526 = vpack.c.bf16 %v4512, %v4513
        %v4527 = vpack.c.bf16 %v4510, %v4511
        %v4528 = vpack.c.bf16 %v4508, %v4509
        %v4529 = vpack.c.bf16 %v4506, %v4507
        %v4530 = vpack.c.bf16 %v4504, %v4505
        %v4531 = vpack.c.bf16 %v4502, %v4503
        %v4532 = vpack.c.bf16 %v4500, %v4501
        %v4533 = vpack.c.bf16 %v4498, %v4499
        %v4534 = vpack.c.bf16 %v4496, %v4497
        %v4535 = vpack.c.bf16 %v4494, %v4495
        %v4536 = vpack.c.bf16 %v4492, %v4493
        %v4537 = vpack.c.bf16 %v4490, %v4491
        %v4538 = vpack.c.bf16 %v4488, %v4489
        %v4539 = vpack.c.bf16 %v4486, %v4487
        %v4540 = vpack.c.bf16 %v4484, %v4485
        %v4541 = vpack.c.bf16 %v4482, %v4483
        %v4542 = vpack.c.bf16 %v4480, %v4481
        %v4543 = vpack.c.bf16 %v4522, %v4479
        %v4544 = vpack.c.bf16 %v4520, %v4521
        %v4545 = vld [vmem:[#allocation7] sm:$0xf]
        %v4546 = vld [vmem:[#allocation7 + $0x4] sm:$0xf]
        %v4547 = vld [vmem:[#allocation7 + $0x8] sm:$0xf]
        %v4548 = vld [vmem:[#allocation7 + $0xc] sm:$0xf]
        %v4549 = vld [vmem:[#allocation7 + $0x10] sm:$0xf]
        %v4550 = vld [vmem:[#allocation7 + $0x14] sm:$0xf]
        %v4551 = vld [vmem:[#allocation7 + $0x18] sm:$0xf]
        %v4552 = vld [vmem:[#allocation7 + $0x1c] sm:$0xf]
        %v4553 = vld [vmem:[#allocation7 + $0x20] sm:$0xf]
        %v4554 = vld [vmem:[#allocation7 + $0x24] sm:$0xf]
        %v4555 = vld [vmem:[#allocation7 + $0x28] sm:$0xf]
        %v4556 = vld [vmem:[#allocation7 + $0x2c] sm:$0xf]
        %v4557 = vld [vmem:[#allocation7 + $0x30] sm:$0xf]
        %v4558 = vld [vmem:[#allocation7 + $0x34] sm:$0xf]
        %v4559 = vld [vmem:[#allocation7 + $0x38] sm:$0xf]
        %v4560 = vld [vmem:[#allocation7 + $0x3c] sm:$0xf]
        %v4561 = vld [vmem:[#allocation7 + $0x40] sm:$0xf]
        %v4562 = vld [vmem:[#allocation7 + $0x44] sm:$0xf]
        %v4563 = vld [vmem:[#allocation7 + $0x48] sm:$0xf]
        %v4564 = vld [vmem:[#allocation7 + $0x4c] sm:$0xf]
        %v4565 = vld [vmem:[#allocation7 + $0x50] sm:$0xf]
        %v4566 = vld [vmem:[#allocation7 + $0x54] sm:$0xf]
        %v4567 = vld [vmem:[#allocation7 + $0x58] sm:$0xf]
        %v4568 = vld [vmem:[#allocation7 + $0x5c] sm:$0xf]
        %v4569 = vld [vmem:[#allocation7 + $0x60] sm:$0xf]
        %v4570 = vld [vmem:[#allocation7 + $0x64] sm:$0xf]
        %v4571 = vld [vmem:[#allocation7 + $0x68] sm:$0xf]
        %v4572 = vld [vmem:[#allocation7 + $0x6c] sm:$0xf]
        %v4573 = vld [vmem:[#allocation7 + $0x70] sm:$0xf]
        %v4574 = vld [vmem:[#allocation7 + $0x74] sm:$0xf]
        %v4575 = vld [vmem:[#allocation7 + $0x78] sm:$0xf]
        %v4576 = vld [vmem:[#allocation7 + $0x7c] sm:$0xf]
        %v4577 = vld [vmem:[#allocation7 + $0x80] sm:$0xf]
        %v4578 = vld [vmem:[#allocation7 + $0x84] sm:$0xf]
        %v4579 = vld [vmem:[#allocation7 + $0x88] sm:$0xf]
        %v4580 = vld [vmem:[#allocation7 + $0x8c] sm:$0xf]
        %v4581 = vld [vmem:[#allocation7 + $0x90] sm:$0xf]
        %v4582 = vld [vmem:[#allocation7 + $0x94] sm:$0xf]
        %v4583 = vld [vmem:[#allocation7 + $0x98] sm:$0xf]
        %v4584 = vld [vmem:[#allocation7 + $0x9c] sm:$0xf]
        %v4585 = vld [vmem:[#allocation7 + $0xa0] sm:$0xf]
        %v4586 = vld [vmem:[#allocation7 + $0xa4] sm:$0xf]
        %v4587 = vld [vmem:[#allocation7 + $0xa8] sm:$0xf]
        %v4588 = vld [vmem:[#allocation7 + $0xac] sm:$0xf]
        %v4589 = vld [vmem:[#allocation7 + $0xb0] sm:$0xf]
        %v4590 = vld [vmem:[#allocation7 + $0xb4] sm:$0xf]
        %v4591 = vld [vmem:[#allocation7 + $0xb8] sm:$0xf]
        %v4592 = vld [vmem:[#allocation7 + $0xbc] sm:$0xf]
        %v4593 = vld [vmem:[#allocation7 + $0xc0] sm:$0xf]
        %v4594 = vld [vmem:[#allocation7 + $0xc4] sm:$0xf]
        %v4595 = vld [vmem:[#allocation7 + $0xc8] sm:$0xf]
        %v4596 = vld [vmem:[#allocation7 + $0xcc] sm:$0xf]
        %v4597 = vld [vmem:[#allocation7 + $0xd0] sm:$0xf]
        %v4598 = vld [vmem:[#allocation7 + $0xd4] sm:$0xf]
        %v4599 = vld [vmem:[#allocation7 + $0xd8] sm:$0xf]
        %v4600 = vld [vmem:[#allocation7 + $0xdc] sm:$0xf]
        %v4601 = vld [vmem:[#allocation7 + $0xe0] sm:$0xf]
        %v4602 = vld [vmem:[#allocation7 + $0xe4] sm:$0xf]
        %v4603 = vld [vmem:[#allocation7 + $0xe8] sm:$0xf]
        %v4604 = vld [vmem:[#allocation7 + $0xec] sm:$0xf]
        %v4605 = vld [vmem:[#allocation7 + $0xf0] sm:$0xf]
        %v4606 = vld [vmem:[#allocation7 + $0xf4] sm:$0xf]
        %v4607 = vld [vmem:[#allocation7 + $0xf8] sm:$0xf]
        %v4608 = vld [vmem:[#allocation7 + $0xfc] sm:$0xf]
        %v4609 = vld [vmem:[#allocation7 + $0x100] sm:$0xf]
        %v4610 = vld [vmem:[#allocation7 + $0x104] sm:$0xf]
        %v4611 = vld [vmem:[#allocation7 + $0x108] sm:$0xf]
        %v4612 = vld [vmem:[#allocation7 + $0x10c] sm:$0xf]
        %v4613 = vld [vmem:[#allocation7 + $0x110] sm:$0xf]
        %v4614 = vld [vmem:[#allocation7 + $0x114] sm:$0xf]
        %v4615 = vld [vmem:[#allocation7 + $0x118] sm:$0xf]
        %v4616 = vld [vmem:[#allocation7 + $0x11c] sm:$0xf]
        %v4617 = vld [vmem:[#allocation7 + $0x120] sm:$0xf]
        %v4618 = vld [vmem:[#allocation7 + $0x124] sm:$0xf]
        %v4619 = vld [vmem:[#allocation7 + $0x128] sm:$0xf]
        %v4620 = vld [vmem:[#allocation7 + $0x12c] sm:$0xf]
        %v4621 = vld [vmem:[#allocation7 + $0x130] sm:$0xf]
        %v4622 = vld [vmem:[#allocation7 + $0x134] sm:$0xf]
        %v4623 = vld [vmem:[#allocation7 + $0x138] sm:$0xf]
        %v4624 = vld [vmem:[#allocation7 + $0x13c] sm:$0xf]
        %v4625 = vld [vmem:[#allocation7 + $0x140] sm:$0xf]
        %v4626 = vld [vmem:[#allocation7 + $0x144] sm:$0xf]
        %v4627 = vld [vmem:[#allocation7 + $0x148] sm:$0xf]
        %v4628 = vld [vmem:[#allocation7 + $0x14c] sm:$0xf]
        %v4629 = vld [vmem:[#allocation7 + $0x150] sm:$0xf]
        %v4630 = vld [vmem:[#allocation7 + $0x154] sm:$0xf]
        %v4631 = vld [vmem:[#allocation7 + $0x158] sm:$0xf]
        %v4632 = vld [vmem:[#allocation7 + $0x15c] sm:$0xf]
        %v4633 = vld [vmem:[#allocation7 + $0x160] sm:$0xf]
        %v4634 = vld [vmem:[#allocation7 + $0x164] sm:$0xf]
        %v4635 = vld [vmem:[#allocation7 + $0x168] sm:$0xf]
        %v4636 = vld [vmem:[#allocation7 + $0x16c] sm:$0xf]
        %v4637 = vld [vmem:[#allocation7 + $0x170] sm:$0xf]
        %v4638 = vld [vmem:[#allocation7 + $0x174] sm:$0xf]
        %v4639 = vld [vmem:[#allocation7 + $0x178] sm:$0xf]
        %v4640 = vld [vmem:[#allocation7 + $0x17c] sm:$0xf]
        %v4641 = vld [vmem:[#allocation7 + $0x180] sm:$0xf]
        %v4642 = vld [vmem:[#allocation7 + $0x184] sm:$0xf]
        %v4643 = vld [vmem:[#allocation7 + $0x188] sm:$0xf]
        %v4644 = vld [vmem:[#allocation7 + $0x18c] sm:$0xf]
        %v4645 = vld [vmem:[#allocation7 + $0x190] sm:$0xf]
        %v4646 = vld [vmem:[#allocation7 + $0x194] sm:$0xf]
        %v4647 = vld [vmem:[#allocation7 + $0x198] sm:$0xf]
        %v4648 = vld [vmem:[#allocation7 + $0x19c] sm:$0xf]
        %v4649 = vld [vmem:[#allocation7 + $0x1a0] sm:$0xf]
        %v4650 = vld [vmem:[#allocation7 + $0x1a4] sm:$0xf]
        %v4651 = vld [vmem:[#allocation7 + $0x1a8] sm:$0xf]
        %v4652 = vld [vmem:[#allocation7 + $0x1ac] sm:$0xf]
        %v4653 = vld [vmem:[#allocation7 + $0x1b0] sm:$0xf]
        %v4654 = vld [vmem:[#allocation7 + $0x1b4] sm:$0xf]
        %v4655 = vld [vmem:[#allocation7 + $0x1b8] sm:$0xf]
        %v4656 = vld [vmem:[#allocation7 + $0x1bc] sm:$0xf]
        %v4657 = vld [vmem:[#allocation7 + $0x1c0] sm:$0xf]
        %v4658 = vld [vmem:[#allocation7 + $0x1c4] sm:$0xf]
        %v4659 = vld [vmem:[#allocation7 + $0x1c8] sm:$0xf]
        %v4660 = vld [vmem:[#allocation7 + $0x1cc] sm:$0xf]
        %v4661 = vld [vmem:[#allocation7 + $0x1d0] sm:$0xf]
        %v4662 = vld [vmem:[#allocation7 + $0x1d4] sm:$0xf]
        %v4663 = vld [vmem:[#allocation7 + $0x1d8] sm:$0xf]
        %v4664 = vld [vmem:[#allocation7 + $0x1dc] sm:$0xf]
        %v4665 = vld [vmem:[#allocation7 + $0x1e0] sm:$0xf]
        %v4666 = vld [vmem:[#allocation7 + $0x1e4] sm:$0xf]
        %v4667 = vld [vmem:[#allocation7 + $0x1e8] sm:$0xf]
        %v4668 = vld [vmem:[#allocation7 + $0x1ec] sm:$0xf]
        %v4669 = vld [vmem:[#allocation7 + $0x1f0] sm:$0xf]
        %v4670 = vld [vmem:[#allocation7 + $0x1f4] sm:$0xf]
        %v4671 = vld [vmem:[#allocation7 + $0x1f8] sm:$0xf]
        %v4672 = vld [vmem:[#allocation7 + $0x1fc] sm:$0xf]
        %v4673 = vld [vmem:[#allocation7 + $0x200] sm:$0xf]
        %v4674 = vld [vmem:[#allocation7 + $0x204] sm:$0xf]
        %v4675 = vld [vmem:[#allocation7 + $0x208] sm:$0xf]
        %v4676 = vld [vmem:[#allocation7 + $0x20c] sm:$0xf]
        %v4677 = vld [vmem:[#allocation7 + $0x210] sm:$0xf]
        %v4678 = vld [vmem:[#allocation7 + $0x214] sm:$0xf]
        %v4679 = vld [vmem:[#allocation7 + $0x218] sm:$0xf]
        %v4680 = vld [vmem:[#allocation7 + $0x21c] sm:$0xf]
        %v4681 = vld [vmem:[#allocation7 + $0x220] sm:$0xf]
        %v4682 = vld [vmem:[#allocation7 + $0x224] sm:$0xf]
        %v4683 = vld [vmem:[#allocation7 + $0x228] sm:$0xf]
        %v4684 = vld [vmem:[#allocation7 + $0x22c] sm:$0xf]
        %v4685 = vld [vmem:[#allocation7 + $0x230] sm:$0xf]
        %v4686 = vld [vmem:[#allocation7 + $0x234] sm:$0xf]
        %v4687 = vld [vmem:[#allocation7 + $0x238] sm:$0xf]
        %v4688 = vld [vmem:[#allocation7 + $0x23c] sm:$0xf]
        %v4833 = vunpack.c.l.b16 %v4545
        %v4834 = vunpack.c.l.b16 %v4546
        %v4835 = vunpack.c.l.b16 %v4547
        %v4836 = vunpack.c.l.b16 %v4548
        %v4837 = vunpack.c.l.b16 %v4549
        %v4838 = vunpack.c.l.b16 %v4550
        %v4839 = vunpack.c.l.b16 %v4551
        %v4840 = vunpack.c.l.b16 %v4552
        %v4841 = vunpack.c.l.b16 %v4553
        %v4842 = vunpack.c.l.b16 %v4554
        %v4843 = vunpack.c.l.b16 %v4555
        %v4844 = vunpack.c.l.b16 %v4556
        %v4845 = vunpack.c.l.b16 %v4557
        %v4846 = vunpack.c.l.b16 %v4558
        %v4847 = vunpack.c.l.b16 %v4559
        %v4848 = vunpack.c.l.b16 %v4560
        %v4849 = vunpack.c.l.b16 %v4561
        %v4850 = vunpack.c.l.b16 %v4562
        %v4851 = vunpack.c.l.b16 %v4563
        %v4852 = vunpack.c.l.b16 %v4564
        %v4853 = vunpack.c.l.b16 %v4565
        %v4854 = vunpack.c.l.b16 %v4566
        %v4855 = vunpack.c.l.b16 %v4567
        %v4856 = vunpack.c.l.b16 %v4568
        %v4857 = vunpack.c.l.b16 %v4569
        %v4858 = vunpack.c.l.b16 %v4570
        %v4859 = vunpack.c.l.b16 %v4571
        %v4860 = vunpack.c.l.b16 %v4572
        %v4861 = vunpack.c.l.b16 %v4573
        %v4862 = vunpack.c.l.b16 %v4574
        %v4863 = vunpack.c.l.b16 %v4575
        %v4864 = vunpack.c.l.b16 %v4576
        %v4865 = vunpack.c.l.b16 %v4577
        %v4866 = vunpack.c.l.b16 %v4578
        %v4867 = vunpack.c.l.b16 %v4579
        %v4868 = vunpack.c.l.b16 %v4580
        %v4869 = vunpack.c.l.b16 %v4581
        %v4870 = vunpack.c.l.b16 %v4582
        %v4871 = vunpack.c.l.b16 %v4583
        %v4872 = vunpack.c.l.b16 %v4584
        %v4873 = vunpack.c.l.b16 %v4585
        %v4874 = vunpack.c.l.b16 %v4586
        %v4875 = vunpack.c.l.b16 %v4587
        %v4876 = vunpack.c.l.b16 %v4588
        %v4877 = vunpack.c.l.b16 %v4589
        %v4878 = vunpack.c.l.b16 %v4590
        %v4879 = vunpack.c.l.b16 %v4591
        %v4880 = vunpack.c.l.b16 %v4592
        %v4881 = vunpack.c.l.b16 %v4593
        %v4882 = vunpack.c.l.b16 %v4594
        %v4883 = vunpack.c.l.b16 %v4595
        %v4884 = vunpack.c.l.b16 %v4596
        %v4885 = vunpack.c.l.b16 %v4597
        %v4886 = vunpack.c.l.b16 %v4598
        %v4887 = vunpack.c.l.b16 %v4599
        %v4888 = vunpack.c.l.b16 %v4600
        %v4889 = vunpack.c.l.b16 %v4601
        %v4890 = vunpack.c.l.b16 %v4602
        %v4891 = vunpack.c.l.b16 %v4603
        %v4892 = vunpack.c.l.b16 %v4604
        %v4893 = vunpack.c.l.b16 %v4605
        %v4894 = vunpack.c.l.b16 %v4606
        %v4895 = vunpack.c.l.b16 %v4607
        %v4896 = vunpack.c.l.b16 %v4608
        %v4897 = vunpack.c.l.b16 %v4609
        %v4898 = vunpack.c.l.b16 %v4610
        %v4899 = vunpack.c.l.b16 %v4611
        %v4900 = vunpack.c.l.b16 %v4612
        %v4901 = vunpack.c.l.b16 %v4613
        %v4902 = vunpack.c.l.b16 %v4614
        %v4903 = vunpack.c.l.b16 %v4615
        %v4904 = vunpack.c.l.b16 %v4616
        %v4905 = vunpack.c.l.b16 %v4617
        %v4906 = vunpack.c.l.b16 %v4618
        %v4907 = vunpack.c.l.b16 %v4619
        %v4908 = vunpack.c.l.b16 %v4620
        %v4909 = vunpack.c.l.b16 %v4621
        %v4910 = vunpack.c.l.b16 %v4622
        %v4911 = vunpack.c.l.b16 %v4623
        %v4912 = vunpack.c.l.b16 %v4624
        %v4913 = vunpack.c.l.b16 %v4625
        %v4914 = vunpack.c.l.b16 %v4626
        %v4915 = vunpack.c.l.b16 %v4627
        %v4916 = vunpack.c.l.b16 %v4628
        %v4917 = vunpack.c.l.b16 %v4629
        %v4918 = vunpack.c.l.b16 %v4630
        %v4919 = vunpack.c.l.b16 %v4631
        %v4920 = vunpack.c.l.b16 %v4632
        %v4921 = vunpack.c.l.b16 %v4633
        %v4922 = vunpack.c.l.b16 %v4634
        %v4923 = vunpack.c.l.b16 %v4635
        %v4924 = vunpack.c.l.b16 %v4636
        %v4925 = vunpack.c.l.b16 %v4637
        %v4926 = vunpack.c.l.b16 %v4638
        %v4927 = vunpack.c.l.b16 %v4639
        %v4928 = vunpack.c.l.b16 %v4640
        %v4929 = vunpack.c.l.b16 %v4641
        %v4930 = vunpack.c.l.b16 %v4642
        %v4931 = vunpack.c.l.b16 %v4643
        %v4932 = vunpack.c.l.b16 %v4644
        %v4933 = vunpack.c.l.b16 %v4645
        %v4934 = vunpack.c.l.b16 %v4646
        %v4935 = vunpack.c.l.b16 %v4647
        %v4936 = vunpack.c.l.b16 %v4648
        %v4937 = vunpack.c.l.b16 %v4649
        %v4938 = vunpack.c.l.b16 %v4650
        %v4939 = vunpack.c.l.b16 %v4651
        %v4940 = vunpack.c.l.b16 %v4652
        %v4941 = vunpack.c.l.b16 %v4653
        %v4942 = vunpack.c.l.b16 %v4654
        %v4943 = vunpack.c.l.b16 %v4655
        %v4944 = vunpack.c.l.b16 %v4656
        %v4945 = vunpack.c.l.b16 %v4657
        %v4946 = vunpack.c.l.b16 %v4658
        %v4947 = vunpack.c.l.b16 %v4659
        %v4948 = vunpack.c.l.b16 %v4660
        %v4949 = vunpack.c.l.b16 %v4661
        %v4950 = vunpack.c.l.b16 %v4662
        %v4951 = vunpack.c.l.b16 %v4663
        %v4952 = vunpack.c.l.b16 %v4664
        %v4953 = vunpack.c.l.b16 %v4665
        %v4954 = vunpack.c.l.b16 %v4666
        %v4955 = vunpack.c.l.b16 %v4667
        %v4956 = vunpack.c.l.b16 %v4668
        %v4957 = vunpack.c.l.b16 %v4669
        %v4958 = vunpack.c.l.b16 %v4670
        %v4959 = vunpack.c.l.b16 %v4671
        %v4960 = vunpack.c.l.b16 %v4672
        %v4961 = vunpack.c.l.b16 %v4673
        %v4962 = vunpack.c.l.b16 %v4674
        %v4963 = vunpack.c.l.b16 %v4675
        %v4964 = vunpack.c.l.b16 %v4676
        %v4965 = vunpack.c.l.b16 %v4677
        %v4966 = vunpack.c.l.b16 %v4678
        %v4967 = vunpack.c.l.b16 %v4679
        %v4968 = vunpack.c.l.b16 %v4680
        %v4969 = vunpack.c.l.b16 %v4681
        %v4970 = vunpack.c.l.b16 %v4682
        %v4971 = vunpack.c.l.b16 %v4683
        %v4972 = vunpack.c.l.b16 %v4684
        %v4973 = vunpack.c.l.b16 %v4685
        %v4974 = vunpack.c.l.b16 %v4686
        %v4975 = vunpack.c.l.b16 %v4687
        %v4976 = vunpack.c.l.b16 %v4688
        %v4977 = vpack.c.b16 %v4834, %v4833
        %v4978 = vpack.c.b16 %v4836, %v4835
        %v4979 = vpack.c.b16 %v4838, %v4837
        %v4980 = vpack.c.b16 %v4840, %v4839
        %v4981 = vpack.c.b16 %v4842, %v4841
        %v4982 = vpack.c.b16 %v4844, %v4843
        %v4983 = vpack.c.b16 %v4846, %v4845
        %v4984 = vpack.c.b16 %v4848, %v4847
        %v4985 = vpack.c.b16 %v4850, %v4849
        %v4986 = vpack.c.b16 %v4852, %v4851
        %v4987 = vpack.c.b16 %v4854, %v4853
        %v4988 = vpack.c.b16 %v4856, %v4855
        %v4989 = vpack.c.b16 %v4858, %v4857
        %v4990 = vpack.c.b16 %v4860, %v4859
        %v4991 = vpack.c.b16 %v4862, %v4861
        %v4992 = vpack.c.b16 %v4864, %v4863
        %v4993 = vpack.c.b16 %v4866, %v4865
        %v4994 = vpack.c.b16 %v4868, %v4867
        %v4995 = vpack.c.b16 %v4870, %v4869
        %v4996 = vpack.c.b16 %v4872, %v4871
        %v4997 = vpack.c.b16 %v4874, %v4873
        %v4998 = vpack.c.b16 %v4876, %v4875
        %v4999 = vpack.c.b16 %v4878, %v4877
        %v5000 = vpack.c.b16 %v4880, %v4879
        %v5001 = vpack.c.b16 %v4882, %v4881
        %v5002 = vpack.c.b16 %v4884, %v4883
        %v5003 = vpack.c.b16 %v4886, %v4885
        %v5004 = vpack.c.b16 %v4888, %v4887
        %v5005 = vpack.c.b16 %v4890, %v4889
        %v5006 = vpack.c.b16 %v4892, %v4891
        %v5007 = vpack.c.b16 %v4894, %v4893
        %v5008 = vpack.c.b16 %v4896, %v4895
        %v5009 = vpack.c.b16 %v4898, %v4897
        %v5010 = vpack.c.b16 %v4900, %v4899
        %v5011 = vpack.c.b16 %v4902, %v4901
        %v5012 = vpack.c.b16 %v4904, %v4903
        %v5013 = vpack.c.b16 %v4906, %v4905
        %v5014 = vpack.c.b16 %v4908, %v4907
        %v5015 = vpack.c.b16 %v4910, %v4909
        %v5016 = vpack.c.b16 %v4912, %v4911
        %v5017 = vpack.c.b16 %v4914, %v4913
        %v5018 = vpack.c.b16 %v4916, %v4915
        %v5019 = vpack.c.b16 %v4918, %v4917
        %v5020 = vpack.c.b16 %v4920, %v4919
        %v5021 = vpack.c.b16 %v4922, %v4921
        %v5022 = vpack.c.b16 %v4924, %v4923
        %v5023 = vpack.c.b16 %v4926, %v4925
        %v5024 = vpack.c.b16 %v4928, %v4927
        %v5025 = vpack.c.b16 %v4930, %v4929
        %v5026 = vpack.c.b16 %v4932, %v4931
        %v5027 = vpack.c.b16 %v4934, %v4933
        %v5028 = vpack.c.b16 %v4936, %v4935
        %v5029 = vpack.c.b16 %v4938, %v4937
        %v5030 = vpack.c.b16 %v4940, %v4939
        %v5031 = vpack.c.b16 %v4942, %v4941
        %v5032 = vpack.c.b16 %v4944, %v4943
        %v5033 = vpack.c.b16 %v4946, %v4945
        %v5034 = vpack.c.b16 %v4948, %v4947
        %v5035 = vpack.c.b16 %v4950, %v4949
        %v5036 = vpack.c.b16 %v4952, %v4951
        %v5037 = vpack.c.b16 %v4954, %v4953
        %v5038 = vpack.c.b16 %v4956, %v4955
        %v5039 = vpack.c.b16 %v4958, %v4957
        %v5040 = vpack.c.b16 %v4960, %v4959
        %v5041 = vpack.c.b16 %v4962, %v4961
        %v5042 = vpack.c.b16 %v4964, %v4963
        %v5043 = vpack.c.b16 %v4966, %v4965
        %v5044 = vpack.c.b16 %v4968, %v4967
        %v5045 = vpack.c.b16 %v4970, %v4969
        %v5046 = vpack.c.b16 %v4972, %v4971
        %v5047 = vpack.c.b16 %v4974, %v4973
        %v5048 = vpack.c.b16 %v4976, %v4975
        %5121 = vmatprep.subr.bf16.mxu0 0
        %5122 = vmatpush1.bf16.msra.mxu0 %v4977
        %5123 = vmatprep.subr.bf16.mxu0 0
        %5124 = vmatpush1.bf16.msra.mxu0 %v4978
        %5125 = vmatprep.subr.bf16.mxu0 0
        %5126 = vmatpush1.bf16.msra.mxu0 %v4979
        %5127 = vmatprep.subr.bf16.mxu0 0
        %5128 = vmatpush1.bf16.msra.mxu0 %v4980
        %5129 = vmatprep.subr.bf16.mxu0 0
        %5130 = vmatpush1.bf16.msra.mxu0 %v4981
        %5131 = vmatprep.subr.bf16.mxu0 0
        %5132 = vmatpush1.bf16.msra.mxu0 %v4982
        %5133 = vmatprep.subr.bf16.mxu0 0
        %5134 = vmatpush1.bf16.msra.mxu0 %v4983
        %5135 = vmatprep.subr.bf16.mxu0 0
        %5136 = vmatpush1.bf16.msra.mxu0 %v4984
        %5137 = vmatprep.subr.bf16.mxu0 0
        %5138 = vmatpush1.bf16.msra.mxu0 %v4985
        %5139 = vmatprep.subr.bf16.mxu0 0
        %5140 = vmatpush1.bf16.msra.mxu0 %v4986
        %5141 = vmatprep.subr.bf16.mxu0 0
        %5142 = vmatpush1.bf16.msra.mxu0 %v4987
        %5143 = vmatprep.subr.bf16.mxu0 0
        %5144 = vmatpush1.bf16.msra.mxu0 %v4988
        %5145 = vmatprep.subr.bf16.mxu0 0
        %5146 = vmatpush1.bf16.msra.mxu0 %v4989
        %5147 = vmatprep.subr.bf16.mxu0 0
        %5148 = vmatpush1.bf16.msra.mxu0 %v4990
        %5149 = vmatprep.subr.bf16.mxu0 0
        %5150 = vmatpush1.bf16.msra.mxu0 %v4991
        %5151 = vmatprep.subr.bf16.mxu0 0
        %5152 = vmatpush1.bf16.msra.mxu0 %v4992
        %5153 = vmatprep.mubr.bf16.mxu0 %v4061
        %5154 = vmatmul.mubr.bf16.gmra.mrb[0].mxu0 %v3951
        %v5155 = vpop.f32.mrb[0].mxu0
        %v5156 = vadd.f32 0.0, %v5155
        %v5157 = vpop.f32.mrb[0].mxu0
        %v5158 = vpop.f32.mrb[0].mxu0
        %v5159 = vadd.f32 0.0, %v5158
        %v5160 = vpop.f32.mrb[0].mxu0
        %5161 = vmatprep.mubr.bf16.mxu0 %v4062
        %5162 = vmatmul.mubr.bf16.gmra.mrb[0].mxu0 %v3952
        %v5163 = vpop.f32.mrb[0].mxu0
        %v5164 = vadd.f32 0.0, %v5163
        %v5165 = vpop.f32.mrb[0].mxu0
        %v5166 = vpop.f32.mrb[0].mxu0
        %v5167 = vadd.f32 0.0, %v5166
        %v5168 = vpop.f32.mrb[0].mxu0
        %5169 = vmatprep.mubr.bf16.mxu0 %v4063
        %5170 = vmatmul.mubr.bf16.gmra.mrb[0].mxu0 %v3953
        %v5171 = vpop.f32.mrb[0].mxu0
        %v5172 = vadd.f32 0.0, %v5171
        %v5173 = vpop.f32.mrb[0].mxu0
        %v5174 = vpop.f32.mrb[0].mxu0
        %v5175 = vadd.f32 0.0, %v5174
        %v5176 = vpop.f32.mrb[0].mxu0
        %5177 = vmatprep.mubr.bf16.mxu0 %v4064
        %5178 = vmatmul.mubr.bf16.gmra.mrb[0].mxu0 %v3954
        %v5179 = vpop.f32.mrb[0].mxu0
        %v5180 = vadd.f32 0.0, %v5179
        %v5181 = vpop.f32.mrb[0].mxu0
        %v5182 = vpop.f32.mrb[0].mxu0
        %v5183 = vadd.f32 0.0, %v5182
        %v5184 = vpop.f32.mrb[0].mxu0
        %5185 = vmatprep.mubr.bf16.mxu0 %v4065
        %5186 = vmatmul.mubr.bf16.gmra.mrb[0].mxu0 %v3955
        %v5187 = vpop.f32.mrb[0].mxu0
        %v5188 = vadd.f32 0.0, %v5187
        %v5189 = vpop.f32.mrb[0].mxu0
        %v5190 = vpop.f32.mrb[0].mxu0
        %v5191 = vadd.f32 0.0, %v5190
        %v5192 = vpop.f32.mrb[0].mxu0
        %5193 = vmatprep.mubr.bf16.mxu0 %v4066
        %5194 = vmatmul.mubr.bf16.gmra.mrb[0].mxu0 %v3956
        %v5195 = vpop.f32.mrb[0].mxu0
        %v5196 = vadd.f32 0.0, %v5195
        %v5197 = vpop.f32.mrb[0].mxu0
        %v5198 = vpop.f32.mrb[0].mxu0
        %v5199 = vadd.f32 0.0, %v5198
        %v5200 = vpop.f32.mrb[0].mxu0
        %5201 = vmatprep.mubr.bf16.mxu0 %v4067
        %5202 = vmatmul.mubr.bf16.gmra.mrb[0].mxu0 %v3957
        %v5203 = vpop.f32.mrb[0].mxu0
        %v5204 = vadd.f32 0.0, %v5203
        %v5205 = vpop.f32.mrb[0].mxu0
        %v5206 = vpop.f32.mrb[0].mxu0
        %v5207 = vadd.f32 0.0, %v5206
        %v5208 = vpop.f32.mrb[0].mxu0
        %5209 = vmatprep.mubr.bf16.mxu0 %v4068
        %5210 = vmatmul.mubr.bf16.gmra.mrb[0].mxu0 %v3958
        %v5211 = vpop.f32.mrb[0].mxu0
        %v5212 = vadd.f32 0.0, %v5211
        %v5213 = vpop.f32.mrb[0].mxu0
        %v5214 = vpop.f32.mrb[0].mxu0
        %v5215 = vadd.f32 0.0, %v5214
        %v5216 = vpop.f32.mrb[0].mxu0
        %5217 = vmatprep.mubr.bf16.mxu0 %v4069
        %5218 = vmatmul.mubr.bf16.gmra.mrb[0].mxu0 %v3959
        %v5219 = vpop.f32.mrb[0].mxu0
        %v5220 = vadd.f32 0.0, %v5219
        %v5221 = vpop.f32.mrb[0].mxu0
        %v5222 = vpop.f32.mrb[0].mxu0
        %v5223 = vadd.f32 0.0, %v5222
        %v5224 = vpop.f32.mrb[0].mxu0
        %5225 = vmatprep.mubr.bf16.mxu0 %v4070
        %5226 = vmatmul.mubr.bf16.gmra.mrb[0].mxu0 %v3960
        %v5227 = vpop.f32.mrb[0].mxu0
        %v5228 = vadd.f32 0.0, %v5227
        %v5229 = vpop.f32.mrb[0].mxu0
        %v5230 = vpop.f32.mrb[0].mxu0
        %v5231 = vadd.f32 0.0, %v5230
        %v5232 = vpop.f32.mrb[0].mxu0
        %5233 = vmatprep.mubr.bf16.mxu0 %v4071
        %5234 = vmatmul.mubr.bf16.gmra.mrb[0].mxu0 %v3961
        %v5235 = vpop.f32.mrb[0].mxu0
        %v5236 = vadd.f32 0.0, %v5235
        %v5237 = vpop.f32.mrb[0].mxu0
        %v5238 = vpop.f32.mrb[0].mxu0
        %v5239 = vadd.f32 0.0, %v5238
        %v5240 = vpop.f32.mrb[0].mxu0
        %5241 = vmatprep.mubr.bf16.mxu0 %v4072
        %5242 = vmatmul.mubr.bf16.gmra.mrb[0].mxu0 %v3962
        %v5243 = vpop.f32.mrb[0].mxu0
        %v5244 = vadd.f32 0.0, %v5243
        %v5245 = vpop.f32.mrb[0].mxu0
        %v5246 = vpop.f32.mrb[0].mxu0
        %v5247 = vadd.f32 0.0, %v5246
        %v5248 = vpop.f32.mrb[0].mxu0
        %5249 = vmatprep.mubr.bf16.mxu0 %v4073
        %5250 = vmatmul.mubr.bf16.gmra.mrb[0].mxu0 %v3963
        %v5251 = vpop.f32.mrb[0].mxu0
        %v5252 = vadd.f32 0.0, %v5251
        %v5253 = vpop.f32.mrb[0].mxu0
        %v5254 = vpop.f32.mrb[0].mxu0
        %v5255 = vadd.f32 0.0, %v5254
        %v5256 = vpop.f32.mrb[0].mxu0
        %5257 = vmatprep.mubr.bf16.mxu0 %v4074
        %5258 = vmatmul.mubr.bf16.gmra.mrb[0].mxu0 %v3964
        %v5259 = vpop.f32.mrb[0].mxu0
        %v5260 = vadd.f32 0.0, %v5259
        %v5261 = vpop.f32.mrb[0].mxu0
        %v5262 = vpop.f32.mrb[0].mxu0
        %v5263 = vadd.f32 0.0, %v5262
        %v5264 = vpop.f32.mrb[0].mxu0
        %5265 = vmatprep.mubr.bf16.mxu0 %v4075
        %5266 = vmatmul.mubr.bf16.gmra.mrb[0].mxu0 %v3965
        %v5267 = vpop.f32.mrb[0].mxu0
        %v5268 = vadd.f32 0.0, %v5267
        %v5269 = vpop.f32.mrb[0].mxu0
        %v5270 = vpop.f32.mrb[0].mxu0
        %v5271 = vadd.f32 0.0, %v5270
        %v5272 = vpop.f32.mrb[0].mxu0
        %5273 = vmatprep.mubr.bf16.mxu0 %v4076
        %5274 = vmatmul.mubr.bf16.gmra.mrb[0].mxu0 %v3966
        %v5275 = vpop.f32.mrb[0].mxu0
        %v5276 = vadd.f32 0.0, %v5275
        %v5277 = vpop.f32.mrb[0].mxu0
        %v5278 = vpop.f32.mrb[0].mxu0
        %v5279 = vadd.f32 0.0, %v5278
        %v5280 = vpop.f32.mrb[0].mxu0
        %5281 = vmatprep.mubr.bf16.mxu0 %v4077
        %5282 = vmatmul.mubr.bf16.gmra.mrb[0].mxu0 %v3967
        %v5283 = vpop.f32.mrb[0].mxu0
        %v5284 = vadd.f32 0.0, %v5283
        %v5285 = vpop.f32.mrb[0].mxu0
        %v5286 = vpop.f32.mrb[0].mxu0
        %v5287 = vadd.f32 0.0, %v5286
        %v5288 = vpop.f32.mrb[0].mxu0
        %5289 = vmatprep.mubr.bf16.mxu0 %v4078
        %5290 = vmatmul.mubr.bf16.gmra.mrb[0].mxu0 %v3968
        %v5291 = vpop.f32.mrb[0].mxu0
        %v5292 = vadd.f32 0.0, %v5291
        %v5293 = vpop.f32.mrb[0].mxu0
        %v5294 = vpop.f32.mrb[0].mxu0
        %v5295 = vadd.f32 0.0, %v5294
        %v5296 = vpop.f32.mrb[0].mxu0
        %5297 = vmatprep.mubr.bf16.mxu0 %v4079
        %5298 = vmatmul.mubr.bf16.gmra.mrb[0].mxu0 %v3969
        %v5299 = vpop.f32.mrb[0].mxu0
        %v5300 = vadd.f32 0.0, %v5299
        %v5301 = vpop.f32.mrb[0].mxu0
        %v5302 = vpop.f32.mrb[0].mxu0
        %v5303 = vadd.f32 0.0, %v5302
        %v5304 = vpop.f32.mrb[0].mxu0
        %5305 = vmatprep.mubr.bf16.mxu0 %v4080
        %5306 = vmatmul.mubr.bf16.gmra.mrb[0].mxu0 %v3970
        %v5307 = vpop.f32.mrb[0].mxu0
        %v5308 = vadd.f32 0.0, %v5307
        %v5309 = vpop.f32.mrb[0].mxu0
        %v5310 = vpop.f32.mrb[0].mxu0
        %v5311 = vadd.f32 0.0, %v5310
        %v5312 = vpop.f32.mrb[0].mxu0
        %5313 = vmatprep.mubr.bf16.mxu0 %v4081
        %5314 = vmatmul.mubr.bf16.gmra.mrb[0].mxu0 %v3971
        %v5315 = vpop.f32.mrb[0].mxu0
        %v5316 = vadd.f32 0.0, %v5315
        %v5317 = vpop.f32.mrb[0].mxu0
        %v5318 = vpop.f32.mrb[0].mxu0
        %v5319 = vadd.f32 0.0, %v5318
        %v5320 = vpop.f32.mrb[0].mxu0
        %5321 = vmatprep.mubr.bf16.mxu0 %v4082
        %5322 = vmatmul.mubr.bf16.gmra.mrb[0].mxu0 %v3972
        %v5323 = vpop.f32.mrb[0].mxu0
        %v5324 = vadd.f32 0.0, %v5323
        %v5325 = vpop.f32.mrb[0].mxu0
        %v5326 = vpop.f32.mrb[0].mxu0
        %v5327 = vadd.f32 0.0, %v5326
        %v5328 = vpop.f32.mrb[0].mxu0
        %5329 = vdwg.mxu0
        %5330 = vmatprep.subr.bf16.mxu0 0
        %5331 = vmatpush1.bf16.msra.mxu0 %v4993
        %5332 = vmatprep.subr.bf16.mxu0 0
        %5333 = vmatpush1.bf16.msra.mxu0 %v4994
        %5334 = vmatprep.subr.bf16.mxu0 0
        %5335 = vmatpush1.bf16.msra.mxu0 %v4995
        %5336 = vmatprep.subr.bf16.mxu0 0
        %5337 = vmatpush1.bf16.msra.mxu0 %v4996
        %5338 = vmatprep.subr.bf16.mxu0 0
        %5339 = vmatpush1.bf16.msra.mxu0 %v4997
        %5340 = vmatprep.subr.bf16.mxu0 0
        %5341 = vmatpush1.bf16.msra.mxu0 %v4998
        %5342 = vmatprep.subr.bf16.mxu0 0
        %5343 = vmatpush1.bf16.msra.mxu0 %v4999
        %5344 = vmatprep.subr.bf16.mxu0 0
        %5345 = vmatpush1.bf16.msra.mxu0 %v5000
        %5346 = vmatprep.subr.bf16.mxu0 0
        %5347 = vmatpush1.bf16.msra.mxu0 %v5001
        %5348 = vmatprep.subr.bf16.mxu0 0
        %5349 = vmatpush1.bf16.msra.mxu0 %v5002
        %5350 = vmatprep.subr.bf16.mxu0 0
        %5351 = vmatpush1.bf16.msra.mxu0 %v5003
        %5352 = vmatprep.subr.bf16.mxu0 0
        %5353 = vmatpush1.bf16.msra.mxu0 %v5004
        %5354 = vmatprep.subr.bf16.mxu0 0
        %5355 = vmatpush1.bf16.msra.mxu0 %v5005
        %5356 = vmatprep.subr.bf16.mxu0 0
        %5357 = vmatpush1.bf16.msra.mxu0 %v5006
        %5358 = vmatprep.subr.bf16.mxu0 0
        %5359 = vmatpush1.bf16.msra.mxu0 %v5007
        %5360 = vmatprep.subr.bf16.mxu0 0
        %5361 = vmatpush1.bf16.msra.mxu0 %v5008
        %5362 = vmatprep.mubr.bf16.mxu0 %v4172
        %5363 = vmatmul.mubr.bf16.gmra.mrb[0].mxu0 %v4171
        %v5364 = vpop.f32.mrb[0].mxu0
        %v5365 = vadd.f32 %v5156, %v5364
        %v5366 = vpop.f32.mrb[0].mxu0
        %v5367 = vpop.f32.mrb[0].mxu0
        %v5368 = vadd.f32 %v5159, %v5367
        %v5369 = vpop.f32.mrb[0].mxu0
        %5370 = vmatprep.mubr.bf16.mxu0 %v4173
        %5371 = vmatmul.mubr.bf16.gmra.mrb[0].mxu0 %v4172
        %v5372 = vpop.f32.mrb[0].mxu0
        %v5373 = vadd.f32 %v5164, %v5372
        %v5374 = vpop.f32.mrb[0].mxu0
        %v5375 = vpop.f32.mrb[0].mxu0
        %v5376 = vadd.f32 %v5167, %v5375
        %v5377 = vpop.f32.mrb[0].mxu0
        %5378 = vmatprep.mubr.bf16.mxu0 %v4174
        %5379 = vmatmul.mubr.bf16.gmra.mrb[0].mxu0 %v4173
        %v5380 = vpop.f32.mrb[0].mxu0
        %v5381 = vadd.f32 %v5172, %v5380
        %v5382 = vpop.f32.mrb[0].mxu0
        %v5383 = vpop.f32.mrb[0].mxu0
        %v5384 = vadd.f32 %v5175, %v5383
        %v5385 = vpop.f32.mrb[0].mxu0
        %5386 = vmatprep.mubr.bf16.mxu0 %v4175
        %5387 = vmatmul.mubr.bf16.gmra.mrb[0].mxu0 %v4174
        %v5388 = vpop.f32.mrb[0].mxu0
        %v5389 = vadd.f32 %v5180, %v5388
        %v5390 = vpop.f32.mrb[0].mxu0
        %v5391 = vpop.f32.mrb[0].mxu0
        %v5392 = vadd.f32 %v5183, %v5391
        %v5393 = vpop.f32.mrb[0].mxu0
        %5394 = vmatprep.mubr.bf16.mxu0 %v4176
        %5395 = vmatmul.mubr.bf16.gmra.mrb[0].mxu0 %v4175
        %v5396 = vpop.f32.mrb[0].mxu0
        %v5397 = vadd.f32 %v5188, %v5396
        %v5398 = vpop.f32.mrb[0].mxu0
        %v5399 = vpop.f32.mrb[0].mxu0
        %v5400 = vadd.f32 %v5191, %v5399
        %v5401 = vpop.f32.mrb[0].mxu0
        %5402 = vmatprep.mubr.bf16.mxu0 %v4177
        %5403 = vmatmul.mubr.bf16.gmra.mrb[0].mxu0 %v4176
        %v5404 = vpop.f32.mrb[0].mxu0
        %v5405 = vadd.f32 %v5196, %v5404
        %v5406 = vpop.f32.mrb[0].mxu0
        %v5407 = vpop.f32.mrb[0].mxu0
        %v5408 = vadd.f32 %v5199, %v5407
        %v5409 = vpop.f32.mrb[0].mxu0
        %5410 = vmatprep.mubr.bf16.mxu0 %v4178
        %5411 = vmatmul.mubr.bf16.gmra.mrb[0].mxu0 %v4177
        %v5412 = vpop.f32.mrb[0].mxu0
        %v5413 = vadd.f32 %v5204, %v5412
        %v5414 = vpop.f32.mrb[0].mxu0
        %v5415 = vpop.f32.mrb[0].mxu0
        %v5416 = vadd.f32 %v5207, %v5415
        %v5417 = vpop.f32.mrb[0].mxu0
        %5418 = vmatprep.mubr.bf16.mxu0 %v4179
        %5419 = vmatmul.mubr.bf16.gmra.mrb[0].mxu0 %v4178
        %v5420 = vpop.f32.mrb[0].mxu0
        %v5421 = vadd.f32 %v5212, %v5420
        %v5422 = vpop.f32.mrb[0].mxu0
        %v5423 = vpop.f32.mrb[0].mxu0
        %v5424 = vadd.f32 %v5215, %v5423
        %v5425 = vpop.f32.mrb[0].mxu0
        %5426 = vmatprep.mubr.bf16.mxu0 %v4180
        %5427 = vmatmul.mubr.bf16.gmra.mrb[0].mxu0 %v4179
        %v5428 = vpop.f32.mrb[0].mxu0
        %v5429 = vadd.f32 %v5220, %v5428
        %v5430 = vpop.f32.mrb[0].mxu0
        %v5431 = vpop.f32.mrb[0].mxu0
        %v5432 = vadd.f32 %v5223, %v5431
        %v5433 = vpop.f32.mrb[0].mxu0
        %5434 = vmatprep.mubr.bf16.mxu0 %v4181
        %5435 = vmatmul.mubr.bf16.gmra.mrb[0].mxu0 %v4180
        %v5436 = vpop.f32.mrb[0].mxu0
        %v5437 = vadd.f32 %v5228, %v5436
        %v5438 = vpop.f32.mrb[0].mxu0
        %v5439 = vpop.f32.mrb[0].mxu0
        %v5440 = vadd.f32 %v5231, %v5439
        %v5441 = vpop.f32.mrb[0].mxu0
        %5442 = vmatprep.mubr.bf16.mxu0 %v4182
        %5443 = vmatmul.mubr.bf16.gmra.mrb[0].mxu0 %v4181
        %v5444 = vpop.f32.mrb[0].mxu0
        %v5445 = vadd.f32 %v5236, %v5444
        %v5446 = vpop.f32.mrb[0].mxu0
        %v5447 = vpop.f32.mrb[0].mxu0
        %v5448 = vadd.f32 %v5239, %v5447
        %v5449 = vpop.f32.mrb[0].mxu0
        %5450 = vmatprep.mubr.bf16.mxu0 %v4183
        %5451 = vmatmul.mubr.bf16.gmra.mrb[0].mxu0 %v4182
        %v5452 = vpop.f32.mrb[0].mxu0
        %v5453 = vadd.f32 %v5244, %v5452
        %v5454 = vpop.f32.mrb[0].mxu0
        %v5455 = vpop.f32.mrb[0].mxu0
        %v5456 = vadd.f32 %v5247, %v5455
        %v5457 = vpop.f32.mrb[0].mxu0
        %5458 = vmatprep.mubr.bf16.mxu0 %v4184
        %5459 = vmatmul.mubr.bf16.gmra.mrb[0].mxu0 %v4183
        %v5460 = vpop.f32.mrb[0].mxu0
        %v5461 = vadd.f32 %v5252, %v5460
        %v5462 = vpop.f32.mrb[0].mxu0
        %v5463 = vpop.f32.mrb[0].mxu0
        %v5464 = vadd.f32 %v5255, %v5463
        %v5465 = vpop.f32.mrb[0].mxu0
        %5466 = vmatprep.mubr.bf16.mxu0 %v4185
        %5467 = vmatmul.mubr.bf16.gmra.mrb[0].mxu0 %v4184
        %v5468 = vpop.f32.mrb[0].mxu0
        %v5469 = vadd.f32 %v5260, %v5468
        %v5470 = vpop.f32.mrb[0].mxu0
        %v5471 = vpop.f32.mrb[0].mxu0
        %v5472 = vadd.f32 %v5263, %v5471
        %v5473 = vpop.f32.mrb[0].mxu0
        %5474 = vmatprep.mubr.bf16.mxu0 %v4186
        %5475 = vmatmul.mubr.bf16.gmra.mrb[0].mxu0 %v4185
        %v5476 = vpop.f32.mrb[0].mxu0
        %v5477 = vadd.f32 %v5268, %v5476
        %v5478 = vpop.f32.mrb[0].mxu0
        %v5479 = vpop.f32.mrb[0].mxu0
        %v5480 = vadd.f32 %v5271, %v5479
        %v5481 = vpop.f32.mrb[0].mxu0
        %5482 = vmatprep.mubr.bf16.mxu0 %v4187
        %5483 = vmatmul.mubr.bf16.gmra.mrb[0].mxu0 %v4186
        %v5484 = vpop.f32.mrb[0].mxu0
        %v5485 = vadd.f32 %v5276, %v5484
        %v5486 = vpop.f32.mrb[0].mxu0
        %v5487 = vpop.f32.mrb[0].mxu0
        %v5488 = vadd.f32 %v5279, %v5487
        %v5489 = vpop.f32.mrb[0].mxu0
        %5490 = vmatprep.mubr.bf16.mxu0 %v4188
        %5491 = vmatmul.mubr.bf16.gmra.mrb[0].mxu0 %v4187
        %v5492 = vpop.f32.mrb[0].mxu0
        %v5493 = vadd.f32 %v5284, %v5492
        %v5494 = vpop.f32.mrb[0].mxu0
        %v5495 = vpop.f32.mrb[0].mxu0
        %v5496 = vadd.f32 %v5287, %v5495
        %v5497 = vpop.f32.mrb[0].mxu0
        %5498 = vmatprep.mubr.bf16.mxu0 %v4189
        %5499 = vmatmul.mubr.bf16.gmra.mrb[0].mxu0 %v4188
        %v5500 = vpop.f32.mrb[0].mxu0
        %v5501 = vadd.f32 %v5292, %v5500
        %v5502 = vpop.f32.mrb[0].mxu0
        %v5503 = vpop.f32.mrb[0].mxu0
        %v5504 = vadd.f32 %v5295, %v5503
        %v5505 = vpop.f32.mrb[0].mxu0
        %5506 = vmatprep.mubr.bf16.mxu0 %v4190
        %5507 = vmatmul.mubr.bf16.gmra.mrb[0].mxu0 %v4189
        %v5508 = vpop.f32.mrb[0].mxu0
        %v5509 = vadd.f32 %v5300, %v5508
        %v5510 = vpop.f32.mrb[0].mxu0
        %v5511 = vpop.f32.mrb[0].mxu0
        %v5512 = vadd.f32 %v5303, %v5511
        %v5513 = vpop.f32.mrb[0].mxu0
        %5514 = vmatprep.mubr.bf16.mxu0 %v4191
        %5515 = vmatmul.mubr.bf16.gmra.mrb[0].mxu0 %v4190
        %v5516 = vpop.f32.mrb[0].mxu0
        %v5517 = vadd.f32 %v5308, %v5516
        %v5518 = vpop.f32.mrb[0].mxu0
        %v5519 = vpop.f32.mrb[0].mxu0
        %v5520 = vadd.f32 %v5311, %v5519
        %v5521 = vpop.f32.mrb[0].mxu0
        %5522 = vmatprep.mubr.bf16.mxu0 %v4192
        %5523 = vmatmul.mubr.bf16.gmra.mrb[0].mxu0 %v4191
        %v5524 = vpop.f32.mrb[0].mxu0
        %v5525 = vadd.f32 %v5316, %v5524
        %v5526 = vpop.f32.mrb[0].mxu0
        %v5527 = vpop.f32.mrb[0].mxu0
        %v5528 = vadd.f32 %v5319, %v5527
        %v5529 = vpop.f32.mrb[0].mxu0
        %5530 = vmatprep.mubr.bf16.mxu0 %v4171
        %5531 = vmatmul.mubr.bf16.gmra.mrb[0].mxu0 %v4192
        %v5532 = vpop.f32.mrb[0].mxu0
        %v5533 = vadd.f32 %v5324, %v5532
        %v5534 = vpop.f32.mrb[0].mxu0
        %v5535 = vpop.f32.mrb[0].mxu0
        %v5536 = vadd.f32 %v5327, %v5535
        %v5537 = vpop.f32.mrb[0].mxu0
        %5538 = vdwg.mxu0
        %5539 = vmatprep.subr.bf16.mxu0 0
        %5540 = vmatpush1.bf16.msra.mxu0 %v5009
        %5541 = vmatprep.subr.bf16.mxu0 0
        %5542 = vmatpush1.bf16.msra.mxu0 %v5010
        %5543 = vmatprep.subr.bf16.mxu0 0
        %5544 = vmatpush1.bf16.msra.mxu0 %v5011
        %5545 = vmatprep.subr.bf16.mxu0 0
        %5546 = vmatpush1.bf16.msra.mxu0 %v5012
        %5547 = vmatprep.subr.bf16.mxu0 0
        %5548 = vmatpush1.bf16.msra.mxu0 %v5013
        %5549 = vmatprep.subr.bf16.mxu0 0
        %5550 = vmatpush1.bf16.msra.mxu0 %v5014
        %5551 = vmatprep.subr.bf16.mxu0 0
        %5552 = vmatpush1.bf16.msra.mxu0 %v5015
        %5553 = vmatprep.subr.bf16.mxu0 0
        %5554 = vmatpush1.bf16.msra.mxu0 %v5016
        %5555 = vmatprep.subr.bf16.mxu0 0
        %5556 = vmatpush1.bf16.msra.mxu0 %v5017
        %5557 = vmatprep.subr.bf16.mxu0 0
        %5558 = vmatpush1.bf16.msra.mxu0 %v5018
        %5559 = vmatprep.subr.bf16.mxu0 0
        %5560 = vmatpush1.bf16.msra.mxu0 %v5019
        %5561 = vmatprep.subr.bf16.mxu0 0
        %5562 = vmatpush1.bf16.msra.mxu0 %v5020
        %5563 = vmatprep.subr.bf16.mxu0 0
        %5564 = vmatpush1.bf16.msra.mxu0 %v5021
        %5565 = vmatprep.subr.bf16.mxu0 0
        %5566 = vmatpush1.bf16.msra.mxu0 %v5022
        %5567 = vmatprep.subr.bf16.mxu0 0
        %5568 = vmatpush1.bf16.msra.mxu0 %v5023
        %5569 = vmatprep.subr.bf16.mxu0 0
        %5570 = vmatpush1.bf16.msra.mxu0 %v5024
        %5571 = vmatprep.mubr.bf16.mxu0 %v4303
        %5572 = vmatmul.mubr.bf16.gmra.mrb[0].mxu0 %v4193
        %v5573 = vpop.f32.mrb[0].mxu0
        %v5574 = vadd.f32 %v5365, %v5573
        %v5575 = vpop.f32.mrb[0].mxu0
        %v5576 = vpop.f32.mrb[0].mxu0
        %v5577 = vadd.f32 %v5368, %v5576
        %v5578 = vpop.f32.mrb[0].mxu0
        %5579 = vmatprep.mubr.bf16.mxu0 %v4304
        %5580 = vmatmul.mubr.bf16.gmra.mrb[0].mxu0 %v4194
        %v5581 = vpop.f32.mrb[0].mxu0
        %v5582 = vadd.f32 %v5373, %v5581
        %v5583 = vpop.f32.mrb[0].mxu0
        %v5584 = vpop.f32.mrb[0].mxu0
        %v5585 = vadd.f32 %v5376, %v5584
        %v5586 = vpop.f32.mrb[0].mxu0
        %5587 = vmatprep.mubr.bf16.mxu0 %v4305
        %5588 = vmatmul.mubr.bf16.gmra.mrb[0].mxu0 %v4195
        %v5589 = vpop.f32.mrb[0].mxu0
        %v5590 = vadd.f32 %v5381, %v5589
        %v5591 = vpop.f32.mrb[0].mxu0
        %v5592 = vpop.f32.mrb[0].mxu0
        %v5593 = vadd.f32 %v5384, %v5592
        %v5594 = vpop.f32.mrb[0].mxu0
        %5595 = vmatprep.mubr.bf16.mxu0 %v4306
        %5596 = vmatmul.mubr.bf16.gmra.mrb[0].mxu0 %v4196
        %v5597 = vpop.f32.mrb[0].mxu0
        %v5598 = vadd.f32 %v5389, %v5597
        %v5599 = vpop.f32.mrb[0].mxu0
        %v5600 = vpop.f32.mrb[0].mxu0
        %v5601 = vadd.f32 %v5392, %v5600
        %v5602 = vpop.f32.mrb[0].mxu0
        %5603 = vmatprep.mubr.bf16.mxu0 %v4307
        %5604 = vmatmul.mubr.bf16.gmra.mrb[0].mxu0 %v4197
        %v5605 = vpop.f32.mrb[0].mxu0
        %v5606 = vadd.f32 %v5397, %v5605
        %v5607 = vpop.f32.mrb[0].mxu0
        %v5608 = vpop.f32.mrb[0].mxu0
        %v5609 = vadd.f32 %v5400, %v5608
        %v5610 = vpop.f32.mrb[0].mxu0
        %5611 = vmatprep.mubr.bf16.mxu0 %v4308
        %5612 = vmatmul.mubr.bf16.gmra.mrb[0].mxu0 %v4198
        %v5613 = vpop.f32.mrb[0].mxu0
        %v5614 = vadd.f32 %v5405, %v5613
        %v5615 = vpop.f32.mrb[0].mxu0
        %v5616 = vpop.f32.mrb[0].mxu0
        %v5617 = vadd.f32 %v5408, %v5616
        %v5618 = vpop.f32.mrb[0].mxu0
        %5619 = vmatprep.mubr.bf16.mxu0 %v4309
        %5620 = vmatmul.mubr.bf16.gmra.mrb[0].mxu0 %v4199
        %v5621 = vpop.f32.mrb[0].mxu0
        %v5622 = vadd.f32 %v5413, %v5621
        %v5623 = vpop.f32.mrb[0].mxu0
        %v5624 = vpop.f32.mrb[0].mxu0
        %v5625 = vadd.f32 %v5416, %v5624
        %v5626 = vpop.f32.mrb[0].mxu0
        %5627 = vmatprep.mubr.bf16.mxu0 %v4310
        %5628 = vmatmul.mubr.bf16.gmra.mrb[0].mxu0 %v4200
        %v5629 = vpop.f32.mrb[0].mxu0
        %v5630 = vadd.f32 %v5421, %v5629
        %v5631 = vpop.f32.mrb[0].mxu0
        %v5632 = vpop.f32.mrb[0].mxu0
        %v5633 = vadd.f32 %v5424, %v5632
        %v5634 = vpop.f32.mrb[0].mxu0
        %5635 = vmatprep.mubr.bf16.mxu0 %v4311
        %5636 = vmatmul.mubr.bf16.gmra.mrb[0].mxu0 %v4201
        %v5637 = vpop.f32.mrb[0].mxu0
        %v5638 = vadd.f32 %v5429, %v5637
        %v5639 = vpop.f32.mrb[0].mxu0
        %v5640 = vpop.f32.mrb[0].mxu0
        %v5641 = vadd.f32 %v5432, %v5640
        %v5642 = vpop.f32.mrb[0].mxu0
        %5643 = vmatprep.mubr.bf16.mxu0 %v4312
        %5644 = vmatmul.mubr.bf16.gmra.mrb[0].mxu0 %v4202
        %v5645 = vpop.f32.mrb[0].mxu0
        %v5646 = vadd.f32 %v5437, %v5645
        %v5647 = vpop.f32.mrb[0].mxu0
        %v5648 = vpop.f32.mrb[0].mxu0
        %v5649 = vadd.f32 %v5440, %v5648
        %v5650 = vpop.f32.mrb[0].mxu0
        %5651 = vmatprep.mubr.bf16.mxu0 %v4313
        %5652 = vmatmul.mubr.bf16.gmra.mrb[0].mxu0 %v4203
        %v5653 = vpop.f32.mrb[0].mxu0
        %v5654 = vadd.f32 %v5445, %v5653
        %v5655 = vpop.f32.mrb[0].mxu0
        %v5656 = vpop.f32.mrb[0].mxu0
        %v5657 = vadd.f32 %v5448, %v5656
        %v5658 = vpop.f32.mrb[0].mxu0
        %5659 = vmatprep.mubr.bf16.mxu0 %v4314
        %5660 = vmatmul.mubr.bf16.gmra.mrb[0].mxu0 %v4204
        %v5661 = vpop.f32.mrb[0].mxu0
        %v5662 = vadd.f32 %v5453, %v5661
        %v5663 = vpop.f32.mrb[0].mxu0
        %v5664 = vpop.f32.mrb[0].mxu0
        %v5665 = vadd.f32 %v5456, %v5664
        %v5666 = vpop.f32.mrb[0].mxu0
        %5667 = vmatprep.mubr.bf16.mxu0 %v4315
        %5668 = vmatmul.mubr.bf16.gmra.mrb[0].mxu0 %v4205
        %v5669 = vpop.f32.mrb[0].mxu0
        %v5670 = vadd.f32 %v5461, %v5669
        %v5671 = vpop.f32.mrb[0].mxu0
        %v5672 = vpop.f32.mrb[0].mxu0
        %v5673 = vadd.f32 %v5464, %v5672
        %v5674 = vpop.f32.mrb[0].mxu0
        %5675 = vmatprep.mubr.bf16.mxu0 %v4316
        %5676 = vmatmul.mubr.bf16.gmra.mrb[0].mxu0 %v4206
        %v5677 = vpop.f32.mrb[0].mxu0
        %v5678 = vadd.f32 %v5469, %v5677
        %v5679 = vpop.f32.mrb[0].mxu0
        %v5680 = vpop.f32.mrb[0].mxu0
        %v5681 = vadd.f32 %v5472, %v5680
        %v5682 = vpop.f32.mrb[0].mxu0
        %5683 = vmatprep.mubr.bf16.mxu0 %v4317
        %5684 = vmatmul.mubr.bf16.gmra.mrb[0].mxu0 %v4207
        %v5685 = vpop.f32.mrb[0].mxu0
        %v5686 = vadd.f32 %v5477, %v5685
        %v5687 = vpop.f32.mrb[0].mxu0
        %v5688 = vpop.f32.mrb[0].mxu0
        %v5689 = vadd.f32 %v5480, %v5688
        %v5690 = vpop.f32.mrb[0].mxu0
        %5691 = vmatprep.mubr.bf16.mxu0 %v4318
        %5692 = vmatmul.mubr.bf16.gmra.mrb[0].mxu0 %v4208
        %v5693 = vpop.f32.mrb[0].mxu0
        %v5694 = vadd.f32 %v5485, %v5693
        %v5695 = vpop.f32.mrb[0].mxu0
        %v5696 = vpop.f32.mrb[0].mxu0
        %v5697 = vadd.f32 %v5488, %v5696
        %v5698 = vpop.f32.mrb[0].mxu0
        %5699 = vmatprep.mubr.bf16.mxu0 %v4319
        %5700 = vmatmul.mubr.bf16.gmra.mrb[0].mxu0 %v4209
        %v5701 = vpop.f32.mrb[0].mxu0
        %v5702 = vadd.f32 %v5493, %v5701
        %v5703 = vpop.f32.mrb[0].mxu0
        %v5704 = vpop.f32.mrb[0].mxu0
        %v5705 = vadd.f32 %v5496, %v5704
        %v5706 = vpop.f32.mrb[0].mxu0
        %5707 = vmatprep.mubr.bf16.mxu0 %v4320
        %5708 = vmatmul.mubr.bf16.gmra.mrb[0].mxu0 %v4210
        %v5709 = vpop.f32.mrb[0].mxu0
        %v5710 = vadd.f32 %v5501, %v5709
        %v5711 = vpop.f32.mrb[0].mxu0
        %v5712 = vpop.f32.mrb[0].mxu0
        %v5713 = vadd.f32 %v5504, %v5712
        %v5714 = vpop.f32.mrb[0].mxu0
        %5715 = vmatprep.mubr.bf16.mxu0 %v4321
        %5716 = vmatmul.mubr.bf16.gmra.mrb[0].mxu0 %v4211
        %v5717 = vpop.f32.mrb[0].mxu0
        %v5718 = vadd.f32 %v5509, %v5717
        %v5719 = vpop.f32.mrb[0].mxu0
        %v5720 = vpop.f32.mrb[0].mxu0
        %v5721 = vadd.f32 %v5512, %v5720
        %v5722 = vpop.f32.mrb[0].mxu0
        %5723 = vmatprep.mubr.bf16.mxu0 %v4322
        %5724 = vmatmul.mubr.bf16.gmra.mrb[0].mxu0 %v4212
        %v5725 = vpop.f32.mrb[0].mxu0
        %v5726 = vadd.f32 %v5517, %v5725
        %v5727 = vpop.f32.mrb[0].mxu0
        %v5728 = vpop.f32.mrb[0].mxu0
        %v5729 = vadd.f32 %v5520, %v5728
        %v5730 = vpop.f32.mrb[0].mxu0
        %5731 = vmatprep.mubr.bf16.mxu0 %v4323
        %5732 = vmatmul.mubr.bf16.gmra.mrb[0].mxu0 %v4213
        %v5733 = vpop.f32.mrb[0].mxu0
        %v5734 = vadd.f32 %v5525, %v5733
        %v5735 = vpop.f32.mrb[0].mxu0
        %v5736 = vpop.f32.mrb[0].mxu0
        %v5737 = vadd.f32 %v5528, %v5736
        %v5738 = vpop.f32.mrb[0].mxu0
        %5739 = vmatprep.mubr.bf16.mxu0 %v4324
        %5740 = vmatmul.mubr.bf16.gmra.mrb[0].mxu0 %v4214
        %v5741 = vpop.f32.mrb[0].mxu0
        %v5742 = vadd.f32 %v5533, %v5741
        %v5743 = vpop.f32.mrb[0].mxu0
        %v5744 = vpop.f32.mrb[0].mxu0
        %v5745 = vadd.f32 %v5536, %v5744
        %v5746 = vpop.f32.mrb[0].mxu0
        %5747 = vdwg.mxu0
        %5748 = vmatprep.subr.bf16.mxu0 0
        %5749 = vmatpush1.bf16.msra.mxu0 %v5025
        %5750 = vmatprep.subr.bf16.mxu0 0
        %5751 = vmatpush1.bf16.msra.mxu0 %v5026
        %5752 = vmatprep.subr.bf16.mxu0 0
        %5753 = vmatpush1.bf16.msra.mxu0 %v5027
        %5754 = vmatprep.subr.bf16.mxu0 0
        %5755 = vmatpush1.bf16.msra.mxu0 %v5028
        %5756 = vmatprep.subr.bf16.mxu0 0
        %5757 = vmatpush1.bf16.msra.mxu0 %v5029
        %5758 = vmatprep.subr.bf16.mxu0 0
        %5759 = vmatpush1.bf16.msra.mxu0 %v5030
        %5760 = vmatprep.subr.bf16.mxu0 0
        %5761 = vmatpush1.bf16.msra.mxu0 %v5031
        %5762 = vmatprep.subr.bf16.mxu0 0
        %5763 = vmatpush1.bf16.msra.mxu0 %v5032
        %5764 = vmatprep.subr.bf16.mxu0 0
        %5765 = vmatpush1.bf16.msra.mxu0 %v5033
        %5766 = vmatprep.subr.bf16.mxu0 0
        %5767 = vmatpush1.bf16.msra.mxu0 %v5034
        %5768 = vmatprep.subr.bf16.mxu0 0
        %5769 = vmatpush1.bf16.msra.mxu0 %v5035
        %5770 = vmatprep.subr.bf16.mxu0 0
        %5771 = vmatpush1.bf16.msra.mxu0 %v5036
        %5772 = vmatprep.subr.bf16.mxu0 0
        %5773 = vmatpush1.bf16.msra.mxu0 %v5037
        %5774 = vmatprep.subr.bf16.mxu0 0
        %5775 = vmatpush1.bf16.msra.mxu0 %v5038
        %5776 = vmatprep.subr.bf16.mxu0 0
        %5777 = vmatpush1.bf16.msra.mxu0 %v5039
        %5778 = vmatprep.subr.bf16.mxu0 0
        %5779 = vmatpush1.bf16.msra.mxu0 %v5040
        %5780 = vmatprep.mubr.bf16.mxu0 %v4413
        %5781 = vmatmul.mubr.bf16.gmra.mrb[0].mxu0 %v4304
        %v5782 = vpop.f32.mrb[0].mxu0
        %v5783 = vadd.f32 %v5574, %v5782
        %v5784 = vpop.f32.mrb[0].mxu0
        %v5785 = vpop.f32.mrb[0].mxu0
        %v5786 = vadd.f32 %v5577, %v5785
        %v5787 = vpop.f32.mrb[0].mxu0
        %5788 = vmatprep.mubr.bf16.mxu0 %v4414
        %5789 = vmatmul.mubr.bf16.gmra.mrb[0].mxu0 %v4305
        %v5790 = vpop.f32.mrb[0].mxu0
        %v5791 = vadd.f32 %v5582, %v5790
        %v5792 = vpop.f32.mrb[0].mxu0
        %v5793 = vpop.f32.mrb[0].mxu0
        %v5794 = vadd.f32 %v5585, %v5793
        %v5795 = vpop.f32.mrb[0].mxu0
        %5796 = vmatprep.mubr.bf16.mxu0 %v4415
        %5797 = vmatmul.mubr.bf16.gmra.mrb[0].mxu0 %v4306
        %v5798 = vpop.f32.mrb[0].mxu0
        %v5799 = vadd.f32 %v5590, %v5798
        %v5800 = vpop.f32.mrb[0].mxu0
        %v5801 = vpop.f32.mrb[0].mxu0
        %v5802 = vadd.f32 %v5593, %v5801
        %v5803 = vpop.f32.mrb[0].mxu0
        %5804 = vmatprep.mubr.bf16.mxu0 %v4416
        %5805 = vmatmul.mubr.bf16.gmra.mrb[0].mxu0 %v4307
        %v5806 = vpop.f32.mrb[0].mxu0
        %v5807 = vadd.f32 %v5598, %v5806
        %v5808 = vpop.f32.mrb[0].mxu0
        %v5809 = vpop.f32.mrb[0].mxu0
        %v5810 = vadd.f32 %v5601, %v5809
        %v5811 = vpop.f32.mrb[0].mxu0
        %5812 = vmatprep.mubr.bf16.mxu0 %v4417
        %5813 = vmatmul.mubr.bf16.gmra.mrb[0].mxu0 %v4308
        %v5814 = vpop.f32.mrb[0].mxu0
        %v5815 = vadd.f32 %v5606, %v5814
        %v5816 = vpop.f32.mrb[0].mxu0
        %v5817 = vpop.f32.mrb[0].mxu0
        %v5818 = vadd.f32 %v5609, %v5817
        %v5819 = vpop.f32.mrb[0].mxu0
        %5820 = vmatprep.mubr.bf16.mxu0 %v4418
        %5821 = vmatmul.mubr.bf16.gmra.mrb[0].mxu0 %v4309
        %v5822 = vpop.f32.mrb[0].mxu0
        %v5823 = vadd.f32 %v5614, %v5822
        %v5824 = vpop.f32.mrb[0].mxu0
        %v5825 = vpop.f32.mrb[0].mxu0
        %v5826 = vadd.f32 %v5617, %v5825
        %v5827 = vpop.f32.mrb[0].mxu0
        %5828 = vmatprep.mubr.bf16.mxu0 %v4419
        %5829 = vmatmul.mubr.bf16.gmra.mrb[0].mxu0 %v4310
        %v5830 = vpop.f32.mrb[0].mxu0
        %v5831 = vadd.f32 %v5622, %v5830
        %v5832 = vpop.f32.mrb[0].mxu0
        %v5833 = vpop.f32.mrb[0].mxu0
        %v5834 = vadd.f32 %v5625, %v5833
        %v5835 = vpop.f32.mrb[0].mxu0
        %5836 = vmatprep.mubr.bf16.mxu0 %v4420
        %5837 = vmatmul.mubr.bf16.gmra.mrb[0].mxu0 %v4311
        %v5838 = vpop.f32.mrb[0].mxu0
        %v5839 = vadd.f32 %v5630, %v5838
        %v5840 = vpop.f32.mrb[0].mxu0
        %v5841 = vpop.f32.mrb[0].mxu0
        %v5842 = vadd.f32 %v5633, %v5841
        %v5843 = vpop.f32.mrb[0].mxu0
        %5844 = vmatprep.mubr.bf16.mxu0 %v4421
        %5845 = vmatmul.mubr.bf16.gmra.mrb[0].mxu0 %v4312
        %v5846 = vpop.f32.mrb[0].mxu0
        %v5847 = vadd.f32 %v5638, %v5846
        %v5848 = vpop.f32.mrb[0].mxu0
        %v5849 = vpop.f32.mrb[0].mxu0
        %v5850 = vadd.f32 %v5641, %v5849
        %v5851 = vpop.f32.mrb[0].mxu0
        %5852 = vmatprep.mubr.bf16.mxu0 %v4422
        %5853 = vmatmul.mubr.bf16.gmra.mrb[0].mxu0 %v4313
        %v5854 = vpop.f32.mrb[0].mxu0
        %v5855 = vadd.f32 %v5646, %v5854
        %v5856 = vpop.f32.mrb[0].mxu0
        %v5857 = vpop.f32.mrb[0].mxu0
        %v5858 = vadd.f32 %v5649, %v5857
        %v5859 = vpop.f32.mrb[0].mxu0
        %5860 = vmatprep.mubr.bf16.mxu0 %v4423
        %5861 = vmatmul.mubr.bf16.gmra.mrb[0].mxu0 %v4314
        %v5862 = vpop.f32.mrb[0].mxu0
        %v5863 = vadd.f32 %v5654, %v5862
        %v5864 = vpop.f32.mrb[0].mxu0
        %v5865 = vpop.f32.mrb[0].mxu0
        %v5866 = vadd.f32 %v5657, %v5865
        %v5867 = vpop.f32.mrb[0].mxu0
        %5868 = vmatprep.mubr.bf16.mxu0 %v4424
        %5869 = vmatmul.mubr.bf16.gmra.mrb[0].mxu0 %v4315
        %v5870 = vpop.f32.mrb[0].mxu0
        %v5871 = vadd.f32 %v5662, %v5870
        %v5872 = vpop.f32.mrb[0].mxu0
        %v5873 = vpop.f32.mrb[0].mxu0
        %v5874 = vadd.f32 %v5665, %v5873
        %v5875 = vpop.f32.mrb[0].mxu0
        %5876 = vmatprep.mubr.bf16.mxu0 %v4425
        %5877 = vmatmul.mubr.bf16.gmra.mrb[0].mxu0 %v4316
        %v5878 = vpop.f32.mrb[0].mxu0
        %v5879 = vadd.f32 %v5670, %v5878
        %v5880 = vpop.f32.mrb[0].mxu0
        %v5881 = vpop.f32.mrb[0].mxu0
        %v5882 = vadd.f32 %v5673, %v5881
        %v5883 = vpop.f32.mrb[0].mxu0
        %5884 = vmatprep.mubr.bf16.mxu0 %v4426
        %5885 = vmatmul.mubr.bf16.gmra.mrb[0].mxu0 %v4317
        %v5886 = vpop.f32.mrb[0].mxu0
        %v5887 = vadd.f32 %v5678, %v5886
        %v5888 = vpop.f32.mrb[0].mxu0
        %v5889 = vpop.f32.mrb[0].mxu0
        %v5890 = vadd.f32 %v5681, %v5889
        %v5891 = vpop.f32.mrb[0].mxu0
        %5892 = vmatprep.mubr.bf16.mxu0 %v4427
        %5893 = vmatmul.mubr.bf16.gmra.mrb[0].mxu0 %v4318
        %v5894 = vpop.f32.mrb[0].mxu0
        %v5895 = vadd.f32 %v5686, %v5894
        %v5896 = vpop.f32.mrb[0].mxu0
        %v5897 = vpop.f32.mrb[0].mxu0
        %v5898 = vadd.f32 %v5689, %v5897
        %v5899 = vpop.f32.mrb[0].mxu0
        %5900 = vmatprep.mubr.bf16.mxu0 %v4428
        %5901 = vmatmul.mubr.bf16.gmra.mrb[0].mxu0 %v4319
        %v5902 = vpop.f32.mrb[0].mxu0
        %v5903 = vadd.f32 %v5694, %v5902
        %v5904 = vpop.f32.mrb[0].mxu0
        %v5905 = vpop.f32.mrb[0].mxu0
        %v5906 = vadd.f32 %v5697, %v5905
        %v5907 = vpop.f32.mrb[0].mxu0
        %5908 = vmatprep.mubr.bf16.mxu0 %v4429
        %5909 = vmatmul.mubr.bf16.gmra.mrb[0].mxu0 %v4320
        %v5910 = vpop.f32.mrb[0].mxu0
        %v5911 = vadd.f32 %v5702, %v5910
        %v5912 = vpop.f32.mrb[0].mxu0
        %v5913 = vpop.f32.mrb[0].mxu0
        %v5914 = vadd.f32 %v5705, %v5913
        %v5915 = vpop.f32.mrb[0].mxu0
        %5916 = vmatprep.mubr.bf16.mxu0 %v4430
        %5917 = vmatmul.mubr.bf16.gmra.mrb[0].mxu0 %v4321
        %v5918 = vpop.f32.mrb[0].mxu0
        %v5919 = vadd.f32 %v5710, %v5918
        %v5920 = vpop.f32.mrb[0].mxu0
        %v5921 = vpop.f32.mrb[0].mxu0
        %v5922 = vadd.f32 %v5713, %v5921
        %v5923 = vpop.f32.mrb[0].mxu0
        %5924 = vmatprep.mubr.bf16.mxu0 %v4431
        %5925 = vmatmul.mubr.bf16.gmra.mrb[0].mxu0 %v4322
        %v5926 = vpop.f32.mrb[0].mxu0
        %v5927 = vadd.f32 %v5718, %v5926
        %v5928 = vpop.f32.mrb[0].mxu0
        %v5929 = vpop.f32.mrb[0].mxu0
        %v5930 = vadd.f32 %v5721, %v5929
        %v5931 = vpop.f32.mrb[0].mxu0
        %5932 = vmatprep.mubr.bf16.mxu0 %v4432
        %5933 = vmatmul.mubr.bf16.gmra.mrb[0].mxu0 %v4323
        %v5934 = vpop.f32.mrb[0].mxu0
        %v5935 = vadd.f32 %v5726, %v5934
        %v5936 = vpop.f32.mrb[0].mxu0
        %v5937 = vpop.f32.mrb[0].mxu0
        %v5938 = vadd.f32 %v5729, %v5937
        %v5939 = vpop.f32.mrb[0].mxu0
        %5940 = vmatprep.mubr.bf16.mxu0 %v4433
        %5941 = vmatmul.mubr.bf16.gmra.mrb[0].mxu0 %v4324
        %v5942 = vpop.f32.mrb[0].mxu0
        %v5943 = vadd.f32 %v5734, %v5942
        %v5944 = vpop.f32.mrb[0].mxu0
        %v5945 = vpop.f32.mrb[0].mxu0
        %v5946 = vadd.f32 %v5737, %v5945
        %v5947 = vpop.f32.mrb[0].mxu0
        %5948 = vmatprep.mubr.bf16.mxu0 %v4434
        %5949 = vmatmul.mubr.bf16.gmra.mrb[0].mxu0 %v4303
        %v5950 = vpop.f32.mrb[0].mxu0
        %v5951 = vadd.f32 %v5742, %v5950
        %v5952 = vpop.f32.mrb[0].mxu0
        %v5953 = vpop.f32.mrb[0].mxu0
        %v5954 = vadd.f32 %v5745, %v5953
        %v5955 = vpop.f32.mrb[0].mxu0
        %5956 = vdwg.mxu0
        %5957 = vmatprep.subr.bf16.mxu0 0
        %5958 = vmatpush1.bf16.msra.mxu0 %v5041
        %5959 = vmatprep.subr.bf16.mxu0 0
        %5960 = vmatpush1.bf16.msra.mxu0 %v5042
        %5961 = vmatprep.subr.bf16.mxu0 0
        %5962 = vmatpush1.bf16.msra.mxu0 %v5043
        %5963 = vmatprep.subr.bf16.mxu0 0
        %5964 = vmatpush1.bf16.msra.mxu0 %v5044
        %5965 = vmatprep.subr.bf16.mxu0 0
        %5966 = vmatpush1.bf16.msra.mxu0 %v5045
        %5967 = vmatprep.subr.bf16.mxu0 0
        %5968 = vmatpush1.bf16.msra.mxu0 %v5046
        %5969 = vmatprep.subr.bf16.mxu0 0
        %5970 = vmatpush1.bf16.msra.mxu0 %v5047
        %5971 = vmatprep.subr.bf16.mxu0 0
        %5972 = vmatpush1.bf16.msra.mxu0 %v5048
        %5973 = vmatprep.subr.bf16.mxu0 0
        %5974 = vmatpush1.bf16.msra.mxu0 0
        %5975 = vmatprep.subr.bf16.mxu0 0
        %5976 = vmatpush1.bf16.msra.mxu0 0
        %5977 = vmatprep.subr.bf16.mxu0 0
        %5978 = vmatpush1.bf16.msra.mxu0 0
        %5979 = vmatprep.subr.bf16.mxu0 0
        %5980 = vmatpush1.bf16.msra.mxu0 0
        %5981 = vmatprep.subr.bf16.mxu0 0
        %5982 = vmatpush1.bf16.msra.mxu0 0
        %5983 = vmatprep.subr.bf16.mxu0 0
        %5984 = vmatpush1.bf16.msra.mxu0 0
        %5985 = vmatprep.subr.bf16.mxu0 0
        %5986 = vmatpush1.bf16.msra.mxu0 0
        %5987 = vmatprep.subr.bf16.mxu0 0
        %5988 = vmatpush1.bf16.msra.mxu0 0
        %5989 = vmatprep.mubr.bf16.mxu0 0
        %5990 = vmatmul.mubr.bf16.gmra.mrb[0].mxu0 %v4523
        %v5991 = vpop.f32.mrb[0].mxu0
        %v5992 = vadd.f32 %v5783, %v5991
        %v5993 = vpop.f32.mrb[0].mxu0
        %v5994 = vpop.f32.mrb[0].mxu0
        %v5995 = vadd.f32 %v5786, %v5994
        %v5996 = vpop.f32.mrb[0].mxu0
        %5997 = vmatprep.mubr.bf16.mxu0 0
        %5998 = vmatmul.mubr.bf16.gmra.mrb[0].mxu0 %v4524
        %v5999 = vpop.f32.mrb[0].mxu0
        %v6000 = vadd.f32 %v5791, %v5999
        %v6001 = vpop.f32.mrb[0].mxu0
        %v6002 = vpop.f32.mrb[0].mxu0
        %v6003 = vadd.f32 %v5794, %v6002
        %v6004 = vpop.f32.mrb[0].mxu0
        %6005 = vmatprep.mubr.bf16.mxu0 0
        %6006 = vmatmul.mubr.bf16.gmra.mrb[0].mxu0 %v4525
        %v6007 = vpop.f32.mrb[0].mxu0
        %v6008 = vadd.f32 %v5799, %v6007
        %v6009 = vpop.f32.mrb[0].mxu0
        %v6010 = vpop.f32.mrb[0].mxu0
        %v6011 = vadd.f32 %v5802, %v6010
        %v6012 = vpop.f32.mrb[0].mxu0
        %6013 = vmatprep.mubr.bf16.mxu0 0
        %6014 = vmatmul.mubr.bf16.gmra.mrb[0].mxu0 %v4526
        %v6015 = vpop.f32.mrb[0].mxu0
        %v6016 = vadd.f32 %v5807, %v6015
        %v6017 = vpop.f32.mrb[0].mxu0
        %v6018 = vpop.f32.mrb[0].mxu0
        %v6019 = vadd.f32 %v5810, %v6018
        %v6020 = vpop.f32.mrb[0].mxu0
        %6021 = vmatprep.mubr.bf16.mxu0 0
        %6022 = vmatmul.mubr.bf16.gmra.mrb[0].mxu0 %v4527
        %v6023 = vpop.f32.mrb[0].mxu0
        %v6024 = vadd.f32 %v5815, %v6023
        %v6025 = vpop.f32.mrb[0].mxu0
        %v6026 = vpop.f32.mrb[0].mxu0
        %v6027 = vadd.f32 %v5818, %v6026
        %v6028 = vpop.f32.mrb[0].mxu0
        %6029 = vmatprep.mubr.bf16.mxu0 0
        %6030 = vmatmul.mubr.bf16.gmra.mrb[0].mxu0 %v4528
        %v6031 = vpop.f32.mrb[0].mxu0
        %v6032 = vadd.f32 %v5823, %v6031
        %v6033 = vpop.f32.mrb[0].mxu0
        %v6034 = vpop.f32.mrb[0].mxu0
        %v6035 = vadd.f32 %v5826, %v6034
        %v6036 = vpop.f32.mrb[0].mxu0
        %6037 = vmatprep.mubr.bf16.mxu0 0
        %6038 = vmatmul.mubr.bf16.gmra.mrb[0].mxu0 %v4529
        %v6039 = vpop.f32.mrb[0].mxu0
        %v6040 = vadd.f32 %v5831, %v6039
        %v6041 = vpop.f32.mrb[0].mxu0
        %v6042 = vpop.f32.mrb[0].mxu0
        %v6043 = vadd.f32 %v5834, %v6042
        %v6044 = vpop.f32.mrb[0].mxu0
        %6045 = vmatprep.mubr.bf16.mxu0 0
        %6046 = vmatmul.mubr.bf16.gmra.mrb[0].mxu0 %v4530
        %v6047 = vpop.f32.mrb[0].mxu0
        %v6048 = vadd.f32 %v5839, %v6047
        %v6049 = vpop.f32.mrb[0].mxu0
        %v6050 = vpop.f32.mrb[0].mxu0
        %v6051 = vadd.f32 %v5842, %v6050
        %v6052 = vpop.f32.mrb[0].mxu0
        %6053 = vmatprep.mubr.bf16.mxu0 0
        %6054 = vmatmul.mubr.bf16.gmra.mrb[0].mxu0 %v4531
        %v6055 = vpop.f32.mrb[0].mxu0
        %v6056 = vadd.f32 %v5847, %v6055
        %v6057 = vpop.f32.mrb[0].mxu0
        %v6058 = vpop.f32.mrb[0].mxu0
        %v6059 = vadd.f32 %v5850, %v6058
        %v6060 = vpop.f32.mrb[0].mxu0
        %6061 = vmatprep.mubr.bf16.mxu0 0
        %6062 = vmatmul.mubr.bf16.gmra.mrb[0].mxu0 %v4532
        %v6063 = vpop.f32.mrb[0].mxu0
        %v6064 = vadd.f32 %v5855, %v6063
        %v6065 = vpop.f32.mrb[0].mxu0
        %v6066 = vpop.f32.mrb[0].mxu0
        %v6067 = vadd.f32 %v5858, %v6066
        %v6068 = vpop.f32.mrb[0].mxu0
        %6069 = vmatprep.mubr.bf16.mxu0 0
        %6070 = vmatmul.mubr.bf16.gmra.mrb[0].mxu0 %v4533
        %v6071 = vpop.f32.mrb[0].mxu0
        %v6072 = vadd.f32 %v5863, %v6071
        %v6073 = vpop.f32.mrb[0].mxu0
        %v6074 = vpop.f32.mrb[0].mxu0
        %v6075 = vadd.f32 %v5866, %v6074
        %v6076 = vpop.f32.mrb[0].mxu0
        %6077 = vmatprep.mubr.bf16.mxu0 0
        %6078 = vmatmul.mubr.bf16.gmra.mrb[0].mxu0 %v4534
        %v6079 = vpop.f32.mrb[0].mxu0
        %v6080 = vadd.f32 %v5871, %v6079
        %v6081 = vpop.f32.mrb[0].mxu0
        %v6082 = vpop.f32.mrb[0].mxu0
        %v6083 = vadd.f32 %v5874, %v6082
        %v6084 = vpop.f32.mrb[0].mxu0
        %6085 = vmatprep.mubr.bf16.mxu0 0
        %6086 = vmatmul.mubr.bf16.gmra.mrb[0].mxu0 %v4535
        %v6087 = vpop.f32.mrb[0].mxu0
        %v6088 = vadd.f32 %v5879, %v6087
        %v6089 = vpop.f32.mrb[0].mxu0
        %v6090 = vpop.f32.mrb[0].mxu0
        %v6091 = vadd.f32 %v5882, %v6090
        %v6092 = vpop.f32.mrb[0].mxu0
        %6093 = vmatprep.mubr.bf16.mxu0 0
        %6094 = vmatmul.mubr.bf16.gmra.mrb[0].mxu0 %v4536
        %v6095 = vpop.f32.mrb[0].mxu0
        %v6096 = vadd.f32 %v5887, %v6095
        %v6097 = vpop.f32.mrb[0].mxu0
        %v6098 = vpop.f32.mrb[0].mxu0
        %v6099 = vadd.f32 %v5890, %v6098
        %v6100 = vpop.f32.mrb[0].mxu0
        %6101 = vmatprep.mubr.bf16.mxu0 0
        %6102 = vmatmul.mubr.bf16.gmra.mrb[0].mxu0 %v4537
        %v6103 = vpop.f32.mrb[0].mxu0
        %v6104 = vadd.f32 %v5895, %v6103
        %v6105 = vpop.f32.mrb[0].mxu0
        %v6106 = vpop.f32.mrb[0].mxu0
        %v6107 = vadd.f32 %v5898, %v6106
        %v6108 = vpop.f32.mrb[0].mxu0
        %6109 = vmatprep.mubr.bf16.mxu0 0
        %6110 = vmatmul.mubr.bf16.gmra.mrb[0].mxu0 %v4538
        %v6111 = vpop.f32.mrb[0].mxu0
        %v6112 = vadd.f32 %v5903, %v6111
        %v6113 = vpop.f32.mrb[0].mxu0
        %v6114 = vpop.f32.mrb[0].mxu0
        %v6115 = vadd.f32 %v5906, %v6114
        %v6116 = vpop.f32.mrb[0].mxu0
        %6117 = vmatprep.mubr.bf16.mxu0 0
        %6118 = vmatmul.mubr.bf16.gmra.mrb[0].mxu0 %v4539
        %v6119 = vpop.f32.mrb[0].mxu0
        %v6120 = vadd.f32 %v5911, %v6119
        %v6121 = vpop.f32.mrb[0].mxu0
        %v6122 = vpop.f32.mrb[0].mxu0
        %v6123 = vadd.f32 %v5914, %v6122
        %v6124 = vpop.f32.mrb[0].mxu0
        %6125 = vmatprep.mubr.bf16.mxu0 0
        %6126 = vmatmul.mubr.bf16.gmra.mrb[0].mxu0 %v4540
        %v6127 = vpop.f32.mrb[0].mxu0
        %v6128 = vadd.f32 %v5919, %v6127
        %v6129 = vpop.f32.mrb[0].mxu0
        %v6130 = vpop.f32.mrb[0].mxu0
        %v6131 = vadd.f32 %v5922, %v6130
        %v6132 = vpop.f32.mrb[0].mxu0
        %6133 = vmatprep.mubr.bf16.mxu0 0
        %6134 = vmatmul.mubr.bf16.gmra.mrb[0].mxu0 %v4541
        %v6135 = vpop.f32.mrb[0].mxu0
        %v6136 = vadd.f32 %v5927, %v6135
        %v6137 = vpop.f32.mrb[0].mxu0
        %v6138 = vpop.f32.mrb[0].mxu0
        %v6139 = vadd.f32 %v5930, %v6138
        %v6140 = vpop.f32.mrb[0].mxu0
        %6141 = vmatprep.mubr.bf16.mxu0 0
        %6142 = vmatmul.mubr.bf16.gmra.mrb[0].mxu0 %v4542
        %v6143 = vpop.f32.mrb[0].mxu0
        %v6144 = vadd.f32 %v5935, %v6143
        %v6145 = vpop.f32.mrb[0].mxu0
        %v6146 = vpop.f32.mrb[0].mxu0
        %v6147 = vadd.f32 %v5938, %v6146
        %v6148 = vpop.f32.mrb[0].mxu0
        %6149 = vmatprep.mubr.bf16.mxu0 0
        %6150 = vmatmul.mubr.bf16.gmra.mrb[0].mxu0 %v4543
        %v6151 = vpop.f32.mrb[0].mxu0
        %v6152 = vadd.f32 %v5943, %v6151
        %v6153 = vpop.f32.mrb[0].mxu0
        %v6154 = vpop.f32.mrb[0].mxu0
        %v6155 = vadd.f32 %v5946, %v6154
        %v6156 = vpop.f32.mrb[0].mxu0
        %6157 = vmatprep.mubr.bf16.mxu0 0
        %6158 = vmatmul.mubr.bf16.gmra.mrb[0].mxu0 %v4544
        %v6159 = vpop.f32.mrb[0].mxu0
        %v6160 = vadd.f32 %v5951, %v6159
        %v6161 = vpop.f32.mrb[0].mxu0
        %v6162 = vpop.f32.mrb[0].mxu0
        %v6163 = vadd.f32 %v5954, %v6162
        %v6164 = vpop.f32.mrb[0].mxu0
        %6165 = vdwg.mxu0
        %v6166 = vld [vmem:[%s11] sm:$0xf]
        %v6167 = vld [vmem:[%s6] sm:$0x1]
        %v6168 = vld [vmem:[%s7] sm:$0x1]
        %v6169 = vmul.f32 %v5992, %v3156
        %v6170 = vmul.f32 %v5995, %v3161
        %v6171 = vmul.f32 %v6000, %v3166
        %v6172 = vmul.f32 %v6003, %v3171
        %v6173 = vmul.f32 %v6008, %v3176
        %v6174 = vmul.f32 %v6011, %v3181
        %v6175 = vmul.f32 %v6016, %v3186
        %v6176 = vmul.f32 %v6019, %v3191
        %v6177 = vmul.f32 %v6024, %v3196
        %v6178 = vmul.f32 %v6027, %v3201
        %v6179 = vmul.f32 %v6032, %v3206
        %v6180 = vmul.f32 %v6035, %v3211
        %v6181 = vmul.f32 %v6040, %v3216
        %v6182 = vmul.f32 %v6043, %v3221
        %v6183 = vmul.f32 %v6048, %v3226
        %v6184 = vmul.f32 %v6051, %v3231
        %v6185 = vmul.f32 %v6056, %v3236
        %v6186 = vmul.f32 %v6059, %v3241
        %v6187 = vmul.f32 %v6064, %v3246
        %v6188 = vmul.f32 %v6067, %v3251
        %v6189 = vmul.f32 %v6072, %v3256
        %v6190 = vmul.f32 %v6075, %v3261
        %v6191 = vmul.f32 %v6080, %v3266
        %v6192 = vmul.f32 %v6083, %v3271
        %v6193 = vmul.f32 %v6088, %v3276
        %v6194 = vmul.f32 %v6091, %v3281
        %v6195 = vmul.f32 %v6096, %v3286
        %v6196 = vmul.f32 %v6099, %v3291
        %v6197 = vmul.f32 %v6104, %v3296
        %v6198 = vmul.f32 %v6107, %v3301
        %v6199 = vmul.f32 %v6112, %v3306
        %v6200 = vmul.f32 %v6115, %v3311
        %v6201 = vmul.f32 %v6120, %v3316
        %v6202 = vmul.f32 %v6123, %v3321
        %v6203 = vmul.f32 %v6128, %v3326
        %v6204 = vmul.f32 %v6131, %v3331
        %v6205 = vmul.f32 %v6136, %v3336
        %v6206 = vmul.f32 %v6139, %v3341
        %v6207 = vmul.f32 %v6144, %v3346
        %v6208 = vmul.f32 %v6147, %v3351
        %v6209 = vmul.f32 %v6152, %v3356
        %v6210 = vmul.f32 %v6155, %v3361
        %v6211 = vmul.f32 %v6160, %v3366
        %v6212 = vmul.f32 %v6163, %v3371
        %v6213 = vadd.f32 %v6169, %v6170
        %v6214 = vadd.f32 %v6213, %v6171
        %v6215 = vadd.f32 %v6214, %v6172
        %v6216 = vadd.f32 %v6215, %v6173
        %v6217 = vadd.f32 %v6216, %v6174
        %v6218 = vadd.f32 %v6217, %v6175
        %v6219 = vadd.f32 %v6218, %v6176
        %v6220 = vadd.f32 %v6219, %v6177
        %v6221 = vadd.f32 %v6220, %v6178
        %v6222 = vadd.f32 %v6221, %v6179
        %v6223 = vadd.f32 %v6222, %v6180
        %v6224 = vadd.f32 %v6223, %v6181
        %v6225 = vadd.f32 %v6224, %v6182
        %v6226 = vadd.f32 %v6225, %v6183
        %v6227 = vadd.f32 %v6226, %v6184
        %v6228 = vadd.f32 %v6227, %v6185
        %v6229 = vadd.f32 %v6228, %v6186
        %v6230 = vadd.f32 %v6229, %v6187
        %v6231 = vadd.f32 %v6230, %v6188
        %v6232 = vadd.f32 %v6231, %v6189
        %v6233 = vadd.f32 %v6232, %v6190
        %v6234 = vadd.f32 %v6233, %v6191
        %v6235 = vadd.f32 %v6234, %v6192
        %v6236 = vadd.f32 %v6235, %v6193
        %v6237 = vadd.f32 %v6236, %v6194
        %v6238 = vadd.f32 %v6237, %v6195
        %v6239 = vadd.f32 %v6238, %v6196
        %v6240 = vadd.f32 %v6239, %v6197
        %v6241 = vadd.f32 %v6240, %v6198
        %v6242 = vadd.f32 %v6241, %v6199
        %v6243 = vadd.f32 %v6242, %v6200
        %v6244 = vadd.f32 %v6243, %v6201
        %v6245 = vadd.f32 %v6244, %v6202
        %v6246 = vadd.f32 %v6245, %v6203
        %v6247 = vadd.f32 %v6246, %v6204
        %v6248 = vadd.f32 %v6247, %v6205
        %v6249 = vadd.f32 %v6248, %v6206
        %v6250 = vadd.f32 %v6249, %v6207
        %v6251 = vadd.f32 %v6250, %v6208
        %v6252 = vadd.f32 %v6251, %v6209
        %v6253 = vadd.f32 %v6252, %v6210
        %v6254 = vadd.f32 %v6253, %v6211
        %v6255 = vadd.f32 %v6254, %v6212
        %v6256 = vrot.slane %v6255, 4
        %v6257 = vadd.f32 %v6255, %v6256
        %v6258 = vrot.slane %v6257, 2
        %v6259 = vadd.f32 %v6257, %v6258
        %v6260 = vrot.slane %v6259, 1
        %v6261 = vadd.f32 %v6259, %v6260
        %v6262 = vmul.f32 %v6166, %v6261
        %v6263 = vsel %vm3467, %v6262, 0.0
        %6264 = vadd.xlane.f32.xlu0 %v6263
        %v6265 = vpop.xlane.xlu0 %6264
        %v6266 = vmul.f32 %v6166, %v6265
        %v6267 = vsel %vm3467, %v6266, 0.0
        %v6268 = vrot.slane %v6267, 4
        %v6269 = vadd.f32 %v6267, %v6268
        %v6270 = vrot.slane %v6269, 2
        %v6271 = vadd.f32 %v6269, %v6270
        %v6272 = vrot.slane %v6271, 1
        %v6273 = vadd.f32 %v6271, %v6272
        %v6274 = vmul.f32 %v6273, 0.00390625
        %v6275 = vsub.f32 %v5992, %v6274
        %v6276 = vsub.f32 %v5995, %v6274
        %v6277 = vsub.f32 %v6000, %v6274
        %v6278 = vsub.f32 %v6003, %v6274
        %v6279 = vsub.f32 %v6008, %v6274
        %v6280 = vsub.f32 %v6011, %v6274
        %v6281 = vsub.f32 %v6016, %v6274
        %v6282 = vsub.f32 %v6019, %v6274
        %v6283 = vsub.f32 %v6024, %v6274
        %v6284 = vsub.f32 %v6027, %v6274
        %v6285 = vsub.f32 %v6032, %v6274
        %v6286 = vsub.f32 %v6035, %v6274
        %v6287 = vsub.f32 %v6040, %v6274
        %v6288 = vsub.f32 %v6043, %v6274
        %v6289 = vsub.f32 %v6048, %v6274
        %v6290 = vsub.f32 %v6051, %v6274
        %v6291 = vsub.f32 %v6056, %v6274
        %v6292 = vsub.f32 %v6059, %v6274
        %v6293 = vsub.f32 %v6064, %v6274
        %v6294 = vsub.f32 %v6067, %v6274
        %v6295 = vsub.f32 %v6072, %v6274
        %v6296 = vsub.f32 %v6075, %v6274
        %v6297 = vsub.f32 %v6080, %v6274
        %v6298 = vsub.f32 %v6083, %v6274
        %v6299 = vsub.f32 %v6088, %v6274
        %v6300 = vsub.f32 %v6091, %v6274
        %v6301 = vsub.f32 %v6096, %v6274
        %v6302 = vsub.f32 %v6099, %v6274
        %v6303 = vsub.f32 %v6104, %v6274
        %v6304 = vsub.f32 %v6107, %v6274
        %v6305 = vsub.f32 %v6112, %v6274
        %v6306 = vsub.f32 %v6115, %v6274
        %v6307 = vsub.f32 %v6120, %v6274
        %v6308 = vsub.f32 %v6123, %v6274
        %v6309 = vsub.f32 %v6128, %v6274
        %v6310 = vsub.f32 %v6131, %v6274
        %v6311 = vsub.f32 %v6136, %v6274
        %v6312 = vsub.f32 %v6139, %v6274
        %v6313 = vsub.f32 %v6144, %v6274
        %v6314 = vsub.f32 %v6147, %v6274
        %v6315 = vsub.f32 %v6152, %v6274
        %v6316 = vsub.f32 %v6155, %v6274
        %v6317 = vsub.f32 %v6160, %v6274
        %v6318 = vsub.f32 %v6163, %v6274
        %v6319 = vmul.f32 %v6275, %v3156
        %v6320 = vmul.f32 %v6276, %v3161
        %v6321 = vmul.f32 %v6277, %v3166
        %v6322 = vmul.f32 %v6278, %v3171
        %v6323 = vmul.f32 %v6279, %v3176
        %v6324 = vmul.f32 %v6280, %v3181
        %v6325 = vmul.f32 %v6281, %v3186
        %v6326 = vmul.f32 %v6282, %v3191
        %v6327 = vmul.f32 %v6283, %v3196
        %v6328 = vmul.f32 %v6284, %v3201
        %v6329 = vmul.f32 %v6285, %v3206
        %v6330 = vmul.f32 %v6286, %v3211
        %v6331 = vmul.f32 %v6287, %v3216
        %v6332 = vmul.f32 %v6288, %v3221
        %v6333 = vmul.f32 %v6289, %v3226
        %v6334 = vmul.f32 %v6290, %v3231
        %v6335 = vmul.f32 %v6291, %v3236
        %v6336 = vmul.f32 %v6292, %v3241
        %v6337 = vmul.f32 %v6293, %v3246
        %v6338 = vmul.f32 %v6294, %v3251
        %v6339 = vmul.f32 %v6295, %v3256
        %v6340 = vmul.f32 %v6296, %v3261
        %v6341 = vmul.f32 %v6297, %v3266
        %v6342 = vmul.f32 %v6298, %v3271
        %v6343 = vmul.f32 %v6299, %v3276
        %v6344 = vmul.f32 %v6300, %v3281
        %v6345 = vmul.f32 %v6301, %v3286
        %v6346 = vmul.f32 %v6302, %v3291
        %v6347 = vmul.f32 %v6303, %v3296
        %v6348 = vmul.f32 %v6304, %v3301
        %v6349 = vmul.f32 %v6305, %v3306
        %v6350 = vmul.f32 %v6306, %v3311
        %v6351 = vmul.f32 %v6307, %v3316
        %v6352 = vmul.f32 %v6308, %v3321
        %v6353 = vmul.f32 %v6309, %v3326
        %v6354 = vmul.f32 %v6310, %v3331
        %v6355 = vmul.f32 %v6311, %v3336
        %v6356 = vmul.f32 %v6312, %v3341
        %v6357 = vmul.f32 %v6313, %v3346
        %v6358 = vmul.f32 %v6314, %v3351
        %v6359 = vmul.f32 %v6315, %v3356
        %v6360 = vmul.f32 %v6316, %v3361
        %v6361 = vmul.f32 %v6317, %v3366
        %v6362 = vmul.f32 %v6318, %v3371
        %v6363 = vmul.f32 %v6319, %v6319
        %v6364 = vmul.f32 %v6320, %v6320
        %v6365 = vmul.f32 %v6321, %v6321
        %v6366 = vmul.f32 %v6322, %v6322
        %v6367 = vmul.f32 %v6323, %v6323
        %v6368 = vmul.f32 %v6324, %v6324
        %v6369 = vmul.f32 %v6325, %v6325
        %v6370 = vmul.f32 %v6326, %v6326
        %v6371 = vmul.f32 %v6327, %v6327
        %v6372 = vmul.f32 %v6328, %v6328
        %v6373 = vmul.f32 %v6329, %v6329
        %v6374 = vmul.f32 %v6330, %v6330
        %v6375 = vmul.f32 %v6331, %v6331
        %v6376 = vmul.f32 %v6332, %v6332
        %v6377 = vmul.f32 %v6333, %v6333
        %v6378 = vmul.f32 %v6334, %v6334
        %v6379 = vmul.f32 %v6335, %v6335
        %v6380 = vmul.f32 %v6336, %v6336
        %v6381 = vmul.f32 %v6337, %v6337
        %v6382 = vmul.f32 %v6338, %v6338
        %v6383 = vmul.f32 %v6339, %v6339
        %v6384 = vmul.f32 %v6340, %v6340
        %v6385 = vmul.f32 %v6341, %v6341
        %v6386 = vmul.f32 %v6342, %v6342
        %v6387 = vmul.f32 %v6343, %v6343
        %v6388 = vmul.f32 %v6344, %v6344
        %v6389 = vmul.f32 %v6345, %v6345
        %v6390 = vmul.f32 %v6346, %v6346
        %v6391 = vmul.f32 %v6347, %v6347
        %v6392 = vmul.f32 %v6348, %v6348
        %v6393 = vmul.f32 %v6349, %v6349
        %v6394 = vmul.f32 %v6350, %v6350
        %v6395 = vmul.f32 %v6351, %v6351
        %v6396 = vmul.f32 %v6352, %v6352
        %v6397 = vmul.f32 %v6353, %v6353
        %v6398 = vmul.f32 %v6354, %v6354
        %v6399 = vmul.f32 %v6355, %v6355
        %v6400 = vmul.f32 %v6356, %v6356
        %v6401 = vmul.f32 %v6357, %v6357
        %v6402 = vmul.f32 %v6358, %v6358
        %v6403 = vmul.f32 %v6359, %v6359
        %v6404 = vmul.f32 %v6360, %v6360
        %v6405 = vmul.f32 %v6361, %v6361
        %v6406 = vmul.f32 %v6362, %v6362
        %v6407 = vadd.f32 %v6363, %v6364
        %v6408 = vadd.f32 %v6407, %v6365
        %v6409 = vadd.f32 %v6408, %v6366
        %v6410 = vadd.f32 %v6409, %v6367
        %v6411 = vadd.f32 %v6410, %v6368
        %v6412 = vadd.f32 %v6411, %v6369
        %v6413 = vadd.f32 %v6412, %v6370
        %v6414 = vadd.f32 %v6413, %v6371
        %v6415 = vadd.f32 %v6414, %v6372
        %v6416 = vadd.f32 %v6415, %v6373
        %v6417 = vadd.f32 %v6416, %v6374
        %v6418 = vadd.f32 %v6417, %v6375
        %v6419 = vadd.f32 %v6418, %v6376
        %v6420 = vadd.f32 %v6419, %v6377
        %v6421 = vadd.f32 %v6420, %v6378
        %v6422 = vadd.f32 %v6421, %v6379
        %v6423 = vadd.f32 %v6422, %v6380
        %v6424 = vadd.f32 %v6423, %v6381
        %v6425 = vadd.f32 %v6424, %v6382
        %v6426 = vadd.f32 %v6425, %v6383
        %v6427 = vadd.f32 %v6426, %v6384
        %v6428 = vadd.f32 %v6427, %v6385
        %v6429 = vadd.f32 %v6428, %v6386
        %v6430 = vadd.f32 %v6429, %v6387
        %v6431 = vadd.f32 %v6430, %v6388
        %v6432 = vadd.f32 %v6431, %v6389
        %v6433 = vadd.f32 %v6432, %v6390
        %v6434 = vadd.f32 %v6433, %v6391
        %v6435 = vadd.f32 %v6434, %v6392
        %v6436 = vadd.f32 %v6435, %v6393
        %v6437 = vadd.f32 %v6436, %v6394
        %v6438 = vadd.f32 %v6437, %v6395
        %v6439 = vadd.f32 %v6438, %v6396
        %v6440 = vadd.f32 %v6439, %v6397
        %v6441 = vadd.f32 %v6440, %v6398
        %v6442 = vadd.f32 %v6441, %v6399
        %v6443 = vadd.f32 %v6442, %v6400
        %v6444 = vadd.f32 %v6443, %v6401
        %v6445 = vadd.f32 %v6444, %v6402
        %v6446 = vadd.f32 %v6445, %v6403
        %v6447 = vadd.f32 %v6446, %v6404
        %v6448 = vadd.f32 %v6447, %v6405
        %v6449 = vadd.f32 %v6448, %v6406
        %v6450 = vrot.slane %v6449, 4
        %v6451 = vadd.f32 %v6449, %v6450
        %v6452 = vrot.slane %v6451, 2
        %v6453 = vadd.f32 %v6451, %v6452
        %v6454 = vrot.slane %v6453, 1
        %v6455 = vadd.f32 %v6453, %v6454
        %v6456 = vmul.f32 %v6166, %v6455
        %v6457 = vsel %vm3467, %v6456, 0.0
        %6458 = vadd.xlane.f32.xlu0 %v6457
        %v6459 = vpop.xlane.xlu0 %6458
        %v6460 = vmul.f32 %v6459, 0.00390625
        %v6461 = vadd.f32 %v6460, 1e-05
        %v6462 = vrsqrt.pop %v6461
        %v6463 = vmul.f32 %v6166, %v6462
        %v6464 = vsel %vm3467, %v6463, 0.0
        %v6465 = vrot.slane %v6464, 4
        %v6466 = vadd.f32 %v6464, %v6465
        %v6467 = vrot.slane %v6466, 2
        %v6468 = vadd.f32 %v6466, %v6467
        %v6469 = vrot.slane %v6468, 1
        %v6470 = vadd.f32 %v6468, %v6469
        %v6471 = vmul.f32 %v6470, %v6167
        %v6472 = vlaneseq
        %v6473 = vshrl.u32 %v6472, 7
        %v6474 = vsub.s32 0, %v6473
        %v6475 = vrot.slane %v6471, %v6474
        %v6476 = vmul.f32 %v6319, %v6475
        %v6477 = vmul.f32 %v6320, %v6475
        %v6478 = vmul.f32 %v6321, %v6475
        %v6479 = vmul.f32 %v6322, %v6475
        %v6480 = vmul.f32 %v6323, %v6475
        %v6481 = vmul.f32 %v6324, %v6475
        %v6482 = vmul.f32 %v6325, %v6475
        %v6483 = vmul.f32 %v6326, %v6475
        %v6484 = vmul.f32 %v6327, %v6475
        %v6485 = vmul.f32 %v6328, %v6475
        %v6486 = vmul.f32 %v6329, %v6475
        %v6487 = vmul.f32 %v6330, %v6475
        %v6488 = vmul.f32 %v6331, %v6475
        %v6489 = vmul.f32 %v6332, %v6475
        %v6490 = vmul.f32 %v6333, %v6475
        %v6491 = vmul.f32 %v6334, %v6475
        %v6492 = vmul.f32 %v6335, %v6475
        %v6493 = vmul.f32 %v6336, %v6475
        %v6494 = vmul.f32 %v6337, %v6475
        %v6495 = vmul.f32 %v6338, %v6475
        %v6496 = vmul.f32 %v6339, %v6475
        %v6497 = vmul.f32 %v6340, %v6475
        %v6498 = vmul.f32 %v6341, %v6475
        %v6499 = vmul.f32 %v6342, %v6475
        %v6500 = vmul.f32 %v6343, %v6475
        %v6501 = vmul.f32 %v6344, %v6475
        %v6502 = vmul.f32 %v6345, %v6475
        %v6503 = vmul.f32 %v6346, %v6475
        %v6504 = vmul.f32 %v6347, %v6475
        %v6505 = vmul.f32 %v6348, %v6475
        %v6506 = vmul.f32 %v6349, %v6475
        %v6507 = vmul.f32 %v6350, %v6475
        %v6508 = vmul.f32 %v6351, %v6475
        %v6509 = vmul.f32 %v6352, %v6475
        %v6510 = vmul.f32 %v6353, %v6475
        %v6511 = vmul.f32 %v6354, %v6475
        %v6512 = vmul.f32 %v6355, %v6475
        %v6513 = vmul.f32 %v6356, %v6475
        %v6514 = vmul.f32 %v6357, %v6475
        %v6515 = vmul.f32 %v6358, %v6475
        %v6516 = vmul.f32 %v6359, %v6475
        %v6517 = vmul.f32 %v6360, %v6475
        %v6518 = vmul.f32 %v6361, %v6475
        %v6519 = vmul.f32 %v6362, %v6475
        %v6521 = vlaneseq
        %v6522 = vshrl.u32 %v6521, 7
        %v6523 = vsub.s32 0, %v6522
        %v6524 = vrot.slane %v6168, %v6523
        %v6526 = vadd.f32 %v6476, %v6524
        %v6527 = vadd.f32 %v6477, %v6524
        %v6528 = vadd.f32 %v6478, %v6524
        %v6529 = vadd.f32 %v6479, %v6524
        %v6530 = vadd.f32 %v6480, %v6524
        %v6531 = vadd.f32 %v6481, %v6524
        %v6532 = vadd.f32 %v6482, %v6524
        %v6533 = vadd.f32 %v6483, %v6524
        %v6534 = vadd.f32 %v6484, %v6524
        %v6535 = vadd.f32 %v6485, %v6524
        %v6536 = vadd.f32 %v6486, %v6524
        %v6537 = vadd.f32 %v6487, %v6524
        %v6538 = vadd.f32 %v6488, %v6524
        %v6539 = vadd.f32 %v6489, %v6524
        %v6540 = vadd.f32 %v6490, %v6524
        %v6541 = vadd.f32 %v6491, %v6524
        %v6542 = vadd.f32 %v6492, %v6524
        %v6543 = vadd.f32 %v6493, %v6524
        %v6544 = vadd.f32 %v6494, %v6524
        %v6545 = vadd.f32 %v6495, %v6524
        %v6546 = vadd.f32 %v6496, %v6524
        %v6547 = vadd.f32 %v6497, %v6524
        %v6548 = vadd.f32 %v6498, %v6524
        %v6549 = vadd.f32 %v6499, %v6524
        %v6550 = vadd.f32 %v6500, %v6524
        %v6551 = vadd.f32 %v6501, %v6524
        %v6552 = vadd.f32 %v6502, %v6524
        %v6553 = vadd.f32 %v6503, %v6524
        %v6554 = vadd.f32 %v6504, %v6524
        %v6555 = vadd.f32 %v6505, %v6524
        %v6556 = vadd.f32 %v6506, %v6524
        %v6557 = vadd.f32 %v6507, %v6524
        %v6558 = vadd.f32 %v6508, %v6524
        %v6559 = vadd.f32 %v6509, %v6524
        %v6560 = vadd.f32 %v6510, %v6524
        %v6561 = vadd.f32 %v6511, %v6524
        %v6562 = vadd.f32 %v6512, %v6524
        %v6563 = vadd.f32 %v6513, %v6524
        %v6564 = vadd.f32 %v6514, %v6524
        %v6565 = vadd.f32 %v6515, %v6524
        %v6566 = vadd.f32 %v6516, %v6524
        %v6567 = vadd.f32 %v6517, %v6524
        %v6568 = vadd.f32 %v6518, %v6524
        %v6569 = vadd.f32 %v6519, %v6524
        %v6570 = vadd.f32 %v6526, %v685
        %v6571 = vadd.f32 %v6527, %v686
        %v6572 = vadd.f32 %v6528, %v687
        %v6573 = vadd.f32 %v6529, %v688
        %v6574 = vadd.f32 %v6530, %v689
        %v6575 = vadd.f32 %v6531, %v690
        %v6576 = vadd.f32 %v6532, %v691
        %v6577 = vadd.f32 %v6533, %v692
        %v6578 = vadd.f32 %v6534, %v693
        %v6579 = vadd.f32 %v6535, %v694
        %v6580 = vadd.f32 %v6536, %v695
        %v6581 = vadd.f32 %v6537, %v696
        %v6582 = vadd.f32 %v6538, %v697
        %v6583 = vadd.f32 %v6539, %v698
        %v6584 = vadd.f32 %v6540, %v699
        %v6585 = vadd.f32 %v6541, %v700
        %v6586 = vadd.f32 %v6542, %v701
        %v6587 = vadd.f32 %v6543, %v702
        %v6588 = vadd.f32 %v6544, %v703
        %v6589 = vadd.f32 %v6545, %v704
        %v6590 = vadd.f32 %v6546, %v705
        %v6591 = vadd.f32 %v6547, %v706
        %v6592 = vadd.f32 %v6548, %v707
        %v6593 = vadd.f32 %v6549, %v708
        %v6594 = vadd.f32 %v6550, %v709
        %v6595 = vadd.f32 %v6551, %v710
        %v6596 = vadd.f32 %v6552, %v711
        %v6597 = vadd.f32 %v6553, %v712
        %v6598 = vadd.f32 %v6554, %v713
        %v6599 = vadd.f32 %v6555, %v714
        %v6600 = vadd.f32 %v6556, %v715
        %v6601 = vadd.f32 %v6557, %v716
        %v6602 = vadd.f32 %v6558, %v717
        %v6603 = vadd.f32 %v6559, %v718
        %v6604 = vadd.f32 %v6560, %v719
        %v6605 = vadd.f32 %v6561, %v720
        %v6606 = vadd.f32 %v6562, %v721
        %v6607 = vadd.f32 %v6563, %v722
        %v6608 = vadd.f32 %v6564, %v723
        %v6609 = vadd.f32 %v6565, %v724
        %v6610 = vadd.f32 %v6566, %v725
        %v6611 = vadd.f32 %v6567, %v726
        %v6612 = vadd.f32 %v6568, %v727
        %v6613 = vadd.f32 %v6569, %v728
        %v6614 = vmax.f32 %v6570, 0.0
        %v6615 = vmax.f32 %v6571, 0.0
        %v6616 = vmax.f32 %v6572, 0.0
        %v6617 = vmax.f32 %v6573, 0.0
        %v6618 = vmax.f32 %v6574, 0.0
        %v6619 = vmax.f32 %v6575, 0.0
        %v6620 = vmax.f32 %v6576, 0.0
        %v6621 = vmax.f32 %v6577, 0.0
        %v6622 = vmax.f32 %v6578, 0.0
        %v6623 = vmax.f32 %v6579, 0.0
        %v6624 = vmax.f32 %v6580, 0.0
        %v6625 = vmax.f32 %v6581, 0.0
        %v6626 = vmax.f32 %v6582, 0.0
        %v6627 = vmax.f32 %v6583, 0.0
        %v6628 = vmax.f32 %v6584, 0.0
        %v6629 = vmax.f32 %v6585, 0.0
        %v6630 = vmax.f32 %v6586, 0.0
        %v6631 = vmax.f32 %v6587, 0.0
        %v6632 = vmax.f32 %v6588, 0.0
        %v6633 = vmax.f32 %v6589, 0.0
        %v6634 = vmax.f32 %v6590, 0.0
        %v6635 = vmax.f32 %v6591, 0.0
        %v6636 = vmax.f32 %v6592, 0.0
        %v6637 = vmax.f32 %v6593, 0.0
        %v6638 = vmax.f32 %v6594, 0.0
        %v6639 = vmax.f32 %v6595, 0.0
        %v6640 = vmax.f32 %v6596, 0.0
        %v6641 = vmax.f32 %v6597, 0.0
        %v6642 = vmax.f32 %v6598, 0.0
        %v6643 = vmax.f32 %v6599, 0.0
        %v6644 = vmax.f32 %v6600, 0.0
        %v6645 = vmax.f32 %v6601, 0.0
        %v6646 = vmax.f32 %v6602, 0.0
        %v6647 = vmax.f32 %v6603, 0.0
        %v6648 = vmax.f32 %v6604, 0.0
        %v6649 = vmax.f32 %v6605, 0.0
        %v6650 = vmax.f32 %v6606, 0.0
        %v6651 = vmax.f32 %v6607, 0.0
        %v6652 = vmax.f32 %v6608, 0.0
        %v6653 = vmax.f32 %v6609, 0.0
        %v6654 = vmax.f32 %v6610, 0.0
        %v6655 = vmax.f32 %v6611, 0.0
        %v6656 = vmax.f32 %v6612, 0.0
        %v6657 = vmax.f32 %v6613, 0.0
        %v6658 = vld [vmem:[%s8] sm:$0x1]
        %v6659 = vld [vmem:[%s9] sm:$0x1]
        %v6660 = vmul.f32 %v6614, %v3156
        %v6661 = vmul.f32 %v6615, %v3161
        %v6662 = vmul.f32 %v6616, %v3166
        %v6663 = vmul.f32 %v6617, %v3171
        %v6664 = vmul.f32 %v6618, %v3176
        %v6665 = vmul.f32 %v6619, %v3181
        %v6666 = vmul.f32 %v6620, %v3186
        %v6667 = vmul.f32 %v6621, %v3191
        %v6668 = vmul.f32 %v6622, %v3196
        %v6669 = vmul.f32 %v6623, %v3201
        %v6670 = vmul.f32 %v6624, %v3206
        %v6671 = vmul.f32 %v6625, %v3211
        %v6672 = vmul.f32 %v6626, %v3216
        %v6673 = vmul.f32 %v6627, %v3221
        %v6674 = vmul.f32 %v6628, %v3226
        %v6675 = vmul.f32 %v6629, %v3231
        %v6676 = vmul.f32 %v6630, %v3236
        %v6677 = vmul.f32 %v6631, %v3241
        %v6678 = vmul.f32 %v6632, %v3246
        %v6679 = vmul.f32 %v6633, %v3251
        %v6680 = vmul.f32 %v6634, %v3256
        %v6681 = vmul.f32 %v6635, %v3261
        %v6682 = vmul.f32 %v6636, %v3266
        %v6683 = vmul.f32 %v6637, %v3271
        %v6684 = vmul.f32 %v6638, %v3276
        %v6685 = vmul.f32 %v6639, %v3281
        %v6686 = vmul.f32 %v6640, %v3286
        %v6687 = vmul.f32 %v6641, %v3291
        %v6688 = vmul.f32 %v6642, %v3296
        %v6689 = vmul.f32 %v6643, %v3301
        %v6690 = vmul.f32 %v6644, %v3306
        %v6691 = vmul.f32 %v6645, %v3311
        %v6692 = vmul.f32 %v6646, %v3316
        %v6693 = vmul.f32 %v6647, %v3321
        %v6694 = vmul.f32 %v6648, %v3326
        %v6695 = vmul.f32 %v6649, %v3331
        %v6696 = vmul.f32 %v6650, %v3336
        %v6697 = vmul.f32 %v6651, %v3341
        %v6698 = vmul.f32 %v6652, %v3346
        %v6699 = vmul.f32 %v6653, %v3351
        %v6700 = vmul.f32 %v6654, %v3356
        %v6701 = vmul.f32 %v6655, %v3361
        %v6702 = vmul.f32 %v6656, %v3366
        %v6703 = vmul.f32 %v6657, %v3371
        %v6704 = vadd.f32 %v6660, %v6661
        %v6705 = vadd.f32 %v6704, %v6662
        %v6706 = vadd.f32 %v6705, %v6663
        %v6707 = vadd.f32 %v6706, %v6664
        %v6708 = vadd.f32 %v6707, %v6665
        %v6709 = vadd.f32 %v6708, %v6666
        %v6710 = vadd.f32 %v6709, %v6667
        %v6711 = vadd.f32 %v6710, %v6668
        %v6712 = vadd.f32 %v6711, %v6669
        %v6713 = vadd.f32 %v6712, %v6670
        %v6714 = vadd.f32 %v6713, %v6671
        %v6715 = vadd.f32 %v6714, %v6672
        %v6716 = vadd.f32 %v6715, %v6673
        %v6717 = vadd.f32 %v6716, %v6674
        %v6718 = vadd.f32 %v6717, %v6675
        %v6719 = vadd.f32 %v6718, %v6676
        %v6720 = vadd.f32 %v6719, %v6677
        %v6721 = vadd.f32 %v6720, %v6678
        %v6722 = vadd.f32 %v6721, %v6679
        %v6723 = vadd.f32 %v6722, %v6680
        %v6724 = vadd.f32 %v6723, %v6681
        %v6725 = vadd.f32 %v6724, %v6682
        %v6726 = vadd.f32 %v6725, %v6683
        %v6727 = vadd.f32 %v6726, %v6684
        %v6728 = vadd.f32 %v6727, %v6685
        %v6729 = vadd.f32 %v6728, %v6686
        %v6730 = vadd.f32 %v6729, %v6687
        %v6731 = vadd.f32 %v6730, %v6688
        %v6732 = vadd.f32 %v6731, %v6689
        %v6733 = vadd.f32 %v6732, %v6690
        %v6734 = vadd.f32 %v6733, %v6691
        %v6735 = vadd.f32 %v6734, %v6692
        %v6736 = vadd.f32 %v6735, %v6693
        %v6737 = vadd.f32 %v6736, %v6694
        %v6738 = vadd.f32 %v6737, %v6695
        %v6739 = vadd.f32 %v6738, %v6696
        %v6740 = vadd.f32 %v6739, %v6697
        %v6741 = vadd.f32 %v6740, %v6698
        %v6742 = vadd.f32 %v6741, %v6699
        %v6743 = vadd.f32 %v6742, %v6700
        %v6744 = vadd.f32 %v6743, %v6701
        %v6745 = vadd.f32 %v6744, %v6702
        %v6746 = vadd.f32 %v6745, %v6703
        %v6747 = vrot.slane %v6746, 4
        %v6748 = vadd.f32 %v6746, %v6747
        %v6749 = vrot.slane %v6748, 2
        %v6750 = vadd.f32 %v6748, %v6749
        %v6751 = vrot.slane %v6750, 1
        %v6752 = vadd.f32 %v6750, %v6751
        %v6753 = vmul.f32 %v6166, %v6752
        %v6754 = vsel %vm3467, %v6753, 0.0
        %6755 = vadd.xlane.f32.xlu0 %v6754
        %v6756 = vpop.xlane.xlu0 %6755
        %v6757 = vmul.f32 %v6166, %v6756
        %v6758 = vsel %vm3467, %v6757, 0.0
        %v6759 = vrot.slane %v6758, 4
        %v6760 = vadd.f32 %v6758, %v6759
        %v6761 = vrot.slane %v6760, 2
        %v6762 = vadd.f32 %v6760, %v6761
        %v6763 = vrot.slane %v6762, 1
        %v6764 = vadd.f32 %v6762, %v6763
        %v6765 = vmul.f32 %v6764, 0.00390625
        %v6766 = vsub.f32 %v6614, %v6765
        %v6767 = vsub.f32 %v6615, %v6765
        %v6768 = vsub.f32 %v6616, %v6765
        %v6769 = vsub.f32 %v6617, %v6765
        %v6770 = vsub.f32 %v6618, %v6765
        %v6771 = vsub.f32 %v6619, %v6765
        %v6772 = vsub.f32 %v6620, %v6765
        %v6773 = vsub.f32 %v6621, %v6765
        %v6774 = vsub.f32 %v6622, %v6765
        %v6775 = vsub.f32 %v6623, %v6765
        %v6776 = vsub.f32 %v6624, %v6765
        %v6777 = vsub.f32 %v6625, %v6765
        %v6778 = vsub.f32 %v6626, %v6765
        %v6779 = vsub.f32 %v6627, %v6765
        %v6780 = vsub.f32 %v6628, %v6765
        %v6781 = vsub.f32 %v6629, %v6765
        %v6782 = vsub.f32 %v6630, %v6765
        %v6783 = vsub.f32 %v6631, %v6765
        %v6784 = vsub.f32 %v6632, %v6765
        %v6785 = vsub.f32 %v6633, %v6765
        %v6786 = vsub.f32 %v6634, %v6765
        %v6787 = vsub.f32 %v6635, %v6765
        %v6788 = vsub.f32 %v6636, %v6765
        %v6789 = vsub.f32 %v6637, %v6765
        %v6790 = vsub.f32 %v6638, %v6765
        %v6791 = vsub.f32 %v6639, %v6765
        %v6792 = vsub.f32 %v6640, %v6765
        %v6793 = vsub.f32 %v6641, %v6765
        %v6794 = vsub.f32 %v6642, %v6765
        %v6795 = vsub.f32 %v6643, %v6765
        %v6796 = vsub.f32 %v6644, %v6765
        %v6797 = vsub.f32 %v6645, %v6765
        %v6798 = vsub.f32 %v6646, %v6765
        %v6799 = vsub.f32 %v6647, %v6765
        %v6800 = vsub.f32 %v6648, %v6765
        %v6801 = vsub.f32 %v6649, %v6765
        %v6802 = vsub.f32 %v6650, %v6765
        %v6803 = vsub.f32 %v6651, %v6765
        %v6804 = vsub.f32 %v6652, %v6765
        %v6805 = vsub.f32 %v6653, %v6765
        %v6806 = vsub.f32 %v6654, %v6765
        %v6807 = vsub.f32 %v6655, %v6765
        %v6808 = vsub.f32 %v6656, %v6765
        %v6809 = vsub.f32 %v6657, %v6765
        %v6810 = vmul.f32 %v6766, %v3156
        %v6811 = vmul.f32 %v6767, %v3161
        %v6812 = vmul.f32 %v6768, %v3166
        %v6813 = vmul.f32 %v6769, %v3171
        %v6814 = vmul.f32 %v6770, %v3176
        %v6815 = vmul.f32 %v6771, %v3181
        %v6816 = vmul.f32 %v6772, %v3186
        %v6817 = vmul.f32 %v6773, %v3191
        %v6818 = vmul.f32 %v6774, %v3196
        %v6819 = vmul.f32 %v6775, %v3201
        %v6820 = vmul.f32 %v6776, %v3206
        %v6821 = vmul.f32 %v6777, %v3211
        %v6822 = vmul.f32 %v6778, %v3216
        %v6823 = vmul.f32 %v6779, %v3221
        %v6824 = vmul.f32 %v6780, %v3226
        %v6825 = vmul.f32 %v6781, %v3231
        %v6826 = vmul.f32 %v6782, %v3236
        %v6827 = vmul.f32 %v6783, %v3241
        %v6828 = vmul.f32 %v6784, %v3246
        %v6829 = vmul.f32 %v6785, %v3251
        %v6830 = vmul.f32 %v6786, %v3256
        %v6831 = vmul.f32 %v6787, %v3261
        %v6832 = vmul.f32 %v6788, %v3266
        %v6833 = vmul.f32 %v6789, %v3271
        %v6834 = vmul.f32 %v6790, %v3276
        %v6835 = vmul.f32 %v6791, %v3281
        %v6836 = vmul.f32 %v6792, %v3286
        %v6837 = vmul.f32 %v6793, %v3291
        %v6838 = vmul.f32 %v6794, %v3296
        %v6839 = vmul.f32 %v6795, %v3301
        %v6840 = vmul.f32 %v6796, %v3306
        %v6841 = vmul.f32 %v6797, %v3311
        %v6842 = vmul.f32 %v6798, %v3316
        %v6843 = vmul.f32 %v6799, %v3321
        %v6844 = vmul.f32 %v6800, %v3326
        %v6845 = vmul.f32 %v6801, %v3331
        %v6846 = vmul.f32 %v6802, %v3336
        %v6847 = vmul.f32 %v6803, %v3341
        %v6848 = vmul.f32 %v6804, %v3346
        %v6849 = vmul.f32 %v6805, %v3351
        %v6850 = vmul.f32 %v6806, %v3356
        %v6851 = vmul.f32 %v6807, %v3361
        %v6852 = vmul.f32 %v6808, %v3366
        %v6853 = vmul.f32 %v6809, %v3371
        %v6854 = vmul.f32 %v6810, %v6810
        %v6855 = vmul.f32 %v6811, %v6811
        %v6856 = vmul.f32 %v6812, %v6812
        %v6857 = vmul.f32 %v6813, %v6813
        %v6858 = vmul.f32 %v6814, %v6814
        %v6859 = vmul.f32 %v6815, %v6815
        %v6860 = vmul.f32 %v6816, %v6816
        %v6861 = vmul.f32 %v6817, %v6817
        %v6862 = vmul.f32 %v6818, %v6818
        %v6863 = vmul.f32 %v6819, %v6819
        %v6864 = vmul.f32 %v6820, %v6820
        %v6865 = vmul.f32 %v6821, %v6821
        %v6866 = vmul.f32 %v6822, %v6822
        %v6867 = vmul.f32 %v6823, %v6823
        %v6868 = vmul.f32 %v6824, %v6824
        %v6869 = vmul.f32 %v6825, %v6825
        %v6870 = vmul.f32 %v6826, %v6826
        %v6871 = vmul.f32 %v6827, %v6827
        %v6872 = vmul.f32 %v6828, %v6828
        %v6873 = vmul.f32 %v6829, %v6829
        %v6874 = vmul.f32 %v6830, %v6830
        %v6875 = vmul.f32 %v6831, %v6831
        %v6876 = vmul.f32 %v6832, %v6832
        %v6877 = vmul.f32 %v6833, %v6833
        %v6878 = vmul.f32 %v6834, %v6834
        %v6879 = vmul.f32 %v6835, %v6835
        %v6880 = vmul.f32 %v6836, %v6836
        %v6881 = vmul.f32 %v6837, %v6837
        %v6882 = vmul.f32 %v6838, %v6838
        %v6883 = vmul.f32 %v6839, %v6839
        %v6884 = vmul.f32 %v6840, %v6840
        %v6885 = vmul.f32 %v6841, %v6841
        %v6886 = vmul.f32 %v6842, %v6842
        %v6887 = vmul.f32 %v6843, %v6843
        %v6888 = vmul.f32 %v6844, %v6844
        %v6889 = vmul.f32 %v6845, %v6845
        %v6890 = vmul.f32 %v6846, %v6846
        %v6891 = vmul.f32 %v6847, %v6847
        %v6892 = vmul.f32 %v6848, %v6848
        %v6893 = vmul.f32 %v6849, %v6849
        %v6894 = vmul.f32 %v6850, %v6850
        %v6895 = vmul.f32 %v6851, %v6851
        %v6896 = vmul.f32 %v6852, %v6852
        %v6897 = vmul.f32 %v6853, %v6853
        %v6898 = vadd.f32 %v6854, %v6855
        %v6899 = vadd.f32 %v6898, %v6856
        %v6900 = vadd.f32 %v6899, %v6857
        %v6901 = vadd.f32 %v6900, %v6858
        %v6902 = vadd.f32 %v6901, %v6859
        %v6903 = vadd.f32 %v6902, %v6860
        %v6904 = vadd.f32 %v6903, %v6861
        %v6905 = vadd.f32 %v6904, %v6862
        %v6906 = vadd.f32 %v6905, %v6863
        %v6907 = vadd.f32 %v6906, %v6864
        %v6908 = vadd.f32 %v6907, %v6865
        %v6909 = vadd.f32 %v6908, %v6866
        %v6910 = vadd.f32 %v6909, %v6867
        %v6911 = vadd.f32 %v6910, %v6868
        %v6912 = vadd.f32 %v6911, %v6869
        %v6913 = vadd.f32 %v6912, %v6870
        %v6914 = vadd.f32 %v6913, %v6871
        %v6915 = vadd.f32 %v6914, %v6872
        %v6916 = vadd.f32 %v6915, %v6873
        %v6917 = vadd.f32 %v6916, %v6874
        %v6918 = vadd.f32 %v6917, %v6875
        %v6919 = vadd.f32 %v6918, %v6876
        %v6920 = vadd.f32 %v6919, %v6877
        %v6921 = vadd.f32 %v6920, %v6878
        %v6922 = vadd.f32 %v6921, %v6879
        %v6923 = vadd.f32 %v6922, %v6880
        %v6924 = vadd.f32 %v6923, %v6881
        %v6925 = vadd.f32 %v6924, %v6882
        %v6926 = vadd.f32 %v6925, %v6883
        %v6927 = vadd.f32 %v6926, %v6884
        %v6928 = vadd.f32 %v6927, %v6885
        %v6929 = vadd.f32 %v6928, %v6886
        %v6930 = vadd.f32 %v6929, %v6887
        %v6931 = vadd.f32 %v6930, %v6888
        %v6932 = vadd.f32 %v6931, %v6889
        %v6933 = vadd.f32 %v6932, %v6890
        %v6934 = vadd.f32 %v6933, %v6891
        %v6935 = vadd.f32 %v6934, %v6892
        %v6936 = vadd.f32 %v6935, %v6893
        %v6937 = vadd.f32 %v6936, %v6894
        %v6938 = vadd.f32 %v6937, %v6895
        %v6939 = vadd.f32 %v6938, %v6896
        %v6940 = vadd.f32 %v6939, %v6897
        %v6941 = vrot.slane %v6940, 4
        %v6942 = vadd.f32 %v6940, %v6941
        %v6943 = vrot.slane %v6942, 2
        %v6944 = vadd.f32 %v6942, %v6943
        %v6945 = vrot.slane %v6944, 1
        %v6946 = vadd.f32 %v6944, %v6945
        %v6947 = vmul.f32 %v6166, %v6946
        %v6948 = vsel %vm3467, %v6947, 0.0
        %6949 = vadd.xlane.f32.xlu0 %v6948
        %v6950 = vpop.xlane.xlu0 %6949
        %v6951 = vmul.f32 %v6950, 0.00390625
        %v6952 = vadd.f32 %v6951, 1e-05
        %v6953 = vrsqrt.pop %v6952
        %v6954 = vmul.f32 %v6166, %v6953
        %v6955 = vsel %vm3467, %v6954, 0.0
        %v6956 = vrot.slane %v6955, 4
        %v6957 = vadd.f32 %v6955, %v6956
        %v6958 = vrot.slane %v6957, 2
        %v6959 = vadd.f32 %v6957, %v6958
        %v6960 = vrot.slane %v6959, 1
        %v6961 = vadd.f32 %v6959, %v6960
        %v6962 = vmul.f32 %v6961, %v6658
        %v6963 = vlaneseq
        %v6964 = vshrl.u32 %v6963, 7
        %v6965 = vsub.s32 0, %v6964
        %v6966 = vrot.slane %v6962, %v6965
        %v6967 = vmul.f32 %v6810, %v6966
        %v6968 = vmul.f32 %v6811, %v6966
        %v6969 = vmul.f32 %v6812, %v6966
        %v6970 = vmul.f32 %v6813, %v6966
        %v6971 = vmul.f32 %v6814, %v6966
        %v6972 = vmul.f32 %v6815, %v6966
        %v6973 = vmul.f32 %v6816, %v6966
        %v6974 = vmul.f32 %v6817, %v6966
        %v6975 = vmul.f32 %v6818, %v6966
        %v6976 = vmul.f32 %v6819, %v6966
        %v6977 = vmul.f32 %v6820, %v6966
        %v6978 = vmul.f32 %v6821, %v6966
        %v6979 = vmul.f32 %v6822, %v6966
        %v6980 = vmul.f32 %v6823, %v6966
        %v6981 = vmul.f32 %v6824, %v6966
        %v6982 = vmul.f32 %v6825, %v6966
        %v6983 = vmul.f32 %v6826, %v6966
        %v6984 = vmul.f32 %v6827, %v6966
        %v6985 = vmul.f32 %v6828, %v6966
        %v6986 = vmul.f32 %v6829, %v6966
        %v6987 = vmul.f32 %v6830, %v6966
        %v6988 = vmul.f32 %v6831, %v6966
        %v6989 = vmul.f32 %v6832, %v6966
        %v6990 = vmul.f32 %v6833, %v6966
        %v6991 = vmul.f32 %v6834, %v6966
        %v6992 = vmul.f32 %v6835, %v6966
        %v6993 = vmul.f32 %v6836, %v6966
        %v6994 = vmul.f32 %v6837, %v6966
        %v6995 = vmul.f32 %v6838, %v6966
        %v6996 = vmul.f32 %v6839, %v6966
        %v6997 = vmul.f32 %v6840, %v6966
        %v6998 = vmul.f32 %v6841, %v6966
        %v6999 = vmul.f32 %v6842, %v6966
        %v7000 = vmul.f32 %v6843, %v6966
        %v7001 = vmul.f32 %v6844, %v6966
        %v7002 = vmul.f32 %v6845, %v6966
        %v7003 = vmul.f32 %v6846, %v6966
        %v7004 = vmul.f32 %v6847, %v6966
        %v7005 = vmul.f32 %v6848, %v6966
        %v7006 = vmul.f32 %v6849, %v6966
        %v7007 = vmul.f32 %v6850, %v6966
        %v7008 = vmul.f32 %v6851, %v6966
        %v7009 = vmul.f32 %v6852, %v6966
        %v7010 = vmul.f32 %v6853, %v6966
        %v7012 = vlaneseq
        %v7013 = vshrl.u32 %v7012, 7
        %v7014 = vsub.s32 0, %v7013
        %v7015 = vrot.slane %v6659, %v7014
        %v7017 = vadd.f32 %v6967, %v7015
        %v7018 = vadd.f32 %v6968, %v7015
        %v7019 = vadd.f32 %v6969, %v7015
        %v7020 = vadd.f32 %v6970, %v7015
        %v7021 = vadd.f32 %v6971, %v7015
        %v7022 = vadd.f32 %v6972, %v7015
        %v7023 = vadd.f32 %v6973, %v7015
        %v7024 = vadd.f32 %v6974, %v7015
        %v7025 = vadd.f32 %v6975, %v7015
        %v7026 = vadd.f32 %v6976, %v7015
        %v7027 = vadd.f32 %v6977, %v7015
        %v7028 = vadd.f32 %v6978, %v7015
        %v7029 = vadd.f32 %v6979, %v7015
        %v7030 = vadd.f32 %v6980, %v7015
        %v7031 = vadd.f32 %v6981, %v7015
        %v7032 = vadd.f32 %v6982, %v7015
        %v7033 = vadd.f32 %v6983, %v7015
        %v7034 = vadd.f32 %v6984, %v7015
        %v7035 = vadd.f32 %v6985, %v7015
        %v7036 = vadd.f32 %v6986, %v7015
        %v7037 = vadd.f32 %v6987, %v7015
        %v7038 = vadd.f32 %v6988, %v7015
        %v7039 = vadd.f32 %v6989, %v7015
        %v7040 = vadd.f32 %v6990, %v7015
        %v7041 = vadd.f32 %v6991, %v7015
        %v7042 = vadd.f32 %v6992, %v7015
        %v7043 = vadd.f32 %v6993, %v7015
        %v7044 = vadd.f32 %v6994, %v7015
        %v7045 = vadd.f32 %v6995, %v7015
        %v7046 = vadd.f32 %v6996, %v7015
        %v7047 = vadd.f32 %v6997, %v7015
        %v7048 = vadd.f32 %v6998, %v7015
        %v7049 = vadd.f32 %v6999, %v7015
        %v7050 = vadd.f32 %v7000, %v7015
        %v7051 = vadd.f32 %v7001, %v7015
        %v7052 = vadd.f32 %v7002, %v7015
        %v7053 = vadd.f32 %v7003, %v7015
        %v7054 = vadd.f32 %v7004, %v7015
        %v7055 = vadd.f32 %v7005, %v7015
        %v7056 = vadd.f32 %v7006, %v7015
        %v7057 = vadd.f32 %v7007, %v7015
        %v7058 = vadd.f32 %v7008, %v7015
        %v7059 = vadd.f32 %v7009, %v7015
        %v7060 = vadd.f32 %v7010, %v7015
        %7061 = vst [vmem:[%s502] sm:$0xff] %v7017
        %7062 = vst [vmem:[%s502 + $0x8] sm:$0xff] %v7018
        %7063 = vst [vmem:[%s502 + $0x10] sm:$0xff] %v7019
        %7064 = vst [vmem:[%s502 + $0x18] sm:$0xff] %v7020
        %7065 = vst [vmem:[%s502 + $0x20] sm:$0xff] %v7021
        %7066 = vst [vmem:[%s502 + $0x28] sm:$0xff] %v7022
        %7067 = vst [vmem:[%s502 + $0x30] sm:$0xff] %v7023
        %7068 = vst [vmem:[%s502 + $0x38] sm:$0xff] %v7024
        %7069 = vst [vmem:[%s502 + $0x40] sm:$0xff] %v7025
        %7070 = vst [vmem:[%s502 + $0x48] sm:$0xff] %v7026
        %7071 = vst [vmem:[%s502 + $0x50] sm:$0xff] %v7027
        %7072 = vst [vmem:[%s502 + $0x58] sm:$0xff] %v7028
        %7073 = vst [vmem:[%s502 + $0x60] sm:$0xff] %v7029
        %7074 = vst [vmem:[%s502 + $0x68] sm:$0xff] %v7030
        %7075 = vst [vmem:[%s502 + $0x70] sm:$0xff] %v7031
        %7076 = vst [vmem:[%s502 + $0x78] sm:$0xff] %v7032
        %7077 = vst [vmem:[%s502 + $0x80] sm:$0xff] %v7033
        %7078 = vst [vmem:[%s502 + $0x88] sm:$0xff] %v7034
        %7079 = vst [vmem:[%s502 + $0x90] sm:$0xff] %v7035
        %7080 = vst [vmem:[%s502 + $0x98] sm:$0xff] %v7036
        %7081 = vst [vmem:[%s502 + $0xa0] sm:$0xff] %v7037
        %7082 = vst [vmem:[%s502 + $0xa8] sm:$0xff] %v7038
        %7083 = vst [vmem:[%s502 + $0xb0] sm:$0xff] %v7039
        %7084 = vst [vmem:[%s502 + $0xb8] sm:$0xff] %v7040
        %7085 = vst [vmem:[%s502 + $0xc0] sm:$0xff] %v7041
        %7086 = vst [vmem:[%s502 + $0xc8] sm:$0xff] %v7042
        %7087 = vst [vmem:[%s502 + $0xd0] sm:$0xff] %v7043
        %7088 = vst [vmem:[%s502 + $0xd8] sm:$0xff] %v7044
        %7089 = vst [vmem:[%s502 + $0xe0] sm:$0xff] %v7045
        %7090 = vst [vmem:[%s502 + $0xe8] sm:$0xff] %v7046
        %7091 = vst [vmem:[%s502 + $0xf0] sm:$0xff] %v7047
        %7092 = vst [vmem:[%s502 + $0xf8] sm:$0xff] %v7048
        %7093 = vst [vmem:[%s502 + $0x100] sm:$0xff] %v7049
        %7094 = vst [vmem:[%s502 + $0x108] sm:$0xff] %v7050
        %7095 = vst [vmem:[%s502 + $0x110] sm:$0xff] %v7051
        %7096 = vst [vmem:[%s502 + $0x118] sm:$0xff] %v7052
        %7097 = vst [vmem:[%s502 + $0x120] sm:$0xff] %v7053
        %7098 = vst [vmem:[%s502 + $0x128] sm:$0xff] %v7054
        %7099 = vst [vmem:[%s502 + $0x130] sm:$0xff] %v7055
        %7100 = vst [vmem:[%s502 + $0x138] sm:$0xff] %v7056
        %7101 = vst [vmem:[%s502 + $0x140] sm:$0xff] %v7057
        %7102 = vst [vmem:[%s502 + $0x148] sm:$0xff] %v7058
        %7103 = vst [vmem:[%s502 + $0x150] sm:$0xff] %v7059
        %7104 = vst [vmem:[%s502 + $0x158] sm:$0xff] %v7060
        %s7105 = sand.u32 %s322, 1
        %s7106 = scalar_lea.sflag [#allocation4], %s7105
        %s7107 = sand.u32 %s322, 1
        %s7108 = smul.addr %s7107, 352
        %s7109 = scalar_lea.vmem [#allocation8], %s7108
        // Predicated region
        $region85: #{tpu_custom_call.1} parent=71 // pred_check
          %p7110 = pneg %p332
        $region86: #{tpu_custom_call.1} parent=71 // pred_check_branch
          %7112 = sbr.rel (%p7110) target = $region88
        $region87: #{tpu_custom_call.1} parent=71 // pred_region
          %s7114 = ssub.s32 5632, 5632
          %7115 = vsyncadd %s7106, %s7114
          %s7116 = smul.addr %s31, 44
          %s7117 = smul.addr %s7116, 128
          %s7118 = scalar_lea.hbm %s13, %s7117
          %s7119 = sshll.u32 %s7109, 4
          %s7120 = int_to_ptr.vmem [resolvable:$true] %s7119
          %7125 = dma.vmem_to_hbm [thread:$0]  %s7120, 5632, %s7118, %s7106, 128, 128, 8
        $region88: #{tpu_custom_call.1} parent=71 // pred_fallthru
          _
      $region72: #{tpu_custom_call.1} parent=5 // pred_fallthru
        _
      %p7126 = scmp.le.s32.totalorder 2, %s26
      // Predicated region
      $region89: #{tpu_custom_call.1} parent=5 // pred_check
        %p7127 = pneg %p7126
      $region90: #{tpu_custom_call.1} parent=5 // pred_check_branch
        %7129 = sbr.rel (%p7127) target = $region92
      $region91: #{tpu_custom_call.1} parent=5 // pred_region
        %s7130 = ssub.s32 %s26, 2
        // Predicated region
        $region93: #{tpu_custom_call.1} parent=91 // pred_check
          %p7131 = pneg %p338
        $region94: #{tpu_custom_call.1} parent=91 // pred_check_branch
          %7133 = sbr.rel (%p7131) target = $region96
        $region95: #{tpu_custom_call.1} parent=91 // pred_region
          %s7134 = sand.u32 %s323, 1
          %s7135 = scalar_lea.sflag [#allocation4], %s7134
          %s7136 = sand.u32 %s323, 1
          %s7137 = smul.addr %s7136, 352
          %s7138 = scalar_lea.vmem [#allocation8], %s7137
          %7139 = dma.done %s7135, 5632
        $region96: #{tpu_custom_call.1} parent=91 // pred_fallthru
          _
      $region92: #{tpu_custom_call.1} parent=5 // pred_fallthru
        _
    $region6: #{tpu_custom_call.1} parent=1 // loop_footer
      %s30 = sadd.s32 1, %s26
    $region7: #{tpu_custom_call.1} parent=1 // loop_footer_branch
      %25 = sbr.rel target = $region3
    $region8: #{tpu_custom_call.1} parent=1 // loop_exit
      _
    %7140 = vsyncpa [#allocation3], 1
    %s7141 = scalar_lea.sflag [#allocation3], 1
    %7142 = vsyncpa %s7141, 1
    %7143 = vsyncpa [#allocation6], 1
    %7144 = vsyncpa [#allocation4], 1
    %s7145 = scalar_lea.sflag [#allocation4], 1
    %7146 = vsyncpa %s7145, 1

</llo_original>
